<compile_context>
chip_gen: v7x
topology: tpu7x:2x2x1
jax: 0.10.0
libtpu: 0.0.40
codegen_flags: <defaults>
</compile_context>

<pallas_src>
import numpy as np
import jax
import jax.numpy as jnp
from jax.experimental import pallas as pl
from jax.experimental.pallas import tpu as pltpu


B_TILE = 8  # samples per grid step (tunable; keep grid = batch/B_TILE >= 2)


# ----------------------------------------------------------------------------
# Fused forward kernel: B_TILE samples per grid step, everything in VMEM.
# Folded activation layout: rows = (sample-major, spatial-h minor), lanes =
# (spatial-w major, channel minor).
# ----------------------------------------------------------------------------
def _cnn_fused_kernel(
    x_ref,                       # (T*30, 96)   f32  conv1 im2col'd input rows
    w1_ref, b1_ref,              # (96, 992)    bf16, (1, 992)  f32
    sr1_ref,                     # (T*15, T*30-1) bf16   pool1 row select
    w2_ref, b2_ref,              # (3, 480, 768) bf16, (1, 768) f32
    sr2_ref,                     # (T*6, T*15-3)  bf16   pool2 row select
    w3_ref, b3_ref,              # (3, 384, 256) bf16, (1, 256) f32
    fc1w_ref, fc1b_ref,          # (1024, 64)   bf16, (1, 64)  f32
    sro_ref,                     # (T, T*6-5)   bf16   final row select
    fc2w_ref, fc2b_ref,          # (64, 128)    bf16, (1, 128) f32
    out_ref,                     # (T, 128)     f32
):
    f32, bf16 = jnp.float32, jnp.bfloat16
    r0 = x_ref.shape[0]                                   # T*30

    # ---- conv1 + ReLU: one MXU matmul, K = 96 (3 row taps folded into lanes).
    #      Output columns are pre-permuted to [even-w (480) | zeros (32) | odd-w (480)].
    a1 = x_ref[...].astype(bf16)                                          # (T*30, 96)
    o1 = jnp.dot(a1, w1_ref[...], preferred_element_type=f32) + b1_ref[...]
    o1 = jnp.maximum(o1, 0.0).astype(bf16)                                # (T*30, 992)

    # ---- maxpool1: lane-aligned even|odd column max, adjacent-row max, then a
    #      tiny 0/1 row-select matmul (keeps rows 2h', drops cross-sample rows).
    c1 = jnp.maximum(o1[:, 0:480], o1[:, 512:992])                        # (T*30, 480)
    r1 = jnp.maximum(c1[0:r0 - 1, :], c1[1:r0, :])                        # (T*30-1, 480)
    p1 = jnp.dot(sr1_ref[...], r1, preferred_element_type=f32).astype(bf16)  # (T*15, 480)

    # ---- conv2 + ReLU (3 structured matmuls over the folded layout).
    #      Output columns pre-permuted to [even-w2 | odd-w2]; w2 = 12 never built.
    l2 = p1.shape[0] - 2                                                  # T*15-2
    o2 = b2_ref[...]
    for ki in range(3):
        o2 = o2 + jnp.dot(p1[ki:ki + l2, :], w2_ref[ki],
                          preferred_element_type=f32)
    o2 = jnp.maximum(o2, 0.0).astype(bf16)                                # (T*15-2, 768)

    # ---- maxpool2 (floor semantics: row/col 12 of conv2 unused).
    c2 = jnp.maximum(o2[:, 0:384], o2[:, 384:768])                        # (T*15-2, 384)
    r2 = jnp.maximum(c2[0:l2 - 1, :], c2[1:l2, :])                        # (T*15-3, 384)
    p2 = jnp.dot(sr2_ref[...], r2, preferred_element_type=f32).astype(bf16)  # (T*6, 384)

    # ---- conv3 + ReLU.
    l3 = p2.shape[0] - 2                                                  # T*6-2
    o3 = b3_ref[...]
    for ki in range(3):
        o3 = o3 + jnp.dot(p2[ki:ki + l3, :], w3_ref[ki],
                          preferred_element_type=f32)
    o3 = jnp.maximum(o3, 0.0).astype(bf16)                                # (T*6-2, 256)

    # ---- fc1 + ReLU, "conv-style" over the 4 valid conv3 rows per sample
    #      (fc1 weights were pre-permuted to this folded flatten order).
    l4 = l3 - 3                                                           # T*6-5
    y = fc1b_ref[...]
    for h in range(4):
        y = y + jnp.dot(o3[h:h + l4, :], fc1w_ref[h * 256:(h + 1) * 256, :],
                        preferred_element_type=f32)
    y = jnp.maximum(y, 0.0).astype(bf16)                                  # (T*6-5, 64)

    # ---- pick one row per sample, fc2 into a lane-dense 128-wide output block.
    ysel = jnp.dot(sro_ref[...], y, preferred_element_type=f32).astype(bf16)  # (T, 64)
    out_ref[...] = (jnp.dot(ysel, fc2w_ref[...], preferred_element_type=f32)
                    + fc2b_ref[...])                                      # (T, 128)


# ----------------------------------------------------------------------------
# One-time parameter re-layout (PyTorch layouts -> kernel operands)
# ----------------------------------------------------------------------------
def _structured_conv_weights(w, w_in, out_w_order):
    """(Co,Ci,3,3) torch conv weight -> (3, w_in*Ci, len(out_w_order)*Co) f32.

    Wbig[ki][(w_out+kj)*Ci + ci, g*Co + co] = w[co, ci, ki, kj], so that with the
    folded layout A[h, w*Ci + ci]:  conv(A)[h, col] = sum_ki (A[ki:ki+OH] @ Wbig[ki]).
    """
    w = np.asarray(w, np.float32)
    co, ci, kh, kw = w.shape
    ng = len(out_w_order)
    mats = np.zeros((kh, w_in * ci, ng * co), np.float32)
    for ki in range(kh):
        for g, wo in enumerate(out_w_order):
            for kj in range(kw):
                mats[ki, (wo + kj) * ci:(wo + kj + 1) * ci,
                     g * co:(g + 1) * co] = w[:, :, ki, kj].T
    return mats


def _conv1_merged_weights(w1, out_w_order):
    """Conv1 (Ci=1) with its 3 row taps folded into K: (96, len(order)*32) f32.

    LHS row layout is X3[h, ki*32 + j] = x[h+ki, j] (built in the wrapper)."""
    w1 = np.asarray(w1, np.float32)                       # (32, 1, 3, 3)
    co = w1.shape[0]
    m = np.zeros((3 * 32, len(out_w_order) * co), np.float32)
    for ki in range(3):
        for g, wo in enumerate(out_w_order):
            for kj in range(3):
                m[ki * 32 + wo + kj, g * co:(g + 1) * co] = w1[:, 0, ki, kj]
    return m


def _row_select(t, per_out, per_in, n_in):
    """0/1 (t*per_out, n_in) matrix picking row b*per_in + 2*h for each (b, h)."""
    m = np.zeros((t * per_out, n_in), np.float32)
    for b in range(t):
        for h in range(per_out):
            m[b * per_out + h, b * per_in + 2 * h] = 1.0
    return m


def prepare_params(params):
    t = B_TILE
    even15, odd15 = list(range(0, 30, 2)), list(range(1, 30, 2))
    even6, odd6 = list(range(0, 12, 2)), list(range(1, 12, 2))

    # conv1: single K=96 matmul; columns ordered [even-w | 32 zero cols | odd-w]
    # so both pool-1 column slices start at a multiple of 128 lanes.
    w1m = _conv1_merged_weights(params["w1"], even15 + odd15)             # (96, 960)
    w1m = np.concatenate(
        [w1m[:, :480], np.zeros((96, 32), np.float32), w1m[:, 480:]], axis=1)
    b1 = np.asarray(params["b1"], np.float32)
    bb1 = np.concatenate([np.tile(b1, 15), np.zeros(32, np.float32),
                          np.tile(b1, 15)])[None, :]                      # (1, 992)

    # conv2 on the pooled (w'=15, Ci=32) layout; output cols [even-w2 | odd-w2],
    # w2=12 dropped (MaxPool2d floor semantics).
    wb2 = _structured_conv_weights(params["w2"], 15, even6 + odd6)        # (3, 480, 768)
    bb2 = np.tile(np.asarray(params["b2"], np.float32), 12)[None, :]      # (1, 768)

    # conv3 on the pooled (w''=6, Ci=64) layout; natural output column order.
    wb3 = _structured_conv_weights(params["w3"], 6, list(range(4)))       # (3, 384, 256)
    bb3 = np.tile(np.asarray(params["b3"], np.float32), 4)[None, :]       # (1, 256)

    # fc1: permute PyTorch NCHW-flatten order (c*16 + h*4 + w) to the kernel's
    # folded order (h*256 + w*64 + c).
    fc1 = np.asarray(params["fc1_w"], np.float32).reshape(64, 64, 4, 4)   # (n, c, h, w)
    fc1 = fc1.transpose(2, 3, 1, 0).reshape(1024, 64)
    fc1b = np.asarray(params["fc1_b"], np.float32)[None, :]

    # fc2: transpose + zero-pad N to a lane-dense 128.
    fc2w = np.zeros((64, 128), np.float32)
    fc2w[:, :10] = np.asarray(params["fc2_w"], np.float32).T
    fc2b = np.zeros((1, 128), np.float32)
    fc2b[0, :10] = np.asarray(params["fc2_b"], np.float32)

    # Tiny 0/1 row-selection matrices (pool row pick + garbage-row drop + realign).
    sr1 = _row_select(t, 15, 30, t * 30 - 1)
    sr2 = _row_select(t, 6, 15, t * 15 - 3)
    sro = _row_select(t, 1, 6, t * 6 - 5)

    bf16, f32 = jnp.bfloat16, jnp.float32
    return {
        "w1m": jnp.asarray(w1m, bf16), "bb1": jnp.asarray(bb1, f32),
        "sr1": jnp.asarray(sr1, bf16),
        "wb2": jnp.asarray(wb2, bf16), "bb2": jnp.asarray(bb2, f32),
        "sr2": jnp.asarray(sr2, bf16),
        "wb3": jnp.asarray(wb3, bf16), "bb3": jnp.asarray(bb3, f32),
        "fc1w": jnp.asarray(fc1, bf16), "fc1b": jnp.asarray(fc1b, f32),
        "sro": jnp.asarray(sro, bf16),
        "fc2w": jnp.asarray(fc2w, bf16), "fc2b": jnp.asarray(fc2b, f32),
    }


# ----------------------------------------------------------------------------
# Forward pass (mirrors CNNModel.forward)
# ----------------------------------------------------------------------------
def cnn_forward(x_nchw, prep):
    """x_nchw: (B, 1, 32, 32) f32 -> logits (B, 10) f32."""
    b = x_nchw.shape[0]
    assert x_nchw.shape[1:] == (1, 32, 32), x_nchw.shape
    t = B_TILE
    n_tiles = -(-b // t)
    bp = n_tiles * t

    x = x_nchw[:, 0, :, :].astype(jnp.float32)                            # (B, 32, 32)
    if bp != b:
        x = jnp.pad(x, ((0, bp - b), (0, 0), (0, 0)))

    # conv1 row-im2col (layout plumbing only, 1 input channel):
    # X3[b*30 + h, ki*32 + j] = x[b, h+ki, j]  -> conv1 is one K=96 matmul.
    x3 = jnp.concatenate([x[:, 0:30, :], x[:, 1:31, :], x[:, 2:32, :]], axis=-1)
    x3 = x3.reshape(bp * 30, 96)

    weights = (prep["w1m"], prep["bb1"], prep["sr1"],
               prep["wb2"], prep["bb2"], prep["sr2"],
               prep["wb3"], prep["bb3"],
               prep["fc1w"], prep["fc1b"], prep["sro"],
               prep["fc2w"], prep["fc2b"])

    def resident(arr):    # whole array, constant index -> DMA'd once, VMEM-resident
        nd = arr.ndim
        return pl.BlockSpec(arr.shape, lambda i, _nd=nd: (0,) * _nd)

    out = pl.pallas_call(
        _cnn_fused_kernel,
        out_shape=jax.ShapeDtypeStruct((bp, 128), jnp.float32),
        grid=(n_tiles,),
        in_specs=[pl.BlockSpec((t * 30, 96), lambda i: (i, 0))]
        + [resident(w) for w in weights],
        out_specs=pl.BlockSpec((t, 128), lambda i: (i, 0)),
        compiler_params=pltpu.CompilerParams(
            dimension_semantics=("parallel",),        # batch tiles across TCs (v7x)
            vmem_limit_bytes=32 * 1024 * 1024,        # safe on v5e/v6e/v7x; usage ~10 MB
        ),
    )(x3, *weights)
    return out[:b, :10]


# ----------------------------------------------------------------------------
# Pure-JAX reference (f32) for a tolerance check against the bf16 kernel
# ----------------------------------------------------------------------------
def cnn_reference(x_nchw, params):
    x = x_nchw.astype(jnp.float32)

    def conv(x, w, bias):
        y = jax.lax.conv_general_dilated(
            x, w.astype(jnp.float32), window_strides=(1, 1), padding="VALID",
            dimension_numbers=("NCHW", "OIHW", "NCHW"))
        return y + bias.astype(jnp.float32)[None, :, None, None]

    def pool(x):
        return jax.lax.reduce_window(x, -jnp.inf, jax.lax.max,
                                     (1, 1, 2, 2), (1, 1, 2, 2), "VALID")

    x = pool(jnp.maximum(conv(x, params["w1"], params["b1"]), 0.0))
    x = pool(jnp.maximum(conv(x, params["w2"], params["b2"]), 0.0))
    x = jnp.maximum(conv(x, params["w3"], params["b3"]), 0.0)
    x = x.reshape(x.shape[0], -1)                                   # NCHW flatten
    x = jnp.maximum(x @ params["fc1_w"].T + params["fc1_b"], 0.0)
    return x @ params["fc2_w"].T + params["fc2_b"]


# ----------------------------------------------------------------------------
# Synthetic params (PyTorch layouts) + smoke test
# ----------------------------------------------------------------------------
def init_params(key):
    ks = jax.random.split(key, 10)
    s = 0.1  # deterministic synthetic init (not a checkpoint load)
    return {
        "w1": s * jax.random.normal(ks[0], (32, 1, 3, 3), jnp.float32),
        "b1": s * jax.random.normal(ks[1], (32,), jnp.float32),
        "w2": s * jax.random.normal(ks[2], (64, 32, 3, 3), jnp.float32),
        "b2": s * jax.random.normal(ks[3], (64,), jnp.float32),
        "w3": s * jax.random.normal(ks[4], (64, 64, 3, 3), jnp.float32),
        "b3": s * jax.random.normal(ks[5], (64,), jnp.float32),
        "fc1_w": s * jax.random.normal(ks[6], (64, 64 * 4 * 4), jnp.float32),
        "fc1_b": s * jax.random.normal(ks[7], (64,), jnp.float32),
        "fc2_w": s * jax.random.normal(ks[8], (10, 64), jnp.float32),
        "fc2_b": s * jax.random.normal(ks[9], (10,), jnp.float32),
    }


if __name__ == "__main__":
    key = jax.random.PRNGKey(0)
    k_x, k_p = jax.random.split(key)
    # 32x32 single-channel input is the only spatial size consistent with
    # fc1 = Linear(64*4*4, 64): 32 ->conv 30 ->pool 15 ->conv 13 ->pool 6 ->conv 4.
    # batch=16 with B_TILE=8 -> grid of 2 parallel steps (even, for v7x megacore).
    x = jax.random.normal(k_x, (16, 1, 32, 32), jnp.float32)
    params = init_params(k_p)

    prep = prepare_params(params)            # one-time weight re-layout (host side)
    fwd = jax.jit(cnn_forward)

    out = jax.block_until_ready(fwd(x, prep))
    assert out.shape == (16, 10), out.shape
    assert out.dtype == jnp.float32

    ref = cnn_reference(x, params)
    max_err = float(jnp.max(jnp.abs(out - ref)))
    assert max_err < 0.2, f"kernel vs f32 reference max |err| = {max_err}"
    print("KERNEL_OK")
</pallas_src>

<mosaic_0001>
module attributes {stable_mosaic.version = 11 : i64} {
  func.func @_cnn_fused_kernel(%arg0: i32, %arg1: memref<240x96xf32, #tpu.memory_space<vmem>>, %arg2: memref<96x992xbf16, #tpu.memory_space<vmem>>, %arg3: memref<1x992xf32, #tpu.memory_space<vmem>>, %arg4: memref<120x239xbf16, #tpu.memory_space<vmem>>, %arg5: memref<3x480x768xbf16, #tpu.memory_space<vmem>>, %arg6: memref<1x768xf32, #tpu.memory_space<vmem>>, %arg7: memref<48x117xbf16, #tpu.memory_space<vmem>>, %arg8: memref<3x384x256xbf16, #tpu.memory_space<vmem>>, %arg9: memref<1x256xf32, #tpu.memory_space<vmem>>, %arg10: memref<1024x64xbf16, #tpu.memory_space<vmem>>, %arg11: memref<1x64xf32, #tpu.memory_space<vmem>>, %arg12: memref<8x43xbf16, #tpu.memory_space<vmem>>, %arg13: memref<64x128xbf16, #tpu.memory_space<vmem>>, %arg14: memref<1x128xf32, #tpu.memory_space<vmem>>, %arg15: memref<8x128xf32, #tpu.memory_space<vmem>>) attributes {dimension_semantics = [#tpu.dimension_semantics<parallel>], iteration_bounds = array<i64: 2>, scalar_prefetch = 0 : i64, scratch_operands = 0 : i64, tpu.core_type = #tpu.core_type<tc>, window_params = [{transform_indices = @transform_0, window_bounds = array<i64: 240, 96>}, {pipeline_mode = #tpu.pipeline_mode<synchronous>, transform_indices = @transform_1, window_bounds = array<i64: 96, 992>}, {pipeline_mode = #tpu.pipeline_mode<synchronous>, transform_indices = @transform_2, window_bounds = array<i64: 1, 992>}, {pipeline_mode = #tpu.pipeline_mode<synchronous>, transform_indices = @transform_3, window_bounds = array<i64: 120, 239>}, {pipeline_mode = #tpu.pipeline_mode<synchronous>, transform_indices = @transform_4, window_bounds = array<i64: 3, 480, 768>}, {pipeline_mode = #tpu.pipeline_mode<synchronous>, transform_indices = @transform_5, window_bounds = array<i64: 1, 768>}, {pipeline_mode = #tpu.pipeline_mode<synchronous>, transform_indices = @transform_6, window_bounds = array<i64: 48, 117>}, {pipeline_mode = #tpu.pipeline_mode<synchronous>, transform_indices = @transform_7, window_bounds = array<i64: 3, 384, 256>}, {pipeline_mode = #tpu.pipeline_mode<synchronous>, transform_indices = @transform_8, window_bounds = array<i64: 1, 256>}, {pipeline_mode = #tpu.pipeline_mode<synchronous>, transform_indices = @transform_9, window_bounds = array<i64: 1024, 64>}, {pipeline_mode = #tpu.pipeline_mode<synchronous>, transform_indices = @transform_10, window_bounds = array<i64: 1, 64>}, {pipeline_mode = #tpu.pipeline_mode<synchronous>, transform_indices = @transform_11, window_bounds = array<i64: 8, 43>}, {pipeline_mode = #tpu.pipeline_mode<synchronous>, transform_indices = @transform_12, window_bounds = array<i64: 64, 128>}, {pipeline_mode = #tpu.pipeline_mode<synchronous>, transform_indices = @transform_13, window_bounds = array<i64: 1, 128>}, {transform_indices = @transform_14, window_bounds = array<i64: 8, 128>}]} {
    %c0 = arith.constant 0 : index
    %c0_0 = arith.constant 0 : index
    %0 = vector.load %arg1[%c0, %c0_0] : memref<240x96xf32, #tpu.memory_space<vmem>>, vector<240x96xf32>
    %1 = arith.truncf %0 : vector<240x96xf32> to vector<240x96xbf16>
    %c0_1 = arith.constant 0 : index
    %c0_2 = arith.constant 0 : index
    %2 = vector.load %arg2[%c0_1, %c0_2] : memref<96x992xbf16, #tpu.memory_space<vmem>>, vector<96x992xbf16>
    %cst = arith.constant dense<0.000000e+00> : vector<240x992xf32>
    %3 = tpu.matmul %1, %2, %cst {dimension_numbers = #tpu.dot_dimension_numbers<[1], [0], [0], [1], [0, 0, 1, 1], [], []>} : vector<240x96xbf16>, vector<96x992xbf16>, vector<240x992xf32> -> vector<240x992xf32>
    %c0_3 = arith.constant 0 : index
    %c0_4 = arith.constant 0 : index
    %4 = vector.load %arg3[%c0_3, %c0_4] : memref<1x992xf32, #tpu.memory_space<vmem>>, vector<1x992xf32>
    %5 = vector.broadcast %4 : vector<1x992xf32> to vector<240x992xf32>
    %6 = arith.addf %3, %5 : vector<240x992xf32>
    %cst_5 = arith.constant 0.000000e+00 : f32
    %7 = vector.broadcast %cst_5 : f32 to vector<240x992xf32>
    %8 = arith.maximumf %6, %7 : vector<240x992xf32>
    %9 = arith.truncf %8 : vector<240x992xf32> to vector<240x992xbf16>
    %10 = vector.extract_strided_slice %9 {offsets = [0, 0], sizes = [240, 480], strides = [1, 1]} : vector<240x992xbf16> to vector<240x480xbf16>
    %11 = vector.extract_strided_slice %9 {offsets = [0, 512], sizes = [240, 480], strides = [1, 1]} : vector<240x992xbf16> to vector<240x480xbf16>
    %12 = arith.maximumf %10, %11 : vector<240x480xbf16>
    %13 = vector.extract_strided_slice %12 {offsets = [0, 0], sizes = [239, 480], strides = [1, 1]} : vector<240x480xbf16> to vector<239x480xbf16>
    %14 = vector.extract_strided_slice %12 {offsets = [1, 0], sizes = [239, 480], strides = [1, 1]} : vector<240x480xbf16> to vector<239x480xbf16>
    %15 = arith.maximumf %13, %14 : vector<239x480xbf16>
    %c0_6 = arith.constant 0 : index
    %c0_7 = arith.constant 0 : index
    %16 = vector.load %arg4[%c0_6, %c0_7] : memref<120x239xbf16, #tpu.memory_space<vmem>>, vector<120x239xbf16>
    %cst_8 = arith.constant dense<0.000000e+00> : vector<120x480xf32>
    %17 = tpu.matmul %16, %15, %cst_8 {dimension_numbers = #tpu.dot_dimension_numbers<[1], [0], [0], [1], [0, 0, 1, 1], [], []>} : vector<120x239xbf16>, vector<239x480xbf16>, vector<120x480xf32> -> vector<120x480xf32>
    %18 = arith.truncf %17 : vector<120x480xf32> to vector<120x480xbf16>
    %c0_9 = arith.constant 0 : index
    %c0_10 = arith.constant 0 : index
    %19 = vector.load %arg6[%c0_9, %c0_10] : memref<1x768xf32, #tpu.memory_space<vmem>>, vector<1x768xf32>
    %20 = vector.extract_strided_slice %18 {offsets = [0, 0], sizes = [118, 480], strides = [1, 1]} : vector<120x480xbf16> to vector<118x480xbf16>
    %c0_11 = arith.constant 0 : index
    %c0_12 = arith.constant 0 : index
    %c0_13 = arith.constant 0 : index
    %21 = vector.load %arg5[%c0_11, %c0_12, %c0_13] : memref<3x480x768xbf16, #tpu.memory_space<vmem>>, vector<1x480x768xbf16>
    %22 = vector.shape_cast %21 : vector<1x480x768xbf16> to vector<480x768xbf16>
    %cst_14 = arith.constant dense<0.000000e+00> : vector<118x768xf32>
    %23 = tpu.matmul %20, %22, %cst_14 {dimension_numbers = #tpu.dot_dimension_numbers<[1], [0], [0], [1], [0, 0, 1, 1], [], []>} : vector<118x480xbf16>, vector<480x768xbf16>, vector<118x768xf32> -> vector<118x768xf32>
    %24 = vector.broadcast %19 : vector<1x768xf32> to vector<118x768xf32>
    %25 = arith.addf %24, %23 : vector<118x768xf32>
    %26 = vector.extract_strided_slice %18 {offsets = [1, 0], sizes = [118, 480], strides = [1, 1]} : vector<120x480xbf16> to vector<118x480xbf16>
    %c1 = arith.constant 1 : index
    %c0_15 = arith.constant 0 : index
    %c0_16 = arith.constant 0 : index
    %27 = vector.load %arg5[%c1, %c0_15, %c0_16] : memref<3x480x768xbf16, #tpu.memory_space<vmem>>, vector<1x480x768xbf16>
    %28 = vector.shape_cast %27 : vector<1x480x768xbf16> to vector<480x768xbf16>
    %cst_17 = arith.constant dense<0.000000e+00> : vector<118x768xf32>
    %29 = tpu.matmul %26, %28, %cst_17 {dimension_numbers = #tpu.dot_dimension_numbers<[1], [0], [0], [1], [0, 0, 1, 1], [], []>} : vector<118x480xbf16>, vector<480x768xbf16>, vector<118x768xf32> -> vector<118x768xf32>
    %30 = arith.addf %25, %29 : vector<118x768xf32>
    %31 = vector.extract_strided_slice %18 {offsets = [2, 0], sizes = [118, 480], strides = [1, 1]} : vector<120x480xbf16> to vector<118x480xbf16>
    %c2 = arith.constant 2 : index
    %c0_18 = arith.constant 0 : index
    %c0_19 = arith.constant 0 : index
    %32 = vector.load %arg5[%c2, %c0_18, %c0_19] : memref<3x480x768xbf16, #tpu.memory_space<vmem>>, vector<1x480x768xbf16>
    %33 = vector.shape_cast %32 : vector<1x480x768xbf16> to vector<480x768xbf16>
    %cst_20 = arith.constant dense<0.000000e+00> : vector<118x768xf32>
    %34 = tpu.matmul %31, %33, %cst_20 {dimension_numbers = #tpu.dot_dimension_numbers<[1], [0], [0], [1], [0, 0, 1, 1], [], []>} : vector<118x480xbf16>, vector<480x768xbf16>, vector<118x768xf32> -> vector<118x768xf32>
    %35 = arith.addf %30, %34 : vector<118x768xf32>
    %cst_21 = arith.constant 0.000000e+00 : f32
    %36 = vector.broadcast %cst_21 : f32 to vector<118x768xf32>
    %37 = arith.maximumf %35, %36 : vector<118x768xf32>
    %38 = arith.truncf %37 : vector<118x768xf32> to vector<118x768xbf16>
    %39 = vector.extract_strided_slice %38 {offsets = [0, 0], sizes = [118, 384], strides = [1, 1]} : vector<118x768xbf16> to vector<118x384xbf16>
    %40 = vector.extract_strided_slice %38 {offsets = [0, 384], sizes = [118, 384], strides = [1, 1]} : vector<118x768xbf16> to vector<118x384xbf16>
    %41 = arith.maximumf %39, %40 : vector<118x384xbf16>
    %42 = vector.extract_strided_slice %41 {offsets = [0, 0], sizes = [117, 384], strides = [1, 1]} : vector<118x384xbf16> to vector<117x384xbf16>
    %43 = vector.extract_strided_slice %41 {offsets = [1, 0], sizes = [117, 384], strides = [1, 1]} : vector<118x384xbf16> to vector<117x384xbf16>
    %44 = arith.maximumf %42, %43 : vector<117x384xbf16>
    %c0_22 = arith.constant 0 : index
    %c0_23 = arith.constant 0 : index
    %45 = vector.load %arg7[%c0_22, %c0_23] : memref<48x117xbf16, #tpu.memory_space<vmem>>, vector<48x117xbf16>
    %cst_24 = arith.constant dense<0.000000e+00> : vector<48x384xf32>
    %46 = tpu.matmul %45, %44, %cst_24 {dimension_numbers = #tpu.dot_dimension_numbers<[1], [0], [0], [1], [0, 0, 1, 1], [], []>} : vector<48x117xbf16>, vector<117x384xbf16>, vector<48x384xf32> -> vector<48x384xf32>
    %47 = arith.truncf %46 : vector<48x384xf32> to vector<48x384xbf16>
    %c0_25 = arith.constant 0 : index
    %c0_26 = arith.constant 0 : index
    %48 = vector.load %arg9[%c0_25, %c0_26] : memref<1x256xf32, #tpu.memory_space<vmem>>, vector<1x256xf32>
    %49 = vector.extract_strided_slice %47 {offsets = [0, 0], sizes = [46, 384], strides = [1, 1]} : vector<48x384xbf16> to vector<46x384xbf16>
    %c0_27 = arith.constant 0 : index
    %c0_28 = arith.constant 0 : index
    %c0_29 = arith.constant 0 : index
    %50 = vector.load %arg8[%c0_27, %c0_28, %c0_29] : memref<3x384x256xbf16, #tpu.memory_space<vmem>>, vector<1x384x256xbf16>
    %51 = vector.shape_cast %50 : vector<1x384x256xbf16> to vector<384x256xbf16>
    %cst_30 = arith.constant dense<0.000000e+00> : vector<46x256xf32>
    %52 = tpu.matmul %49, %51, %cst_30 {dimension_numbers = #tpu.dot_dimension_numbers<[1], [0], [0], [1], [0, 0, 1, 1], [], []>} : vector<46x384xbf16>, vector<384x256xbf16>, vector<46x256xf32> -> vector<46x256xf32>
    %53 = vector.broadcast %48 : vector<1x256xf32> to vector<46x256xf32>
    %54 = arith.addf %53, %52 : vector<46x256xf32>
    %55 = vector.extract_strided_slice %47 {offsets = [1, 0], sizes = [46, 384], strides = [1, 1]} : vector<48x384xbf16> to vector<46x384xbf16>
    %c1_31 = arith.constant 1 : index
    %c0_32 = arith.constant 0 : index
    %c0_33 = arith.constant 0 : index
    %56 = vector.load %arg8[%c1_31, %c0_32, %c0_33] : memref<3x384x256xbf16, #tpu.memory_space<vmem>>, vector<1x384x256xbf16>
    %57 = vector.shape_cast %56 : vector<1x384x256xbf16> to vector<384x256xbf16>
    %cst_34 = arith.constant dense<0.000000e+00> : vector<46x256xf32>
    %58 = tpu.matmul %55, %57, %cst_34 {dimension_numbers = #tpu.dot_dimension_numbers<[1], [0], [0], [1], [0, 0, 1, 1], [], []>} : vector<46x384xbf16>, vector<384x256xbf16>, vector<46x256xf32> -> vector<46x256xf32>
    %59 = arith.addf %54, %58 : vector<46x256xf32>
    %60 = vector.extract_strided_slice %47 {offsets = [2, 0], sizes = [46, 384], strides = [1, 1]} : vector<48x384xbf16> to vector<46x384xbf16>
    %c2_35 = arith.constant 2 : index
    %c0_36 = arith.constant 0 : index
    %c0_37 = arith.constant 0 : index
    %61 = vector.load %arg8[%c2_35, %c0_36, %c0_37] : memref<3x384x256xbf16, #tpu.memory_space<vmem>>, vector<1x384x256xbf16>
    %62 = vector.shape_cast %61 : vector<1x384x256xbf16> to vector<384x256xbf16>
    %cst_38 = arith.constant dense<0.000000e+00> : vector<46x256xf32>
    %63 = tpu.matmul %60, %62, %cst_38 {dimension_numbers = #tpu.dot_dimension_numbers<[1], [0], [0], [1], [0, 0, 1, 1], [], []>} : vector<46x384xbf16>, vector<384x256xbf16>, vector<46x256xf32> -> vector<46x256xf32>
    %64 = arith.addf %59, %63 : vector<46x256xf32>
    %cst_39 = arith.constant 0.000000e+00 : f32
    %65 = vector.broadcast %cst_39 : f32 to vector<46x256xf32>
    %66 = arith.maximumf %64, %65 : vector<46x256xf32>
    %67 = arith.truncf %66 : vector<46x256xf32> to vector<46x256xbf16>
    %c0_40 = arith.constant 0 : index
    %c0_41 = arith.constant 0 : index
    %68 = vector.load %arg11[%c0_40, %c0_41] : memref<1x64xf32, #tpu.memory_space<vmem>>, vector<1x64xf32>
    %69 = vector.extract_strided_slice %67 {offsets = [0, 0], sizes = [43, 256], strides = [1, 1]} : vector<46x256xbf16> to vector<43x256xbf16>
    %c0_42 = arith.constant 0 : index
    %c0_43 = arith.constant 0 : index
    %70 = vector.load %arg10[%c0_42, %c0_43] : memref<1024x64xbf16, #tpu.memory_space<vmem>>, vector<256x64xbf16>
    %cst_44 = arith.constant dense<0.000000e+00> : vector<43x64xf32>
    %71 = tpu.matmul %69, %70, %cst_44 {dimension_numbers = #tpu.dot_dimension_numbers<[1], [0], [0], [1], [0, 0, 1, 1], [], []>} : vector<43x256xbf16>, vector<256x64xbf16>, vector<43x64xf32> -> vector<43x64xf32>
    %72 = vector.broadcast %68 : vector<1x64xf32> to vector<43x64xf32>
    %73 = arith.addf %72, %71 : vector<43x64xf32>
    %74 = vector.extract_strided_slice %67 {offsets = [1, 0], sizes = [43, 256], strides = [1, 1]} : vector<46x256xbf16> to vector<43x256xbf16>
    %c256 = arith.constant 256 : index
    %c0_45 = arith.constant 0 : index
    %75 = vector.load %arg10[%c256, %c0_45] : memref<1024x64xbf16, #tpu.memory_space<vmem>>, vector<256x64xbf16>
    %cst_46 = arith.constant dense<0.000000e+00> : vector<43x64xf32>
    %76 = tpu.matmul %74, %75, %cst_46 {dimension_numbers = #tpu.dot_dimension_numbers<[1], [0], [0], [1], [0, 0, 1, 1], [], []>} : vector<43x256xbf16>, vector<256x64xbf16>, vector<43x64xf32> -> vector<43x64xf32>
    %77 = arith.addf %73, %76 : vector<43x64xf32>
    %78 = vector.extract_strided_slice %67 {offsets = [2, 0], sizes = [43, 256], strides = [1, 1]} : vector<46x256xbf16> to vector<43x256xbf16>
    %c512 = arith.constant 512 : index
    %c0_47 = arith.constant 0 : index
    %79 = vector.load %arg10[%c512, %c0_47] : memref<1024x64xbf16, #tpu.memory_space<vmem>>, vector<256x64xbf16>
    %cst_48 = arith.constant dense<0.000000e+00> : vector<43x64xf32>
    %80 = tpu.matmul %78, %79, %cst_48 {dimension_numbers = #tpu.dot_dimension_numbers<[1], [0], [0], [1], [0, 0, 1, 1], [], []>} : vector<43x256xbf16>, vector<256x64xbf16>, vector<43x64xf32> -> vector<43x64xf32>
    %81 = arith.addf %77, %80 : vector<43x64xf32>
    %82 = vector.extract_strided_slice %67 {offsets = [3, 0], sizes = [43, 256], strides = [1, 1]} : vector<46x256xbf16> to vector<43x256xbf16>
    %c768 = arith.constant 768 : index
    %c0_49 = arith.constant 0 : index
    %83 = vector.load %arg10[%c768, %c0_49] : memref<1024x64xbf16, #tpu.memory_space<vmem>>, vector<256x64xbf16>
    %cst_50 = arith.constant dense<0.000000e+00> : vector<43x64xf32>
    %84 = tpu.matmul %82, %83, %cst_50 {dimension_numbers = #tpu.dot_dimension_numbers<[1], [0], [0], [1], [0, 0, 1, 1], [], []>} : vector<43x256xbf16>, vector<256x64xbf16>, vector<43x64xf32> -> vector<43x64xf32>
    %85 = arith.addf %81, %84 : vector<43x64xf32>
    %cst_51 = arith.constant 0.000000e+00 : f32
    %86 = vector.broadcast %cst_51 : f32 to vector<43x64xf32>
    %87 = arith.maximumf %85, %86 : vector<43x64xf32>
    %88 = arith.truncf %87 : vector<43x64xf32> to vector<43x64xbf16>
    %c0_52 = arith.constant 0 : index
    %c0_53 = arith.constant 0 : index
    %89 = vector.load %arg12[%c0_52, %c0_53] : memref<8x43xbf16, #tpu.memory_space<vmem>>, vector<8x43xbf16>
    %cst_54 = arith.constant dense<0.000000e+00> : vector<8x64xf32>
    %90 = tpu.matmul %89, %88, %cst_54 {dimension_numbers = #tpu.dot_dimension_numbers<[1], [0], [0], [1], [0, 0, 1, 1], [], []>} : vector<8x43xbf16>, vector<43x64xbf16>, vector<8x64xf32> -> vector<8x64xf32>
    %91 = arith.truncf %90 : vector<8x64xf32> to vector<8x64xbf16>
    %c0_55 = arith.constant 0 : index
    %c0_56 = arith.constant 0 : index
    %92 = vector.load %arg13[%c0_55, %c0_56] : memref<64x128xbf16, #tpu.memory_space<vmem>>, vector<64x128xbf16>
    %cst_57 = arith.constant dense<0.000000e+00> : vector<8x128xf32>
    %93 = tpu.matmul %91, %92, %cst_57 {dimension_numbers = #tpu.dot_dimension_numbers<[1], [0], [0], [1], [0, 0, 1, 1], [], []>} : vector<8x64xbf16>, vector<64x128xbf16>, vector<8x128xf32> -> vector<8x128xf32>
    %c0_58 = arith.constant 0 : index
    %c0_59 = arith.constant 0 : index
    %94 = vector.load %arg14[%c0_58, %c0_59] : memref<1x128xf32, #tpu.memory_space<vmem>>, vector<1x128xf32>
    %95 = vector.broadcast %94 : vector<1x128xf32> to vector<8x128xf32>
    %96 = arith.addf %93, %95 : vector<8x128xf32>
    %c0_60 = arith.constant 0 : index
    %c0_61 = arith.constant 0 : index
    %97 = vector.load %arg15[%c0_60, %c0_61] : memref<8x128xf32, #tpu.memory_space<vmem>>, vector<8x128xf32>
    tpu.vector_store %arg15[%c0_60, %c0_61], %96 {strides = array<i32>} : memref<8x128xf32, #tpu.memory_space<vmem>>, vector<8x128xf32>,
    return
  }
  func.func @transform_0(%arg0: i32) -> (i32, i32) {
    %c0_i32 = arith.constant 0 : i32
    %c0_i32_0 = arith.constant 0 : i32
    return %arg0, %c0_i32 : i32, i32
  }
  func.func @transform_1(%arg0: i32) -> (i32, i32) {
    %c0_i32 = arith.constant 0 : i32
    %c0_i32_0 = arith.constant 0 : i32
    %c0_i32_1 = arith.constant 0 : i32
    return %c0_i32, %c0_i32_0 : i32, i32
  }
  func.func @transform_2(%arg0: i32) -> (i32, i32) {
    %c0_i32 = arith.constant 0 : i32
    %c0_i32_0 = arith.constant 0 : i32
    %c0_i32_1 = arith.constant 0 : i32
    return %c0_i32, %c0_i32_0 : i32, i32
  }
  func.func @transform_3(%arg0: i32) -> (i32, i32) {
    %c0_i32 = arith.constant 0 : i32
    %c0_i32_0 = arith.constant 0 : i32
    %c0_i32_1 = arith.constant 0 : i32
    return %c0_i32, %c0_i32_0 : i32, i32
  }
  func.func @transform_4(%arg0: i32) -> (i32, i32, i32) {
    %c0_i32 = arith.constant 0 : i32
    %c0_i32_0 = arith.constant 0 : i32
    %c0_i32_1 = arith.constant 0 : i32
    %c0_i32_2 = arith.constant 0 : i32
    return %c0_i32, %c0_i32_0, %c0_i32_1 : i32, i32, i32
  }
  func.func @transform_5(%arg0: i32) -> (i32, i32) {
    %c0_i32 = arith.constant 0 : i32
    %c0_i32_0 = arith.constant 0 : i32
    %c0_i32_1 = arith.constant 0 : i32
    return %c0_i32, %c0_i32_0 : i32, i32
  }
  func.func @transform_6(%arg0: i32) -> (i32, i32) {
    %c0_i32 = arith.constant 0 : i32
    %c0_i32_0 = arith.constant 0 : i32
    %c0_i32_1 = arith.constant 0 : i32
    return %c0_i32, %c0_i32_0 : i32, i32
  }
  func.func @transform_7(%arg0: i32) -> (i32, i32, i32) {
    %c0_i32 = arith.constant 0 : i32
    %c0_i32_0 = arith.constant 0 : i32
    %c0_i32_1 = arith.constant 0 : i32
    %c0_i32_2 = arith.constant 0 : i32
    return %c0_i32, %c0_i32_0, %c0_i32_1 : i32, i32, i32
  }
  func.func @transform_8(%arg0: i32) -> (i32, i32) {
    %c0_i32 = arith.constant 0 : i32
    %c0_i32_0 = arith.constant 0 : i32
    %c0_i32_1 = arith.constant 0 : i32
    return %c0_i32, %c0_i32_0 : i32, i32
  }
  func.func @transform_9(%arg0: i32) -> (i32, i32) {
    %c0_i32 = arith.constant 0 : i32
    %c0_i32_0 = arith.constant 0 : i32
    %c0_i32_1 = arith.constant 0 : i32
    return %c0_i32, %c0_i32_0 : i32, i32
  }
  func.func @transform_10(%arg0: i32) -> (i32, i32) {
    %c0_i32 = arith.constant 0 : i32
    %c0_i32_0 = arith.constant 0 : i32
    %c0_i32_1 = arith.constant 0 : i32
    return %c0_i32, %c0_i32_0 : i32, i32
  }
  func.func @transform_11(%arg0: i32) -> (i32, i32) {
    %c0_i32 = arith.constant 0 : i32
    %c0_i32_0 = arith.constant 0 : i32
    %c0_i32_1 = arith.constant 0 : i32
    return %c0_i32, %c0_i32_0 : i32, i32
  }
  func.func @transform_12(%arg0: i32) -> (i32, i32) {
    %c0_i32 = arith.constant 0 : i32
    %c0_i32_0 = arith.constant 0 : i32
    %c0_i32_1 = arith.constant 0 : i32
    return %c0_i32, %c0_i32_0 : i32, i32
  }
  func.func @transform_13(%arg0: i32) -> (i32, i32) {
    %c0_i32 = arith.constant 0 : i32
    %c0_i32_0 = arith.constant 0 : i32
    %c0_i32_1 = arith.constant 0 : i32
    return %c0_i32, %c0_i32_0 : i32, i32
  }
  func.func @transform_14(%arg0: i32) -> (i32, i32) {
    %c0_i32 = arith.constant 0 : i32
    %c0_i32_0 = arith.constant 0 : i32
    return %arg0, %c0_i32 : i32, i32
  }
}

</mosaic_0001>

<llo_original>
// kernel: cnn_forward.1
$region0: #{cnn_forward.1}
  #allocation0 [shape = 'u32[]', space=smem, size = 0x4, offset = 0x4, fixed_abs, tag = 'smem constant byte address 0x4 - core index']
  #allocation1 [shape = 'u32[144,128]{1,0:T(1,128)}', space=vmem, size = 0x12000, scoped, tag = 'internal scratch']
  %s0 = inlined_call_operand.vmem [shape: f32[480,96], index: 0, kind: input, shape index: {}]
  %s1 = inlined_call_operand.vmem [shape: bf16[96,992], index: 1, kind: input, shape index: {}]
  %s2 = inlined_call_operand.vmem [shape: f32[1,992], index: 2, kind: input, shape index: {}]
  %s3 = inlined_call_operand.vmem [shape: bf16[120,239], index: 3, kind: input, shape index: {}]
  %s4 = inlined_call_operand.vmem [shape: bf16[3,480,768], index: 4, kind: input, shape index: {}]
  %s5 = inlined_call_operand.vmem [shape: f32[1,768], index: 5, kind: input, shape index: {}]
  %s6 = inlined_call_operand.vmem [shape: bf16[48,117], index: 6, kind: input, shape index: {}]
  %s7 = inlined_call_operand.vmem [shape: bf16[3,384,256], index: 7, kind: input, shape index: {}]
  %s8 = inlined_call_operand.vmem [shape: f32[1,256], index: 8, kind: input, shape index: {}]
  %s9 = inlined_call_operand.vmem [shape: bf16[1024,64], index: 9, kind: input, shape index: {}]
  %s10 = inlined_call_operand.vmem [shape: f32[1,64], index: 10, kind: input, shape index: {}]
  %s11 = inlined_call_operand.vmem [shape: bf16[8,43], index: 11, kind: input, shape index: {}]
  %s12 = inlined_call_operand.vmem [shape: bf16[64,128], index: 12, kind: input, shape index: {}]
  %s13 = inlined_call_operand.vmem [shape: f32[1,128], index: 13, kind: input, shape index: {}]
  %s14 = inlined_call_operand.hbm [shape: f32[16,128], index: 14, kind: output, shape index: {}]
  %s15 = sld [smem:[#allocation0]]
  $region89: #{cnn_forward.1} parent=0
    _
  %s17 = ssub.s32 1, %s15
  %s18 = scalar_select 0, %s17, %s15
  $region1: #{cnn_forward.1} parent=0
    #allocation2 [shape = 'u8[8192]{0}', space=vmem, size = 0x2000, scoped, tag = 'output window, operand 0']
    #allocation3 [shape = 's32[2]{0}', space=sflag, size = 0x8, scoped, tag = 'scoped memory for cnn_forward.1']
    %19 = vsyncpa [#allocation3], 0
    %s20 = scalar_lea.sflag [#allocation3], 1
    %21 = vsyncpa %s20, 0
    loop: start=0, step=1, limit=4
    $region2: #{cnn_forward.1} parent=1 // loop_pre_header
      _
    $region3: #{cnn_forward.1} parent=1 // loop_header
      %s23 = sphi 0, %s27
      %p24 = scmp.ge.s32.totalorder %s23, 4
      %s33 = sphi 0, %s35
      %s36 = sphi 0, %s33
      %s37 = sphi 0, %s36
      %s53 = sphi 0, %s37
      %s57 = sphi 0, %s57
      %s59 = sphi 0, %s57
      %s60 = sphi 0, %s59
      %s74 = sphi 0, %s60
      %s78 = sphi 0, %s78
      %s80 = sphi 0, %s78
      %s81 = sphi 0, %s80
      %s95 = sphi 0, %s81
      %s99 = sphi 0, %s99
      %s101 = sphi 0, %s99
      %s102 = sphi 0, %s101
      %s116 = sphi 0, %s102
      %s120 = sphi 0, %s120
      %s122 = sphi 0, %s120
      %s123 = sphi 0, %s122
      %s137 = sphi 0, %s123
      %s141 = sphi 0, %s141
      %s143 = sphi 0, %s141
      %s144 = sphi 0, %s143
      %s158 = sphi 0, %s144
      %s162 = sphi 0, %s162
      %s164 = sphi 0, %s162
      %s165 = sphi 0, %s164
      %s179 = sphi 0, %s165
      %s183 = sphi 0, %s183
      %s185 = sphi 0, %s183
      %s186 = sphi 0, %s185
      %s200 = sphi 0, %s186
      %s204 = sphi 0, %s204
      %s206 = sphi 0, %s204
      %s207 = sphi 0, %s206
      %s221 = sphi 0, %s207
      %s225 = sphi 0, %s225
      %s227 = sphi 0, %s225
      %s228 = sphi 0, %s227
      %s242 = sphi 0, %s228
      %s246 = sphi 0, %s246
      %s248 = sphi 0, %s246
      %s249 = sphi 0, %s248
      %s263 = sphi 0, %s249
      %s267 = sphi 0, %s267
      %s269 = sphi 0, %s267
      %s270 = sphi 0, %s269
      %s284 = sphi 0, %s270
      %s288 = sphi 0, %s288
      %s290 = sphi 0, %s288
      %s291 = sphi 0, %s290
      %s305 = sphi 0, %s291
      %s309 = sphi 0, %s309
      %s311 = sphi 0, %s309
      %s312 = sphi 0, %s311
      %s326 = sphi 0, %s312
      %s332 = sphi 0, %s334
      %s335 = sphi 0, %s332
      %s336 = sphi 0, %s335
      %s352 = sphi 0, %s336
    $region4: #{cnn_forward.1} parent=1 // loop_header_branch
      %26 = sbr.rel (%p24) target = $region8
    $region5: #{cnn_forward.1} parent=1 // loop_body
      %s28 = ssub.s32 %s23, 1
      %s29 = ssub.s32 %s23, 2
      %s30 = sadd.s32 %s23, 1
      %s31 = ssub.s32 %s23, %s30
      %p32 = scmp.eq.s32.totalorder %s31, 0
      %s34 = sadd.s32 %s33, 1
      %s35 = scalar_select %p32, %s33, %s34
      %p38 = pneg %p32
      %p39 = scmp.eq.s32.totalorder %s23, 1
      %p40 = por %p38, %p39
      %p41 = scmp.ne.s32.totalorder %s33, %s36
      %p42 = scmp.eq.s32.totalorder %s23, 0
      %p43 = por %p41, %p42
      %p44 = scmp.ne.s32.totalorder %s33, %s36
      %p45 = scmp.eq.s32.totalorder %s28, 1
      %p46 = por %p44, %p45
      %p47 = scmp.ne.s32.totalorder %s36, %s37
      %p48 = scmp.eq.s32.totalorder %s28, 0
      %p49 = por %p47, %p48
      %p50 = scmp.ne.s32.totalorder %s36, %s37
      %p51 = scmp.eq.s32.totalorder %s29, 1
      %p52 = por %p50, %p51
      %p54 = scmp.ne.s32.totalorder %s37, %s53
      %p55 = scmp.eq.s32.totalorder %s29, 0
      %p56 = por %p54, %p55
      %s58 = sadd.s32 %s57, 1
      %p61 = scmp.eq.s32.totalorder %s23, 1
      %p62 = scmp.ne.s32.totalorder %s57, %s59
      %p63 = scmp.eq.s32.totalorder %s23, 0
      %p64 = por %p62, %p63
      %p65 = scmp.ne.s32.totalorder %s57, %s59
      %p66 = scmp.eq.s32.totalorder %s28, 1
      %p67 = por %p65, %p66
      %p68 = scmp.ne.s32.totalorder %s59, %s60
      %p69 = scmp.eq.s32.totalorder %s28, 0
      %p70 = por %p68, %p69
      %p71 = scmp.ne.s32.totalorder %s59, %s60
      %p72 = scmp.eq.s32.totalorder %s29, 1
      %p73 = por %p71, %p72
      %p75 = scmp.ne.s32.totalorder %s60, %s74
      %p76 = scmp.eq.s32.totalorder %s29, 0
      %p77 = por %p75, %p76
      %s79 = sadd.s32 %s78, 1
      %p82 = scmp.eq.s32.totalorder %s23, 1
      %p83 = scmp.ne.s32.totalorder %s78, %s80
      %p84 = scmp.eq.s32.totalorder %s23, 0
      %p85 = por %p83, %p84
      %p86 = scmp.ne.s32.totalorder %s78, %s80
      %p87 = scmp.eq.s32.totalorder %s28, 1
      %p88 = por %p86, %p87
      %p89 = scmp.ne.s32.totalorder %s80, %s81
      %p90 = scmp.eq.s32.totalorder %s28, 0
      %p91 = por %p89, %p90
      %p92 = scmp.ne.s32.totalorder %s80, %s81
      %p93 = scmp.eq.s32.totalorder %s29, 1
      %p94 = por %p92, %p93
      %p96 = scmp.ne.s32.totalorder %s81, %s95
      %p97 = scmp.eq.s32.totalorder %s29, 0
      %p98 = por %p96, %p97
      %s100 = sadd.s32 %s99, 1
      %p103 = scmp.eq.s32.totalorder %s23, 1
      %p104 = scmp.ne.s32.totalorder %s99, %s101
      %p105 = scmp.eq.s32.totalorder %s23, 0
      %p106 = por %p104, %p105
      %p107 = scmp.ne.s32.totalorder %s99, %s101
      %p108 = scmp.eq.s32.totalorder %s28, 1
      %p109 = por %p107, %p108
      %p110 = scmp.ne.s32.totalorder %s101, %s102
      %p111 = scmp.eq.s32.totalorder %s28, 0
      %p112 = por %p110, %p111
      %p113 = scmp.ne.s32.totalorder %s101, %s102
      %p114 = scmp.eq.s32.totalorder %s29, 1
      %p115 = por %p113, %p114
      %p117 = scmp.ne.s32.totalorder %s102, %s116
      %p118 = scmp.eq.s32.totalorder %s29, 0
      %p119 = por %p117, %p118
      %s121 = sadd.s32 %s120, 1
      %p124 = scmp.eq.s32.totalorder %s23, 1
      %p125 = scmp.ne.s32.totalorder %s120, %s122
      %p126 = scmp.eq.s32.totalorder %s23, 0
      %p127 = por %p125, %p126
      %p128 = scmp.ne.s32.totalorder %s120, %s122
      %p129 = scmp.eq.s32.totalorder %s28, 1
      %p130 = por %p128, %p129
      %p131 = scmp.ne.s32.totalorder %s122, %s123
      %p132 = scmp.eq.s32.totalorder %s28, 0
      %p133 = por %p131, %p132
      %p134 = scmp.ne.s32.totalorder %s122, %s123
      %p135 = scmp.eq.s32.totalorder %s29, 1
      %p136 = por %p134, %p135
      %p138 = scmp.ne.s32.totalorder %s123, %s137
      %p139 = scmp.eq.s32.totalorder %s29, 0
      %p140 = por %p138, %p139
      %s142 = sadd.s32 %s141, 1
      %p145 = scmp.eq.s32.totalorder %s23, 1
      %p146 = scmp.ne.s32.totalorder %s141, %s143
      %p147 = scmp.eq.s32.totalorder %s23, 0
      %p148 = por %p146, %p147
      %p149 = scmp.ne.s32.totalorder %s141, %s143
      %p150 = scmp.eq.s32.totalorder %s28, 1
      %p151 = por %p149, %p150
      %p152 = scmp.ne.s32.totalorder %s143, %s144
      %p153 = scmp.eq.s32.totalorder %s28, 0
      %p154 = por %p152, %p153
      %p155 = scmp.ne.s32.totalorder %s143, %s144
      %p156 = scmp.eq.s32.totalorder %s29, 1
      %p157 = por %p155, %p156
      %p159 = scmp.ne.s32.totalorder %s144, %s158
      %p160 = scmp.eq.s32.totalorder %s29, 0
      %p161 = por %p159, %p160
      %s163 = sadd.s32 %s162, 1
      %p166 = scmp.eq.s32.totalorder %s23, 1
      %p167 = scmp.ne.s32.totalorder %s162, %s164
      %p168 = scmp.eq.s32.totalorder %s23, 0
      %p169 = por %p167, %p168
      %p170 = scmp.ne.s32.totalorder %s162, %s164
      %p171 = scmp.eq.s32.totalorder %s28, 1
      %p172 = por %p170, %p171
      %p173 = scmp.ne.s32.totalorder %s164, %s165
      %p174 = scmp.eq.s32.totalorder %s28, 0
      %p175 = por %p173, %p174
      %p176 = scmp.ne.s32.totalorder %s164, %s165
      %p177 = scmp.eq.s32.totalorder %s29, 1
      %p178 = por %p176, %p177
      %p180 = scmp.ne.s32.totalorder %s165, %s179
      %p181 = scmp.eq.s32.totalorder %s29, 0
      %p182 = por %p180, %p181
      %s184 = sadd.s32 %s183, 1
      %p187 = scmp.eq.s32.totalorder %s23, 1
      %p188 = scmp.ne.s32.totalorder %s183, %s185
      %p189 = scmp.eq.s32.totalorder %s23, 0
      %p190 = por %p188, %p189
      %p191 = scmp.ne.s32.totalorder %s183, %s185
      %p192 = scmp.eq.s32.totalorder %s28, 1
      %p193 = por %p191, %p192
      %p194 = scmp.ne.s32.totalorder %s185, %s186
      %p195 = scmp.eq.s32.totalorder %s28, 0
      %p196 = por %p194, %p195
      %p197 = scmp.ne.s32.totalorder %s185, %s186
      %p198 = scmp.eq.s32.totalorder %s29, 1
      %p199 = por %p197, %p198
      %p201 = scmp.ne.s32.totalorder %s186, %s200
      %p202 = scmp.eq.s32.totalorder %s29, 0
      %p203 = por %p201, %p202
      %s205 = sadd.s32 %s204, 1
      %p208 = scmp.eq.s32.totalorder %s23, 1
      %p209 = scmp.ne.s32.totalorder %s204, %s206
      %p210 = scmp.eq.s32.totalorder %s23, 0
      %p211 = por %p209, %p210
      %p212 = scmp.ne.s32.totalorder %s204, %s206
      %p213 = scmp.eq.s32.totalorder %s28, 1
      %p214 = por %p212, %p213
      %p215 = scmp.ne.s32.totalorder %s206, %s207
      %p216 = scmp.eq.s32.totalorder %s28, 0
      %p217 = por %p215, %p216
      %p218 = scmp.ne.s32.totalorder %s206, %s207
      %p219 = scmp.eq.s32.totalorder %s29, 1
      %p220 = por %p218, %p219
      %p222 = scmp.ne.s32.totalorder %s207, %s221
      %p223 = scmp.eq.s32.totalorder %s29, 0
      %p224 = por %p222, %p223
      %s226 = sadd.s32 %s225, 1
      %p229 = scmp.eq.s32.totalorder %s23, 1
      %p230 = scmp.ne.s32.totalorder %s225, %s227
      %p231 = scmp.eq.s32.totalorder %s23, 0
      %p232 = por %p230, %p231
      %p233 = scmp.ne.s32.totalorder %s225, %s227
      %p234 = scmp.eq.s32.totalorder %s28, 1
      %p235 = por %p233, %p234
      %p236 = scmp.ne.s32.totalorder %s227, %s228
      %p237 = scmp.eq.s32.totalorder %s28, 0
      %p238 = por %p236, %p237
      %p239 = scmp.ne.s32.totalorder %s227, %s228
      %p240 = scmp.eq.s32.totalorder %s29, 1
      %p241 = por %p239, %p240
      %p243 = scmp.ne.s32.totalorder %s228, %s242
      %p244 = scmp.eq.s32.totalorder %s29, 0
      %p245 = por %p243, %p244
      %s247 = sadd.s32 %s246, 1
      %p250 = scmp.eq.s32.totalorder %s23, 1
      %p251 = scmp.ne.s32.totalorder %s246, %s248
      %p252 = scmp.eq.s32.totalorder %s23, 0
      %p253 = por %p251, %p252
      %p254 = scmp.ne.s32.totalorder %s246, %s248
      %p255 = scmp.eq.s32.totalorder %s28, 1
      %p256 = por %p254, %p255
      %p257 = scmp.ne.s32.totalorder %s248, %s249
      %p258 = scmp.eq.s32.totalorder %s28, 0
      %p259 = por %p257, %p258
      %p260 = scmp.ne.s32.totalorder %s248, %s249
      %p261 = scmp.eq.s32.totalorder %s29, 1
      %p262 = por %p260, %p261
      %p264 = scmp.ne.s32.totalorder %s249, %s263
      %p265 = scmp.eq.s32.totalorder %s29, 0
      %p266 = por %p264, %p265
      %s268 = sadd.s32 %s267, 1
      %p271 = scmp.eq.s32.totalorder %s23, 1
      %p272 = scmp.ne.s32.totalorder %s267, %s269
      %p273 = scmp.eq.s32.totalorder %s23, 0
      %p274 = por %p272, %p273
      %p275 = scmp.ne.s32.totalorder %s267, %s269
      %p276 = scmp.eq.s32.totalorder %s28, 1
      %p277 = por %p275, %p276
      %p278 = scmp.ne.s32.totalorder %s269, %s270
      %p279 = scmp.eq.s32.totalorder %s28, 0
      %p280 = por %p278, %p279
      %p281 = scmp.ne.s32.totalorder %s269, %s270
      %p282 = scmp.eq.s32.totalorder %s29, 1
      %p283 = por %p281, %p282
      %p285 = scmp.ne.s32.totalorder %s270, %s284
      %p286 = scmp.eq.s32.totalorder %s29, 0
      %p287 = por %p285, %p286
      %s289 = sadd.s32 %s288, 1
      %p292 = scmp.eq.s32.totalorder %s23, 1
      %p293 = scmp.ne.s32.totalorder %s288, %s290
      %p294 = scmp.eq.s32.totalorder %s23, 0
      %p295 = por %p293, %p294
      %p296 = scmp.ne.s32.totalorder %s288, %s290
      %p297 = scmp.eq.s32.totalorder %s28, 1
      %p298 = por %p296, %p297
      %p299 = scmp.ne.s32.totalorder %s290, %s291
      %p300 = scmp.eq.s32.totalorder %s28, 0
      %p301 = por %p299, %p300
      %p302 = scmp.ne.s32.totalorder %s290, %s291
      %p303 = scmp.eq.s32.totalorder %s29, 1
      %p304 = por %p302, %p303
      %p306 = scmp.ne.s32.totalorder %s291, %s305
      %p307 = scmp.eq.s32.totalorder %s29, 0
      %p308 = por %p306, %p307
      %s310 = sadd.s32 %s309, 1
      %p313 = scmp.eq.s32.totalorder %s23, 1
      %p314 = scmp.ne.s32.totalorder %s309, %s311
      %p315 = scmp.eq.s32.totalorder %s23, 0
      %p316 = por %p314, %p315
      %p317 = scmp.ne.s32.totalorder %s309, %s311
      %p318 = scmp.eq.s32.totalorder %s28, 1
      %p319 = por %p317, %p318
      %p320 = scmp.ne.s32.totalorder %s311, %s312
      %p321 = scmp.eq.s32.totalorder %s28, 0
      %p322 = por %p320, %p321
      %p323 = scmp.ne.s32.totalorder %s311, %s312
      %p324 = scmp.eq.s32.totalorder %s29, 1
      %p325 = por %p323, %p324
      %p327 = scmp.ne.s32.totalorder %s312, %s326
      %p328 = scmp.eq.s32.totalorder %s29, 0
      %p329 = por %p327, %p328
      %s330 = ssub.s32 %s23, %s30
      %p331 = scmp.eq.s32.totalorder %s330, 0
      %s333 = sadd.s32 %s332, 1
      %s334 = scalar_select %p331, %s332, %s333
      %p337 = pneg %p331
      %p338 = scmp.eq.s32.totalorder %s23, 1
      %p339 = por %p337, %p338
      %p340 = scmp.ne.s32.totalorder %s332, %s335
      %p341 = scmp.eq.s32.totalorder %s23, 0
      %p342 = por %p340, %p341
      %p343 = scmp.ne.s32.totalorder %s332, %s335
      %p344 = scmp.eq.s32.totalorder %s28, 1
      %p345 = por %p343, %p344
      %p346 = scmp.ne.s32.totalorder %s335, %s336
      %p347 = scmp.eq.s32.totalorder %s28, 0
      %p348 = por %p346, %p347
      %p349 = scmp.ne.s32.totalorder %s335, %s336
      %p350 = scmp.eq.s32.totalorder %s29, 1
      %p351 = por %p349, %p350
      %p353 = scmp.ne.s32.totalorder %s336, %s352
      %p354 = scmp.eq.s32.totalorder %s29, 0
      %p355 = por %p353, %p354
      %p356 = scmp.le.s32.totalorder 1, %s23
      %p357 = scmp.lt.s32.totalorder %s23, 3
      %p358 = pnand %p356, %p357
      %p359 = pneg %p358
      // Predicated region
      $region9: #{cnn_forward.1} parent=5 // pred_check
        _
      $region10: #{cnn_forward.1} parent=5 // pred_check_branch
        %361 = sbr.rel (%p358) target = $region12
      $region11: #{cnn_forward.1} parent=5 // pred_region
        %s362 = ssub.s32 %s23, 1
        // Predicated region
        $region13: #{cnn_forward.1} parent=11 // pred_check
          %p363 = pneg %p70
        $region14: #{cnn_forward.1} parent=11 // pred_check_branch
          %365 = sbr.rel (%p363) target = $region16
        $region15: #{cnn_forward.1} parent=11 // pred_region
          _
        $region16: #{cnn_forward.1} parent=11 // pred_fallthru
          _
        // Predicated region
        $region17: #{cnn_forward.1} parent=11 // pred_check
          %p366 = pneg %p91
        $region18: #{cnn_forward.1} parent=11 // pred_check_branch
          %368 = sbr.rel (%p366) target = $region20
        $region19: #{cnn_forward.1} parent=11 // pred_region
          _
        $region20: #{cnn_forward.1} parent=11 // pred_fallthru
          _
        // Predicated region
        $region21: #{cnn_forward.1} parent=11 // pred_check
          %p369 = pneg %p112
        $region22: #{cnn_forward.1} parent=11 // pred_check_branch
          %371 = sbr.rel (%p369) target = $region24
        $region23: #{cnn_forward.1} parent=11 // pred_region
          _
        $region24: #{cnn_forward.1} parent=11 // pred_fallthru
          _
        // Predicated region
        $region25: #{cnn_forward.1} parent=11 // pred_check
          %p372 = pneg %p133
        $region26: #{cnn_forward.1} parent=11 // pred_check_branch
          %374 = sbr.rel (%p372) target = $region28
        $region27: #{cnn_forward.1} parent=11 // pred_region
          _
        $region28: #{cnn_forward.1} parent=11 // pred_fallthru
          _
        // Predicated region
        $region29: #{cnn_forward.1} parent=11 // pred_check
          %p375 = pneg %p154
        $region30: #{cnn_forward.1} parent=11 // pred_check_branch
          %377 = sbr.rel (%p375) target = $region32
        $region31: #{cnn_forward.1} parent=11 // pred_region
          _
        $region32: #{cnn_forward.1} parent=11 // pred_fallthru
          _
        // Predicated region
        $region33: #{cnn_forward.1} parent=11 // pred_check
          %p378 = pneg %p175
        $region34: #{cnn_forward.1} parent=11 // pred_check_branch
          %380 = sbr.rel (%p378) target = $region36
        $region35: #{cnn_forward.1} parent=11 // pred_region
          _
        $region36: #{cnn_forward.1} parent=11 // pred_fallthru
          _
        // Predicated region
        $region37: #{cnn_forward.1} parent=11 // pred_check
          %p381 = pneg %p196
        $region38: #{cnn_forward.1} parent=11 // pred_check_branch
          %383 = sbr.rel (%p381) target = $region40
        $region39: #{cnn_forward.1} parent=11 // pred_region
          _
        $region40: #{cnn_forward.1} parent=11 // pred_fallthru
          _
        // Predicated region
        $region41: #{cnn_forward.1} parent=11 // pred_check
          %p384 = pneg %p217
        $region42: #{cnn_forward.1} parent=11 // pred_check_branch
          %386 = sbr.rel (%p384) target = $region44
        $region43: #{cnn_forward.1} parent=11 // pred_region
          _
        $region44: #{cnn_forward.1} parent=11 // pred_fallthru
          _
        // Predicated region
        $region45: #{cnn_forward.1} parent=11 // pred_check
          %p387 = pneg %p238
        $region46: #{cnn_forward.1} parent=11 // pred_check_branch
          %389 = sbr.rel (%p387) target = $region48
        $region47: #{cnn_forward.1} parent=11 // pred_region
          _
        $region48: #{cnn_forward.1} parent=11 // pred_fallthru
          _
        // Predicated region
        $region49: #{cnn_forward.1} parent=11 // pred_check
          %p390 = pneg %p259
        $region50: #{cnn_forward.1} parent=11 // pred_check_branch
          %392 = sbr.rel (%p390) target = $region52
        $region51: #{cnn_forward.1} parent=11 // pred_region
          _
        $region52: #{cnn_forward.1} parent=11 // pred_fallthru
          _
        // Predicated region
        $region53: #{cnn_forward.1} parent=11 // pred_check
          %p393 = pneg %p280
        $region54: #{cnn_forward.1} parent=11 // pred_check_branch
          %395 = sbr.rel (%p393) target = $region56
        $region55: #{cnn_forward.1} parent=11 // pred_region
          _
        $region56: #{cnn_forward.1} parent=11 // pred_fallthru
          _
        // Predicated region
        $region57: #{cnn_forward.1} parent=11 // pred_check
          %p396 = pneg %p301
        $region58: #{cnn_forward.1} parent=11 // pred_check_branch
          %398 = sbr.rel (%p396) target = $region60
        $region59: #{cnn_forward.1} parent=11 // pred_region
          _
        $region60: #{cnn_forward.1} parent=11 // pred_fallthru
          _
        // Predicated region
        $region61: #{cnn_forward.1} parent=11 // pred_check
          %p399 = pneg %p322
        $region62: #{cnn_forward.1} parent=11 // pred_check_branch
          %401 = sbr.rel (%p399) target = $region64
        $region63: #{cnn_forward.1} parent=11 // pred_region
          _
        $region64: #{cnn_forward.1} parent=11 // pred_fallthru
          _
      $region12: #{cnn_forward.1} parent=5 // pred_fallthru
        _
      %p402 = scmp.lt.s32.totalorder %s23, 2
      // Predicated region
      $region65: #{cnn_forward.1} parent=5 // pred_check
        %p403 = pneg %p402
      $region66: #{cnn_forward.1} parent=5 // pred_check_branch
        %405 = sbr.rel (%p403) target = $region68
      $region67: #{cnn_forward.1} parent=5 // pred_region
        // Predicated region
        $region69: #{cnn_forward.1} parent=67 // pred_check
          %p406 = pneg %p43
        $region70: #{cnn_forward.1} parent=67 // pred_check_branch
          %408 = sbr.rel (%p406) target = $region72
        $region71: #{cnn_forward.1} parent=67 // pred_region
          %s409 = smul.u32 30, %s23
          %p410 = scmp.lt.s32.totalorder %s409, 59
          %s411 = scalar_select %p410, %s409, 59
          %s412 = smul.addr %s411, 8
          %s413 = scalar_lea.vmem %s0, %s412
          %s414 = smul.u32 30, %s23
        $region72: #{cnn_forward.1} parent=67 // pred_fallthru
          _
      $region68: #{cnn_forward.1} parent=5 // pred_fallthru
        _
      %p415 = scmp.le.s32.totalorder 1, %s23
      %p416 = scmp.lt.s32.totalorder %s23, 3
      %p417 = pnand %p415, %p416
      %p418 = pneg %p417
      // Predicated region
      $region73: #{cnn_forward.1} parent=5 // pred_check
        _
      $region74: #{cnn_forward.1} parent=5 // pred_check_branch
        %420 = sbr.rel (%p417) target = $region76
      $region75: #{cnn_forward.1} parent=5 // pred_region
        %s421 = ssub.s32 %s23, 1
        %s422 = smul.u32 30, %s28
        %p423 = scmp.lt.s32.totalorder %s422, 59
        %s424 = scalar_select %p423, %s422, 59
        %s425 = smul.addr %s424, 8
        %s426 = scalar_lea.vmem %s0, %s425
        %p427 = pneg %p49
        %p428 = pneg %p46
        %p429 = pneg %p70
        %p430 = pneg %p67
        %p431 = pneg %p91
        %p432 = pneg %p88
        %p433 = pneg %p112
        %p434 = pneg %p109
        %p435 = pneg %p133
        %p436 = pneg %p130
        %p437 = pneg %p154
        %p438 = pneg %p151
        %p439 = pneg %p175
        %p440 = pneg %p172
        %p441 = pneg %p196
        %p442 = pneg %p193
        %p443 = pneg %p217
        %p444 = pneg %p214
        %p445 = pneg %p238
        %p446 = pneg %p235
        %p447 = pneg %p259
        %p448 = pneg %p256
        %p449 = pneg %p280
        %p450 = pneg %p277
        %p451 = pneg %p301
        %p452 = pneg %p298
        %p453 = pneg %p322
        %p454 = pneg %p319
        %p455 = pneg %p348
        %p456 = pneg %p345
        %s457 = sand.u32 %s335, 1
        %s458 = scalar_lea.sflag [#allocation3], %s457
        %s459 = sand.u32 %s335, 1
        %s460 = smul.addr %s459, 8
        %s461 = scalar_lea.vmem [#allocation2], %s460
        %s462 = smul.u32 30, %s28
        %p463 = scmp.lt.s32.totalorder %s462, 59
        %s464 = scalar_select %p463, %s462, 59
        %s465 = smul.addr %s464, 8
        %s466 = scalar_lea.vmem %s0, %s465
        %s467 = smul.u32 30, %s28
        %v469 = vld [vmem:[%s466] sm:$0xff]
        %v470 = vld [vmem:[%s466 + $0x8] sm:$0xff]
        %v471 = vld [vmem:[%s466 + $0x10] sm:$0xff]
        %v472 = vld [vmem:[%s466 + $0x18] sm:$0xff]
        %v473 = vld [vmem:[%s466 + $0x20] sm:$0xff]
        %v474 = vld [vmem:[%s466 + $0x28] sm:$0xff]
        %v475 = vld [vmem:[%s466 + $0x30] sm:$0xff]
        %v476 = vld [vmem:[%s466 + $0x38] sm:$0xff]
        %v477 = vld [vmem:[%s466 + $0x40] sm:$0xff]
        %v478 = vld [vmem:[%s466 + $0x48] sm:$0xff]
        %v479 = vld [vmem:[%s466 + $0x50] sm:$0xff]
        %v480 = vld [vmem:[%s466 + $0x58] sm:$0xff]
        %v481 = vld [vmem:[%s466 + $0x60] sm:$0xff]
        %v482 = vld [vmem:[%s466 + $0x68] sm:$0xff]
        %v483 = vld [vmem:[%s466 + $0x70] sm:$0xff]
        %v484 = vld [vmem:[%s466 + $0x78] sm:$0xff]
        %v485 = vld [vmem:[%s466 + $0x80] sm:$0xff]
        %v486 = vld [vmem:[%s466 + $0x88] sm:$0xff]
        %v487 = vld [vmem:[%s466 + $0x90] sm:$0xff]
        %v488 = vld [vmem:[%s466 + $0x98] sm:$0xff]
        %v489 = vld [vmem:[%s466 + $0xa0] sm:$0xff]
        %v490 = vld [vmem:[%s466 + $0xa8] sm:$0xff]
        %v491 = vld [vmem:[%s466 + $0xb0] sm:$0xff]
        %v492 = vld [vmem:[%s466 + $0xb8] sm:$0xff]
        %v493 = vld [vmem:[%s466 + $0xc0] sm:$0xff]
        %v494 = vld [vmem:[%s466 + $0xc8] sm:$0xff]
        %v495 = vld [vmem:[%s466 + $0xd0] sm:$0xff]
        %v496 = vld [vmem:[%s466 + $0xd8] sm:$0xff]
        %v497 = vld [vmem:[%s466 + $0xe0] sm:$0xff]
        %v498 = vld [vmem:[%s466 + $0xe8] sm:$0xff]
        %v499 = vpack.c.bf16 %v470, %v469
        %v500 = vpack.c.bf16 %v472, %v471
        %v501 = vpack.c.bf16 %v474, %v473
        %v502 = vpack.c.bf16 %v476, %v475
        %v503 = vpack.c.bf16 %v478, %v477
        %v504 = vpack.c.bf16 %v480, %v479
        %v505 = vpack.c.bf16 %v482, %v481
        %v506 = vpack.c.bf16 %v484, %v483
        %v507 = vpack.c.bf16 %v486, %v485
        %v508 = vpack.c.bf16 %v488, %v487
        %v509 = vpack.c.bf16 %v490, %v489
        %v510 = vpack.c.bf16 %v492, %v491
        %v511 = vpack.c.bf16 %v494, %v493
        %v512 = vpack.c.bf16 %v496, %v495
        %v513 = vpack.c.bf16 %v498, %v497
        %v514 = vld [vmem:[%s1] sm:$0xff]
        %v515 = vld [vmem:[%s1 + $0x8] sm:$0xff]
        %v516 = vld [vmem:[%s1 + $0x10] sm:$0xff]
        %v517 = vld [vmem:[%s1 + $0x18] sm:$0xff]
        %v518 = vld [vmem:[%s1 + $0x20] sm:$0xff]
        %v519 = vld [vmem:[%s1 + $0x28] sm:$0xff]
        %v520 = vld [vmem:[%s1 + $0x30] sm:$0xff]
        %v521 = vld [vmem:[%s1 + $0x38] sm:$0xff]
        %v522 = vld [vmem:[%s1 + $0x40] sm:$0xff]
        %v523 = vld [vmem:[%s1 + $0x48] sm:$0xff]
        %v524 = vld [vmem:[%s1 + $0x50] sm:$0xff]
        %v525 = vld [vmem:[%s1 + $0x58] sm:$0xff]
        %v526 = vld [vmem:[%s1 + $0x60] sm:$0xff]
        %v527 = vld [vmem:[%s1 + $0x68] sm:$0xff]
        %v528 = vld [vmem:[%s1 + $0x70] sm:$0xff]
        %v529 = vld [vmem:[%s1 + $0x78] sm:$0xff]
        %v530 = vld [vmem:[%s1 + $0x80] sm:$0xff]
        %v531 = vld [vmem:[%s1 + $0x88] sm:$0xff]
        %v532 = vld [vmem:[%s1 + $0x90] sm:$0xff]
        %v533 = vld [vmem:[%s1 + $0x98] sm:$0xff]
        %v534 = vld [vmem:[%s1 + $0xa0] sm:$0xff]
        %v535 = vld [vmem:[%s1 + $0xa8] sm:$0xff]
        %v536 = vld [vmem:[%s1 + $0xb0] sm:$0xff]
        %v537 = vld [vmem:[%s1 + $0xb8] sm:$0xff]
        %v538 = vld [vmem:[%s1 + $0xc0] sm:$0xff]
        %v539 = vld [vmem:[%s1 + $0xc8] sm:$0xff]
        %v540 = vld [vmem:[%s1 + $0xd0] sm:$0xff]
        %v541 = vld [vmem:[%s1 + $0xd8] sm:$0xff]
        %v542 = vld [vmem:[%s1 + $0xe0] sm:$0xff]
        %v543 = vld [vmem:[%s1 + $0xe8] sm:$0xff]
        %v544 = vld [vmem:[%s1 + $0xf0] sm:$0xff]
        %v545 = vld [vmem:[%s1 + $0xf8] sm:$0xff]
        %v546 = vld [vmem:[%s1 + $0x100] sm:$0xff]
        %v547 = vld [vmem:[%s1 + $0x108] sm:$0xff]
        %v548 = vld [vmem:[%s1 + $0x110] sm:$0xff]
        %v549 = vld [vmem:[%s1 + $0x118] sm:$0xff]
        %v550 = vld [vmem:[%s1 + $0x120] sm:$0xff]
        %v551 = vld [vmem:[%s1 + $0x128] sm:$0xff]
        %v552 = vld [vmem:[%s1 + $0x130] sm:$0xff]
        %v553 = vld [vmem:[%s1 + $0x138] sm:$0xff]
        %v554 = vld [vmem:[%s1 + $0x140] sm:$0xff]
        %v555 = vld [vmem:[%s1 + $0x148] sm:$0xff]
        %v556 = vld [vmem:[%s1 + $0x150] sm:$0xff]
        %v557 = vld [vmem:[%s1 + $0x158] sm:$0xff]
        %v558 = vld [vmem:[%s1 + $0x160] sm:$0xff]
        %v559 = vld [vmem:[%s1 + $0x168] sm:$0xff]
        %v560 = vld [vmem:[%s1 + $0x170] sm:$0xff]
        %v561 = vld [vmem:[%s1 + $0x178] sm:$0xff]
        %v562 = vld [vmem:[%s2] sm:$0xff]
        %v564 = vlaneseq
        %v565 = vshrl.u32 %v564, 7
        %v566 = vsub.s32 0, %v565
        %v567 = vrot.slane %v562, %v566
        %v568 = vlaneseq
        %v569 = vshrl.u32 %v568, 7
        %v570 = vsub.s32 1, %v569
        %v571 = vrot.slane %v562, %v570
        %v572 = vlaneseq
        %v573 = vshrl.u32 %v572, 7
        %v574 = vsub.s32 2, %v573
        %v575 = vrot.slane %v562, %v574
        %v576 = vlaneseq
        %v577 = vshrl.u32 %v576, 7
        %v578 = vsub.s32 3, %v577
        %v579 = vrot.slane %v562, %v578
        %v580 = vlaneseq
        %v581 = vshrl.u32 %v580, 7
        %v582 = vsub.s32 4, %v581
        %v583 = vrot.slane %v562, %v582
        %v584 = vlaneseq
        %v585 = vshrl.u32 %v584, 7
        %v586 = vsub.s32 5, %v585
        %v587 = vrot.slane %v562, %v586
        %v588 = vlaneseq
        %v589 = vshrl.u32 %v588, 7
        %v590 = vsub.s32 6, %v589
        %v591 = vrot.slane %v562, %v590
        %v592 = vlaneseq
        %v593 = vshrl.u32 %v592, 7
        %v594 = vsub.s32 7, %v593
        %v595 = vrot.slane %v562, %v594
        %v652 = vunpack.c.l.b16 %v514
        %v653 = vunpack.c.h.b16 %v514
        %v654 = vunpack.c.l.b16 %v515
        %v655 = vunpack.c.h.b16 %v515
        %v656 = vunpack.c.l.b16 %v516
        %v657 = vunpack.c.h.b16 %v516
        %v658 = vunpack.c.l.b16 %v517
        %v659 = vunpack.c.h.b16 %v517
        %v660 = vunpack.c.l.b16 %v518
        %v661 = vunpack.c.h.b16 %v518
        %v662 = vunpack.c.l.b16 %v519
        %v663 = vunpack.c.h.b16 %v519
        %v664 = vunpack.c.l.b16 %v520
        %v665 = vunpack.c.h.b16 %v520
        %v666 = vunpack.c.l.b16 %v521
        %v667 = vunpack.c.h.b16 %v521
        %v668 = vunpack.c.l.b16 %v522
        %v669 = vunpack.c.h.b16 %v522
        %v670 = vunpack.c.l.b16 %v523
        %v671 = vunpack.c.h.b16 %v523
        %v672 = vunpack.c.l.b16 %v524
        %v673 = vunpack.c.h.b16 %v524
        %v674 = vunpack.c.l.b16 %v525
        %v675 = vunpack.c.h.b16 %v525
        %v676 = vunpack.c.l.b16 %v526
        %v677 = vunpack.c.h.b16 %v526
        %v678 = vunpack.c.l.b16 %v527
        %v679 = vunpack.c.h.b16 %v527
        %v680 = vunpack.c.l.b16 %v528
        %v681 = vunpack.c.h.b16 %v528
        %v682 = vunpack.c.l.b16 %v529
        %v683 = vunpack.c.h.b16 %v529
        %v684 = vunpack.c.l.b16 %v530
        %v685 = vunpack.c.h.b16 %v530
        %v686 = vunpack.c.l.b16 %v531
        %v687 = vunpack.c.h.b16 %v531
        %v688 = vunpack.c.l.b16 %v532
        %v689 = vunpack.c.h.b16 %v532
        %v690 = vunpack.c.l.b16 %v533
        %v691 = vunpack.c.h.b16 %v533
        %v692 = vunpack.c.l.b16 %v534
        %v693 = vunpack.c.h.b16 %v534
        %v694 = vunpack.c.l.b16 %v535
        %v695 = vunpack.c.h.b16 %v535
        %v696 = vunpack.c.l.b16 %v536
        %v697 = vunpack.c.h.b16 %v536
        %v698 = vunpack.c.l.b16 %v537
        %v699 = vunpack.c.h.b16 %v537
        %v700 = vunpack.c.l.b16 %v538
        %v701 = vunpack.c.h.b16 %v538
        %v702 = vunpack.c.l.b16 %v539
        %v703 = vunpack.c.h.b16 %v539
        %v704 = vunpack.c.l.b16 %v540
        %v705 = vunpack.c.h.b16 %v540
        %v706 = vunpack.c.l.b16 %v541
        %v707 = vunpack.c.h.b16 %v541
        %v708 = vunpack.c.l.b16 %v542
        %v709 = vunpack.c.h.b16 %v542
        %v710 = vunpack.c.l.b16 %v543
        %v711 = vunpack.c.h.b16 %v543
        %v712 = vunpack.c.l.b16 %v544
        %v713 = vunpack.c.h.b16 %v544
        %v714 = vunpack.c.l.b16 %v545
        %v715 = vunpack.c.h.b16 %v545
        %v716 = vunpack.c.l.b16 %v546
        %v717 = vunpack.c.h.b16 %v546
        %v718 = vunpack.c.l.b16 %v547
        %v719 = vunpack.c.h.b16 %v547
        %v720 = vunpack.c.l.b16 %v548
        %v721 = vunpack.c.h.b16 %v548
        %v722 = vunpack.c.l.b16 %v549
        %v723 = vunpack.c.h.b16 %v549
        %v724 = vunpack.c.l.b16 %v550
        %v725 = vunpack.c.h.b16 %v550
        %v726 = vunpack.c.l.b16 %v551
        %v727 = vunpack.c.h.b16 %v551
        %v728 = vunpack.c.l.b16 %v552
        %v729 = vunpack.c.h.b16 %v552
        %v730 = vunpack.c.l.b16 %v553
        %v731 = vunpack.c.h.b16 %v553
        %v732 = vunpack.c.l.b16 %v554
        %v733 = vunpack.c.h.b16 %v554
        %v734 = vunpack.c.l.b16 %v555
        %v735 = vunpack.c.h.b16 %v555
        %v736 = vunpack.c.l.b16 %v556
        %v737 = vunpack.c.h.b16 %v556
        %v738 = vunpack.c.l.b16 %v557
        %v739 = vunpack.c.h.b16 %v557
        %v740 = vunpack.c.l.b16 %v558
        %v741 = vunpack.c.h.b16 %v558
        %v742 = vunpack.c.l.b16 %v559
        %v743 = vunpack.c.h.b16 %v559
        %v744 = vunpack.c.l.b16 %v560
        %v745 = vunpack.c.h.b16 %v560
        %v746 = vunpack.c.l.b16 %v561
        %v747 = vunpack.c.h.b16 %v561
        %v748 = vpack.c.b16 %v660, %v652
        %v749 = vpack.c.b16 %v661, %v653
        %v750 = vpack.c.b16 %v662, %v654
        %v751 = vpack.c.b16 %v663, %v655
        %v752 = vpack.c.b16 %v664, %v656
        %v753 = vpack.c.b16 %v665, %v657
        %v754 = vpack.c.b16 %v666, %v658
        %v755 = vpack.c.b16 %v667, %v659
        %v756 = vpack.c.b16 %v676, %v668
        %v757 = vpack.c.b16 %v677, %v669
        %v758 = vpack.c.b16 %v678, %v670
        %v759 = vpack.c.b16 %v679, %v671
        %v760 = vpack.c.b16 %v680, %v672
        %v761 = vpack.c.b16 %v681, %v673
        %v762 = vpack.c.b16 %v682, %v674
        %v763 = vpack.c.b16 %v683, %v675
        %v764 = vpack.c.b16 %v692, %v684
        %v765 = vpack.c.b16 %v693, %v685
        %v766 = vpack.c.b16 %v694, %v686
        %v767 = vpack.c.b16 %v695, %v687
        %v768 = vpack.c.b16 %v696, %v688
        %v769 = vpack.c.b16 %v697, %v689
        %v770 = vpack.c.b16 %v698, %v690
        %v771 = vpack.c.b16 %v699, %v691
        %v772 = vpack.c.b16 %v708, %v700
        %v773 = vpack.c.b16 %v709, %v701
        %v774 = vpack.c.b16 %v710, %v702
        %v775 = vpack.c.b16 %v711, %v703
        %v776 = vpack.c.b16 %v712, %v704
        %v777 = vpack.c.b16 %v713, %v705
        %v778 = vpack.c.b16 %v714, %v706
        %v779 = vpack.c.b16 %v715, %v707
        %v780 = vpack.c.b16 %v724, %v716
        %v781 = vpack.c.b16 %v725, %v717
        %v782 = vpack.c.b16 %v726, %v718
        %v783 = vpack.c.b16 %v727, %v719
        %v784 = vpack.c.b16 %v728, %v720
        %v785 = vpack.c.b16 %v729, %v721
        %v786 = vpack.c.b16 %v730, %v722
        %v787 = vpack.c.b16 %v731, %v723
        %v788 = vpack.c.b16 %v740, %v732
        %v789 = vpack.c.b16 %v741, %v733
        %v790 = vpack.c.b16 %v742, %v734
        %v791 = vpack.c.b16 %v743, %v735
        %v792 = vpack.c.b16 %v744, %v736
        %v793 = vpack.c.b16 %v745, %v737
        %v794 = vpack.c.b16 %v746, %v738
        %v795 = vpack.c.b16 %v747, %v739
        %vm844 = vcmask 785408
        %v846 = vsel %vm844, %v499, 0
        %v849 = vsel %vm844, %v500, 0
        %v852 = vsel %vm844, %v501, 0
        %v855 = vsel %vm844, %v502, 0
        %v858 = vsel %vm844, %v503, 0
        %v861 = vsel %vm844, %v504, 0
        %v864 = vsel %vm844, %v505, 0
        %v867 = vsel %vm844, %v506, 0
        %v870 = vsel %vm844, %v507, 0
        %v873 = vsel %vm844, %v508, 0
        %v876 = vsel %vm844, %v509, 0
        %v879 = vsel %vm844, %v510, 0
        %v882 = vsel %vm844, %v511, 0
        %v885 = vsel %vm844, %v512, 0
        %v888 = vsel %vm844, %v513, 0
        %890 = vmatprep.subr.bf16.mxu0 %v749
        %891 = vmatpush1.bf16.msra.mxu0 %v748
        %892 = vmatprep.subr.bf16.mxu0 %v757
        %893 = vmatpush1.bf16.msra.mxu0 %v756
        %894 = vmatprep.subr.bf16.mxu0 %v765
        %895 = vmatpush1.bf16.msra.mxu0 %v764
        %896 = vmatprep.subr.bf16.mxu0 %v773
        %897 = vmatpush1.bf16.msra.mxu0 %v772
        %898 = vmatprep.subr.bf16.mxu0 %v781
        %899 = vmatpush1.bf16.msra.mxu0 %v780
        %900 = vmatprep.subr.bf16.mxu0 %v789
        %901 = vmatpush1.bf16.msra.mxu0 %v788
        %902 = vmatprep.subr.bf16.mxu0 0
        %903 = vmatpush1.bf16.msra.mxu0 0
        %904 = vmatprep.subr.bf16.mxu0 0
        %905 = vmatpush1.bf16.msra.mxu0 0
        %906 = vmatprep.subr.bf16.mxu0 0
        %907 = vmatpush1.bf16.msra.mxu0 0
        %908 = vmatprep.subr.bf16.mxu0 0
        %909 = vmatpush1.bf16.msra.mxu0 0
        %910 = vmatprep.subr.bf16.mxu0 0
        %911 = vmatpush1.bf16.msra.mxu0 0
        %912 = vmatprep.subr.bf16.mxu0 0
        %913 = vmatpush1.bf16.msra.mxu0 0
        %914 = vmatprep.subr.bf16.mxu0 0
        %915 = vmatpush1.bf16.msra.mxu0 0
        %916 = vmatprep.subr.bf16.mxu0 0
        %917 = vmatpush1.bf16.msra.mxu0 0
        %918 = vmatprep.subr.bf16.mxu0 0
        %919 = vmatpush1.bf16.msra.mxu0 0
        %920 = vmatprep.subr.bf16.mxu0 0
        %921 = vmatpush1.bf16.msra.mxu0 0
        %922 = vmatprep.mubr.bf16.mxu0 0
        %923 = vmatmul.mubr.bf16.gmra.mrb[0].mxu0 %v846
        %v924 = vpop.f32.mrb[0].mxu0
        %v925 = vadd.f32 %v567, %v924
        %v926 = vpop.f32.mrb[0].mxu0
        %v927 = vadd.f32 %v571, %v926
        %v928 = vpop.f32.mrb[0].mxu0
        %v929 = vadd.f32 %v567, %v928
        %v930 = vpop.f32.mrb[0].mxu0
        %v931 = vadd.f32 %v571, %v930
        %932 = vmatprep.mubr.bf16.mxu0 0
        %933 = vmatmul.mubr.bf16.gmra.mrb[0].mxu0 %v849
        %v934 = vpop.f32.mrb[0].mxu0
        %v935 = vadd.f32 %v567, %v934
        %v936 = vpop.f32.mrb[0].mxu0
        %v937 = vadd.f32 %v571, %v936
        %v938 = vpop.f32.mrb[0].mxu0
        %v939 = vadd.f32 %v567, %v938
        %v940 = vpop.f32.mrb[0].mxu0
        %v941 = vadd.f32 %v571, %v940
        %942 = vmatprep.mubr.bf16.mxu0 0
        %943 = vmatmul.mubr.bf16.gmra.mrb[0].mxu0 %v852
        %v944 = vpop.f32.mrb[0].mxu0
        %v945 = vadd.f32 %v567, %v944
        %v946 = vpop.f32.mrb[0].mxu0
        %v947 = vadd.f32 %v571, %v946
        %v948 = vpop.f32.mrb[0].mxu0
        %v949 = vadd.f32 %v567, %v948
        %v950 = vpop.f32.mrb[0].mxu0
        %v951 = vadd.f32 %v571, %v950
        %952 = vmatprep.mubr.bf16.mxu0 0
        %953 = vmatmul.mubr.bf16.gmra.mrb[0].mxu0 %v855
        %v954 = vpop.f32.mrb[0].mxu0
        %v955 = vadd.f32 %v567, %v954
        %v956 = vpop.f32.mrb[0].mxu0
        %v957 = vadd.f32 %v571, %v956
        %v958 = vpop.f32.mrb[0].mxu0
        %v959 = vadd.f32 %v567, %v958
        %v960 = vpop.f32.mrb[0].mxu0
        %v961 = vadd.f32 %v571, %v960
        %962 = vmatprep.mubr.bf16.mxu0 0
        %963 = vmatmul.mubr.bf16.gmra.mrb[0].mxu0 %v858
        %v964 = vpop.f32.mrb[0].mxu0
        %v965 = vadd.f32 %v567, %v964
        %v966 = vpop.f32.mrb[0].mxu0
        %v967 = vadd.f32 %v571, %v966
        %v968 = vpop.f32.mrb[0].mxu0
        %v969 = vadd.f32 %v567, %v968
        %v970 = vpop.f32.mrb[0].mxu0
        %v971 = vadd.f32 %v571, %v970
        %972 = vmatprep.mubr.bf16.mxu0 0
        %973 = vmatmul.mubr.bf16.gmra.mrb[0].mxu0 %v861
        %v974 = vpop.f32.mrb[0].mxu0
        %v975 = vadd.f32 %v567, %v974
        %v976 = vpop.f32.mrb[0].mxu0
        %v977 = vadd.f32 %v571, %v976
        %v978 = vpop.f32.mrb[0].mxu0
        %v979 = vadd.f32 %v567, %v978
        %v980 = vpop.f32.mrb[0].mxu0
        %v981 = vadd.f32 %v571, %v980
        %982 = vmatprep.mubr.bf16.mxu0 0
        %983 = vmatmul.mubr.bf16.gmra.mrb[0].mxu0 %v864
        %v984 = vpop.f32.mrb[0].mxu0
        %v985 = vadd.f32 %v567, %v984
        %v986 = vpop.f32.mrb[0].mxu0
        %v987 = vadd.f32 %v571, %v986
        %v988 = vpop.f32.mrb[0].mxu0
        %v989 = vadd.f32 %v567, %v988
        %v990 = vpop.f32.mrb[0].mxu0
        %v991 = vadd.f32 %v571, %v990
        %992 = vmatprep.mubr.bf16.mxu0 0
        %993 = vmatmul.mubr.bf16.gmra.mrb[0].mxu0 %v867
        %v994 = vpop.f32.mrb[0].mxu0
        %v995 = vadd.f32 %v567, %v994
        %v996 = vpop.f32.mrb[0].mxu0
        %v997 = vadd.f32 %v571, %v996
        %v998 = vpop.f32.mrb[0].mxu0
        %v999 = vadd.f32 %v567, %v998
        %v1000 = vpop.f32.mrb[0].mxu0
        %v1001 = vadd.f32 %v571, %v1000
        %1002 = vmatprep.mubr.bf16.mxu0 0
        %1003 = vmatmul.mubr.bf16.gmra.mrb[0].mxu0 %v870
        %v1004 = vpop.f32.mrb[0].mxu0
        %v1005 = vadd.f32 %v567, %v1004
        %v1006 = vpop.f32.mrb[0].mxu0
        %v1007 = vadd.f32 %v571, %v1006
        %v1008 = vpop.f32.mrb[0].mxu0
        %v1009 = vadd.f32 %v567, %v1008
        %v1010 = vpop.f32.mrb[0].mxu0
        %v1011 = vadd.f32 %v571, %v1010
        %1012 = vmatprep.mubr.bf16.mxu0 0
        %1013 = vmatmul.mubr.bf16.gmra.mrb[0].mxu0 %v873
        %v1014 = vpop.f32.mrb[0].mxu0
        %v1015 = vadd.f32 %v567, %v1014
        %v1016 = vpop.f32.mrb[0].mxu0
        %v1017 = vadd.f32 %v571, %v1016
        %v1018 = vpop.f32.mrb[0].mxu0
        %v1019 = vadd.f32 %v567, %v1018
        %v1020 = vpop.f32.mrb[0].mxu0
        %v1021 = vadd.f32 %v571, %v1020
        %1022 = vmatprep.mubr.bf16.mxu0 0
        %1023 = vmatmul.mubr.bf16.gmra.mrb[0].mxu0 %v876
        %v1024 = vpop.f32.mrb[0].mxu0
        %v1025 = vadd.f32 %v567, %v1024
        %v1026 = vpop.f32.mrb[0].mxu0
        %v1027 = vadd.f32 %v571, %v1026
        %v1028 = vpop.f32.mrb[0].mxu0
        %v1029 = vadd.f32 %v567, %v1028
        %v1030 = vpop.f32.mrb[0].mxu0
        %v1031 = vadd.f32 %v571, %v1030
        %1032 = vmatprep.mubr.bf16.mxu0 0
        %1033 = vmatmul.mubr.bf16.gmra.mrb[0].mxu0 %v879
        %v1034 = vpop.f32.mrb[0].mxu0
        %v1035 = vadd.f32 %v567, %v1034
        %v1036 = vpop.f32.mrb[0].mxu0
        %v1037 = vadd.f32 %v571, %v1036
        %v1038 = vpop.f32.mrb[0].mxu0
        %v1039 = vadd.f32 %v567, %v1038
        %v1040 = vpop.f32.mrb[0].mxu0
        %v1041 = vadd.f32 %v571, %v1040
        %1042 = vmatprep.mubr.bf16.mxu0 0
        %1043 = vmatmul.mubr.bf16.gmra.mrb[0].mxu0 %v882
        %v1044 = vpop.f32.mrb[0].mxu0
        %v1045 = vadd.f32 %v567, %v1044
        %v1046 = vpop.f32.mrb[0].mxu0
        %v1047 = vadd.f32 %v571, %v1046
        %v1048 = vpop.f32.mrb[0].mxu0
        %v1049 = vadd.f32 %v567, %v1048
        %v1050 = vpop.f32.mrb[0].mxu0
        %v1051 = vadd.f32 %v571, %v1050
        %1052 = vmatprep.mubr.bf16.mxu0 0
        %1053 = vmatmul.mubr.bf16.gmra.mrb[0].mxu0 %v885
        %v1054 = vpop.f32.mrb[0].mxu0
        %v1055 = vadd.f32 %v567, %v1054
        %v1056 = vpop.f32.mrb[0].mxu0
        %v1057 = vadd.f32 %v571, %v1056
        %v1058 = vpop.f32.mrb[0].mxu0
        %v1059 = vadd.f32 %v567, %v1058
        %v1060 = vpop.f32.mrb[0].mxu0
        %v1061 = vadd.f32 %v571, %v1060
        %1062 = vmatprep.mubr.bf16.mxu0 0
        %1063 = vmatmul.mubr.bf16.gmra.mrb[0].mxu0 %v888
        %v1064 = vpop.f32.mrb[0].mxu0
        %v1065 = vadd.f32 %v567, %v1064
        %v1066 = vpop.f32.mrb[0].mxu0
        %v1067 = vadd.f32 %v571, %v1066
        %v1068 = vpop.f32.mrb[0].mxu0
        %v1069 = vadd.f32 %v567, %v1068
        %v1070 = vpop.f32.mrb[0].mxu0
        %v1071 = vadd.f32 %v571, %v1070
        %1072 = vdwg.mxu0
        %1073 = vmatprep.subr.bf16.mxu0 %v751
        %1074 = vmatpush1.bf16.msra.mxu0 %v750
        %1075 = vmatprep.subr.bf16.mxu0 %v759
        %1076 = vmatpush1.bf16.msra.mxu0 %v758
        %1077 = vmatprep.subr.bf16.mxu0 %v767
        %1078 = vmatpush1.bf16.msra.mxu0 %v766
        %1079 = vmatprep.subr.bf16.mxu0 %v775
        %1080 = vmatpush1.bf16.msra.mxu0 %v774
        %1081 = vmatprep.subr.bf16.mxu0 %v783
        %1082 = vmatpush1.bf16.msra.mxu0 %v782
        %1083 = vmatprep.subr.bf16.mxu0 %v791
        %1084 = vmatpush1.bf16.msra.mxu0 %v790
        %1085 = vmatprep.subr.bf16.mxu0 0
        %1086 = vmatpush1.bf16.msra.mxu0 0
        %1087 = vmatprep.subr.bf16.mxu0 0
        %1088 = vmatpush1.bf16.msra.mxu0 0
        %1089 = vmatprep.subr.bf16.mxu0 0
        %1090 = vmatpush1.bf16.msra.mxu0 0
        %1091 = vmatprep.subr.bf16.mxu0 0
        %1092 = vmatpush1.bf16.msra.mxu0 0
        %1093 = vmatprep.subr.bf16.mxu0 0
        %1094 = vmatpush1.bf16.msra.mxu0 0
        %1095 = vmatprep.subr.bf16.mxu0 0
        %1096 = vmatpush1.bf16.msra.mxu0 0
        %1097 = vmatprep.subr.bf16.mxu0 0
        %1098 = vmatpush1.bf16.msra.mxu0 0
        %1099 = vmatprep.subr.bf16.mxu0 0
        %1100 = vmatpush1.bf16.msra.mxu0 0
        %1101 = vmatprep.subr.bf16.mxu0 0
        %1102 = vmatpush1.bf16.msra.mxu0 0
        %1103 = vmatprep.subr.bf16.mxu0 0
        %1104 = vmatpush1.bf16.msra.mxu0 0
        %1105 = vmatprep.mubr.bf16.mxu0 0
        %1106 = vmatmul.mubr.bf16.gmra.mrb[0].mxu0 %v846
        %v1107 = vpop.f32.mrb[0].mxu0
        %v1108 = vadd.f32 %v575, %v1107
        %v1109 = vpop.f32.mrb[0].mxu0
        %v1110 = vadd.f32 %v579, %v1109
        %v1111 = vpop.f32.mrb[0].mxu0
        %v1112 = vadd.f32 %v575, %v1111
        %v1113 = vpop.f32.mrb[0].mxu0
        %v1114 = vadd.f32 %v579, %v1113
        %1115 = vmatprep.mubr.bf16.mxu0 0
        %1116 = vmatmul.mubr.bf16.gmra.mrb[0].mxu0 %v849
        %v1117 = vpop.f32.mrb[0].mxu0
        %v1118 = vadd.f32 %v575, %v1117
        %v1119 = vpop.f32.mrb[0].mxu0
        %v1120 = vadd.f32 %v579, %v1119
        %v1121 = vpop.f32.mrb[0].mxu0
        %v1122 = vadd.f32 %v575, %v1121
        %v1123 = vpop.f32.mrb[0].mxu0
        %v1124 = vadd.f32 %v579, %v1123
        %1125 = vmatprep.mubr.bf16.mxu0 0
        %1126 = vmatmul.mubr.bf16.gmra.mrb[0].mxu0 %v852
        %v1127 = vpop.f32.mrb[0].mxu0
        %v1128 = vadd.f32 %v575, %v1127
        %v1129 = vpop.f32.mrb[0].mxu0
        %v1130 = vadd.f32 %v579, %v1129
        %v1131 = vpop.f32.mrb[0].mxu0
        %v1132 = vadd.f32 %v575, %v1131
        %v1133 = vpop.f32.mrb[0].mxu0
        %v1134 = vadd.f32 %v579, %v1133
        %1135 = vmatprep.mubr.bf16.mxu0 0
        %1136 = vmatmul.mubr.bf16.gmra.mrb[0].mxu0 %v855
        %v1137 = vpop.f32.mrb[0].mxu0
        %v1138 = vadd.f32 %v575, %v1137
        %v1139 = vpop.f32.mrb[0].mxu0
        %v1140 = vadd.f32 %v579, %v1139
        %v1141 = vpop.f32.mrb[0].mxu0
        %v1142 = vadd.f32 %v575, %v1141
        %v1143 = vpop.f32.mrb[0].mxu0
        %v1144 = vadd.f32 %v579, %v1143
        %1145 = vmatprep.mubr.bf16.mxu0 0
        %1146 = vmatmul.mubr.bf16.gmra.mrb[0].mxu0 %v858
        %v1147 = vpop.f32.mrb[0].mxu0
        %v1148 = vadd.f32 %v575, %v1147
        %v1149 = vpop.f32.mrb[0].mxu0
        %v1150 = vadd.f32 %v579, %v1149
        %v1151 = vpop.f32.mrb[0].mxu0
        %v1152 = vadd.f32 %v575, %v1151
        %v1153 = vpop.f32.mrb[0].mxu0
        %v1154 = vadd.f32 %v579, %v1153
        %1155 = vmatprep.mubr.bf16.mxu0 0
        %1156 = vmatmul.mubr.bf16.gmra.mrb[0].mxu0 %v861
        %v1157 = vpop.f32.mrb[0].mxu0
        %v1158 = vadd.f32 %v575, %v1157
        %v1159 = vpop.f32.mrb[0].mxu0
        %v1160 = vadd.f32 %v579, %v1159
        %v1161 = vpop.f32.mrb[0].mxu0
        %v1162 = vadd.f32 %v575, %v1161
        %v1163 = vpop.f32.mrb[0].mxu0
        %v1164 = vadd.f32 %v579, %v1163
        %1165 = vmatprep.mubr.bf16.mxu0 0
        %1166 = vmatmul.mubr.bf16.gmra.mrb[0].mxu0 %v864
        %v1167 = vpop.f32.mrb[0].mxu0
        %v1168 = vadd.f32 %v575, %v1167
        %v1169 = vpop.f32.mrb[0].mxu0
        %v1170 = vadd.f32 %v579, %v1169
        %v1171 = vpop.f32.mrb[0].mxu0
        %v1172 = vadd.f32 %v575, %v1171
        %v1173 = vpop.f32.mrb[0].mxu0
        %v1174 = vadd.f32 %v579, %v1173
        %1175 = vmatprep.mubr.bf16.mxu0 0
        %1176 = vmatmul.mubr.bf16.gmra.mrb[0].mxu0 %v867
        %v1177 = vpop.f32.mrb[0].mxu0
        %v1178 = vadd.f32 %v575, %v1177
        %v1179 = vpop.f32.mrb[0].mxu0
        %v1180 = vadd.f32 %v579, %v1179
        %v1181 = vpop.f32.mrb[0].mxu0
        %v1182 = vadd.f32 %v575, %v1181
        %v1183 = vpop.f32.mrb[0].mxu0
        %v1184 = vadd.f32 %v579, %v1183
        %1185 = vmatprep.mubr.bf16.mxu0 0
        %1186 = vmatmul.mubr.bf16.gmra.mrb[0].mxu0 %v870
        %v1187 = vpop.f32.mrb[0].mxu0
        %v1188 = vadd.f32 %v575, %v1187
        %v1189 = vpop.f32.mrb[0].mxu0
        %v1190 = vadd.f32 %v579, %v1189
        %v1191 = vpop.f32.mrb[0].mxu0
        %v1192 = vadd.f32 %v575, %v1191
        %v1193 = vpop.f32.mrb[0].mxu0
        %v1194 = vadd.f32 %v579, %v1193
        %1195 = vmatprep.mubr.bf16.mxu0 0
        %1196 = vmatmul.mubr.bf16.gmra.mrb[0].mxu0 %v873
        %v1197 = vpop.f32.mrb[0].mxu0
        %v1198 = vadd.f32 %v575, %v1197
        %v1199 = vpop.f32.mrb[0].mxu0
        %v1200 = vadd.f32 %v579, %v1199
        %v1201 = vpop.f32.mrb[0].mxu0
        %v1202 = vadd.f32 %v575, %v1201
        %v1203 = vpop.f32.mrb[0].mxu0
        %v1204 = vadd.f32 %v579, %v1203
        %1205 = vmatprep.mubr.bf16.mxu0 0
        %1206 = vmatmul.mubr.bf16.gmra.mrb[0].mxu0 %v876
        %v1207 = vpop.f32.mrb[0].mxu0
        %v1208 = vadd.f32 %v575, %v1207
        %v1209 = vpop.f32.mrb[0].mxu0
        %v1210 = vadd.f32 %v579, %v1209
        %v1211 = vpop.f32.mrb[0].mxu0
        %v1212 = vadd.f32 %v575, %v1211
        %v1213 = vpop.f32.mrb[0].mxu0
        %v1214 = vadd.f32 %v579, %v1213
        %1215 = vmatprep.mubr.bf16.mxu0 0
        %1216 = vmatmul.mubr.bf16.gmra.mrb[0].mxu0 %v879
        %v1217 = vpop.f32.mrb[0].mxu0
        %v1218 = vadd.f32 %v575, %v1217
        %v1219 = vpop.f32.mrb[0].mxu0
        %v1220 = vadd.f32 %v579, %v1219
        %v1221 = vpop.f32.mrb[0].mxu0
        %v1222 = vadd.f32 %v575, %v1221
        %v1223 = vpop.f32.mrb[0].mxu0
        %v1224 = vadd.f32 %v579, %v1223
        %1225 = vmatprep.mubr.bf16.mxu0 0
        %1226 = vmatmul.mubr.bf16.gmra.mrb[0].mxu0 %v882
        %v1227 = vpop.f32.mrb[0].mxu0
        %v1228 = vadd.f32 %v575, %v1227
        %v1229 = vpop.f32.mrb[0].mxu0
        %v1230 = vadd.f32 %v579, %v1229
        %v1231 = vpop.f32.mrb[0].mxu0
        %v1232 = vadd.f32 %v575, %v1231
        %v1233 = vpop.f32.mrb[0].mxu0
        %v1234 = vadd.f32 %v579, %v1233
        %1235 = vmatprep.mubr.bf16.mxu0 0
        %1236 = vmatmul.mubr.bf16.gmra.mrb[0].mxu0 %v885
        %v1237 = vpop.f32.mrb[0].mxu0
        %v1238 = vadd.f32 %v575, %v1237
        %v1239 = vpop.f32.mrb[0].mxu0
        %v1240 = vadd.f32 %v579, %v1239
        %v1241 = vpop.f32.mrb[0].mxu0
        %v1242 = vadd.f32 %v575, %v1241
        %v1243 = vpop.f32.mrb[0].mxu0
        %v1244 = vadd.f32 %v579, %v1243
        %1245 = vmatprep.mubr.bf16.mxu0 0
        %1246 = vmatmul.mubr.bf16.gmra.mrb[0].mxu0 %v888
        %v1247 = vpop.f32.mrb[0].mxu0
        %v1248 = vadd.f32 %v575, %v1247
        %v1249 = vpop.f32.mrb[0].mxu0
        %v1250 = vadd.f32 %v579, %v1249
        %v1251 = vpop.f32.mrb[0].mxu0
        %v1252 = vadd.f32 %v575, %v1251
        %v1253 = vpop.f32.mrb[0].mxu0
        %v1254 = vadd.f32 %v579, %v1253
        %1255 = vdwg.mxu0
        %1256 = vmatprep.subr.bf16.mxu0 %v753
        %1257 = vmatpush1.bf16.msra.mxu0 %v752
        %1258 = vmatprep.subr.bf16.mxu0 %v761
        %1259 = vmatpush1.bf16.msra.mxu0 %v760
        %1260 = vmatprep.subr.bf16.mxu0 %v769
        %1261 = vmatpush1.bf16.msra.mxu0 %v768
        %1262 = vmatprep.subr.bf16.mxu0 %v777
        %1263 = vmatpush1.bf16.msra.mxu0 %v776
        %1264 = vmatprep.subr.bf16.mxu0 %v785
        %1265 = vmatpush1.bf16.msra.mxu0 %v784
        %1266 = vmatprep.subr.bf16.mxu0 %v793
        %1267 = vmatpush1.bf16.msra.mxu0 %v792
        %1268 = vmatprep.subr.bf16.mxu0 0
        %1269 = vmatpush1.bf16.msra.mxu0 0
        %1270 = vmatprep.subr.bf16.mxu0 0
        %1271 = vmatpush1.bf16.msra.mxu0 0
        %1272 = vmatprep.subr.bf16.mxu0 0
        %1273 = vmatpush1.bf16.msra.mxu0 0
        %1274 = vmatprep.subr.bf16.mxu0 0
        %1275 = vmatpush1.bf16.msra.mxu0 0
        %1276 = vmatprep.subr.bf16.mxu0 0
        %1277 = vmatpush1.bf16.msra.mxu0 0
        %1278 = vmatprep.subr.bf16.mxu0 0
        %1279 = vmatpush1.bf16.msra.mxu0 0
        %1280 = vmatprep.subr.bf16.mxu0 0
        %1281 = vmatpush1.bf16.msra.mxu0 0
        %1282 = vmatprep.subr.bf16.mxu0 0
        %1283 = vmatpush1.bf16.msra.mxu0 0
        %1284 = vmatprep.subr.bf16.mxu0 0
        %1285 = vmatpush1.bf16.msra.mxu0 0
        %1286 = vmatprep.subr.bf16.mxu0 0
        %1287 = vmatpush1.bf16.msra.mxu0 0
        %1288 = vmatprep.mubr.bf16.mxu0 0
        %1289 = vmatmul.mubr.bf16.gmra.mrb[0].mxu0 %v846
        %v1290 = vpop.f32.mrb[0].mxu0
        %v1291 = vadd.f32 %v583, %v1290
        %v1292 = vpop.f32.mrb[0].mxu0
        %v1293 = vadd.f32 %v587, %v1292
        %v1294 = vpop.f32.mrb[0].mxu0
        %v1295 = vadd.f32 %v583, %v1294
        %v1296 = vpop.f32.mrb[0].mxu0
        %v1297 = vadd.f32 %v587, %v1296
        %1298 = vmatprep.mubr.bf16.mxu0 0
        %1299 = vmatmul.mubr.bf16.gmra.mrb[0].mxu0 %v849
        %v1300 = vpop.f32.mrb[0].mxu0
        %v1301 = vadd.f32 %v583, %v1300
        %v1302 = vpop.f32.mrb[0].mxu0
        %v1303 = vadd.f32 %v587, %v1302
        %v1304 = vpop.f32.mrb[0].mxu0
        %v1305 = vadd.f32 %v583, %v1304
        %v1306 = vpop.f32.mrb[0].mxu0
        %v1307 = vadd.f32 %v587, %v1306
        %1308 = vmatprep.mubr.bf16.mxu0 0
        %1309 = vmatmul.mubr.bf16.gmra.mrb[0].mxu0 %v852
        %v1310 = vpop.f32.mrb[0].mxu0
        %v1311 = vadd.f32 %v583, %v1310
        %v1312 = vpop.f32.mrb[0].mxu0
        %v1313 = vadd.f32 %v587, %v1312
        %v1314 = vpop.f32.mrb[0].mxu0
        %v1315 = vadd.f32 %v583, %v1314
        %v1316 = vpop.f32.mrb[0].mxu0
        %v1317 = vadd.f32 %v587, %v1316
        %1318 = vmatprep.mubr.bf16.mxu0 0
        %1319 = vmatmul.mubr.bf16.gmra.mrb[0].mxu0 %v855
        %v1320 = vpop.f32.mrb[0].mxu0
        %v1321 = vadd.f32 %v583, %v1320
        %v1322 = vpop.f32.mrb[0].mxu0
        %v1323 = vadd.f32 %v587, %v1322
        %v1324 = vpop.f32.mrb[0].mxu0
        %v1325 = vadd.f32 %v583, %v1324
        %v1326 = vpop.f32.mrb[0].mxu0
        %v1327 = vadd.f32 %v587, %v1326
        %1328 = vmatprep.mubr.bf16.mxu0 0
        %1329 = vmatmul.mubr.bf16.gmra.mrb[0].mxu0 %v858
        %v1330 = vpop.f32.mrb[0].mxu0
        %v1331 = vadd.f32 %v583, %v1330
        %v1332 = vpop.f32.mrb[0].mxu0
        %v1333 = vadd.f32 %v587, %v1332
        %v1334 = vpop.f32.mrb[0].mxu0
        %v1335 = vadd.f32 %v583, %v1334
        %v1336 = vpop.f32.mrb[0].mxu0
        %v1337 = vadd.f32 %v587, %v1336
        %1338 = vmatprep.mubr.bf16.mxu0 0
        %1339 = vmatmul.mubr.bf16.gmra.mrb[0].mxu0 %v861
        %v1340 = vpop.f32.mrb[0].mxu0
        %v1341 = vadd.f32 %v583, %v1340
        %v1342 = vpop.f32.mrb[0].mxu0
        %v1343 = vadd.f32 %v587, %v1342
        %v1344 = vpop.f32.mrb[0].mxu0
        %v1345 = vadd.f32 %v583, %v1344
        %v1346 = vpop.f32.mrb[0].mxu0
        %v1347 = vadd.f32 %v587, %v1346
        %1348 = vmatprep.mubr.bf16.mxu0 0
        %1349 = vmatmul.mubr.bf16.gmra.mrb[0].mxu0 %v864
        %v1350 = vpop.f32.mrb[0].mxu0
        %v1351 = vadd.f32 %v583, %v1350
        %v1352 = vpop.f32.mrb[0].mxu0
        %v1353 = vadd.f32 %v587, %v1352
        %v1354 = vpop.f32.mrb[0].mxu0
        %v1355 = vadd.f32 %v583, %v1354
        %v1356 = vpop.f32.mrb[0].mxu0
        %v1357 = vadd.f32 %v587, %v1356
        %1358 = vmatprep.mubr.bf16.mxu0 0
        %1359 = vmatmul.mubr.bf16.gmra.mrb[0].mxu0 %v867
        %v1360 = vpop.f32.mrb[0].mxu0
        %v1361 = vadd.f32 %v583, %v1360
        %v1362 = vpop.f32.mrb[0].mxu0
        %v1363 = vadd.f32 %v587, %v1362
        %v1364 = vpop.f32.mrb[0].mxu0
        %v1365 = vadd.f32 %v583, %v1364
        %v1366 = vpop.f32.mrb[0].mxu0
        %v1367 = vadd.f32 %v587, %v1366
        %1368 = vmatprep.mubr.bf16.mxu0 0
        %1369 = vmatmul.mubr.bf16.gmra.mrb[0].mxu0 %v870
        %v1370 = vpop.f32.mrb[0].mxu0
        %v1371 = vadd.f32 %v583, %v1370
        %v1372 = vpop.f32.mrb[0].mxu0
        %v1373 = vadd.f32 %v587, %v1372
        %v1374 = vpop.f32.mrb[0].mxu0
        %v1375 = vadd.f32 %v583, %v1374
        %v1376 = vpop.f32.mrb[0].mxu0
        %v1377 = vadd.f32 %v587, %v1376
        %1378 = vmatprep.mubr.bf16.mxu0 0
        %1379 = vmatmul.mubr.bf16.gmra.mrb[0].mxu0 %v873
        %v1380 = vpop.f32.mrb[0].mxu0
        %v1381 = vadd.f32 %v583, %v1380
        %v1382 = vpop.f32.mrb[0].mxu0
        %v1383 = vadd.f32 %v587, %v1382
        %v1384 = vpop.f32.mrb[0].mxu0
        %v1385 = vadd.f32 %v583, %v1384
        %v1386 = vpop.f32.mrb[0].mxu0
        %v1387 = vadd.f32 %v587, %v1386
        %1388 = vmatprep.mubr.bf16.mxu0 0
        %1389 = vmatmul.mubr.bf16.gmra.mrb[0].mxu0 %v876
        %v1390 = vpop.f32.mrb[0].mxu0
        %v1391 = vadd.f32 %v583, %v1390
        %v1392 = vpop.f32.mrb[0].mxu0
        %v1393 = vadd.f32 %v587, %v1392
        %v1394 = vpop.f32.mrb[0].mxu0
        %v1395 = vadd.f32 %v583, %v1394
        %v1396 = vpop.f32.mrb[0].mxu0
        %v1397 = vadd.f32 %v587, %v1396
        %1398 = vmatprep.mubr.bf16.mxu0 0
        %1399 = vmatmul.mubr.bf16.gmra.mrb[0].mxu0 %v879
        %v1400 = vpop.f32.mrb[0].mxu0
        %v1401 = vadd.f32 %v583, %v1400
        %v1402 = vpop.f32.mrb[0].mxu0
        %v1403 = vadd.f32 %v587, %v1402
        %v1404 = vpop.f32.mrb[0].mxu0
        %v1405 = vadd.f32 %v583, %v1404
        %v1406 = vpop.f32.mrb[0].mxu0
        %v1407 = vadd.f32 %v587, %v1406
        %1408 = vmatprep.mubr.bf16.mxu0 0
        %1409 = vmatmul.mubr.bf16.gmra.mrb[0].mxu0 %v882
        %v1410 = vpop.f32.mrb[0].mxu0
        %v1411 = vadd.f32 %v583, %v1410
        %v1412 = vpop.f32.mrb[0].mxu0
        %v1413 = vadd.f32 %v587, %v1412
        %v1414 = vpop.f32.mrb[0].mxu0
        %v1415 = vadd.f32 %v583, %v1414
        %v1416 = vpop.f32.mrb[0].mxu0
        %v1417 = vadd.f32 %v587, %v1416
        %1418 = vmatprep.mubr.bf16.mxu0 0
        %1419 = vmatmul.mubr.bf16.gmra.mrb[0].mxu0 %v885
        %v1420 = vpop.f32.mrb[0].mxu0
        %v1421 = vadd.f32 %v583, %v1420
        %v1422 = vpop.f32.mrb[0].mxu0
        %v1423 = vadd.f32 %v587, %v1422
        %v1424 = vpop.f32.mrb[0].mxu0
        %v1425 = vadd.f32 %v583, %v1424
        %v1426 = vpop.f32.mrb[0].mxu0
        %v1427 = vadd.f32 %v587, %v1426
        %1428 = vmatprep.mubr.bf16.mxu0 0
        %1429 = vmatmul.mubr.bf16.gmra.mrb[0].mxu0 %v888
        %v1430 = vpop.f32.mrb[0].mxu0
        %v1431 = vadd.f32 %v583, %v1430
        %v1432 = vpop.f32.mrb[0].mxu0
        %v1433 = vadd.f32 %v587, %v1432
        %v1434 = vpop.f32.mrb[0].mxu0
        %v1435 = vadd.f32 %v583, %v1434
        %v1436 = vpop.f32.mrb[0].mxu0
        %v1437 = vadd.f32 %v587, %v1436
        %1438 = vdwg.mxu0
        %1439 = vmatprep.subr.bf16.mxu0 %v755
        %1440 = vmatpush1.bf16.msra.mxu0 %v754
        %1441 = vmatprep.subr.bf16.mxu0 %v763
        %1442 = vmatpush1.bf16.msra.mxu0 %v762
        %1443 = vmatprep.subr.bf16.mxu0 %v771
        %1444 = vmatpush1.bf16.msra.mxu0 %v770
        %1445 = vmatprep.subr.bf16.mxu0 %v779
        %1446 = vmatpush1.bf16.msra.mxu0 %v778
        %1447 = vmatprep.subr.bf16.mxu0 %v787
        %1448 = vmatpush1.bf16.msra.mxu0 %v786
        %1449 = vmatprep.subr.bf16.mxu0 %v795
        %1450 = vmatpush1.bf16.msra.mxu0 %v794
        %1451 = vmatprep.subr.bf16.mxu0 0
        %1452 = vmatpush1.bf16.msra.mxu0 0
        %1453 = vmatprep.subr.bf16.mxu0 0
        %1454 = vmatpush1.bf16.msra.mxu0 0
        %1455 = vmatprep.subr.bf16.mxu0 0
        %1456 = vmatpush1.bf16.msra.mxu0 0
        %1457 = vmatprep.subr.bf16.mxu0 0
        %1458 = vmatpush1.bf16.msra.mxu0 0
        %1459 = vmatprep.subr.bf16.mxu0 0
        %1460 = vmatpush1.bf16.msra.mxu0 0
        %1461 = vmatprep.subr.bf16.mxu0 0
        %1462 = vmatpush1.bf16.msra.mxu0 0
        %1463 = vmatprep.subr.bf16.mxu0 0
        %1464 = vmatpush1.bf16.msra.mxu0 0
        %1465 = vmatprep.subr.bf16.mxu0 0
        %1466 = vmatpush1.bf16.msra.mxu0 0
        %1467 = vmatprep.subr.bf16.mxu0 0
        %1468 = vmatpush1.bf16.msra.mxu0 0
        %1469 = vmatprep.subr.bf16.mxu0 0
        %1470 = vmatpush1.bf16.msra.mxu0 0
        %1471 = vmatprep.mubr.bf16.mxu0 0
        %1472 = vmatmul.mubr.bf16.gmra.mrb[0].mxu0 %v846
        %v1473 = vpop.f32.mrb[0].mxu0
        %v1474 = vadd.f32 %v591, %v1473
        %v1475 = vpop.f32.mrb[0].mxu0
        %v1476 = vadd.f32 %v595, %v1475
        %v1477 = vpop.f32.mrb[0].mxu0
        %v1478 = vadd.f32 %v591, %v1477
        %v1479 = vpop.f32.mrb[0].mxu0
        %v1480 = vadd.f32 %v595, %v1479
        %1481 = vmatprep.mubr.bf16.mxu0 0
        %1482 = vmatmul.mubr.bf16.gmra.mrb[0].mxu0 %v849
        %v1483 = vpop.f32.mrb[0].mxu0
        %v1484 = vadd.f32 %v591, %v1483
        %v1485 = vpop.f32.mrb[0].mxu0
        %v1486 = vadd.f32 %v595, %v1485
        %v1487 = vpop.f32.mrb[0].mxu0
        %v1488 = vadd.f32 %v591, %v1487
        %v1489 = vpop.f32.mrb[0].mxu0
        %v1490 = vadd.f32 %v595, %v1489
        %1491 = vmatprep.mubr.bf16.mxu0 0
        %1492 = vmatmul.mubr.bf16.gmra.mrb[0].mxu0 %v852
        %v1493 = vpop.f32.mrb[0].mxu0
        %v1494 = vadd.f32 %v591, %v1493
        %v1495 = vpop.f32.mrb[0].mxu0
        %v1496 = vadd.f32 %v595, %v1495
        %v1497 = vpop.f32.mrb[0].mxu0
        %v1498 = vadd.f32 %v591, %v1497
        %v1499 = vpop.f32.mrb[0].mxu0
        %v1500 = vadd.f32 %v595, %v1499
        %1501 = vmatprep.mubr.bf16.mxu0 0
        %1502 = vmatmul.mubr.bf16.gmra.mrb[0].mxu0 %v855
        %v1503 = vpop.f32.mrb[0].mxu0
        %v1504 = vadd.f32 %v591, %v1503
        %v1505 = vpop.f32.mrb[0].mxu0
        %v1506 = vadd.f32 %v595, %v1505
        %v1507 = vpop.f32.mrb[0].mxu0
        %v1508 = vadd.f32 %v591, %v1507
        %v1509 = vpop.f32.mrb[0].mxu0
        %v1510 = vadd.f32 %v595, %v1509
        %1511 = vmatprep.mubr.bf16.mxu0 0
        %1512 = vmatmul.mubr.bf16.gmra.mrb[0].mxu0 %v858
        %v1513 = vpop.f32.mrb[0].mxu0
        %v1514 = vadd.f32 %v591, %v1513
        %v1515 = vpop.f32.mrb[0].mxu0
        %v1516 = vadd.f32 %v595, %v1515
        %v1517 = vpop.f32.mrb[0].mxu0
        %v1518 = vadd.f32 %v591, %v1517
        %v1519 = vpop.f32.mrb[0].mxu0
        %v1520 = vadd.f32 %v595, %v1519
        %1521 = vmatprep.mubr.bf16.mxu0 0
        %1522 = vmatmul.mubr.bf16.gmra.mrb[0].mxu0 %v861
        %v1523 = vpop.f32.mrb[0].mxu0
        %v1524 = vadd.f32 %v591, %v1523
        %v1525 = vpop.f32.mrb[0].mxu0
        %v1526 = vadd.f32 %v595, %v1525
        %v1527 = vpop.f32.mrb[0].mxu0
        %v1528 = vadd.f32 %v591, %v1527
        %v1529 = vpop.f32.mrb[0].mxu0
        %v1530 = vadd.f32 %v595, %v1529
        %1531 = vmatprep.mubr.bf16.mxu0 0
        %1532 = vmatmul.mubr.bf16.gmra.mrb[0].mxu0 %v864
        %v1533 = vpop.f32.mrb[0].mxu0
        %v1534 = vadd.f32 %v591, %v1533
        %v1535 = vpop.f32.mrb[0].mxu0
        %v1536 = vadd.f32 %v595, %v1535
        %v1537 = vpop.f32.mrb[0].mxu0
        %v1538 = vadd.f32 %v591, %v1537
        %v1539 = vpop.f32.mrb[0].mxu0
        %v1540 = vadd.f32 %v595, %v1539
        %1541 = vmatprep.mubr.bf16.mxu0 0
        %1542 = vmatmul.mubr.bf16.gmra.mrb[0].mxu0 %v867
        %v1543 = vpop.f32.mrb[0].mxu0
        %v1544 = vadd.f32 %v591, %v1543
        %v1545 = vpop.f32.mrb[0].mxu0
        %v1546 = vadd.f32 %v595, %v1545
        %v1547 = vpop.f32.mrb[0].mxu0
        %v1548 = vadd.f32 %v591, %v1547
        %v1549 = vpop.f32.mrb[0].mxu0
        %v1550 = vadd.f32 %v595, %v1549
        %1551 = vmatprep.mubr.bf16.mxu0 0
        %1552 = vmatmul.mubr.bf16.gmra.mrb[0].mxu0 %v870
        %v1553 = vpop.f32.mrb[0].mxu0
        %v1554 = vadd.f32 %v591, %v1553
        %v1555 = vpop.f32.mrb[0].mxu0
        %v1556 = vadd.f32 %v595, %v1555
        %v1557 = vpop.f32.mrb[0].mxu0
        %v1558 = vadd.f32 %v591, %v1557
        %v1559 = vpop.f32.mrb[0].mxu0
        %v1560 = vadd.f32 %v595, %v1559
        %1561 = vmatprep.mubr.bf16.mxu0 0
        %1562 = vmatmul.mubr.bf16.gmra.mrb[0].mxu0 %v873
        %v1563 = vpop.f32.mrb[0].mxu0
        %v1564 = vadd.f32 %v591, %v1563
        %v1565 = vpop.f32.mrb[0].mxu0
        %v1566 = vadd.f32 %v595, %v1565
        %v1567 = vpop.f32.mrb[0].mxu0
        %v1568 = vadd.f32 %v591, %v1567
        %v1569 = vpop.f32.mrb[0].mxu0
        %v1570 = vadd.f32 %v595, %v1569
        %1571 = vmatprep.mubr.bf16.mxu0 0
        %1572 = vmatmul.mubr.bf16.gmra.mrb[0].mxu0 %v876
        %v1573 = vpop.f32.mrb[0].mxu0
        %v1574 = vadd.f32 %v591, %v1573
        %v1575 = vpop.f32.mrb[0].mxu0
        %v1576 = vadd.f32 %v595, %v1575
        %v1577 = vpop.f32.mrb[0].mxu0
        %v1578 = vadd.f32 %v591, %v1577
        %v1579 = vpop.f32.mrb[0].mxu0
        %v1580 = vadd.f32 %v595, %v1579
        %1581 = vmatprep.mubr.bf16.mxu0 0
        %1582 = vmatmul.mubr.bf16.gmra.mrb[0].mxu0 %v879
        %v1583 = vpop.f32.mrb[0].mxu0
        %v1584 = vadd.f32 %v591, %v1583
        %v1585 = vpop.f32.mrb[0].mxu0
        %v1586 = vadd.f32 %v595, %v1585
        %v1587 = vpop.f32.mrb[0].mxu0
        %v1588 = vadd.f32 %v591, %v1587
        %v1589 = vpop.f32.mrb[0].mxu0
        %v1590 = vadd.f32 %v595, %v1589
        %1591 = vmatprep.mubr.bf16.mxu0 0
        %1592 = vmatmul.mubr.bf16.gmra.mrb[0].mxu0 %v882
        %v1593 = vpop.f32.mrb[0].mxu0
        %v1594 = vadd.f32 %v591, %v1593
        %v1595 = vpop.f32.mrb[0].mxu0
        %v1596 = vadd.f32 %v595, %v1595
        %v1597 = vpop.f32.mrb[0].mxu0
        %v1598 = vadd.f32 %v591, %v1597
        %v1599 = vpop.f32.mrb[0].mxu0
        %v1600 = vadd.f32 %v595, %v1599
        %1601 = vmatprep.mubr.bf16.mxu0 0
        %1602 = vmatmul.mubr.bf16.gmra.mrb[0].mxu0 %v885
        %v1603 = vpop.f32.mrb[0].mxu0
        %v1604 = vadd.f32 %v591, %v1603
        %v1605 = vpop.f32.mrb[0].mxu0
        %v1606 = vadd.f32 %v595, %v1605
        %v1607 = vpop.f32.mrb[0].mxu0
        %v1608 = vadd.f32 %v591, %v1607
        %v1609 = vpop.f32.mrb[0].mxu0
        %v1610 = vadd.f32 %v595, %v1609
        %1611 = vmatprep.mubr.bf16.mxu0 0
        %1612 = vmatmul.mubr.bf16.gmra.mrb[0].mxu0 %v888
        %v1613 = vpop.f32.mrb[0].mxu0
        %v1614 = vadd.f32 %v591, %v1613
        %v1615 = vpop.f32.mrb[0].mxu0
        %v1616 = vadd.f32 %v595, %v1615
        %v1617 = vpop.f32.mrb[0].mxu0
        %v1618 = vadd.f32 %v591, %v1617
        %v1619 = vpop.f32.mrb[0].mxu0
        %v1620 = vadd.f32 %v595, %v1619
        %1621 = vdwg.mxu0
        %v1622 = vmax.f32 %v925, 0.0
        %v1623 = vmax.f32 %v927, 0.0
        %v1624 = vmax.f32 %v1108, 0.0
        %v1625 = vmax.f32 %v1110, 0.0
        %v1626 = vmax.f32 %v1291, 0.0
        %v1627 = vmax.f32 %v1293, 0.0
        %v1628 = vmax.f32 %v1474, 0.0
        %v1629 = vmax.f32 %v1476, 0.0
        %v1630 = vmax.f32 %v929, 0.0
        %v1631 = vmax.f32 %v931, 0.0
        %v1632 = vmax.f32 %v1112, 0.0
        %v1633 = vmax.f32 %v1114, 0.0
        %v1634 = vmax.f32 %v1295, 0.0
        %v1635 = vmax.f32 %v1297, 0.0
        %v1636 = vmax.f32 %v1478, 0.0
        %v1637 = vmax.f32 %v1480, 0.0
        %v1638 = vmax.f32 %v935, 0.0
        %v1639 = vmax.f32 %v937, 0.0
        %v1640 = vmax.f32 %v1118, 0.0
        %v1641 = vmax.f32 %v1120, 0.0
        %v1642 = vmax.f32 %v1301, 0.0
        %v1643 = vmax.f32 %v1303, 0.0
        %v1644 = vmax.f32 %v1484, 0.0
        %v1645 = vmax.f32 %v1486, 0.0
        %v1646 = vmax.f32 %v939, 0.0
        %v1647 = vmax.f32 %v941, 0.0
        %v1648 = vmax.f32 %v1122, 0.0
        %v1649 = vmax.f32 %v1124, 0.0
        %v1650 = vmax.f32 %v1305, 0.0
        %v1651 = vmax.f32 %v1307, 0.0
        %v1652 = vmax.f32 %v1488, 0.0
        %v1653 = vmax.f32 %v1490, 0.0
        %v1654 = vmax.f32 %v945, 0.0
        %v1655 = vmax.f32 %v947, 0.0
        %v1656 = vmax.f32 %v1128, 0.0
        %v1657 = vmax.f32 %v1130, 0.0
        %v1658 = vmax.f32 %v1311, 0.0
        %v1659 = vmax.f32 %v1313, 0.0
        %v1660 = vmax.f32 %v1494, 0.0
        %v1661 = vmax.f32 %v1496, 0.0
        %v1662 = vmax.f32 %v949, 0.0
        %v1663 = vmax.f32 %v951, 0.0
        %v1664 = vmax.f32 %v1132, 0.0
        %v1665 = vmax.f32 %v1134, 0.0
        %v1666 = vmax.f32 %v1315, 0.0
        %v1667 = vmax.f32 %v1317, 0.0
        %v1668 = vmax.f32 %v1498, 0.0
        %v1669 = vmax.f32 %v1500, 0.0
        %v1670 = vmax.f32 %v955, 0.0
        %v1671 = vmax.f32 %v957, 0.0
        %v1672 = vmax.f32 %v1138, 0.0
        %v1673 = vmax.f32 %v1140, 0.0
        %v1674 = vmax.f32 %v1321, 0.0
        %v1675 = vmax.f32 %v1323, 0.0
        %v1676 = vmax.f32 %v1504, 0.0
        %v1677 = vmax.f32 %v1506, 0.0
        %v1678 = vmax.f32 %v959, 0.0
        %v1679 = vmax.f32 %v961, 0.0
        %v1680 = vmax.f32 %v1142, 0.0
        %v1681 = vmax.f32 %v1144, 0.0
        %v1682 = vmax.f32 %v1325, 0.0
        %v1683 = vmax.f32 %v1327, 0.0
        %v1684 = vmax.f32 %v1508, 0.0
        %v1685 = vmax.f32 %v1510, 0.0
        %v1686 = vmax.f32 %v965, 0.0
        %v1687 = vmax.f32 %v967, 0.0
        %v1688 = vmax.f32 %v1148, 0.0
        %v1689 = vmax.f32 %v1150, 0.0
        %v1690 = vmax.f32 %v1331, 0.0
        %v1691 = vmax.f32 %v1333, 0.0
        %v1692 = vmax.f32 %v1514, 0.0
        %v1693 = vmax.f32 %v1516, 0.0
        %v1694 = vmax.f32 %v969, 0.0
        %v1695 = vmax.f32 %v971, 0.0
        %v1696 = vmax.f32 %v1152, 0.0
        %v1697 = vmax.f32 %v1154, 0.0
        %v1698 = vmax.f32 %v1335, 0.0
        %v1699 = vmax.f32 %v1337, 0.0
        %v1700 = vmax.f32 %v1518, 0.0
        %v1701 = vmax.f32 %v1520, 0.0
        %v1702 = vmax.f32 %v975, 0.0
        %v1703 = vmax.f32 %v977, 0.0
        %v1704 = vmax.f32 %v1158, 0.0
        %v1705 = vmax.f32 %v1160, 0.0
        %v1706 = vmax.f32 %v1341, 0.0
        %v1707 = vmax.f32 %v1343, 0.0
        %v1708 = vmax.f32 %v1524, 0.0
        %v1709 = vmax.f32 %v1526, 0.0
        %v1710 = vmax.f32 %v979, 0.0
        %v1711 = vmax.f32 %v981, 0.0
        %v1712 = vmax.f32 %v1162, 0.0
        %v1713 = vmax.f32 %v1164, 0.0
        %v1714 = vmax.f32 %v1345, 0.0
        %v1715 = vmax.f32 %v1347, 0.0
        %v1716 = vmax.f32 %v1528, 0.0
        %v1717 = vmax.f32 %v1530, 0.0
        %v1718 = vmax.f32 %v985, 0.0
        %v1719 = vmax.f32 %v987, 0.0
        %v1720 = vmax.f32 %v1168, 0.0
        %v1721 = vmax.f32 %v1170, 0.0
        %v1722 = vmax.f32 %v1351, 0.0
        %v1723 = vmax.f32 %v1353, 0.0
        %v1724 = vmax.f32 %v1534, 0.0
        %v1725 = vmax.f32 %v1536, 0.0
        %v1726 = vmax.f32 %v989, 0.0
        %v1727 = vmax.f32 %v991, 0.0
        %v1728 = vmax.f32 %v1172, 0.0
        %v1729 = vmax.f32 %v1174, 0.0
        %v1730 = vmax.f32 %v1355, 0.0
        %v1731 = vmax.f32 %v1357, 0.0
        %v1732 = vmax.f32 %v1538, 0.0
        %v1733 = vmax.f32 %v1540, 0.0
        %v1734 = vmax.f32 %v995, 0.0
        %v1735 = vmax.f32 %v997, 0.0
        %v1736 = vmax.f32 %v1178, 0.0
        %v1737 = vmax.f32 %v1180, 0.0
        %v1738 = vmax.f32 %v1361, 0.0
        %v1739 = vmax.f32 %v1363, 0.0
        %v1740 = vmax.f32 %v1544, 0.0
        %v1741 = vmax.f32 %v1546, 0.0
        %v1742 = vmax.f32 %v999, 0.0
        %v1743 = vmax.f32 %v1001, 0.0
        %v1744 = vmax.f32 %v1182, 0.0
        %v1745 = vmax.f32 %v1184, 0.0
        %v1746 = vmax.f32 %v1365, 0.0
        %v1747 = vmax.f32 %v1367, 0.0
        %v1748 = vmax.f32 %v1548, 0.0
        %v1749 = vmax.f32 %v1550, 0.0
        %v1750 = vmax.f32 %v1005, 0.0
        %v1751 = vmax.f32 %v1007, 0.0
        %v1752 = vmax.f32 %v1188, 0.0
        %v1753 = vmax.f32 %v1190, 0.0
        %v1754 = vmax.f32 %v1371, 0.0
        %v1755 = vmax.f32 %v1373, 0.0
        %v1756 = vmax.f32 %v1554, 0.0
        %v1757 = vmax.f32 %v1556, 0.0
        %v1758 = vmax.f32 %v1009, 0.0
        %v1759 = vmax.f32 %v1011, 0.0
        %v1760 = vmax.f32 %v1192, 0.0
        %v1761 = vmax.f32 %v1194, 0.0
        %v1762 = vmax.f32 %v1375, 0.0
        %v1763 = vmax.f32 %v1377, 0.0
        %v1764 = vmax.f32 %v1558, 0.0
        %v1765 = vmax.f32 %v1560, 0.0
        %v1766 = vmax.f32 %v1015, 0.0
        %v1767 = vmax.f32 %v1017, 0.0
        %v1768 = vmax.f32 %v1198, 0.0
        %v1769 = vmax.f32 %v1200, 0.0
        %v1770 = vmax.f32 %v1381, 0.0
        %v1771 = vmax.f32 %v1383, 0.0
        %v1772 = vmax.f32 %v1564, 0.0
        %v1773 = vmax.f32 %v1566, 0.0
        %v1774 = vmax.f32 %v1019, 0.0
        %v1775 = vmax.f32 %v1021, 0.0
        %v1776 = vmax.f32 %v1202, 0.0
        %v1777 = vmax.f32 %v1204, 0.0
        %v1778 = vmax.f32 %v1385, 0.0
        %v1779 = vmax.f32 %v1387, 0.0
        %v1780 = vmax.f32 %v1568, 0.0
        %v1781 = vmax.f32 %v1570, 0.0
        %v1782 = vmax.f32 %v1025, 0.0
        %v1783 = vmax.f32 %v1027, 0.0
        %v1784 = vmax.f32 %v1208, 0.0
        %v1785 = vmax.f32 %v1210, 0.0
        %v1786 = vmax.f32 %v1391, 0.0
        %v1787 = vmax.f32 %v1393, 0.0
        %v1788 = vmax.f32 %v1574, 0.0
        %v1789 = vmax.f32 %v1576, 0.0
        %v1790 = vmax.f32 %v1029, 0.0
        %v1791 = vmax.f32 %v1031, 0.0
        %v1792 = vmax.f32 %v1212, 0.0
        %v1793 = vmax.f32 %v1214, 0.0
        %v1794 = vmax.f32 %v1395, 0.0
        %v1795 = vmax.f32 %v1397, 0.0
        %v1796 = vmax.f32 %v1578, 0.0
        %v1797 = vmax.f32 %v1580, 0.0
        %v1798 = vmax.f32 %v1035, 0.0
        %v1799 = vmax.f32 %v1037, 0.0
        %v1800 = vmax.f32 %v1218, 0.0
        %v1801 = vmax.f32 %v1220, 0.0
        %v1802 = vmax.f32 %v1401, 0.0
        %v1803 = vmax.f32 %v1403, 0.0
        %v1804 = vmax.f32 %v1584, 0.0
        %v1805 = vmax.f32 %v1586, 0.0
        %v1806 = vmax.f32 %v1039, 0.0
        %v1807 = vmax.f32 %v1041, 0.0
        %v1808 = vmax.f32 %v1222, 0.0
        %v1809 = vmax.f32 %v1224, 0.0
        %v1810 = vmax.f32 %v1405, 0.0
        %v1811 = vmax.f32 %v1407, 0.0
        %v1812 = vmax.f32 %v1588, 0.0
        %v1813 = vmax.f32 %v1590, 0.0
        %v1814 = vmax.f32 %v1045, 0.0
        %v1815 = vmax.f32 %v1047, 0.0
        %v1816 = vmax.f32 %v1228, 0.0
        %v1817 = vmax.f32 %v1230, 0.0
        %v1818 = vmax.f32 %v1411, 0.0
        %v1819 = vmax.f32 %v1413, 0.0
        %v1820 = vmax.f32 %v1594, 0.0
        %v1821 = vmax.f32 %v1596, 0.0
        %v1822 = vmax.f32 %v1049, 0.0
        %v1823 = vmax.f32 %v1051, 0.0
        %v1824 = vmax.f32 %v1232, 0.0
        %v1825 = vmax.f32 %v1234, 0.0
        %v1826 = vmax.f32 %v1415, 0.0
        %v1827 = vmax.f32 %v1417, 0.0
        %v1828 = vmax.f32 %v1598, 0.0
        %v1829 = vmax.f32 %v1600, 0.0
        %v1830 = vmax.f32 %v1055, 0.0
        %v1831 = vmax.f32 %v1057, 0.0
        %v1832 = vmax.f32 %v1238, 0.0
        %v1833 = vmax.f32 %v1240, 0.0
        %v1834 = vmax.f32 %v1421, 0.0
        %v1835 = vmax.f32 %v1423, 0.0
        %v1836 = vmax.f32 %v1604, 0.0
        %v1837 = vmax.f32 %v1606, 0.0
        %v1838 = vmax.f32 %v1059, 0.0
        %v1839 = vmax.f32 %v1061, 0.0
        %v1840 = vmax.f32 %v1242, 0.0
        %v1841 = vmax.f32 %v1244, 0.0
        %v1842 = vmax.f32 %v1425, 0.0
        %v1843 = vmax.f32 %v1427, 0.0
        %v1844 = vmax.f32 %v1608, 0.0
        %v1845 = vmax.f32 %v1610, 0.0
        %v1846 = vmax.f32 %v1065, 0.0
        %v1847 = vmax.f32 %v1067, 0.0
        %v1848 = vmax.f32 %v1248, 0.0
        %v1849 = vmax.f32 %v1250, 0.0
        %v1850 = vmax.f32 %v1431, 0.0
        %v1851 = vmax.f32 %v1433, 0.0
        %v1852 = vmax.f32 %v1614, 0.0
        %v1853 = vmax.f32 %v1616, 0.0
        %v1854 = vmax.f32 %v1069, 0.0
        %v1855 = vmax.f32 %v1071, 0.0
        %v1856 = vmax.f32 %v1252, 0.0
        %v1857 = vmax.f32 %v1254, 0.0
        %v1858 = vmax.f32 %v1435, 0.0
        %v1859 = vmax.f32 %v1437, 0.0
        %v1860 = vmax.f32 %v1618, 0.0
        %v1861 = vmax.f32 %v1620, 0.0
        %v1862 = vpack.c.bf16 %v1630, %v1622
        %v1863 = vpack.c.bf16 %v1631, %v1623
        %v1864 = vpack.c.bf16 %v1632, %v1624
        %v1865 = vpack.c.bf16 %v1633, %v1625
        %v1866 = vpack.c.bf16 %v1634, %v1626
        %v1867 = vpack.c.bf16 %v1635, %v1627
        %v1868 = vpack.c.bf16 %v1636, %v1628
        %v1869 = vpack.c.bf16 %v1637, %v1629
        %v1870 = vpack.c.bf16 %v1646, %v1638
        %v1871 = vpack.c.bf16 %v1647, %v1639
        %v1872 = vpack.c.bf16 %v1648, %v1640
        %v1873 = vpack.c.bf16 %v1649, %v1641
        %v1874 = vpack.c.bf16 %v1650, %v1642
        %v1875 = vpack.c.bf16 %v1651, %v1643
        %v1876 = vpack.c.bf16 %v1652, %v1644
        %v1877 = vpack.c.bf16 %v1653, %v1645
        %v1878 = vpack.c.bf16 %v1662, %v1654
        %v1879 = vpack.c.bf16 %v1663, %v1655
        %v1880 = vpack.c.bf16 %v1664, %v1656
        %v1881 = vpack.c.bf16 %v1665, %v1657
        %v1882 = vpack.c.bf16 %v1666, %v1658
        %v1883 = vpack.c.bf16 %v1667, %v1659
        %v1884 = vpack.c.bf16 %v1668, %v1660
        %v1885 = vpack.c.bf16 %v1669, %v1661
        %v1886 = vpack.c.bf16 %v1678, %v1670
        %v1887 = vpack.c.bf16 %v1679, %v1671
        %v1888 = vpack.c.bf16 %v1680, %v1672
        %v1889 = vpack.c.bf16 %v1681, %v1673
        %v1890 = vpack.c.bf16 %v1682, %v1674
        %v1891 = vpack.c.bf16 %v1683, %v1675
        %v1892 = vpack.c.bf16 %v1684, %v1676
        %v1893 = vpack.c.bf16 %v1685, %v1677
        %v1894 = vpack.c.bf16 %v1694, %v1686
        %v1895 = vpack.c.bf16 %v1695, %v1687
        %v1896 = vpack.c.bf16 %v1696, %v1688
        %v1897 = vpack.c.bf16 %v1697, %v1689
        %v1898 = vpack.c.bf16 %v1698, %v1690
        %v1899 = vpack.c.bf16 %v1699, %v1691
        %v1900 = vpack.c.bf16 %v1700, %v1692
        %v1901 = vpack.c.bf16 %v1701, %v1693
        %v1902 = vpack.c.bf16 %v1710, %v1702
        %v1903 = vpack.c.bf16 %v1711, %v1703
        %v1904 = vpack.c.bf16 %v1712, %v1704
        %v1905 = vpack.c.bf16 %v1713, %v1705
        %v1906 = vpack.c.bf16 %v1714, %v1706
        %v1907 = vpack.c.bf16 %v1715, %v1707
        %v1908 = vpack.c.bf16 %v1716, %v1708
        %v1909 = vpack.c.bf16 %v1717, %v1709
        %v1910 = vpack.c.bf16 %v1726, %v1718
        %v1911 = vpack.c.bf16 %v1727, %v1719
        %v1912 = vpack.c.bf16 %v1728, %v1720
        %v1913 = vpack.c.bf16 %v1729, %v1721
        %v1914 = vpack.c.bf16 %v1730, %v1722
        %v1915 = vpack.c.bf16 %v1731, %v1723
        %v1916 = vpack.c.bf16 %v1732, %v1724
        %v1917 = vpack.c.bf16 %v1733, %v1725
        %v1918 = vpack.c.bf16 %v1742, %v1734
        %v1919 = vpack.c.bf16 %v1743, %v1735
        %v1920 = vpack.c.bf16 %v1744, %v1736
        %v1921 = vpack.c.bf16 %v1745, %v1737
        %v1922 = vpack.c.bf16 %v1746, %v1738
        %v1923 = vpack.c.bf16 %v1747, %v1739
        %v1924 = vpack.c.bf16 %v1748, %v1740
        %v1925 = vpack.c.bf16 %v1749, %v1741
        %v1926 = vpack.c.bf16 %v1758, %v1750
        %v1927 = vpack.c.bf16 %v1759, %v1751
        %v1928 = vpack.c.bf16 %v1760, %v1752
        %v1929 = vpack.c.bf16 %v1761, %v1753
        %v1930 = vpack.c.bf16 %v1762, %v1754
        %v1931 = vpack.c.bf16 %v1763, %v1755
        %v1932 = vpack.c.bf16 %v1764, %v1756
        %v1933 = vpack.c.bf16 %v1765, %v1757
        %v1934 = vpack.c.bf16 %v1774, %v1766
        %v1935 = vpack.c.bf16 %v1775, %v1767
        %v1936 = vpack.c.bf16 %v1776, %v1768
        %v1937 = vpack.c.bf16 %v1777, %v1769
        %v1938 = vpack.c.bf16 %v1778, %v1770
        %v1939 = vpack.c.bf16 %v1779, %v1771
        %v1940 = vpack.c.bf16 %v1780, %v1772
        %v1941 = vpack.c.bf16 %v1781, %v1773
        %v1942 = vpack.c.bf16 %v1790, %v1782
        %v1943 = vpack.c.bf16 %v1791, %v1783
        %v1944 = vpack.c.bf16 %v1792, %v1784
        %v1945 = vpack.c.bf16 %v1793, %v1785
        %v1946 = vpack.c.bf16 %v1794, %v1786
        %v1947 = vpack.c.bf16 %v1795, %v1787
        %v1948 = vpack.c.bf16 %v1796, %v1788
        %v1949 = vpack.c.bf16 %v1797, %v1789
        %v1950 = vpack.c.bf16 %v1806, %v1798
        %v1951 = vpack.c.bf16 %v1807, %v1799
        %v1952 = vpack.c.bf16 %v1808, %v1800
        %v1953 = vpack.c.bf16 %v1809, %v1801
        %v1954 = vpack.c.bf16 %v1810, %v1802
        %v1955 = vpack.c.bf16 %v1811, %v1803
        %v1956 = vpack.c.bf16 %v1812, %v1804
        %v1957 = vpack.c.bf16 %v1813, %v1805
        %v1958 = vpack.c.bf16 %v1822, %v1814
        %v1959 = vpack.c.bf16 %v1823, %v1815
        %v1960 = vpack.c.bf16 %v1824, %v1816
        %v1961 = vpack.c.bf16 %v1825, %v1817
        %v1962 = vpack.c.bf16 %v1826, %v1818
        %v1963 = vpack.c.bf16 %v1827, %v1819
        %v1964 = vpack.c.bf16 %v1828, %v1820
        %v1965 = vpack.c.bf16 %v1829, %v1821
        %v1966 = vpack.c.bf16 %v1838, %v1830
        %v1967 = vpack.c.bf16 %v1839, %v1831
        %v1968 = vpack.c.bf16 %v1840, %v1832
        %v1969 = vpack.c.bf16 %v1841, %v1833
        %v1970 = vpack.c.bf16 %v1842, %v1834
        %v1971 = vpack.c.bf16 %v1843, %v1835
        %v1972 = vpack.c.bf16 %v1844, %v1836
        %v1973 = vpack.c.bf16 %v1845, %v1837
        %v1974 = vpack.c.bf16 %v1854, %v1846
        %v1975 = vpack.c.bf16 %v1855, %v1847
        %v1976 = vpack.c.bf16 %v1856, %v1848
        %v1977 = vpack.c.bf16 %v1857, %v1849
        %v1978 = vpack.c.bf16 %v1858, %v1850
        %v1979 = vpack.c.bf16 %v1859, %v1851
        %v1980 = vpack.c.bf16 %v1860, %v1852
        %v1981 = vpack.c.bf16 %v1861, %v1853
        %v1982 = vmax.bf16 %v1862, %v1866
        %v1983 = vmax.bf16 %v1863, %v1867
        %v1984 = vmax.bf16 %v1864, %v1868
        %v1985 = vmax.bf16 %v1865, %v1869
        %v1986 = vmax.bf16 %v1870, %v1874
        %v1987 = vmax.bf16 %v1871, %v1875
        %v1988 = vmax.bf16 %v1872, %v1876
        %v1989 = vmax.bf16 %v1873, %v1877
        %v1990 = vmax.bf16 %v1878, %v1882
        %v1991 = vmax.bf16 %v1879, %v1883
        %v1992 = vmax.bf16 %v1880, %v1884
        %v1993 = vmax.bf16 %v1881, %v1885
        %v1994 = vmax.bf16 %v1886, %v1890
        %v1995 = vmax.bf16 %v1887, %v1891
        %v1996 = vmax.bf16 %v1888, %v1892
        %v1997 = vmax.bf16 %v1889, %v1893
        %v1998 = vmax.bf16 %v1894, %v1898
        %v1999 = vmax.bf16 %v1895, %v1899
        %v2000 = vmax.bf16 %v1896, %v1900
        %v2001 = vmax.bf16 %v1897, %v1901
        %v2002 = vmax.bf16 %v1902, %v1906
        %v2003 = vmax.bf16 %v1903, %v1907
        %v2004 = vmax.bf16 %v1904, %v1908
        %v2005 = vmax.bf16 %v1905, %v1909
        %v2006 = vmax.bf16 %v1910, %v1914
        %v2007 = vmax.bf16 %v1911, %v1915
        %v2008 = vmax.bf16 %v1912, %v1916
        %v2009 = vmax.bf16 %v1913, %v1917
        %v2010 = vmax.bf16 %v1918, %v1922
        %v2011 = vmax.bf16 %v1919, %v1923
        %v2012 = vmax.bf16 %v1920, %v1924
        %v2013 = vmax.bf16 %v1921, %v1925
        %v2014 = vmax.bf16 %v1926, %v1930
        %v2015 = vmax.bf16 %v1927, %v1931
        %v2016 = vmax.bf16 %v1928, %v1932
        %v2017 = vmax.bf16 %v1929, %v1933
        %v2018 = vmax.bf16 %v1934, %v1938
        %v2019 = vmax.bf16 %v1935, %v1939
        %v2020 = vmax.bf16 %v1936, %v1940
        %v2021 = vmax.bf16 %v1937, %v1941
        %v2022 = vmax.bf16 %v1942, %v1946
        %v2023 = vmax.bf16 %v1943, %v1947
        %v2024 = vmax.bf16 %v1944, %v1948
        %v2025 = vmax.bf16 %v1945, %v1949
        %v2026 = vmax.bf16 %v1950, %v1954
        %v2027 = vmax.bf16 %v1951, %v1955
        %v2028 = vmax.bf16 %v1952, %v1956
        %v2029 = vmax.bf16 %v1953, %v1957
        %v2030 = vmax.bf16 %v1958, %v1962
        %v2031 = vmax.bf16 %v1959, %v1963
        %v2032 = vmax.bf16 %v1960, %v1964
        %v2033 = vmax.bf16 %v1961, %v1965
        %v2034 = vmax.bf16 %v1966, %v1970
        %v2035 = vmax.bf16 %v1967, %v1971
        %v2036 = vmax.bf16 %v1968, %v1972
        %v2037 = vmax.bf16 %v1969, %v1973
        %v2038 = vmax.bf16 %v1974, %v1978
        %v2039 = vmax.bf16 %v1975, %v1979
        %v2040 = vmax.bf16 %v1976, %v1980
        %v2041 = vmax.bf16 %v1977, %v1981
        %vm2042 = vsmask.f32 7424
        %v2044 = vshrl.u32 %v1982, 16
        %v2046 = vshll.u32 %v1982, 16
        %v2048 = vrot.slane %v2046, 1
        %v2049 = vor.u32 %v2044, %v2048
        %v2051 = vshll.u32 %v1986, 16
        %v2053 = vrot.slane %v2051, 1
        %v2054 = vsel %vm2042, %v2049, %v2053
        %v2056 = vshrl.u32 %v1983, 16
        %v2058 = vshll.u32 %v1983, 16
        %v2060 = vrot.slane %v2058, 1
        %v2061 = vor.u32 %v2056, %v2060
        %v2063 = vshll.u32 %v1987, 16
        %v2065 = vrot.slane %v2063, 1
        %v2066 = vsel %vm2042, %v2061, %v2065
        %v2068 = vshrl.u32 %v1984, 16
        %v2070 = vshll.u32 %v1984, 16
        %v2072 = vrot.slane %v2070, 1
        %v2073 = vor.u32 %v2068, %v2072
        %v2075 = vshll.u32 %v1988, 16
        %v2077 = vrot.slane %v2075, 1
        %v2078 = vsel %vm2042, %v2073, %v2077
        %v2080 = vshrl.u32 %v1985, 16
        %v2082 = vshll.u32 %v1985, 16
        %v2084 = vrot.slane %v2082, 1
        %v2085 = vor.u32 %v2080, %v2084
        %v2087 = vshll.u32 %v1989, 16
        %v2089 = vrot.slane %v2087, 1
        %v2090 = vsel %vm2042, %v2085, %v2089
        %v2091 = vshrl.u32 %v1986, 16
        %v2093 = vor.u32 %v2091, %v2053
        %v2095 = vshll.u32 %v1990, 16
        %v2097 = vrot.slane %v2095, 1
        %v2098 = vsel %vm2042, %v2093, %v2097
        %v2099 = vshrl.u32 %v1987, 16
        %v2101 = vor.u32 %v2099, %v2065
        %v2103 = vshll.u32 %v1991, 16
        %v2105 = vrot.slane %v2103, 1
        %v2106 = vsel %vm2042, %v2101, %v2105
        %v2107 = vshrl.u32 %v1988, 16
        %v2109 = vor.u32 %v2107, %v2077
        %v2111 = vshll.u32 %v1992, 16
        %v2113 = vrot.slane %v2111, 1
        %v2114 = vsel %vm2042, %v2109, %v2113
        %v2115 = vshrl.u32 %v1989, 16
        %v2117 = vor.u32 %v2115, %v2089
        %v2119 = vshll.u32 %v1993, 16
        %v2121 = vrot.slane %v2119, 1
        %v2122 = vsel %vm2042, %v2117, %v2121
        %v2123 = vshrl.u32 %v1990, 16
        %v2125 = vor.u32 %v2123, %v2097
        %v2127 = vshll.u32 %v1994, 16
        %v2129 = vrot.slane %v2127, 1
        %v2130 = vsel %vm2042, %v2125, %v2129
        %v2131 = vshrl.u32 %v1991, 16
        %v2133 = vor.u32 %v2131, %v2105
        %v2135 = vshll.u32 %v1995, 16
        %v2137 = vrot.slane %v2135, 1
        %v2138 = vsel %vm2042, %v2133, %v2137
        %v2139 = vshrl.u32 %v1992, 16
        %v2141 = vor.u32 %v2139, %v2113
        %v2143 = vshll.u32 %v1996, 16
        %v2145 = vrot.slane %v2143, 1
        %v2146 = vsel %vm2042, %v2141, %v2145
        %v2147 = vshrl.u32 %v1993, 16
        %v2149 = vor.u32 %v2147, %v2121
        %v2151 = vshll.u32 %v1997, 16
        %v2153 = vrot.slane %v2151, 1
        %v2154 = vsel %vm2042, %v2149, %v2153
        %v2155 = vshrl.u32 %v1994, 16
        %v2157 = vor.u32 %v2155, %v2129
        %v2159 = vshll.u32 %v1998, 16
        %v2161 = vrot.slane %v2159, 1
        %v2162 = vsel %vm2042, %v2157, %v2161
        %v2163 = vshrl.u32 %v1995, 16
        %v2165 = vor.u32 %v2163, %v2137
        %v2167 = vshll.u32 %v1999, 16
        %v2169 = vrot.slane %v2167, 1
        %v2170 = vsel %vm2042, %v2165, %v2169
        %v2171 = vshrl.u32 %v1996, 16
        %v2173 = vor.u32 %v2171, %v2145
        %v2175 = vshll.u32 %v2000, 16
        %v2177 = vrot.slane %v2175, 1
        %v2178 = vsel %vm2042, %v2173, %v2177
        %v2179 = vshrl.u32 %v1997, 16
        %v2181 = vor.u32 %v2179, %v2153
        %v2183 = vshll.u32 %v2001, 16
        %v2185 = vrot.slane %v2183, 1
        %v2186 = vsel %vm2042, %v2181, %v2185
        %v2187 = vshrl.u32 %v1998, 16
        %v2189 = vor.u32 %v2187, %v2161
        %v2191 = vshll.u32 %v2002, 16
        %v2193 = vrot.slane %v2191, 1
        %v2194 = vsel %vm2042, %v2189, %v2193
        %v2195 = vshrl.u32 %v1999, 16
        %v2197 = vor.u32 %v2195, %v2169
        %v2199 = vshll.u32 %v2003, 16
        %v2201 = vrot.slane %v2199, 1
        %v2202 = vsel %vm2042, %v2197, %v2201
        %v2203 = vshrl.u32 %v2000, 16
        %v2205 = vor.u32 %v2203, %v2177
        %v2207 = vshll.u32 %v2004, 16
        %v2209 = vrot.slane %v2207, 1
        %v2210 = vsel %vm2042, %v2205, %v2209
        %v2211 = vshrl.u32 %v2001, 16
        %v2213 = vor.u32 %v2211, %v2185
        %v2215 = vshll.u32 %v2005, 16
        %v2217 = vrot.slane %v2215, 1
        %v2218 = vsel %vm2042, %v2213, %v2217
        %v2219 = vshrl.u32 %v2002, 16
        %v2221 = vor.u32 %v2219, %v2193
        %v2223 = vshll.u32 %v2006, 16
        %v2225 = vrot.slane %v2223, 1
        %v2226 = vsel %vm2042, %v2221, %v2225
        %v2227 = vshrl.u32 %v2003, 16
        %v2229 = vor.u32 %v2227, %v2201
        %v2231 = vshll.u32 %v2007, 16
        %v2233 = vrot.slane %v2231, 1
        %v2234 = vsel %vm2042, %v2229, %v2233
        %v2235 = vshrl.u32 %v2004, 16
        %v2237 = vor.u32 %v2235, %v2209
        %v2239 = vshll.u32 %v2008, 16
        %v2241 = vrot.slane %v2239, 1
        %v2242 = vsel %vm2042, %v2237, %v2241
        %v2243 = vshrl.u32 %v2005, 16
        %v2245 = vor.u32 %v2243, %v2217
        %v2247 = vshll.u32 %v2009, 16
        %v2249 = vrot.slane %v2247, 1
        %v2250 = vsel %vm2042, %v2245, %v2249
        %v2251 = vshrl.u32 %v2006, 16
        %v2253 = vor.u32 %v2251, %v2225
        %v2255 = vshll.u32 %v2010, 16
        %v2257 = vrot.slane %v2255, 1
        %v2258 = vsel %vm2042, %v2253, %v2257
        %v2259 = vshrl.u32 %v2007, 16
        %v2261 = vor.u32 %v2259, %v2233
        %v2263 = vshll.u32 %v2011, 16
        %v2265 = vrot.slane %v2263, 1
        %v2266 = vsel %vm2042, %v2261, %v2265
        %v2267 = vshrl.u32 %v2008, 16
        %v2269 = vor.u32 %v2267, %v2241
        %v2271 = vshll.u32 %v2012, 16
        %v2273 = vrot.slane %v2271, 1
        %v2274 = vsel %vm2042, %v2269, %v2273
        %v2275 = vshrl.u32 %v2009, 16
        %v2277 = vor.u32 %v2275, %v2249
        %v2279 = vshll.u32 %v2013, 16
        %v2281 = vrot.slane %v2279, 1
        %v2282 = vsel %vm2042, %v2277, %v2281
        %v2283 = vshrl.u32 %v2010, 16
        %v2285 = vor.u32 %v2283, %v2257
        %v2287 = vshll.u32 %v2014, 16
        %v2289 = vrot.slane %v2287, 1
        %v2290 = vsel %vm2042, %v2285, %v2289
        %v2291 = vshrl.u32 %v2011, 16
        %v2293 = vor.u32 %v2291, %v2265
        %v2295 = vshll.u32 %v2015, 16
        %v2297 = vrot.slane %v2295, 1
        %v2298 = vsel %vm2042, %v2293, %v2297
        %v2299 = vshrl.u32 %v2012, 16
        %v2301 = vor.u32 %v2299, %v2273
        %v2303 = vshll.u32 %v2016, 16
        %v2305 = vrot.slane %v2303, 1
        %v2306 = vsel %vm2042, %v2301, %v2305
        %v2307 = vshrl.u32 %v2013, 16
        %v2309 = vor.u32 %v2307, %v2281
        %v2311 = vshll.u32 %v2017, 16
        %v2313 = vrot.slane %v2311, 1
        %v2314 = vsel %vm2042, %v2309, %v2313
        %v2315 = vshrl.u32 %v2014, 16
        %v2317 = vor.u32 %v2315, %v2289
        %v2319 = vshll.u32 %v2018, 16
        %v2321 = vrot.slane %v2319, 1
        %v2322 = vsel %vm2042, %v2317, %v2321
        %v2323 = vshrl.u32 %v2015, 16
        %v2325 = vor.u32 %v2323, %v2297
        %v2327 = vshll.u32 %v2019, 16
        %v2329 = vrot.slane %v2327, 1
        %v2330 = vsel %vm2042, %v2325, %v2329
        %v2331 = vshrl.u32 %v2016, 16
        %v2333 = vor.u32 %v2331, %v2305
        %v2335 = vshll.u32 %v2020, 16
        %v2337 = vrot.slane %v2335, 1
        %v2338 = vsel %vm2042, %v2333, %v2337
        %v2339 = vshrl.u32 %v2017, 16
        %v2341 = vor.u32 %v2339, %v2313
        %v2343 = vshll.u32 %v2021, 16
        %v2345 = vrot.slane %v2343, 1
        %v2346 = vsel %vm2042, %v2341, %v2345
        %v2347 = vshrl.u32 %v2018, 16
        %v2349 = vor.u32 %v2347, %v2321
        %v2351 = vshll.u32 %v2022, 16
        %v2353 = vrot.slane %v2351, 1
        %v2354 = vsel %vm2042, %v2349, %v2353
        %v2355 = vshrl.u32 %v2019, 16
        %v2357 = vor.u32 %v2355, %v2329
        %v2359 = vshll.u32 %v2023, 16
        %v2361 = vrot.slane %v2359, 1
        %v2362 = vsel %vm2042, %v2357, %v2361
        %v2363 = vshrl.u32 %v2020, 16
        %v2365 = vor.u32 %v2363, %v2337
        %v2367 = vshll.u32 %v2024, 16
        %v2369 = vrot.slane %v2367, 1
        %v2370 = vsel %vm2042, %v2365, %v2369
        %v2371 = vshrl.u32 %v2021, 16
        %v2373 = vor.u32 %v2371, %v2345
        %v2375 = vshll.u32 %v2025, 16
        %v2377 = vrot.slane %v2375, 1
        %v2378 = vsel %vm2042, %v2373, %v2377
        %v2379 = vshrl.u32 %v2022, 16
        %v2381 = vor.u32 %v2379, %v2353
        %v2383 = vshll.u32 %v2026, 16
        %v2385 = vrot.slane %v2383, 1
        %v2386 = vsel %vm2042, %v2381, %v2385
        %v2387 = vshrl.u32 %v2023, 16
        %v2389 = vor.u32 %v2387, %v2361
        %v2391 = vshll.u32 %v2027, 16
        %v2393 = vrot.slane %v2391, 1
        %v2394 = vsel %vm2042, %v2389, %v2393
        %v2395 = vshrl.u32 %v2024, 16
        %v2397 = vor.u32 %v2395, %v2369
        %v2399 = vshll.u32 %v2028, 16
        %v2401 = vrot.slane %v2399, 1
        %v2402 = vsel %vm2042, %v2397, %v2401
        %v2403 = vshrl.u32 %v2025, 16
        %v2405 = vor.u32 %v2403, %v2377
        %v2407 = vshll.u32 %v2029, 16
        %v2409 = vrot.slane %v2407, 1
        %v2410 = vsel %vm2042, %v2405, %v2409
        %v2411 = vshrl.u32 %v2026, 16
        %v2413 = vor.u32 %v2411, %v2385
        %v2415 = vshll.u32 %v2030, 16
        %v2417 = vrot.slane %v2415, 1
        %v2418 = vsel %vm2042, %v2413, %v2417
        %v2419 = vshrl.u32 %v2027, 16
        %v2421 = vor.u32 %v2419, %v2393
        %v2423 = vshll.u32 %v2031, 16
        %v2425 = vrot.slane %v2423, 1
        %v2426 = vsel %vm2042, %v2421, %v2425
        %v2427 = vshrl.u32 %v2028, 16
        %v2429 = vor.u32 %v2427, %v2401
        %v2431 = vshll.u32 %v2032, 16
        %v2433 = vrot.slane %v2431, 1
        %v2434 = vsel %vm2042, %v2429, %v2433
        %v2435 = vshrl.u32 %v2029, 16
        %v2437 = vor.u32 %v2435, %v2409
        %v2439 = vshll.u32 %v2033, 16
        %v2441 = vrot.slane %v2439, 1
        %v2442 = vsel %vm2042, %v2437, %v2441
        %v2443 = vshrl.u32 %v2030, 16
        %v2445 = vor.u32 %v2443, %v2417
        %v2447 = vshll.u32 %v2034, 16
        %v2449 = vrot.slane %v2447, 1
        %v2450 = vsel %vm2042, %v2445, %v2449
        %v2451 = vshrl.u32 %v2031, 16
        %v2453 = vor.u32 %v2451, %v2425
        %v2455 = vshll.u32 %v2035, 16
        %v2457 = vrot.slane %v2455, 1
        %v2458 = vsel %vm2042, %v2453, %v2457
        %v2459 = vshrl.u32 %v2032, 16
        %v2461 = vor.u32 %v2459, %v2433
        %v2463 = vshll.u32 %v2036, 16
        %v2465 = vrot.slane %v2463, 1
        %v2466 = vsel %vm2042, %v2461, %v2465
        %v2467 = vshrl.u32 %v2033, 16
        %v2469 = vor.u32 %v2467, %v2441
        %v2471 = vshll.u32 %v2037, 16
        %v2473 = vrot.slane %v2471, 1
        %v2474 = vsel %vm2042, %v2469, %v2473
        %v2475 = vshrl.u32 %v2034, 16
        %v2477 = vor.u32 %v2475, %v2449
        %v2479 = vshll.u32 %v2038, 16
        %v2481 = vrot.slane %v2479, 1
        %v2482 = vsel %vm2042, %v2477, %v2481
        %v2483 = vshrl.u32 %v2035, 16
        %v2485 = vor.u32 %v2483, %v2457
        %v2487 = vshll.u32 %v2039, 16
        %v2489 = vrot.slane %v2487, 1
        %v2490 = vsel %vm2042, %v2485, %v2489
        %v2491 = vshrl.u32 %v2036, 16
        %v2493 = vor.u32 %v2491, %v2465
        %v2495 = vshll.u32 %v2040, 16
        %v2497 = vrot.slane %v2495, 1
        %v2498 = vsel %vm2042, %v2493, %v2497
        %v2499 = vshrl.u32 %v2037, 16
        %v2501 = vor.u32 %v2499, %v2473
        %v2503 = vshll.u32 %v2041, 16
        %v2505 = vrot.slane %v2503, 1
        %v2506 = vsel %vm2042, %v2501, %v2505
        %v2507 = vshrl.u32 %v2038, 16
        %v2509 = vor.u32 %v2507, %v2481
        %v2510 = vshrl.u32 %v2039, 16
        %v2512 = vor.u32 %v2510, %v2489
        %v2513 = vshrl.u32 %v2040, 16
        %v2515 = vor.u32 %v2513, %v2497
        %v2516 = vshrl.u32 %v2041, 16
        %v2518 = vor.u32 %v2516, %v2505
        %v2579 = vmax.bf16 %v1982, %v2054
        %v2580 = vmax.bf16 %v1983, %v2066
        %v2581 = vmax.bf16 %v1984, %v2078
        %v2582 = vmax.bf16 %v1985, %v2090
        %v2583 = vmax.bf16 %v1986, %v2098
        %v2584 = vmax.bf16 %v1987, %v2106
        %v2585 = vmax.bf16 %v1988, %v2114
        %v2586 = vmax.bf16 %v1989, %v2122
        %v2587 = vmax.bf16 %v1990, %v2130
        %v2588 = vmax.bf16 %v1991, %v2138
        %v2589 = vmax.bf16 %v1992, %v2146
        %v2590 = vmax.bf16 %v1993, %v2154
        %v2591 = vmax.bf16 %v1994, %v2162
        %v2592 = vmax.bf16 %v1995, %v2170
        %v2593 = vmax.bf16 %v1996, %v2178
        %v2594 = vmax.bf16 %v1997, %v2186
        %v2595 = vmax.bf16 %v1998, %v2194
        %v2596 = vmax.bf16 %v1999, %v2202
        %v2597 = vmax.bf16 %v2000, %v2210
        %v2598 = vmax.bf16 %v2001, %v2218
        %v2599 = vmax.bf16 %v2002, %v2226
        %v2600 = vmax.bf16 %v2003, %v2234
        %v2601 = vmax.bf16 %v2004, %v2242
        %v2602 = vmax.bf16 %v2005, %v2250
        %v2603 = vmax.bf16 %v2006, %v2258
        %v2604 = vmax.bf16 %v2007, %v2266
        %v2605 = vmax.bf16 %v2008, %v2274
        %v2606 = vmax.bf16 %v2009, %v2282
        %v2607 = vmax.bf16 %v2010, %v2290
        %v2608 = vmax.bf16 %v2011, %v2298
        %v2609 = vmax.bf16 %v2012, %v2306
        %v2610 = vmax.bf16 %v2013, %v2314
        %v2611 = vmax.bf16 %v2014, %v2322
        %v2612 = vmax.bf16 %v2015, %v2330
        %v2613 = vmax.bf16 %v2016, %v2338
        %v2614 = vmax.bf16 %v2017, %v2346
        %v2615 = vmax.bf16 %v2018, %v2354
        %v2616 = vmax.bf16 %v2019, %v2362
        %v2617 = vmax.bf16 %v2020, %v2370
        %v2618 = vmax.bf16 %v2021, %v2378
        %v2619 = vmax.bf16 %v2022, %v2386
        %v2620 = vmax.bf16 %v2023, %v2394
        %v2621 = vmax.bf16 %v2024, %v2402
        %v2622 = vmax.bf16 %v2025, %v2410
        %v2623 = vmax.bf16 %v2026, %v2418
        %v2624 = vmax.bf16 %v2027, %v2426
        %v2625 = vmax.bf16 %v2028, %v2434
        %v2626 = vmax.bf16 %v2029, %v2442
        %v2627 = vmax.bf16 %v2030, %v2450
        %v2628 = vmax.bf16 %v2031, %v2458
        %v2629 = vmax.bf16 %v2032, %v2466
        %v2630 = vmax.bf16 %v2033, %v2474
        %v2631 = vmax.bf16 %v2034, %v2482
        %v2632 = vmax.bf16 %v2035, %v2490
        %v2633 = vmax.bf16 %v2036, %v2498
        %v2634 = vmax.bf16 %v2037, %v2506
        %v2635 = vmax.bf16 %v2038, %v2509
        %v2636 = vmax.bf16 %v2039, %v2512
        %v2637 = vmax.bf16 %v2040, %v2515
        %v2638 = vmax.bf16 %v2041, %v2518
        %v2639 = vld [vmem:[%s3] sm:$0xff]
        %v2640 = vld [vmem:[%s3 + $0x8] sm:$0xff]
        %v2641 = vld [vmem:[%s3 + $0x10] sm:$0xff]
        %v2642 = vld [vmem:[%s3 + $0x18] sm:$0xff]
        %v2643 = vld [vmem:[%s3 + $0x20] sm:$0xff]
        %v2644 = vld [vmem:[%s3 + $0x28] sm:$0xff]
        %v2645 = vld [vmem:[%s3 + $0x30] sm:$0xff]
        %v2646 = vld [vmem:[%s3 + $0x38] sm:$0xff]
        %v2647 = vld [vmem:[%s3 + $0x40] sm:$0xff]
        %v2648 = vld [vmem:[%s3 + $0x48] sm:$0xff]
        %v2649 = vld [vmem:[%s3 + $0x50] sm:$0xff]
        %v2650 = vld [vmem:[%s3 + $0x58] sm:$0xff]
        %v2651 = vld [vmem:[%s3 + $0x60] sm:$0xff]
        %v2652 = vld [vmem:[%s3 + $0x68] sm:$0xff]
        %v2653 = vld [vmem:[%s3 + $0x70] sm:$0xff]
        %v2669 = vunpack.c.l.b16 %v2639
        %v2670 = vunpack.c.h.b16 %v2639
        %v2671 = vunpack.c.l.b16 %v2640
        %v2672 = vunpack.c.h.b16 %v2640
        %v2673 = vunpack.c.l.b16 %v2641
        %v2674 = vunpack.c.h.b16 %v2641
        %v2675 = vunpack.c.l.b16 %v2642
        %v2676 = vunpack.c.h.b16 %v2642
        %v2677 = vunpack.c.l.b16 %v2643
        %v2678 = vunpack.c.h.b16 %v2643
        %v2679 = vunpack.c.l.b16 %v2644
        %v2680 = vunpack.c.h.b16 %v2644
        %v2681 = vunpack.c.l.b16 %v2645
        %v2682 = vunpack.c.h.b16 %v2645
        %v2683 = vunpack.c.l.b16 %v2646
        %v2684 = vunpack.c.h.b16 %v2646
        %v2685 = vunpack.c.l.b16 %v2647
        %v2686 = vunpack.c.h.b16 %v2647
        %v2687 = vunpack.c.l.b16 %v2648
        %v2688 = vunpack.c.h.b16 %v2648
        %v2689 = vunpack.c.l.b16 %v2649
        %v2690 = vunpack.c.h.b16 %v2649
        %v2691 = vunpack.c.l.b16 %v2650
        %v2692 = vunpack.c.h.b16 %v2650
        %v2693 = vunpack.c.l.b16 %v2651
        %v2694 = vunpack.c.h.b16 %v2651
        %v2695 = vunpack.c.l.b16 %v2652
        %v2696 = vunpack.c.h.b16 %v2652
        %v2697 = vunpack.c.l.b16 %v2653
        %v2698 = vunpack.c.h.b16 %v2653
        %v2699 = vpack.c.b16 %v2671, %v2669
        %v2700 = vpack.c.b16 %v2672, %v2670
        %v2701 = vpack.c.b16 %v2675, %v2673
        %v2702 = vpack.c.b16 %v2676, %v2674
        %v2703 = vpack.c.b16 %v2679, %v2677
        %v2704 = vpack.c.b16 %v2680, %v2678
        %v2705 = vpack.c.b16 %v2683, %v2681
        %v2706 = vpack.c.b16 %v2684, %v2682
        %v2707 = vpack.c.b16 %v2687, %v2685
        %v2708 = vpack.c.b16 %v2688, %v2686
        %v2709 = vpack.c.b16 %v2691, %v2689
        %v2710 = vpack.c.b16 %v2692, %v2690
        %v2711 = vpack.c.b16 %v2695, %v2693
        %v2712 = vpack.c.b16 %v2696, %v2694
        %v2713 = vpack.c.b16 %v2697, %v2697
        %v2714 = vpack.c.b16 %v2698, %v2698
        %vm2723 = vcmask 908288
        %v2725 = vsel %vm2723, %v2700, 0
        %v2728 = vsel %vm2723, %v2702, 0
        %v2731 = vsel %vm2723, %v2704, 0
        %v2734 = vsel %vm2723, %v2706, 0
        %v2737 = vsel %vm2723, %v2708, 0
        %v2740 = vsel %vm2723, %v2710, 0
        %v2743 = vsel %vm2723, %v2712, 0
        %v2746 = vsel %vm2723, %v2714, 0
        %vm2748 = vcmask 1046528
        %vm2749 = vcmask 1047552
        %v2750 = vsel %vm2748, 4294967295, 65535
        %v2751 = vsel %vm2749, %v2750, 0
        %v2753 = vand.u32 %v2635, %v2751
        %v2756 = vand.u32 %v2636, %v2751
        %v2759 = vand.u32 %v2637, %v2751
        %v2762 = vand.u32 %v2638, %v2751
        %2764 = vmatprep.subr.bf16.mxu0 %v2580
        %2765 = vmatpush1.bf16.msra.mxu0 %v2579
        %2766 = vmatprep.subr.bf16.mxu0 %v2584
        %2767 = vmatpush1.bf16.msra.mxu0 %v2583
        %2768 = vmatprep.subr.bf16.mxu0 %v2588
        %2769 = vmatpush1.bf16.msra.mxu0 %v2587
        %2770 = vmatprep.subr.bf16.mxu0 %v2592
        %2771 = vmatpush1.bf16.msra.mxu0 %v2591
        %2772 = vmatprep.subr.bf16.mxu0 %v2596
        %2773 = vmatpush1.bf16.msra.mxu0 %v2595
        %2774 = vmatprep.subr.bf16.mxu0 %v2600
        %2775 = vmatpush1.bf16.msra.mxu0 %v2599
        %2776 = vmatprep.subr.bf16.mxu0 %v2604
        %2777 = vmatpush1.bf16.msra.mxu0 %v2603
        %2778 = vmatprep.subr.bf16.mxu0 %v2608
        %2779 = vmatpush1.bf16.msra.mxu0 %v2607
        %2780 = vmatprep.subr.bf16.mxu0 %v2612
        %2781 = vmatpush1.bf16.msra.mxu0 %v2611
        %2782 = vmatprep.subr.bf16.mxu0 %v2616
        %2783 = vmatpush1.bf16.msra.mxu0 %v2615
        %2784 = vmatprep.subr.bf16.mxu0 %v2620
        %2785 = vmatpush1.bf16.msra.mxu0 %v2619
        %2786 = vmatprep.subr.bf16.mxu0 %v2624
        %2787 = vmatpush1.bf16.msra.mxu0 %v2623
        %2788 = vmatprep.subr.bf16.mxu0 %v2628
        %2789 = vmatpush1.bf16.msra.mxu0 %v2627
        %2790 = vmatprep.subr.bf16.mxu0 %v2632
        %2791 = vmatpush1.bf16.msra.mxu0 %v2631
        %2792 = vmatprep.subr.bf16.mxu0 %v2756
        %2793 = vmatpush1.bf16.msra.mxu0 %v2753
        %2794 = vmatprep.subr.bf16.mxu0 0
        %2795 = vmatpush1.bf16.msra.mxu0 0
        %2796 = vmatprep.mubr.bf16.mxu0 %v2725
        %2797 = vmatmul.mubr.bf16.gmra.mrb[0].mxu0 %v2699
        %v2798 = vpop.f32.mrb[0].mxu0
        %v2799 = vadd.f32 0.0, %v2798
        %v2800 = vpop.f32.mrb[0].mxu0
        %v2801 = vadd.f32 0.0, %v2800
        %v2802 = vpop.f32.mrb[0].mxu0
        %v2803 = vadd.f32 0.0, %v2802
        %v2804 = vpop.f32.mrb[0].mxu0
        %v2805 = vadd.f32 0.0, %v2804
        %2806 = vmatprep.mubr.bf16.mxu0 %v2728
        %2807 = vmatmul.mubr.bf16.gmra.mrb[0].mxu0 %v2701
        %v2808 = vpop.f32.mrb[0].mxu0
        %v2809 = vadd.f32 0.0, %v2808
        %v2810 = vpop.f32.mrb[0].mxu0
        %v2811 = vadd.f32 0.0, %v2810
        %v2812 = vpop.f32.mrb[0].mxu0
        %v2813 = vadd.f32 0.0, %v2812
        %v2814 = vpop.f32.mrb[0].mxu0
        %v2815 = vadd.f32 0.0, %v2814
        %2816 = vmatprep.mubr.bf16.mxu0 %v2731
        %2817 = vmatmul.mubr.bf16.gmra.mrb[0].mxu0 %v2703
        %v2818 = vpop.f32.mrb[0].mxu0
        %v2819 = vadd.f32 0.0, %v2818
        %v2820 = vpop.f32.mrb[0].mxu0
        %v2821 = vadd.f32 0.0, %v2820
        %v2822 = vpop.f32.mrb[0].mxu0
        %v2823 = vadd.f32 0.0, %v2822
        %v2824 = vpop.f32.mrb[0].mxu0
        %v2825 = vadd.f32 0.0, %v2824
        %2826 = vmatprep.mubr.bf16.mxu0 %v2734
        %2827 = vmatmul.mubr.bf16.gmra.mrb[0].mxu0 %v2705
        %v2828 = vpop.f32.mrb[0].mxu0
        %v2829 = vadd.f32 0.0, %v2828
        %v2830 = vpop.f32.mrb[0].mxu0
        %v2831 = vadd.f32 0.0, %v2830
        %v2832 = vpop.f32.mrb[0].mxu0
        %v2833 = vadd.f32 0.0, %v2832
        %v2834 = vpop.f32.mrb[0].mxu0
        %v2835 = vadd.f32 0.0, %v2834
        %2836 = vmatprep.mubr.bf16.mxu0 %v2737
        %2837 = vmatmul.mubr.bf16.gmra.mrb[0].mxu0 %v2707
        %v2838 = vpop.f32.mrb[0].mxu0
        %v2839 = vadd.f32 0.0, %v2838
        %v2840 = vpop.f32.mrb[0].mxu0
        %v2841 = vadd.f32 0.0, %v2840
        %v2842 = vpop.f32.mrb[0].mxu0
        %v2843 = vadd.f32 0.0, %v2842
        %v2844 = vpop.f32.mrb[0].mxu0
        %v2845 = vadd.f32 0.0, %v2844
        %2846 = vmatprep.mubr.bf16.mxu0 %v2740
        %2847 = vmatmul.mubr.bf16.gmra.mrb[0].mxu0 %v2709
        %v2848 = vpop.f32.mrb[0].mxu0
        %v2849 = vadd.f32 0.0, %v2848
        %v2850 = vpop.f32.mrb[0].mxu0
        %v2851 = vadd.f32 0.0, %v2850
        %v2852 = vpop.f32.mrb[0].mxu0
        %v2853 = vadd.f32 0.0, %v2852
        %v2854 = vpop.f32.mrb[0].mxu0
        %v2855 = vadd.f32 0.0, %v2854
        %2856 = vmatprep.mubr.bf16.mxu0 %v2743
        %2857 = vmatmul.mubr.bf16.gmra.mrb[0].mxu0 %v2711
        %v2858 = vpop.f32.mrb[0].mxu0
        %v2859 = vadd.f32 0.0, %v2858
        %v2860 = vpop.f32.mrb[0].mxu0
        %v2861 = vadd.f32 0.0, %v2860
        %v2862 = vpop.f32.mrb[0].mxu0
        %v2863 = vadd.f32 0.0, %v2862
        %v2864 = vpop.f32.mrb[0].mxu0
        %v2865 = vadd.f32 0.0, %v2864
        %2866 = vmatprep.mubr.bf16.mxu0 %v2746
        %2867 = vmatmul.mubr.bf16.gmra.mrb[0].mxu0 %v2713
        %v2868 = vpop.f32.mrb[0].mxu0
        %v2869 = vadd.f32 0.0, %v2868
        %v2870 = vpop.f32.mrb[0].mxu0
        %v2871 = vadd.f32 0.0, %v2870
        %v2872 = vpop.f32.mrb[0].mxu0
        %v2873 = vpop.f32.mrb[0].mxu0
        %2874 = vdwg.mxu0
        %2875 = vmatprep.subr.bf16.mxu0 %v2582
        %2876 = vmatpush1.bf16.msra.mxu0 %v2581
        %2877 = vmatprep.subr.bf16.mxu0 %v2586
        %2878 = vmatpush1.bf16.msra.mxu0 %v2585
        %2879 = vmatprep.subr.bf16.mxu0 %v2590
        %2880 = vmatpush1.bf16.msra.mxu0 %v2589
        %2881 = vmatprep.subr.bf16.mxu0 %v2594
        %2882 = vmatpush1.bf16.msra.mxu0 %v2593
        %2883 = vmatprep.subr.bf16.mxu0 %v2598
        %2884 = vmatpush1.bf16.msra.mxu0 %v2597
        %2885 = vmatprep.subr.bf16.mxu0 %v2602
        %2886 = vmatpush1.bf16.msra.mxu0 %v2601
        %2887 = vmatprep.subr.bf16.mxu0 %v2606
        %2888 = vmatpush1.bf16.msra.mxu0 %v2605
        %2889 = vmatprep.subr.bf16.mxu0 %v2610
        %2890 = vmatpush1.bf16.msra.mxu0 %v2609
        %2891 = vmatprep.subr.bf16.mxu0 %v2614
        %2892 = vmatpush1.bf16.msra.mxu0 %v2613
        %2893 = vmatprep.subr.bf16.mxu0 %v2618
        %2894 = vmatpush1.bf16.msra.mxu0 %v2617
        %2895 = vmatprep.subr.bf16.mxu0 %v2622
        %2896 = vmatpush1.bf16.msra.mxu0 %v2621
        %2897 = vmatprep.subr.bf16.mxu0 %v2626
        %2898 = vmatpush1.bf16.msra.mxu0 %v2625
        %2899 = vmatprep.subr.bf16.mxu0 %v2630
        %2900 = vmatpush1.bf16.msra.mxu0 %v2629
        %2901 = vmatprep.subr.bf16.mxu0 %v2634
        %2902 = vmatpush1.bf16.msra.mxu0 %v2633
        %2903 = vmatprep.subr.bf16.mxu0 %v2762
        %2904 = vmatpush1.bf16.msra.mxu0 %v2759
        %2905 = vmatprep.subr.bf16.mxu0 0
        %2906 = vmatpush1.bf16.msra.mxu0 0
        %2907 = vmatprep.mubr.bf16.mxu0 %v2725
        %2908 = vmatmul.mubr.bf16.gmra.mrb[0].mxu0 %v2699
        %v2909 = vpop.f32.mrb[0].mxu0
        %v2910 = vadd.f32 0.0, %v2909
        %v2911 = vpop.f32.mrb[0].mxu0
        %v2912 = vadd.f32 0.0, %v2911
        %v2913 = vpop.f32.mrb[0].mxu0
        %v2914 = vadd.f32 0.0, %v2913
        %v2915 = vpop.f32.mrb[0].mxu0
        %v2916 = vadd.f32 0.0, %v2915
        %2917 = vmatprep.mubr.bf16.mxu0 %v2728
        %2918 = vmatmul.mubr.bf16.gmra.mrb[0].mxu0 %v2701
        %v2919 = vpop.f32.mrb[0].mxu0
        %v2920 = vadd.f32 0.0, %v2919
        %v2921 = vpop.f32.mrb[0].mxu0
        %v2922 = vadd.f32 0.0, %v2921
        %v2923 = vpop.f32.mrb[0].mxu0
        %v2924 = vadd.f32 0.0, %v2923
        %v2925 = vpop.f32.mrb[0].mxu0
        %v2926 = vadd.f32 0.0, %v2925
        %2927 = vmatprep.mubr.bf16.mxu0 %v2731
        %2928 = vmatmul.mubr.bf16.gmra.mrb[0].mxu0 %v2703
        %v2929 = vpop.f32.mrb[0].mxu0
        %v2930 = vadd.f32 0.0, %v2929
        %v2931 = vpop.f32.mrb[0].mxu0
        %v2932 = vadd.f32 0.0, %v2931
        %v2933 = vpop.f32.mrb[0].mxu0
        %v2934 = vadd.f32 0.0, %v2933
        %v2935 = vpop.f32.mrb[0].mxu0
        %v2936 = vadd.f32 0.0, %v2935
        %2937 = vmatprep.mubr.bf16.mxu0 %v2734
        %2938 = vmatmul.mubr.bf16.gmra.mrb[0].mxu0 %v2705
        %v2939 = vpop.f32.mrb[0].mxu0
        %v2940 = vadd.f32 0.0, %v2939
        %v2941 = vpop.f32.mrb[0].mxu0
        %v2942 = vadd.f32 0.0, %v2941
        %v2943 = vpop.f32.mrb[0].mxu0
        %v2944 = vadd.f32 0.0, %v2943
        %v2945 = vpop.f32.mrb[0].mxu0
        %v2946 = vadd.f32 0.0, %v2945
        %2947 = vmatprep.mubr.bf16.mxu0 %v2737
        %2948 = vmatmul.mubr.bf16.gmra.mrb[0].mxu0 %v2707
        %v2949 = vpop.f32.mrb[0].mxu0
        %v2950 = vadd.f32 0.0, %v2949
        %v2951 = vpop.f32.mrb[0].mxu0
        %v2952 = vadd.f32 0.0, %v2951
        %v2953 = vpop.f32.mrb[0].mxu0
        %v2954 = vadd.f32 0.0, %v2953
        %v2955 = vpop.f32.mrb[0].mxu0
        %v2956 = vadd.f32 0.0, %v2955
        %2957 = vmatprep.mubr.bf16.mxu0 %v2740
        %2958 = vmatmul.mubr.bf16.gmra.mrb[0].mxu0 %v2709
        %v2959 = vpop.f32.mrb[0].mxu0
        %v2960 = vadd.f32 0.0, %v2959
        %v2961 = vpop.f32.mrb[0].mxu0
        %v2962 = vadd.f32 0.0, %v2961
        %v2963 = vpop.f32.mrb[0].mxu0
        %v2964 = vadd.f32 0.0, %v2963
        %v2965 = vpop.f32.mrb[0].mxu0
        %v2966 = vadd.f32 0.0, %v2965
        %2967 = vmatprep.mubr.bf16.mxu0 %v2743
        %2968 = vmatmul.mubr.bf16.gmra.mrb[0].mxu0 %v2711
        %v2969 = vpop.f32.mrb[0].mxu0
        %v2970 = vadd.f32 0.0, %v2969
        %v2971 = vpop.f32.mrb[0].mxu0
        %v2972 = vadd.f32 0.0, %v2971
        %v2973 = vpop.f32.mrb[0].mxu0
        %v2974 = vadd.f32 0.0, %v2973
        %v2975 = vpop.f32.mrb[0].mxu0
        %v2976 = vadd.f32 0.0, %v2975
        %2977 = vmatprep.mubr.bf16.mxu0 %v2746
        %2978 = vmatmul.mubr.bf16.gmra.mrb[0].mxu0 %v2713
        %v2979 = vpop.f32.mrb[0].mxu0
        %v2980 = vadd.f32 0.0, %v2979
        %v2981 = vpop.f32.mrb[0].mxu0
        %v2982 = vadd.f32 0.0, %v2981
        %v2983 = vpop.f32.mrb[0].mxu0
        %v2984 = vpop.f32.mrb[0].mxu0
        %2985 = vdwg.mxu0
        %v2986 = vpack.c.bf16 %v2803, %v2799
        %v2987 = vpack.c.bf16 %v2805, %v2801
        %v2988 = vpack.c.bf16 %v2914, %v2910
        %v2989 = vpack.c.bf16 %v2916, %v2912
        %v2990 = vpack.c.bf16 %v2813, %v2809
        %v2991 = vpack.c.bf16 %v2815, %v2811
        %v2992 = vpack.c.bf16 %v2924, %v2920
        %v2993 = vpack.c.bf16 %v2926, %v2922
        %v2994 = vpack.c.bf16 %v2823, %v2819
        %v2995 = vpack.c.bf16 %v2825, %v2821
        %v2996 = vpack.c.bf16 %v2934, %v2930
        %v2997 = vpack.c.bf16 %v2936, %v2932
        %v2998 = vpack.c.bf16 %v2833, %v2829
        %v2999 = vpack.c.bf16 %v2835, %v2831
        %v3000 = vpack.c.bf16 %v2944, %v2940
        %v3001 = vpack.c.bf16 %v2946, %v2942
        %v3002 = vpack.c.bf16 %v2843, %v2839
        %v3003 = vpack.c.bf16 %v2845, %v2841
        %v3004 = vpack.c.bf16 %v2954, %v2950
        %v3005 = vpack.c.bf16 %v2956, %v2952
        %v3006 = vpack.c.bf16 %v2853, %v2849
        %v3007 = vpack.c.bf16 %v2855, %v2851
        %v3008 = vpack.c.bf16 %v2964, %v2960
        %v3009 = vpack.c.bf16 %v2966, %v2962
        %v3010 = vpack.c.bf16 %v2863, %v2859
        %v3011 = vpack.c.bf16 %v2865, %v2861
        %v3012 = vpack.c.bf16 %v2974, %v2970
        %v3013 = vpack.c.bf16 %v2976, %v2972
        %v3014 = vpack.c.bf16 %v2869, %v2869
        %v3015 = vpack.c.bf16 %v2871, %v2871
        %v3016 = vpack.c.bf16 %v2980, %v2980
        %v3017 = vpack.c.bf16 %v2982, %v2982
        %v3018 = vld [vmem:[%s5] sm:$0x3f]
        %v3019 = vld [vmem:[%s4] sm:$0xff]
        %v3020 = vld [vmem:[%s4 + $0x8] sm:$0xff]
        %v3021 = vld [vmem:[%s4 + $0x10] sm:$0xff]
        %v3022 = vld [vmem:[%s4 + $0x18] sm:$0xff]
        %v3023 = vld [vmem:[%s4 + $0x20] sm:$0xff]
        %v3024 = vld [vmem:[%s4 + $0x28] sm:$0xff]
        %v3025 = vld [vmem:[%s4 + $0x30] sm:$0xff]
        %v3026 = vld [vmem:[%s4 + $0x38] sm:$0xff]
        %v3027 = vld [vmem:[%s4 + $0x40] sm:$0xff]
        %v3028 = vld [vmem:[%s4 + $0x48] sm:$0xff]
        %v3029 = vld [vmem:[%s4 + $0x50] sm:$0xff]
        %v3030 = vld [vmem:[%s4 + $0x58] sm:$0xff]
        %v3031 = vld [vmem:[%s4 + $0x60] sm:$0xff]
        %v3032 = vld [vmem:[%s4 + $0x68] sm:$0xff]
        %v3033 = vld [vmem:[%s4 + $0x70] sm:$0xff]
        %v3034 = vld [vmem:[%s4 + $0x78] sm:$0xff]
        %v3035 = vld [vmem:[%s4 + $0x80] sm:$0xff]
        %v3036 = vld [vmem:[%s4 + $0x88] sm:$0xff]
        %v3037 = vld [vmem:[%s4 + $0x90] sm:$0xff]
        %v3038 = vld [vmem:[%s4 + $0x98] sm:$0xff]
        %v3039 = vld [vmem:[%s4 + $0xa0] sm:$0xff]
        %v3040 = vld [vmem:[%s4 + $0xa8] sm:$0xff]
        %v3041 = vld [vmem:[%s4 + $0xb0] sm:$0xff]
        %v3042 = vld [vmem:[%s4 + $0xb8] sm:$0xff]
        %v3043 = vld [vmem:[%s4 + $0xc0] sm:$0xff]
        %v3044 = vld [vmem:[%s4 + $0xc8] sm:$0xff]
        %v3045 = vld [vmem:[%s4 + $0xd0] sm:$0xff]
        %v3046 = vld [vmem:[%s4 + $0xd8] sm:$0xff]
        %v3047 = vld [vmem:[%s4 + $0xe0] sm:$0xff]
        %v3048 = vld [vmem:[%s4 + $0xe8] sm:$0xff]
        %v3049 = vld [vmem:[%s4 + $0xf0] sm:$0xff]
        %v3050 = vld [vmem:[%s4 + $0xf8] sm:$0xff]
        %v3051 = vld [vmem:[%s4 + $0x100] sm:$0xff]
        %v3052 = vld [vmem:[%s4 + $0x108] sm:$0xff]
        %v3053 = vld [vmem:[%s4 + $0x110] sm:$0xff]
        %v3054 = vld [vmem:[%s4 + $0x118] sm:$0xff]
        %v3055 = vld [vmem:[%s4 + $0x120] sm:$0xff]
        %v3056 = vld [vmem:[%s4 + $0x128] sm:$0xff]
        %v3057 = vld [vmem:[%s4 + $0x130] sm:$0xff]
        %v3058 = vld [vmem:[%s4 + $0x138] sm:$0xff]
        %v3059 = vld [vmem:[%s4 + $0x140] sm:$0xff]
        %v3060 = vld [vmem:[%s4 + $0x148] sm:$0xff]
        %v3061 = vld [vmem:[%s4 + $0x150] sm:$0xff]
        %v3062 = vld [vmem:[%s4 + $0x158] sm:$0xff]
        %v3063 = vld [vmem:[%s4 + $0x160] sm:$0xff]
        %v3064 = vld [vmem:[%s4 + $0x168] sm:$0xff]
        %v3065 = vld [vmem:[%s4 + $0x170] sm:$0xff]
        %v3066 = vld [vmem:[%s4 + $0x178] sm:$0xff]
        %v3067 = vld [vmem:[%s4 + $0x180] sm:$0xff]
        %v3068 = vld [vmem:[%s4 + $0x188] sm:$0xff]
        %v3069 = vld [vmem:[%s4 + $0x190] sm:$0xff]
        %v3070 = vld [vmem:[%s4 + $0x198] sm:$0xff]
        %v3071 = vld [vmem:[%s4 + $0x1a0] sm:$0xff]
        %v3072 = vld [vmem:[%s4 + $0x1a8] sm:$0xff]
        %v3073 = vld [vmem:[%s4 + $0x1b0] sm:$0xff]
        %v3074 = vld [vmem:[%s4 + $0x1b8] sm:$0xff]
        %v3075 = vld [vmem:[%s4 + $0x1c0] sm:$0xff]
        %v3076 = vld [vmem:[%s4 + $0x1c8] sm:$0xff]
        %v3077 = vld [vmem:[%s4 + $0x1d0] sm:$0xff]
        %v3078 = vld [vmem:[%s4 + $0x1d8] sm:$0xff]
        %v3079 = vld [vmem:[%s4 + $0x1e0] sm:$0xff]
        %v3080 = vld [vmem:[%s4 + $0x1e8] sm:$0xff]
        %v3081 = vld [vmem:[%s4 + $0x1f0] sm:$0xff]
        %v3082 = vld [vmem:[%s4 + $0x1f8] sm:$0xff]
        %v3083 = vld [vmem:[%s4 + $0x200] sm:$0xff]
        %v3084 = vld [vmem:[%s4 + $0x208] sm:$0xff]
        %v3085 = vld [vmem:[%s4 + $0x210] sm:$0xff]
        %v3086 = vld [vmem:[%s4 + $0x218] sm:$0xff]
        %v3087 = vld [vmem:[%s4 + $0x220] sm:$0xff]
        %v3088 = vld [vmem:[%s4 + $0x228] sm:$0xff]
        %v3089 = vld [vmem:[%s4 + $0x230] sm:$0xff]
        %v3090 = vld [vmem:[%s4 + $0x238] sm:$0xff]
        %v3091 = vld [vmem:[%s4 + $0x240] sm:$0xff]
        %v3092 = vld [vmem:[%s4 + $0x248] sm:$0xff]
        %v3093 = vld [vmem:[%s4 + $0x250] sm:$0xff]
        %v3094 = vld [vmem:[%s4 + $0x258] sm:$0xff]
        %v3095 = vld [vmem:[%s4 + $0x260] sm:$0xff]
        %v3096 = vld [vmem:[%s4 + $0x268] sm:$0xff]
        %v3097 = vld [vmem:[%s4 + $0x270] sm:$0xff]
        %v3098 = vld [vmem:[%s4 + $0x278] sm:$0xff]
        %v3099 = vld [vmem:[%s4 + $0x280] sm:$0xff]
        %v3100 = vld [vmem:[%s4 + $0x288] sm:$0xff]
        %v3101 = vld [vmem:[%s4 + $0x290] sm:$0xff]
        %v3102 = vld [vmem:[%s4 + $0x298] sm:$0xff]
        %v3103 = vld [vmem:[%s4 + $0x2a0] sm:$0xff]
        %v3104 = vld [vmem:[%s4 + $0x2a8] sm:$0xff]
        %v3105 = vld [vmem:[%s4 + $0x2b0] sm:$0xff]
        %v3106 = vld [vmem:[%s4 + $0x2b8] sm:$0xff]
        %v3107 = vld [vmem:[%s4 + $0x2c0] sm:$0xff]
        %v3108 = vld [vmem:[%s4 + $0x2c8] sm:$0xff]
        %v3109 = vld [vmem:[%s4 + $0x2d0] sm:$0xff]
        %v3110 = vld [vmem:[%s4 + $0x2d8] sm:$0xff]
        %v3111 = vld [vmem:[%s4 + $0x2e0] sm:$0xff]
        %v3112 = vld [vmem:[%s4 + $0x2e8] sm:$0xff]
        %v3113 = vld [vmem:[%s4 + $0x2f0] sm:$0xff]
        %v3114 = vld [vmem:[%s4 + $0x2f8] sm:$0xff]
        %v3115 = vld [vmem:[%s4 + $0x300] sm:$0xff]
        %v3116 = vld [vmem:[%s4 + $0x308] sm:$0xff]
        %v3117 = vld [vmem:[%s4 + $0x310] sm:$0xff]
        %v3118 = vld [vmem:[%s4 + $0x318] sm:$0xff]
        %v3119 = vld [vmem:[%s4 + $0x320] sm:$0xff]
        %v3120 = vld [vmem:[%s4 + $0x328] sm:$0xff]
        %v3121 = vld [vmem:[%s4 + $0x330] sm:$0xff]
        %v3122 = vld [vmem:[%s4 + $0x338] sm:$0xff]
        %v3123 = vld [vmem:[%s4 + $0x340] sm:$0xff]
        %v3124 = vld [vmem:[%s4 + $0x348] sm:$0xff]
        %v3125 = vld [vmem:[%s4 + $0x350] sm:$0xff]
        %v3126 = vld [vmem:[%s4 + $0x358] sm:$0xff]
        %v3127 = vld [vmem:[%s4 + $0x360] sm:$0xff]
        %v3128 = vld [vmem:[%s4 + $0x368] sm:$0xff]
        %v3129 = vld [vmem:[%s4 + $0x370] sm:$0xff]
        %v3130 = vld [vmem:[%s4 + $0x378] sm:$0xff]
        %v3131 = vld [vmem:[%s4 + $0x380] sm:$0xff]
        %v3132 = vld [vmem:[%s4 + $0x388] sm:$0xff]
        %v3133 = vld [vmem:[%s4 + $0x390] sm:$0xff]
        %v3134 = vld [vmem:[%s4 + $0x398] sm:$0xff]
        %v3135 = vld [vmem:[%s4 + $0x3a0] sm:$0xff]
        %v3136 = vld [vmem:[%s4 + $0x3a8] sm:$0xff]
        %v3137 = vld [vmem:[%s4 + $0x3b0] sm:$0xff]
        %v3138 = vld [vmem:[%s4 + $0x3b8] sm:$0xff]
        %v3139 = vld [vmem:[%s4 + $0x3c0] sm:$0xff]
        %v3140 = vld [vmem:[%s4 + $0x3c8] sm:$0xff]
        %v3141 = vld [vmem:[%s4 + $0x3d0] sm:$0xff]
        %v3142 = vld [vmem:[%s4 + $0x3d8] sm:$0xff]
        %v3143 = vld [vmem:[%s4 + $0x3e0] sm:$0xff]
        %v3144 = vld [vmem:[%s4 + $0x3e8] sm:$0xff]
        %v3145 = vld [vmem:[%s4 + $0x3f0] sm:$0xff]
        %v3146 = vld [vmem:[%s4 + $0x3f8] sm:$0xff]
        %v3147 = vld [vmem:[%s4 + $0x400] sm:$0xff]
        %v3148 = vld [vmem:[%s4 + $0x408] sm:$0xff]
        %v3149 = vld [vmem:[%s4 + $0x410] sm:$0xff]
        %v3150 = vld [vmem:[%s4 + $0x418] sm:$0xff]
        %v3151 = vld [vmem:[%s4 + $0x420] sm:$0xff]
        %v3152 = vld [vmem:[%s4 + $0x428] sm:$0xff]
        %v3153 = vld [vmem:[%s4 + $0x430] sm:$0xff]
        %v3154 = vld [vmem:[%s4 + $0x438] sm:$0xff]
        %v3155 = vld [vmem:[%s4 + $0x440] sm:$0xff]
        %v3156 = vld [vmem:[%s4 + $0x448] sm:$0xff]
        %v3157 = vld [vmem:[%s4 + $0x450] sm:$0xff]
        %v3158 = vld [vmem:[%s4 + $0x458] sm:$0xff]
        %v3159 = vld [vmem:[%s4 + $0x460] sm:$0xff]
        %v3160 = vld [vmem:[%s4 + $0x468] sm:$0xff]
        %v3161 = vld [vmem:[%s4 + $0x470] sm:$0xff]
        %v3162 = vld [vmem:[%s4 + $0x478] sm:$0xff]
        %v3163 = vld [vmem:[%s4 + $0x480] sm:$0xff]
        %v3164 = vld [vmem:[%s4 + $0x488] sm:$0xff]
        %v3165 = vld [vmem:[%s4 + $0x490] sm:$0xff]
        %v3166 = vld [vmem:[%s4 + $0x498] sm:$0xff]
        %v3167 = vld [vmem:[%s4 + $0x4a0] sm:$0xff]
        %v3168 = vld [vmem:[%s4 + $0x4a8] sm:$0xff]
        %v3169 = vld [vmem:[%s4 + $0x4b0] sm:$0xff]
        %v3170 = vld [vmem:[%s4 + $0x4b8] sm:$0xff]
        %v3171 = vld [vmem:[%s4 + $0x4c0] sm:$0xff]
        %v3172 = vld [vmem:[%s4 + $0x4c8] sm:$0xff]
        %v3173 = vld [vmem:[%s4 + $0x4d0] sm:$0xff]
        %v3174 = vld [vmem:[%s4 + $0x4d8] sm:$0xff]
        %v3175 = vld [vmem:[%s4 + $0x4e0] sm:$0xff]
        %v3176 = vld [vmem:[%s4 + $0x4e8] sm:$0xff]
        %v3177 = vld [vmem:[%s4 + $0x4f0] sm:$0xff]
        %v3178 = vld [vmem:[%s4 + $0x4f8] sm:$0xff]
        %v3179 = vld [vmem:[%s4 + $0x500] sm:$0xff]
        %v3180 = vld [vmem:[%s4 + $0x508] sm:$0xff]
        %v3181 = vld [vmem:[%s4 + $0x510] sm:$0xff]
        %v3182 = vld [vmem:[%s4 + $0x518] sm:$0xff]
        %v3183 = vld [vmem:[%s4 + $0x520] sm:$0xff]
        %v3184 = vld [vmem:[%s4 + $0x528] sm:$0xff]
        %v3185 = vld [vmem:[%s4 + $0x530] sm:$0xff]
        %v3186 = vld [vmem:[%s4 + $0x538] sm:$0xff]
        %v3187 = vld [vmem:[%s4 + $0x540] sm:$0xff]
        %v3188 = vld [vmem:[%s4 + $0x548] sm:$0xff]
        %v3189 = vld [vmem:[%s4 + $0x550] sm:$0xff]
        %v3190 = vld [vmem:[%s4 + $0x558] sm:$0xff]
        %v3191 = vld [vmem:[%s4 + $0x560] sm:$0xff]
        %v3192 = vld [vmem:[%s4 + $0x568] sm:$0xff]
        %v3193 = vld [vmem:[%s4 + $0x570] sm:$0xff]
        %v3194 = vld [vmem:[%s4 + $0x578] sm:$0xff]
        %v3195 = vld [vmem:[%s4 + $0x580] sm:$0xff]
        %v3196 = vld [vmem:[%s4 + $0x588] sm:$0xff]
        %v3197 = vld [vmem:[%s4 + $0x590] sm:$0xff]
        %v3198 = vld [vmem:[%s4 + $0x598] sm:$0xff]
        %v3379 = vunpack.c.l.b16 %v3019
        %v3380 = vunpack.c.h.b16 %v3019
        %v3381 = vunpack.c.l.b16 %v3020
        %v3382 = vunpack.c.h.b16 %v3020
        %v3383 = vunpack.c.l.b16 %v3021
        %v3384 = vunpack.c.h.b16 %v3021
        %v3385 = vunpack.c.l.b16 %v3022
        %v3386 = vunpack.c.h.b16 %v3022
        %v3387 = vunpack.c.l.b16 %v3023
        %v3388 = vunpack.c.h.b16 %v3023
        %v3389 = vunpack.c.l.b16 %v3024
        %v3390 = vunpack.c.h.b16 %v3024
        %v3391 = vunpack.c.l.b16 %v3025
        %v3392 = vunpack.c.h.b16 %v3025
        %v3393 = vunpack.c.l.b16 %v3026
        %v3394 = vunpack.c.h.b16 %v3026
        %v3395 = vunpack.c.l.b16 %v3027
        %v3396 = vunpack.c.h.b16 %v3027
        %v3397 = vunpack.c.l.b16 %v3028
        %v3398 = vunpack.c.h.b16 %v3028
        %v3399 = vunpack.c.l.b16 %v3029
        %v3400 = vunpack.c.h.b16 %v3029
        %v3401 = vunpack.c.l.b16 %v3030
        %v3402 = vunpack.c.h.b16 %v3030
        %v3403 = vunpack.c.l.b16 %v3031
        %v3404 = vunpack.c.h.b16 %v3031
        %v3405 = vunpack.c.l.b16 %v3032
        %v3406 = vunpack.c.h.b16 %v3032
        %v3407 = vunpack.c.l.b16 %v3033
        %v3408 = vunpack.c.h.b16 %v3033
        %v3409 = vunpack.c.l.b16 %v3034
        %v3410 = vunpack.c.h.b16 %v3034
        %v3411 = vunpack.c.l.b16 %v3035
        %v3412 = vunpack.c.h.b16 %v3035
        %v3413 = vunpack.c.l.b16 %v3036
        %v3414 = vunpack.c.h.b16 %v3036
        %v3415 = vunpack.c.l.b16 %v3037
        %v3416 = vunpack.c.h.b16 %v3037
        %v3417 = vunpack.c.l.b16 %v3038
        %v3418 = vunpack.c.h.b16 %v3038
        %v3419 = vunpack.c.l.b16 %v3039
        %v3420 = vunpack.c.h.b16 %v3039
        %v3421 = vunpack.c.l.b16 %v3040
        %v3422 = vunpack.c.h.b16 %v3040
        %v3423 = vunpack.c.l.b16 %v3041
        %v3424 = vunpack.c.h.b16 %v3041
        %v3425 = vunpack.c.l.b16 %v3042
        %v3426 = vunpack.c.h.b16 %v3042
        %v3427 = vunpack.c.l.b16 %v3043
        %v3428 = vunpack.c.h.b16 %v3043
        %v3429 = vunpack.c.l.b16 %v3044
        %v3430 = vunpack.c.h.b16 %v3044
        %v3431 = vunpack.c.l.b16 %v3045
        %v3432 = vunpack.c.h.b16 %v3045
        %v3433 = vunpack.c.l.b16 %v3046
        %v3434 = vunpack.c.h.b16 %v3046
        %v3435 = vunpack.c.l.b16 %v3047
        %v3436 = vunpack.c.h.b16 %v3047
        %v3437 = vunpack.c.l.b16 %v3048
        %v3438 = vunpack.c.h.b16 %v3048
        %v3439 = vunpack.c.l.b16 %v3049
        %v3440 = vunpack.c.h.b16 %v3049
        %v3441 = vunpack.c.l.b16 %v3050
        %v3442 = vunpack.c.h.b16 %v3050
        %v3443 = vunpack.c.l.b16 %v3051
        %v3444 = vunpack.c.h.b16 %v3051
        %v3445 = vunpack.c.l.b16 %v3052
        %v3446 = vunpack.c.h.b16 %v3052
        %v3447 = vunpack.c.l.b16 %v3053
        %v3448 = vunpack.c.h.b16 %v3053
        %v3449 = vunpack.c.l.b16 %v3054
        %v3450 = vunpack.c.h.b16 %v3054
        %v3451 = vunpack.c.l.b16 %v3055
        %v3452 = vunpack.c.h.b16 %v3055
        %v3453 = vunpack.c.l.b16 %v3056
        %v3454 = vunpack.c.h.b16 %v3056
        %v3455 = vunpack.c.l.b16 %v3057
        %v3456 = vunpack.c.h.b16 %v3057
        %v3457 = vunpack.c.l.b16 %v3058
        %v3458 = vunpack.c.h.b16 %v3058
        %v3459 = vunpack.c.l.b16 %v3059
        %v3460 = vunpack.c.h.b16 %v3059
        %v3461 = vunpack.c.l.b16 %v3060
        %v3462 = vunpack.c.h.b16 %v3060
        %v3463 = vunpack.c.l.b16 %v3061
        %v3464 = vunpack.c.h.b16 %v3061
        %v3465 = vunpack.c.l.b16 %v3062
        %v3466 = vunpack.c.h.b16 %v3062
        %v3467 = vunpack.c.l.b16 %v3063
        %v3468 = vunpack.c.h.b16 %v3063
        %v3469 = vunpack.c.l.b16 %v3064
        %v3470 = vunpack.c.h.b16 %v3064
        %v3471 = vunpack.c.l.b16 %v3065
        %v3472 = vunpack.c.h.b16 %v3065
        %v3473 = vunpack.c.l.b16 %v3066
        %v3474 = vunpack.c.h.b16 %v3066
        %v3475 = vunpack.c.l.b16 %v3067
        %v3476 = vunpack.c.h.b16 %v3067
        %v3477 = vunpack.c.l.b16 %v3068
        %v3478 = vunpack.c.h.b16 %v3068
        %v3479 = vunpack.c.l.b16 %v3069
        %v3480 = vunpack.c.h.b16 %v3069
        %v3481 = vunpack.c.l.b16 %v3070
        %v3482 = vunpack.c.h.b16 %v3070
        %v3483 = vunpack.c.l.b16 %v3071
        %v3484 = vunpack.c.h.b16 %v3071
        %v3485 = vunpack.c.l.b16 %v3072
        %v3486 = vunpack.c.h.b16 %v3072
        %v3487 = vunpack.c.l.b16 %v3073
        %v3488 = vunpack.c.h.b16 %v3073
        %v3489 = vunpack.c.l.b16 %v3074
        %v3490 = vunpack.c.h.b16 %v3074
        %v3491 = vunpack.c.l.b16 %v3075
        %v3492 = vunpack.c.h.b16 %v3075
        %v3493 = vunpack.c.l.b16 %v3076
        %v3494 = vunpack.c.h.b16 %v3076
        %v3495 = vunpack.c.l.b16 %v3077
        %v3496 = vunpack.c.h.b16 %v3077
        %v3497 = vunpack.c.l.b16 %v3078
        %v3498 = vunpack.c.h.b16 %v3078
        %v3499 = vunpack.c.l.b16 %v3079
        %v3500 = vunpack.c.h.b16 %v3079
        %v3501 = vunpack.c.l.b16 %v3080
        %v3502 = vunpack.c.h.b16 %v3080
        %v3503 = vunpack.c.l.b16 %v3081
        %v3504 = vunpack.c.h.b16 %v3081
        %v3505 = vunpack.c.l.b16 %v3082
        %v3506 = vunpack.c.h.b16 %v3082
        %v3507 = vunpack.c.l.b16 %v3083
        %v3508 = vunpack.c.h.b16 %v3083
        %v3509 = vunpack.c.l.b16 %v3084
        %v3510 = vunpack.c.h.b16 %v3084
        %v3511 = vunpack.c.l.b16 %v3085
        %v3512 = vunpack.c.h.b16 %v3085
        %v3513 = vunpack.c.l.b16 %v3086
        %v3514 = vunpack.c.h.b16 %v3086
        %v3515 = vunpack.c.l.b16 %v3087
        %v3516 = vunpack.c.h.b16 %v3087
        %v3517 = vunpack.c.l.b16 %v3088
        %v3518 = vunpack.c.h.b16 %v3088
        %v3519 = vunpack.c.l.b16 %v3089
        %v3520 = vunpack.c.h.b16 %v3089
        %v3521 = vunpack.c.l.b16 %v3090
        %v3522 = vunpack.c.h.b16 %v3090
        %v3523 = vunpack.c.l.b16 %v3091
        %v3524 = vunpack.c.h.b16 %v3091
        %v3525 = vunpack.c.l.b16 %v3092
        %v3526 = vunpack.c.h.b16 %v3092
        %v3527 = vunpack.c.l.b16 %v3093
        %v3528 = vunpack.c.h.b16 %v3093
        %v3529 = vunpack.c.l.b16 %v3094
        %v3530 = vunpack.c.h.b16 %v3094
        %v3531 = vunpack.c.l.b16 %v3095
        %v3532 = vunpack.c.h.b16 %v3095
        %v3533 = vunpack.c.l.b16 %v3096
        %v3534 = vunpack.c.h.b16 %v3096
        %v3535 = vunpack.c.l.b16 %v3097
        %v3536 = vunpack.c.h.b16 %v3097
        %v3537 = vunpack.c.l.b16 %v3098
        %v3538 = vunpack.c.h.b16 %v3098
        %v3539 = vunpack.c.l.b16 %v3099
        %v3540 = vunpack.c.h.b16 %v3099
        %v3541 = vunpack.c.l.b16 %v3100
        %v3542 = vunpack.c.h.b16 %v3100
        %v3543 = vunpack.c.l.b16 %v3101
        %v3544 = vunpack.c.h.b16 %v3101
        %v3545 = vunpack.c.l.b16 %v3102
        %v3546 = vunpack.c.h.b16 %v3102
        %v3547 = vunpack.c.l.b16 %v3103
        %v3548 = vunpack.c.h.b16 %v3103
        %v3549 = vunpack.c.l.b16 %v3104
        %v3550 = vunpack.c.h.b16 %v3104
        %v3551 = vunpack.c.l.b16 %v3105
        %v3552 = vunpack.c.h.b16 %v3105
        %v3553 = vunpack.c.l.b16 %v3106
        %v3554 = vunpack.c.h.b16 %v3106
        %v3555 = vunpack.c.l.b16 %v3107
        %v3556 = vunpack.c.h.b16 %v3107
        %v3557 = vunpack.c.l.b16 %v3108
        %v3558 = vunpack.c.h.b16 %v3108
        %v3559 = vunpack.c.l.b16 %v3109
        %v3560 = vunpack.c.h.b16 %v3109
        %v3561 = vunpack.c.l.b16 %v3110
        %v3562 = vunpack.c.h.b16 %v3110
        %v3563 = vunpack.c.l.b16 %v3111
        %v3564 = vunpack.c.h.b16 %v3111
        %v3565 = vunpack.c.l.b16 %v3112
        %v3566 = vunpack.c.h.b16 %v3112
        %v3567 = vunpack.c.l.b16 %v3113
        %v3568 = vunpack.c.h.b16 %v3113
        %v3569 = vunpack.c.l.b16 %v3114
        %v3570 = vunpack.c.h.b16 %v3114
        %v3571 = vunpack.c.l.b16 %v3115
        %v3572 = vunpack.c.h.b16 %v3115
        %v3573 = vunpack.c.l.b16 %v3116
        %v3574 = vunpack.c.h.b16 %v3116
        %v3575 = vunpack.c.l.b16 %v3117
        %v3576 = vunpack.c.h.b16 %v3117
        %v3577 = vunpack.c.l.b16 %v3118
        %v3578 = vunpack.c.h.b16 %v3118
        %v3579 = vunpack.c.l.b16 %v3119
        %v3580 = vunpack.c.h.b16 %v3119
        %v3581 = vunpack.c.l.b16 %v3120
        %v3582 = vunpack.c.h.b16 %v3120
        %v3583 = vunpack.c.l.b16 %v3121
        %v3584 = vunpack.c.h.b16 %v3121
        %v3585 = vunpack.c.l.b16 %v3122
        %v3586 = vunpack.c.h.b16 %v3122
        %v3587 = vunpack.c.l.b16 %v3123
        %v3588 = vunpack.c.h.b16 %v3123
        %v3589 = vunpack.c.l.b16 %v3124
        %v3590 = vunpack.c.h.b16 %v3124
        %v3591 = vunpack.c.l.b16 %v3125
        %v3592 = vunpack.c.h.b16 %v3125
        %v3593 = vunpack.c.l.b16 %v3126
        %v3594 = vunpack.c.h.b16 %v3126
        %v3595 = vunpack.c.l.b16 %v3127
        %v3596 = vunpack.c.h.b16 %v3127
        %v3597 = vunpack.c.l.b16 %v3128
        %v3598 = vunpack.c.h.b16 %v3128
        %v3599 = vunpack.c.l.b16 %v3129
        %v3600 = vunpack.c.h.b16 %v3129
        %v3601 = vunpack.c.l.b16 %v3130
        %v3602 = vunpack.c.h.b16 %v3130
        %v3603 = vunpack.c.l.b16 %v3131
        %v3604 = vunpack.c.h.b16 %v3131
        %v3605 = vunpack.c.l.b16 %v3132
        %v3606 = vunpack.c.h.b16 %v3132
        %v3607 = vunpack.c.l.b16 %v3133
        %v3608 = vunpack.c.h.b16 %v3133
        %v3609 = vunpack.c.l.b16 %v3134
        %v3610 = vunpack.c.h.b16 %v3134
        %v3611 = vunpack.c.l.b16 %v3135
        %v3612 = vunpack.c.h.b16 %v3135
        %v3613 = vunpack.c.l.b16 %v3136
        %v3614 = vunpack.c.h.b16 %v3136
        %v3615 = vunpack.c.l.b16 %v3137
        %v3616 = vunpack.c.h.b16 %v3137
        %v3617 = vunpack.c.l.b16 %v3138
        %v3618 = vunpack.c.h.b16 %v3138
        %v3619 = vunpack.c.l.b16 %v3139
        %v3620 = vunpack.c.h.b16 %v3139
        %v3621 = vunpack.c.l.b16 %v3140
        %v3622 = vunpack.c.h.b16 %v3140
        %v3623 = vunpack.c.l.b16 %v3141
        %v3624 = vunpack.c.h.b16 %v3141
        %v3625 = vunpack.c.l.b16 %v3142
        %v3626 = vunpack.c.h.b16 %v3142
        %v3627 = vunpack.c.l.b16 %v3143
        %v3628 = vunpack.c.h.b16 %v3143
        %v3629 = vunpack.c.l.b16 %v3144
        %v3630 = vunpack.c.h.b16 %v3144
        %v3631 = vunpack.c.l.b16 %v3145
        %v3632 = vunpack.c.h.b16 %v3145
        %v3633 = vunpack.c.l.b16 %v3146
        %v3634 = vunpack.c.h.b16 %v3146
        %v3635 = vunpack.c.l.b16 %v3147
        %v3636 = vunpack.c.h.b16 %v3147
        %v3637 = vunpack.c.l.b16 %v3148
        %v3638 = vunpack.c.h.b16 %v3148
        %v3639 = vunpack.c.l.b16 %v3149
        %v3640 = vunpack.c.h.b16 %v3149
        %v3641 = vunpack.c.l.b16 %v3150
        %v3642 = vunpack.c.h.b16 %v3150
        %v3643 = vunpack.c.l.b16 %v3151
        %v3644 = vunpack.c.h.b16 %v3151
        %v3645 = vunpack.c.l.b16 %v3152
        %v3646 = vunpack.c.h.b16 %v3152
        %v3647 = vunpack.c.l.b16 %v3153
        %v3648 = vunpack.c.h.b16 %v3153
        %v3649 = vunpack.c.l.b16 %v3154
        %v3650 = vunpack.c.h.b16 %v3154
        %v3651 = vunpack.c.l.b16 %v3155
        %v3652 = vunpack.c.h.b16 %v3155
        %v3653 = vunpack.c.l.b16 %v3156
        %v3654 = vunpack.c.h.b16 %v3156
        %v3655 = vunpack.c.l.b16 %v3157
        %v3656 = vunpack.c.h.b16 %v3157
        %v3657 = vunpack.c.l.b16 %v3158
        %v3658 = vunpack.c.h.b16 %v3158
        %v3659 = vunpack.c.l.b16 %v3159
        %v3660 = vunpack.c.h.b16 %v3159
        %v3661 = vunpack.c.l.b16 %v3160
        %v3662 = vunpack.c.h.b16 %v3160
        %v3663 = vunpack.c.l.b16 %v3161
        %v3664 = vunpack.c.h.b16 %v3161
        %v3665 = vunpack.c.l.b16 %v3162
        %v3666 = vunpack.c.h.b16 %v3162
        %v3667 = vunpack.c.l.b16 %v3163
        %v3668 = vunpack.c.h.b16 %v3163
        %v3669 = vunpack.c.l.b16 %v3164
        %v3670 = vunpack.c.h.b16 %v3164
        %v3671 = vunpack.c.l.b16 %v3165
        %v3672 = vunpack.c.h.b16 %v3165
        %v3673 = vunpack.c.l.b16 %v3166
        %v3674 = vunpack.c.h.b16 %v3166
        %v3675 = vunpack.c.l.b16 %v3167
        %v3676 = vunpack.c.h.b16 %v3167
        %v3677 = vunpack.c.l.b16 %v3168
        %v3678 = vunpack.c.h.b16 %v3168
        %v3679 = vunpack.c.l.b16 %v3169
        %v3680 = vunpack.c.h.b16 %v3169
        %v3681 = vunpack.c.l.b16 %v3170
        %v3682 = vunpack.c.h.b16 %v3170
        %v3683 = vunpack.c.l.b16 %v3171
        %v3684 = vunpack.c.h.b16 %v3171
        %v3685 = vunpack.c.l.b16 %v3172
        %v3686 = vunpack.c.h.b16 %v3172
        %v3687 = vunpack.c.l.b16 %v3173
        %v3688 = vunpack.c.h.b16 %v3173
        %v3689 = vunpack.c.l.b16 %v3174
        %v3690 = vunpack.c.h.b16 %v3174
        %v3691 = vunpack.c.l.b16 %v3175
        %v3692 = vunpack.c.h.b16 %v3175
        %v3693 = vunpack.c.l.b16 %v3176
        %v3694 = vunpack.c.h.b16 %v3176
        %v3695 = vunpack.c.l.b16 %v3177
        %v3696 = vunpack.c.h.b16 %v3177
        %v3697 = vunpack.c.l.b16 %v3178
        %v3698 = vunpack.c.h.b16 %v3178
        %v3699 = vunpack.c.l.b16 %v3179
        %v3700 = vunpack.c.h.b16 %v3179
        %v3701 = vunpack.c.l.b16 %v3180
        %v3702 = vunpack.c.h.b16 %v3180
        %v3703 = vunpack.c.l.b16 %v3181
        %v3704 = vunpack.c.h.b16 %v3181
        %v3705 = vunpack.c.l.b16 %v3182
        %v3706 = vunpack.c.h.b16 %v3182
        %v3707 = vunpack.c.l.b16 %v3183
        %v3708 = vunpack.c.h.b16 %v3183
        %v3709 = vunpack.c.l.b16 %v3184
        %v3710 = vunpack.c.h.b16 %v3184
        %v3711 = vunpack.c.l.b16 %v3185
        %v3712 = vunpack.c.h.b16 %v3185
        %v3713 = vunpack.c.l.b16 %v3186
        %v3714 = vunpack.c.h.b16 %v3186
        %v3715 = vunpack.c.l.b16 %v3187
        %v3716 = vunpack.c.h.b16 %v3187
        %v3717 = vunpack.c.l.b16 %v3188
        %v3718 = vunpack.c.h.b16 %v3188
        %v3719 = vunpack.c.l.b16 %v3189
        %v3720 = vunpack.c.h.b16 %v3189
        %v3721 = vunpack.c.l.b16 %v3190
        %v3722 = vunpack.c.h.b16 %v3190
        %v3723 = vunpack.c.l.b16 %v3191
        %v3724 = vunpack.c.h.b16 %v3191
        %v3725 = vunpack.c.l.b16 %v3192
        %v3726 = vunpack.c.h.b16 %v3192
        %v3727 = vunpack.c.l.b16 %v3193
        %v3728 = vunpack.c.h.b16 %v3193
        %v3729 = vunpack.c.l.b16 %v3194
        %v3730 = vunpack.c.h.b16 %v3194
        %v3731 = vunpack.c.l.b16 %v3195
        %v3732 = vunpack.c.h.b16 %v3195
        %v3733 = vunpack.c.l.b16 %v3196
        %v3734 = vunpack.c.h.b16 %v3196
        %v3735 = vunpack.c.l.b16 %v3197
        %v3736 = vunpack.c.h.b16 %v3197
        %v3737 = vunpack.c.l.b16 %v3198
        %v3738 = vunpack.c.h.b16 %v3198
        %v3739 = vpack.c.b16 %v3385, %v3379
        %v3740 = vpack.c.b16 %v3386, %v3380
        %v3741 = vpack.c.b16 %v3387, %v3381
        %v3742 = vpack.c.b16 %v3388, %v3382
        %v3743 = vpack.c.b16 %v3389, %v3383
        %v3744 = vpack.c.b16 %v3390, %v3384
        %v3745 = vpack.c.b16 %v3397, %v3391
        %v3746 = vpack.c.b16 %v3398, %v3392
        %v3747 = vpack.c.b16 %v3399, %v3393
        %v3748 = vpack.c.b16 %v3400, %v3394
        %v3749 = vpack.c.b16 %v3401, %v3395
        %v3750 = vpack.c.b16 %v3402, %v3396
        %v3751 = vpack.c.b16 %v3409, %v3403
        %v3752 = vpack.c.b16 %v3410, %v3404
        %v3753 = vpack.c.b16 %v3411, %v3405
        %v3754 = vpack.c.b16 %v3412, %v3406
        %v3755 = vpack.c.b16 %v3413, %v3407
        %v3756 = vpack.c.b16 %v3414, %v3408
        %v3757 = vpack.c.b16 %v3421, %v3415
        %v3758 = vpack.c.b16 %v3422, %v3416
        %v3759 = vpack.c.b16 %v3423, %v3417
        %v3760 = vpack.c.b16 %v3424, %v3418
        %v3761 = vpack.c.b16 %v3425, %v3419
        %v3762 = vpack.c.b16 %v3426, %v3420
        %v3763 = vpack.c.b16 %v3433, %v3427
        %v3764 = vpack.c.b16 %v3434, %v3428
        %v3765 = vpack.c.b16 %v3435, %v3429
        %v3766 = vpack.c.b16 %v3436, %v3430
        %v3767 = vpack.c.b16 %v3437, %v3431
        %v3768 = vpack.c.b16 %v3438, %v3432
        %v3769 = vpack.c.b16 %v3445, %v3439
        %v3770 = vpack.c.b16 %v3446, %v3440
        %v3771 = vpack.c.b16 %v3447, %v3441
        %v3772 = vpack.c.b16 %v3448, %v3442
        %v3773 = vpack.c.b16 %v3449, %v3443
        %v3774 = vpack.c.b16 %v3450, %v3444
        %v3775 = vpack.c.b16 %v3457, %v3451
        %v3776 = vpack.c.b16 %v3458, %v3452
        %v3777 = vpack.c.b16 %v3459, %v3453
        %v3778 = vpack.c.b16 %v3460, %v3454
        %v3779 = vpack.c.b16 %v3461, %v3455
        %v3780 = vpack.c.b16 %v3462, %v3456
        %v3781 = vpack.c.b16 %v3469, %v3463
        %v3782 = vpack.c.b16 %v3470, %v3464
        %v3783 = vpack.c.b16 %v3471, %v3465
        %v3784 = vpack.c.b16 %v3472, %v3466
        %v3785 = vpack.c.b16 %v3473, %v3467
        %v3786 = vpack.c.b16 %v3474, %v3468
        %v3787 = vpack.c.b16 %v3481, %v3475
        %v3788 = vpack.c.b16 %v3482, %v3476
        %v3789 = vpack.c.b16 %v3483, %v3477
        %v3790 = vpack.c.b16 %v3484, %v3478
        %v3791 = vpack.c.b16 %v3485, %v3479
        %v3792 = vpack.c.b16 %v3486, %v3480
        %v3793 = vpack.c.b16 %v3493, %v3487
        %v3794 = vpack.c.b16 %v3494, %v3488
        %v3795 = vpack.c.b16 %v3495, %v3489
        %v3796 = vpack.c.b16 %v3496, %v3490
        %v3797 = vpack.c.b16 %v3497, %v3491
        %v3798 = vpack.c.b16 %v3498, %v3492
        %v3799 = vpack.c.b16 %v3505, %v3499
        %v3800 = vpack.c.b16 %v3506, %v3500
        %v3801 = vpack.c.b16 %v3507, %v3501
        %v3802 = vpack.c.b16 %v3508, %v3502
        %v3803 = vpack.c.b16 %v3509, %v3503
        %v3804 = vpack.c.b16 %v3510, %v3504
        %v3805 = vpack.c.b16 %v3517, %v3511
        %v3806 = vpack.c.b16 %v3518, %v3512
        %v3807 = vpack.c.b16 %v3519, %v3513
        %v3808 = vpack.c.b16 %v3520, %v3514
        %v3809 = vpack.c.b16 %v3521, %v3515
        %v3810 = vpack.c.b16 %v3522, %v3516
        %v3811 = vpack.c.b16 %v3529, %v3523
        %v3812 = vpack.c.b16 %v3530, %v3524
        %v3813 = vpack.c.b16 %v3531, %v3525
        %v3814 = vpack.c.b16 %v3532, %v3526
        %v3815 = vpack.c.b16 %v3533, %v3527
        %v3816 = vpack.c.b16 %v3534, %v3528
        %v3817 = vpack.c.b16 %v3541, %v3535
        %v3818 = vpack.c.b16 %v3542, %v3536
        %v3819 = vpack.c.b16 %v3543, %v3537
        %v3820 = vpack.c.b16 %v3544, %v3538
        %v3821 = vpack.c.b16 %v3545, %v3539
        %v3822 = vpack.c.b16 %v3546, %v3540
        %v3823 = vpack.c.b16 %v3553, %v3547
        %v3824 = vpack.c.b16 %v3554, %v3548
        %v3825 = vpack.c.b16 %v3555, %v3549
        %v3826 = vpack.c.b16 %v3556, %v3550
        %v3827 = vpack.c.b16 %v3557, %v3551
        %v3828 = vpack.c.b16 %v3558, %v3552
        %v3829 = vpack.c.b16 %v3565, %v3559
        %v3830 = vpack.c.b16 %v3566, %v3560
        %v3831 = vpack.c.b16 %v3567, %v3561
        %v3832 = vpack.c.b16 %v3568, %v3562
        %v3833 = vpack.c.b16 %v3569, %v3563
        %v3834 = vpack.c.b16 %v3570, %v3564
        %v3835 = vpack.c.b16 %v3577, %v3571
        %v3836 = vpack.c.b16 %v3578, %v3572
        %v3837 = vpack.c.b16 %v3579, %v3573
        %v3838 = vpack.c.b16 %v3580, %v3574
        %v3839 = vpack.c.b16 %v3581, %v3575
        %v3840 = vpack.c.b16 %v3582, %v3576
        %v3841 = vpack.c.b16 %v3589, %v3583
        %v3842 = vpack.c.b16 %v3590, %v3584
        %v3843 = vpack.c.b16 %v3591, %v3585
        %v3844 = vpack.c.b16 %v3592, %v3586
        %v3845 = vpack.c.b16 %v3593, %v3587
        %v3846 = vpack.c.b16 %v3594, %v3588
        %v3847 = vpack.c.b16 %v3601, %v3595
        %v3848 = vpack.c.b16 %v3602, %v3596
        %v3849 = vpack.c.b16 %v3603, %v3597
        %v3850 = vpack.c.b16 %v3604, %v3598
        %v3851 = vpack.c.b16 %v3605, %v3599
        %v3852 = vpack.c.b16 %v3606, %v3600
        %v3853 = vpack.c.b16 %v3613, %v3607
        %v3854 = vpack.c.b16 %v3614, %v3608
        %v3855 = vpack.c.b16 %v3615, %v3609
        %v3856 = vpack.c.b16 %v3616, %v3610
        %v3857 = vpack.c.b16 %v3617, %v3611
        %v3858 = vpack.c.b16 %v3618, %v3612
        %v3859 = vpack.c.b16 %v3625, %v3619
        %v3860 = vpack.c.b16 %v3626, %v3620
        %v3861 = vpack.c.b16 %v3627, %v3621
        %v3862 = vpack.c.b16 %v3628, %v3622
        %v3863 = vpack.c.b16 %v3629, %v3623
        %v3864 = vpack.c.b16 %v3630, %v3624
        %v3865 = vpack.c.b16 %v3637, %v3631
        %v3866 = vpack.c.b16 %v3638, %v3632
        %v3867 = vpack.c.b16 %v3639, %v3633
        %v3868 = vpack.c.b16 %v3640, %v3634
        %v3869 = vpack.c.b16 %v3641, %v3635
        %v3870 = vpack.c.b16 %v3642, %v3636
        %v3871 = vpack.c.b16 %v3649, %v3643
        %v3872 = vpack.c.b16 %v3650, %v3644
        %v3873 = vpack.c.b16 %v3651, %v3645
        %v3874 = vpack.c.b16 %v3652, %v3646
        %v3875 = vpack.c.b16 %v3653, %v3647
        %v3876 = vpack.c.b16 %v3654, %v3648
        %v3877 = vpack.c.b16 %v3661, %v3655
        %v3878 = vpack.c.b16 %v3662, %v3656
        %v3879 = vpack.c.b16 %v3663, %v3657
        %v3880 = vpack.c.b16 %v3664, %v3658
        %v3881 = vpack.c.b16 %v3665, %v3659
        %v3882 = vpack.c.b16 %v3666, %v3660
        %v3883 = vpack.c.b16 %v3673, %v3667
        %v3884 = vpack.c.b16 %v3674, %v3668
        %v3885 = vpack.c.b16 %v3675, %v3669
        %v3886 = vpack.c.b16 %v3676, %v3670
        %v3887 = vpack.c.b16 %v3677, %v3671
        %v3888 = vpack.c.b16 %v3678, %v3672
        %v3889 = vpack.c.b16 %v3685, %v3679
        %v3890 = vpack.c.b16 %v3686, %v3680
        %v3891 = vpack.c.b16 %v3687, %v3681
        %v3892 = vpack.c.b16 %v3688, %v3682
        %v3893 = vpack.c.b16 %v3689, %v3683
        %v3894 = vpack.c.b16 %v3690, %v3684
        %v3895 = vpack.c.b16 %v3697, %v3691
        %v3896 = vpack.c.b16 %v3698, %v3692
        %v3897 = vpack.c.b16 %v3699, %v3693
        %v3898 = vpack.c.b16 %v3700, %v3694
        %v3899 = vpack.c.b16 %v3701, %v3695
        %v3900 = vpack.c.b16 %v3702, %v3696
        %v3901 = vpack.c.b16 %v3709, %v3703
        %v3902 = vpack.c.b16 %v3710, %v3704
        %v3903 = vpack.c.b16 %v3711, %v3705
        %v3904 = vpack.c.b16 %v3712, %v3706
        %v3905 = vpack.c.b16 %v3713, %v3707
        %v3906 = vpack.c.b16 %v3714, %v3708
        %v3907 = vpack.c.b16 %v3721, %v3715
        %v3908 = vpack.c.b16 %v3722, %v3716
        %v3909 = vpack.c.b16 %v3723, %v3717
        %v3910 = vpack.c.b16 %v3724, %v3718
        %v3911 = vpack.c.b16 %v3725, %v3719
        %v3912 = vpack.c.b16 %v3726, %v3720
        %v3913 = vpack.c.b16 %v3733, %v3727
        %v3914 = vpack.c.b16 %v3734, %v3728
        %v3915 = vpack.c.b16 %v3735, %v3729
        %v3916 = vpack.c.b16 %v3736, %v3730
        %v3917 = vpack.c.b16 %v3737, %v3731
        %v3918 = vpack.c.b16 %v3738, %v3732
        %v4100 = vsel %vm844, %v2989, 0
        %v4103 = vsel %vm844, %v2993, 0
        %v4106 = vsel %vm844, %v2997, 0
        %v4109 = vsel %vm844, %v3001, 0
        %v4112 = vsel %vm844, %v3005, 0
        %v4115 = vsel %vm844, %v3009, 0
        %v4118 = vsel %vm844, %v3013, 0
        %v4121 = vsel %vm844, %v3017, 0
        %4123 = vmatprep.subr.bf16.mxu0 %v3740
        %4124 = vmatpush1.bf16.msra.mxu0 %v3739
        %4125 = vmatprep.subr.bf16.mxu0 %v3746
        %4126 = vmatpush1.bf16.msra.mxu0 %v3745
        %4127 = vmatprep.subr.bf16.mxu0 %v3752
        %4128 = vmatpush1.bf16.msra.mxu0 %v3751
        %4129 = vmatprep.subr.bf16.mxu0 %v3758
        %4130 = vmatpush1.bf16.msra.mxu0 %v3757
        %4131 = vmatprep.subr.bf16.mxu0 %v3764
        %4132 = vmatpush1.bf16.msra.mxu0 %v3763
        %4133 = vmatprep.subr.bf16.mxu0 %v3770
        %4134 = vmatpush1.bf16.msra.mxu0 %v3769
        %4135 = vmatprep.subr.bf16.mxu0 %v3776
        %4136 = vmatpush1.bf16.msra.mxu0 %v3775
        %4137 = vmatprep.subr.bf16.mxu0 %v3782
        %4138 = vmatpush1.bf16.msra.mxu0 %v3781
        %4139 = vmatprep.subr.bf16.mxu0 %v3788
        %4140 = vmatpush1.bf16.msra.mxu0 %v3787
        %4141 = vmatprep.subr.bf16.mxu0 %v3794
        %4142 = vmatpush1.bf16.msra.mxu0 %v3793
        %4143 = vmatprep.subr.bf16.mxu0 %v3800
        %4144 = vmatpush1.bf16.msra.mxu0 %v3799
        %4145 = vmatprep.subr.bf16.mxu0 %v3806
        %4146 = vmatpush1.bf16.msra.mxu0 %v3805
        %4147 = vmatprep.subr.bf16.mxu0 %v3812
        %4148 = vmatpush1.bf16.msra.mxu0 %v3811
        %4149 = vmatprep.subr.bf16.mxu0 %v3818
        %4150 = vmatpush1.bf16.msra.mxu0 %v3817
        %4151 = vmatprep.subr.bf16.mxu0 %v3824
        %4152 = vmatpush1.bf16.msra.mxu0 %v3823
        %4153 = vmatprep.subr.bf16.mxu0 %v3830
        %4154 = vmatpush1.bf16.msra.mxu0 %v3829
        %4155 = vmatprep.mubr.bf16.mxu0 %v2987
        %4156 = vmatmul.mubr.bf16.gmra.mrb[0].mxu0 %v2986
        %v4157 = vpop.f32.mrb[0].mxu0
        %v4158 = vadd.f32 0.0, %v4157
        %v4159 = vpop.f32.mrb[0].mxu0
        %v4160 = vadd.f32 0.0, %v4159
        %v4161 = vpop.f32.mrb[0].mxu0
        %v4162 = vadd.f32 0.0, %v4161
        %v4163 = vpop.f32.mrb[0].mxu0
        %v4164 = vadd.f32 0.0, %v4163
        %4165 = vmatprep.mubr.bf16.mxu0 %v2991
        %4166 = vmatmul.mubr.bf16.gmra.mrb[0].mxu0 %v2990
        %v4167 = vpop.f32.mrb[0].mxu0
        %v4168 = vadd.f32 0.0, %v4167
        %v4169 = vpop.f32.mrb[0].mxu0
        %v4170 = vadd.f32 0.0, %v4169
        %v4171 = vpop.f32.mrb[0].mxu0
        %v4172 = vadd.f32 0.0, %v4171
        %v4173 = vpop.f32.mrb[0].mxu0
        %v4174 = vadd.f32 0.0, %v4173
        %4175 = vmatprep.mubr.bf16.mxu0 %v2995
        %4176 = vmatmul.mubr.bf16.gmra.mrb[0].mxu0 %v2994
        %v4177 = vpop.f32.mrb[0].mxu0
        %v4178 = vadd.f32 0.0, %v4177
        %v4179 = vpop.f32.mrb[0].mxu0
        %v4180 = vadd.f32 0.0, %v4179
        %v4181 = vpop.f32.mrb[0].mxu0
        %v4182 = vadd.f32 0.0, %v4181
        %v4183 = vpop.f32.mrb[0].mxu0
        %v4184 = vadd.f32 0.0, %v4183
        %4185 = vmatprep.mubr.bf16.mxu0 %v2999
        %4186 = vmatmul.mubr.bf16.gmra.mrb[0].mxu0 %v2998
        %v4187 = vpop.f32.mrb[0].mxu0
        %v4188 = vadd.f32 0.0, %v4187
        %v4189 = vpop.f32.mrb[0].mxu0
        %v4190 = vadd.f32 0.0, %v4189
        %v4191 = vpop.f32.mrb[0].mxu0
        %v4192 = vadd.f32 0.0, %v4191
        %v4193 = vpop.f32.mrb[0].mxu0
        %v4194 = vadd.f32 0.0, %v4193
        %4195 = vmatprep.mubr.bf16.mxu0 %v3003
        %4196 = vmatmul.mubr.bf16.gmra.mrb[0].mxu0 %v3002
        %v4197 = vpop.f32.mrb[0].mxu0
        %v4198 = vadd.f32 0.0, %v4197
        %v4199 = vpop.f32.mrb[0].mxu0
        %v4200 = vadd.f32 0.0, %v4199
        %v4201 = vpop.f32.mrb[0].mxu0
        %v4202 = vadd.f32 0.0, %v4201
        %v4203 = vpop.f32.mrb[0].mxu0
        %v4204 = vadd.f32 0.0, %v4203
        %4205 = vmatprep.mubr.bf16.mxu0 %v3007
        %4206 = vmatmul.mubr.bf16.gmra.mrb[0].mxu0 %v3006
        %v4207 = vpop.f32.mrb[0].mxu0
        %v4208 = vadd.f32 0.0, %v4207
        %v4209 = vpop.f32.mrb[0].mxu0
        %v4210 = vadd.f32 0.0, %v4209
        %v4211 = vpop.f32.mrb[0].mxu0
        %v4212 = vadd.f32 0.0, %v4211
        %v4213 = vpop.f32.mrb[0].mxu0
        %v4214 = vadd.f32 0.0, %v4213
        %4215 = vmatprep.mubr.bf16.mxu0 %v3011
        %4216 = vmatmul.mubr.bf16.gmra.mrb[0].mxu0 %v3010
        %v4217 = vpop.f32.mrb[0].mxu0
        %v4218 = vadd.f32 0.0, %v4217
        %v4219 = vpop.f32.mrb[0].mxu0
        %v4220 = vadd.f32 0.0, %v4219
        %v4221 = vpop.f32.mrb[0].mxu0
        %v4222 = vadd.f32 0.0, %v4221
        %v4223 = vpop.f32.mrb[0].mxu0
        %v4224 = vadd.f32 0.0, %v4223
        %4225 = vmatprep.mubr.bf16.mxu0 %v3015
        %4226 = vmatmul.mubr.bf16.gmra.mrb[0].mxu0 %v3014
        %v4227 = vpop.f32.mrb[0].mxu0
        %v4228 = vadd.f32 0.0, %v4227
        %v4229 = vpop.f32.mrb[0].mxu0
        %v4230 = vadd.f32 0.0, %v4229
        %v4231 = vpop.f32.mrb[0].mxu0
        %v4232 = vpop.f32.mrb[0].mxu0
        %4233 = vdwg.mxu0
        %4234 = vmatprep.subr.bf16.mxu0 %v3836
        %4235 = vmatpush1.bf16.msra.mxu0 %v3835
        %4236 = vmatprep.subr.bf16.mxu0 %v3842
        %4237 = vmatpush1.bf16.msra.mxu0 %v3841
        %4238 = vmatprep.subr.bf16.mxu0 %v3848
        %4239 = vmatpush1.bf16.msra.mxu0 %v3847
        %4240 = vmatprep.subr.bf16.mxu0 %v3854
        %4241 = vmatpush1.bf16.msra.mxu0 %v3853
        %4242 = vmatprep.subr.bf16.mxu0 %v3860
        %4243 = vmatpush1.bf16.msra.mxu0 %v3859
        %4244 = vmatprep.subr.bf16.mxu0 %v3866
        %4245 = vmatpush1.bf16.msra.mxu0 %v3865
        %4246 = vmatprep.subr.bf16.mxu0 %v3872
        %4247 = vmatpush1.bf16.msra.mxu0 %v3871
        %4248 = vmatprep.subr.bf16.mxu0 %v3878
        %4249 = vmatpush1.bf16.msra.mxu0 %v3877
        %4250 = vmatprep.subr.bf16.mxu0 %v3884
        %4251 = vmatpush1.bf16.msra.mxu0 %v3883
        %4252 = vmatprep.subr.bf16.mxu0 %v3890
        %4253 = vmatpush1.bf16.msra.mxu0 %v3889
        %4254 = vmatprep.subr.bf16.mxu0 %v3896
        %4255 = vmatpush1.bf16.msra.mxu0 %v3895
        %4256 = vmatprep.subr.bf16.mxu0 %v3902
        %4257 = vmatpush1.bf16.msra.mxu0 %v3901
        %4258 = vmatprep.subr.bf16.mxu0 %v3908
        %4259 = vmatpush1.bf16.msra.mxu0 %v3907
        %4260 = vmatprep.subr.bf16.mxu0 %v3914
        %4261 = vmatpush1.bf16.msra.mxu0 %v3913
        %4262 = vmatprep.subr.bf16.mxu0 0
        %4263 = vmatpush1.bf16.msra.mxu0 0
        %4264 = vmatprep.subr.bf16.mxu0 0
        %4265 = vmatpush1.bf16.msra.mxu0 0
        %4266 = vmatprep.mubr.bf16.mxu0 %v4100
        %4267 = vmatmul.mubr.bf16.gmra.mrb[0].mxu0 %v2988
        %v4268 = vpop.f32.mrb[0].mxu0
        %v4269 = vadd.f32 %v4158, %v4268
        %v4270 = vpop.f32.mrb[0].mxu0
        %v4271 = vadd.f32 %v4160, %v4270
        %v4272 = vpop.f32.mrb[0].mxu0
        %v4273 = vadd.f32 %v4162, %v4272
        %v4274 = vpop.f32.mrb[0].mxu0
        %v4275 = vadd.f32 %v4164, %v4274
        %4276 = vmatprep.mubr.bf16.mxu0 %v4103
        %4277 = vmatmul.mubr.bf16.gmra.mrb[0].mxu0 %v2992
        %v4278 = vpop.f32.mrb[0].mxu0
        %v4279 = vadd.f32 %v4168, %v4278
        %v4280 = vpop.f32.mrb[0].mxu0
        %v4281 = vadd.f32 %v4170, %v4280
        %v4282 = vpop.f32.mrb[0].mxu0
        %v4283 = vadd.f32 %v4172, %v4282
        %v4284 = vpop.f32.mrb[0].mxu0
        %v4285 = vadd.f32 %v4174, %v4284
        %4286 = vmatprep.mubr.bf16.mxu0 %v4106
        %4287 = vmatmul.mubr.bf16.gmra.mrb[0].mxu0 %v2996
        %v4288 = vpop.f32.mrb[0].mxu0
        %v4289 = vadd.f32 %v4178, %v4288
        %v4290 = vpop.f32.mrb[0].mxu0
        %v4291 = vadd.f32 %v4180, %v4290
        %v4292 = vpop.f32.mrb[0].mxu0
        %v4293 = vadd.f32 %v4182, %v4292
        %v4294 = vpop.f32.mrb[0].mxu0
        %v4295 = vadd.f32 %v4184, %v4294
        %4296 = vmatprep.mubr.bf16.mxu0 %v4109
        %4297 = vmatmul.mubr.bf16.gmra.mrb[0].mxu0 %v3000
        %v4298 = vpop.f32.mrb[0].mxu0
        %v4299 = vadd.f32 %v4188, %v4298
        %v4300 = vpop.f32.mrb[0].mxu0
        %v4301 = vadd.f32 %v4190, %v4300
        %v4302 = vpop.f32.mrb[0].mxu0
        %v4303 = vadd.f32 %v4192, %v4302
        %v4304 = vpop.f32.mrb[0].mxu0
        %v4305 = vadd.f32 %v4194, %v4304
        %4306 = vmatprep.mubr.bf16.mxu0 %v4112
        %4307 = vmatmul.mubr.bf16.gmra.mrb[0].mxu0 %v3004
        %v4308 = vpop.f32.mrb[0].mxu0
        %v4309 = vadd.f32 %v4198, %v4308
        %v4310 = vpop.f32.mrb[0].mxu0
        %v4311 = vadd.f32 %v4200, %v4310
        %v4312 = vpop.f32.mrb[0].mxu0
        %v4313 = vadd.f32 %v4202, %v4312
        %v4314 = vpop.f32.mrb[0].mxu0
        %v4315 = vadd.f32 %v4204, %v4314
        %4316 = vmatprep.mubr.bf16.mxu0 %v4115
        %4317 = vmatmul.mubr.bf16.gmra.mrb[0].mxu0 %v3008
        %v4318 = vpop.f32.mrb[0].mxu0
        %v4319 = vadd.f32 %v4208, %v4318
        %v4320 = vpop.f32.mrb[0].mxu0
        %v4321 = vadd.f32 %v4210, %v4320
        %v4322 = vpop.f32.mrb[0].mxu0
        %v4323 = vadd.f32 %v4212, %v4322
        %v4324 = vpop.f32.mrb[0].mxu0
        %v4325 = vadd.f32 %v4214, %v4324
        %4326 = vmatprep.mubr.bf16.mxu0 %v4118
        %4327 = vmatmul.mubr.bf16.gmra.mrb[0].mxu0 %v3012
        %v4328 = vpop.f32.mrb[0].mxu0
        %v4329 = vadd.f32 %v4218, %v4328
        %v4330 = vpop.f32.mrb[0].mxu0
        %v4331 = vadd.f32 %v4220, %v4330
        %v4332 = vpop.f32.mrb[0].mxu0
        %v4333 = vadd.f32 %v4222, %v4332
        %v4334 = vpop.f32.mrb[0].mxu0
        %v4335 = vadd.f32 %v4224, %v4334
        %4336 = vmatprep.mubr.bf16.mxu0 %v4121
        %4337 = vmatmul.mubr.bf16.gmra.mrb[0].mxu0 %v3016
        %v4338 = vpop.f32.mrb[0].mxu0
        %v4339 = vadd.f32 %v4228, %v4338
        %v4340 = vpop.f32.mrb[0].mxu0
        %v4341 = vadd.f32 %v4230, %v4340
        %v4342 = vpop.f32.mrb[0].mxu0
        %v4343 = vpop.f32.mrb[0].mxu0
        %4344 = vdwg.mxu0
        %4345 = vmatprep.subr.bf16.mxu0 %v3742
        %4346 = vmatpush1.bf16.msra.mxu0 %v3741
        %4347 = vmatprep.subr.bf16.mxu0 %v3748
        %4348 = vmatpush1.bf16.msra.mxu0 %v3747
        %4349 = vmatprep.subr.bf16.mxu0 %v3754
        %4350 = vmatpush1.bf16.msra.mxu0 %v3753
        %4351 = vmatprep.subr.bf16.mxu0 %v3760
        %4352 = vmatpush1.bf16.msra.mxu0 %v3759
        %4353 = vmatprep.subr.bf16.mxu0 %v3766
        %4354 = vmatpush1.bf16.msra.mxu0 %v3765
        %4355 = vmatprep.subr.bf16.mxu0 %v3772
        %4356 = vmatpush1.bf16.msra.mxu0 %v3771
        %4357 = vmatprep.subr.bf16.mxu0 %v3778
        %4358 = vmatpush1.bf16.msra.mxu0 %v3777
        %4359 = vmatprep.subr.bf16.mxu0 %v3784
        %4360 = vmatpush1.bf16.msra.mxu0 %v3783
        %4361 = vmatprep.subr.bf16.mxu0 %v3790
        %4362 = vmatpush1.bf16.msra.mxu0 %v3789
        %4363 = vmatprep.subr.bf16.mxu0 %v3796
        %4364 = vmatpush1.bf16.msra.mxu0 %v3795
        %4365 = vmatprep.subr.bf16.mxu0 %v3802
        %4366 = vmatpush1.bf16.msra.mxu0 %v3801
        %4367 = vmatprep.subr.bf16.mxu0 %v3808
        %4368 = vmatpush1.bf16.msra.mxu0 %v3807
        %4369 = vmatprep.subr.bf16.mxu0 %v3814
        %4370 = vmatpush1.bf16.msra.mxu0 %v3813
        %4371 = vmatprep.subr.bf16.mxu0 %v3820
        %4372 = vmatpush1.bf16.msra.mxu0 %v3819
        %4373 = vmatprep.subr.bf16.mxu0 %v3826
        %4374 = vmatpush1.bf16.msra.mxu0 %v3825
        %4375 = vmatprep.subr.bf16.mxu0 %v3832
        %4376 = vmatpush1.bf16.msra.mxu0 %v3831
        %4377 = vmatprep.mubr.bf16.mxu0 %v2987
        %4378 = vmatmul.mubr.bf16.gmra.mrb[0].mxu0 %v2986
        %v4379 = vpop.f32.mrb[0].mxu0
        %v4380 = vadd.f32 0.0, %v4379
        %v4381 = vpop.f32.mrb[0].mxu0
        %v4382 = vadd.f32 0.0, %v4381
        %v4383 = vpop.f32.mrb[0].mxu0
        %v4384 = vadd.f32 0.0, %v4383
        %v4385 = vpop.f32.mrb[0].mxu0
        %v4386 = vadd.f32 0.0, %v4385
        %4387 = vmatprep.mubr.bf16.mxu0 %v2991
        %4388 = vmatmul.mubr.bf16.gmra.mrb[0].mxu0 %v2990
        %v4389 = vpop.f32.mrb[0].mxu0
        %v4390 = vadd.f32 0.0, %v4389
        %v4391 = vpop.f32.mrb[0].mxu0
        %v4392 = vadd.f32 0.0, %v4391
        %v4393 = vpop.f32.mrb[0].mxu0
        %v4394 = vadd.f32 0.0, %v4393
        %v4395 = vpop.f32.mrb[0].mxu0
        %v4396 = vadd.f32 0.0, %v4395
        %4397 = vmatprep.mubr.bf16.mxu0 %v2995
        %4398 = vmatmul.mubr.bf16.gmra.mrb[0].mxu0 %v2994
        %v4399 = vpop.f32.mrb[0].mxu0
        %v4400 = vadd.f32 0.0, %v4399
        %v4401 = vpop.f32.mrb[0].mxu0
        %v4402 = vadd.f32 0.0, %v4401
        %v4403 = vpop.f32.mrb[0].mxu0
        %v4404 = vadd.f32 0.0, %v4403
        %v4405 = vpop.f32.mrb[0].mxu0
        %v4406 = vadd.f32 0.0, %v4405
        %4407 = vmatprep.mubr.bf16.mxu0 %v2999
        %4408 = vmatmul.mubr.bf16.gmra.mrb[0].mxu0 %v2998
        %v4409 = vpop.f32.mrb[0].mxu0
        %v4410 = vadd.f32 0.0, %v4409
        %v4411 = vpop.f32.mrb[0].mxu0
        %v4412 = vadd.f32 0.0, %v4411
        %v4413 = vpop.f32.mrb[0].mxu0
        %v4414 = vadd.f32 0.0, %v4413
        %v4415 = vpop.f32.mrb[0].mxu0
        %v4416 = vadd.f32 0.0, %v4415
        %4417 = vmatprep.mubr.bf16.mxu0 %v3003
        %4418 = vmatmul.mubr.bf16.gmra.mrb[0].mxu0 %v3002
        %v4419 = vpop.f32.mrb[0].mxu0
        %v4420 = vadd.f32 0.0, %v4419
        %v4421 = vpop.f32.mrb[0].mxu0
        %v4422 = vadd.f32 0.0, %v4421
        %v4423 = vpop.f32.mrb[0].mxu0
        %v4424 = vadd.f32 0.0, %v4423
        %v4425 = vpop.f32.mrb[0].mxu0
        %v4426 = vadd.f32 0.0, %v4425
        %4427 = vmatprep.mubr.bf16.mxu0 %v3007
        %4428 = vmatmul.mubr.bf16.gmra.mrb[0].mxu0 %v3006
        %v4429 = vpop.f32.mrb[0].mxu0
        %v4430 = vadd.f32 0.0, %v4429
        %v4431 = vpop.f32.mrb[0].mxu0
        %v4432 = vadd.f32 0.0, %v4431
        %v4433 = vpop.f32.mrb[0].mxu0
        %v4434 = vadd.f32 0.0, %v4433
        %v4435 = vpop.f32.mrb[0].mxu0
        %v4436 = vadd.f32 0.0, %v4435
        %4437 = vmatprep.mubr.bf16.mxu0 %v3011
        %4438 = vmatmul.mubr.bf16.gmra.mrb[0].mxu0 %v3010
        %v4439 = vpop.f32.mrb[0].mxu0
        %v4440 = vadd.f32 0.0, %v4439
        %v4441 = vpop.f32.mrb[0].mxu0
        %v4442 = vadd.f32 0.0, %v4441
        %v4443 = vpop.f32.mrb[0].mxu0
        %v4444 = vadd.f32 0.0, %v4443
        %v4445 = vpop.f32.mrb[0].mxu0
        %v4446 = vadd.f32 0.0, %v4445
        %4447 = vmatprep.mubr.bf16.mxu0 %v3015
        %4448 = vmatmul.mubr.bf16.gmra.mrb[0].mxu0 %v3014
        %v4449 = vpop.f32.mrb[0].mxu0
        %v4450 = vadd.f32 0.0, %v4449
        %v4451 = vpop.f32.mrb[0].mxu0
        %v4452 = vadd.f32 0.0, %v4451
        %v4453 = vpop.f32.mrb[0].mxu0
        %v4454 = vpop.f32.mrb[0].mxu0
        %4455 = vdwg.mxu0
        %4456 = vmatprep.subr.bf16.mxu0 %v3838
        %4457 = vmatpush1.bf16.msra.mxu0 %v3837
        %4458 = vmatprep.subr.bf16.mxu0 %v3844
        %4459 = vmatpush1.bf16.msra.mxu0 %v3843
        %4460 = vmatprep.subr.bf16.mxu0 %v3850
        %4461 = vmatpush1.bf16.msra.mxu0 %v3849
        %4462 = vmatprep.subr.bf16.mxu0 %v3856
        %4463 = vmatpush1.bf16.msra.mxu0 %v3855
        %4464 = vmatprep.subr.bf16.mxu0 %v3862
        %4465 = vmatpush1.bf16.msra.mxu0 %v3861
        %4466 = vmatprep.subr.bf16.mxu0 %v3868
        %4467 = vmatpush1.bf16.msra.mxu0 %v3867
        %4468 = vmatprep.subr.bf16.mxu0 %v3874
        %4469 = vmatpush1.bf16.msra.mxu0 %v3873
        %4470 = vmatprep.subr.bf16.mxu0 %v3880
        %4471 = vmatpush1.bf16.msra.mxu0 %v3879
        %4472 = vmatprep.subr.bf16.mxu0 %v3886
        %4473 = vmatpush1.bf16.msra.mxu0 %v3885
        %4474 = vmatprep.subr.bf16.mxu0 %v3892
        %4475 = vmatpush1.bf16.msra.mxu0 %v3891
        %4476 = vmatprep.subr.bf16.mxu0 %v3898
        %4477 = vmatpush1.bf16.msra.mxu0 %v3897
        %4478 = vmatprep.subr.bf16.mxu0 %v3904
        %4479 = vmatpush1.bf16.msra.mxu0 %v3903
        %4480 = vmatprep.subr.bf16.mxu0 %v3910
        %4481 = vmatpush1.bf16.msra.mxu0 %v3909
        %4482 = vmatprep.subr.bf16.mxu0 %v3916
        %4483 = vmatpush1.bf16.msra.mxu0 %v3915
        %4484 = vmatprep.subr.bf16.mxu0 0
        %4485 = vmatpush1.bf16.msra.mxu0 0
        %4486 = vmatprep.subr.bf16.mxu0 0
        %4487 = vmatpush1.bf16.msra.mxu0 0
        %4488 = vmatprep.mubr.bf16.mxu0 %v4100
        %4489 = vmatmul.mubr.bf16.gmra.mrb[0].mxu0 %v2988
        %v4490 = vpop.f32.mrb[0].mxu0
        %v4491 = vadd.f32 %v4380, %v4490
        %v4492 = vpop.f32.mrb[0].mxu0
        %v4493 = vadd.f32 %v4382, %v4492
        %v4494 = vpop.f32.mrb[0].mxu0
        %v4495 = vadd.f32 %v4384, %v4494
        %v4496 = vpop.f32.mrb[0].mxu0
        %v4497 = vadd.f32 %v4386, %v4496
        %4498 = vmatprep.mubr.bf16.mxu0 %v4103
        %4499 = vmatmul.mubr.bf16.gmra.mrb[0].mxu0 %v2992
        %v4500 = vpop.f32.mrb[0].mxu0
        %v4501 = vadd.f32 %v4390, %v4500
        %v4502 = vpop.f32.mrb[0].mxu0
        %v4503 = vadd.f32 %v4392, %v4502
        %v4504 = vpop.f32.mrb[0].mxu0
        %v4505 = vadd.f32 %v4394, %v4504
        %v4506 = vpop.f32.mrb[0].mxu0
        %v4507 = vadd.f32 %v4396, %v4506
        %4508 = vmatprep.mubr.bf16.mxu0 %v4106
        %4509 = vmatmul.mubr.bf16.gmra.mrb[0].mxu0 %v2996
        %v4510 = vpop.f32.mrb[0].mxu0
        %v4511 = vadd.f32 %v4400, %v4510
        %v4512 = vpop.f32.mrb[0].mxu0
        %v4513 = vadd.f32 %v4402, %v4512
        %v4514 = vpop.f32.mrb[0].mxu0
        %v4515 = vadd.f32 %v4404, %v4514
        %v4516 = vpop.f32.mrb[0].mxu0
        %v4517 = vadd.f32 %v4406, %v4516
        %4518 = vmatprep.mubr.bf16.mxu0 %v4109
        %4519 = vmatmul.mubr.bf16.gmra.mrb[0].mxu0 %v3000
        %v4520 = vpop.f32.mrb[0].mxu0
        %v4521 = vadd.f32 %v4410, %v4520
        %v4522 = vpop.f32.mrb[0].mxu0
        %v4523 = vadd.f32 %v4412, %v4522
        %v4524 = vpop.f32.mrb[0].mxu0
        %v4525 = vadd.f32 %v4414, %v4524
        %v4526 = vpop.f32.mrb[0].mxu0
        %v4527 = vadd.f32 %v4416, %v4526
        %4528 = vmatprep.mubr.bf16.mxu0 %v4112
        %4529 = vmatmul.mubr.bf16.gmra.mrb[0].mxu0 %v3004
        %v4530 = vpop.f32.mrb[0].mxu0
        %v4531 = vadd.f32 %v4420, %v4530
        %v4532 = vpop.f32.mrb[0].mxu0
        %v4533 = vadd.f32 %v4422, %v4532
        %v4534 = vpop.f32.mrb[0].mxu0
        %v4535 = vadd.f32 %v4424, %v4534
        %v4536 = vpop.f32.mrb[0].mxu0
        %v4537 = vadd.f32 %v4426, %v4536
        %4538 = vmatprep.mubr.bf16.mxu0 %v4115
        %4539 = vmatmul.mubr.bf16.gmra.mrb[0].mxu0 %v3008
        %v4540 = vpop.f32.mrb[0].mxu0
        %v4541 = vadd.f32 %v4430, %v4540
        %v4542 = vpop.f32.mrb[0].mxu0
        %v4543 = vadd.f32 %v4432, %v4542
        %v4544 = vpop.f32.mrb[0].mxu0
        %v4545 = vadd.f32 %v4434, %v4544
        %v4546 = vpop.f32.mrb[0].mxu0
        %v4547 = vadd.f32 %v4436, %v4546
        %4548 = vmatprep.mubr.bf16.mxu0 %v4118
        %4549 = vmatmul.mubr.bf16.gmra.mrb[0].mxu0 %v3012
        %v4550 = vpop.f32.mrb[0].mxu0
        %v4551 = vadd.f32 %v4440, %v4550
        %v4552 = vpop.f32.mrb[0].mxu0
        %v4553 = vadd.f32 %v4442, %v4552
        %v4554 = vpop.f32.mrb[0].mxu0
        %v4555 = vadd.f32 %v4444, %v4554
        %v4556 = vpop.f32.mrb[0].mxu0
        %v4557 = vadd.f32 %v4446, %v4556
        %4558 = vmatprep.mubr.bf16.mxu0 %v4121
        %4559 = vmatmul.mubr.bf16.gmra.mrb[0].mxu0 %v3016
        %v4560 = vpop.f32.mrb[0].mxu0
        %v4561 = vadd.f32 %v4450, %v4560
        %v4562 = vpop.f32.mrb[0].mxu0
        %v4563 = vadd.f32 %v4452, %v4562
        %v4564 = vpop.f32.mrb[0].mxu0
        %v4565 = vpop.f32.mrb[0].mxu0
        %4566 = vdwg.mxu0
        %4567 = vmatprep.subr.bf16.mxu0 %v3744
        %4568 = vmatpush1.bf16.msra.mxu0 %v3743
        %4569 = vmatprep.subr.bf16.mxu0 %v3750
        %4570 = vmatpush1.bf16.msra.mxu0 %v3749
        %4571 = vmatprep.subr.bf16.mxu0 %v3756
        %4572 = vmatpush1.bf16.msra.mxu0 %v3755
        %4573 = vmatprep.subr.bf16.mxu0 %v3762
        %4574 = vmatpush1.bf16.msra.mxu0 %v3761
        %4575 = vmatprep.subr.bf16.mxu0 %v3768
        %4576 = vmatpush1.bf16.msra.mxu0 %v3767
        %4577 = vmatprep.subr.bf16.mxu0 %v3774
        %4578 = vmatpush1.bf16.msra.mxu0 %v3773
        %4579 = vmatprep.subr.bf16.mxu0 %v3780
        %4580 = vmatpush1.bf16.msra.mxu0 %v3779
        %4581 = vmatprep.subr.bf16.mxu0 %v3786
        %4582 = vmatpush1.bf16.msra.mxu0 %v3785
        %4583 = vmatprep.subr.bf16.mxu0 %v3792
        %4584 = vmatpush1.bf16.msra.mxu0 %v3791
        %4585 = vmatprep.subr.bf16.mxu0 %v3798
        %4586 = vmatpush1.bf16.msra.mxu0 %v3797
        %4587 = vmatprep.subr.bf16.mxu0 %v3804
        %4588 = vmatpush1.bf16.msra.mxu0 %v3803
        %4589 = vmatprep.subr.bf16.mxu0 %v3810
        %4590 = vmatpush1.bf16.msra.mxu0 %v3809
        %4591 = vmatprep.subr.bf16.mxu0 %v3816
        %4592 = vmatpush1.bf16.msra.mxu0 %v3815
        %4593 = vmatprep.subr.bf16.mxu0 %v3822
        %4594 = vmatpush1.bf16.msra.mxu0 %v3821
        %4595 = vmatprep.subr.bf16.mxu0 %v3828
        %4596 = vmatpush1.bf16.msra.mxu0 %v3827
        %4597 = vmatprep.subr.bf16.mxu0 %v3834
        %4598 = vmatpush1.bf16.msra.mxu0 %v3833
        %4599 = vmatprep.mubr.bf16.mxu0 %v2987
        %4600 = vmatmul.mubr.bf16.gmra.mrb[0].mxu0 %v2986
        %v4601 = vpop.f32.mrb[0].mxu0
        %v4602 = vadd.f32 0.0, %v4601
        %v4603 = vpop.f32.mrb[0].mxu0
        %v4604 = vadd.f32 0.0, %v4603
        %v4605 = vpop.f32.mrb[0].mxu0
        %v4606 = vadd.f32 0.0, %v4605
        %v4607 = vpop.f32.mrb[0].mxu0
        %v4608 = vadd.f32 0.0, %v4607
        %4609 = vmatprep.mubr.bf16.mxu0 %v2991
        %4610 = vmatmul.mubr.bf16.gmra.mrb[0].mxu0 %v2990
        %v4611 = vpop.f32.mrb[0].mxu0
        %v4612 = vadd.f32 0.0, %v4611
        %v4613 = vpop.f32.mrb[0].mxu0
        %v4614 = vadd.f32 0.0, %v4613
        %v4615 = vpop.f32.mrb[0].mxu0
        %v4616 = vadd.f32 0.0, %v4615
        %v4617 = vpop.f32.mrb[0].mxu0
        %v4618 = vadd.f32 0.0, %v4617
        %4619 = vmatprep.mubr.bf16.mxu0 %v2995
        %4620 = vmatmul.mubr.bf16.gmra.mrb[0].mxu0 %v2994
        %v4621 = vpop.f32.mrb[0].mxu0
        %v4622 = vadd.f32 0.0, %v4621
        %v4623 = vpop.f32.mrb[0].mxu0
        %v4624 = vadd.f32 0.0, %v4623
        %v4625 = vpop.f32.mrb[0].mxu0
        %v4626 = vadd.f32 0.0, %v4625
        %v4627 = vpop.f32.mrb[0].mxu0
        %v4628 = vadd.f32 0.0, %v4627
        %4629 = vmatprep.mubr.bf16.mxu0 %v2999
        %4630 = vmatmul.mubr.bf16.gmra.mrb[0].mxu0 %v2998
        %v4631 = vpop.f32.mrb[0].mxu0
        %v4632 = vadd.f32 0.0, %v4631
        %v4633 = vpop.f32.mrb[0].mxu0
        %v4634 = vadd.f32 0.0, %v4633
        %v4635 = vpop.f32.mrb[0].mxu0
        %v4636 = vadd.f32 0.0, %v4635
        %v4637 = vpop.f32.mrb[0].mxu0
        %v4638 = vadd.f32 0.0, %v4637
        %4639 = vmatprep.mubr.bf16.mxu0 %v3003
        %4640 = vmatmul.mubr.bf16.gmra.mrb[0].mxu0 %v3002
        %v4641 = vpop.f32.mrb[0].mxu0
        %v4642 = vadd.f32 0.0, %v4641
        %v4643 = vpop.f32.mrb[0].mxu0
        %v4644 = vadd.f32 0.0, %v4643
        %v4645 = vpop.f32.mrb[0].mxu0
        %v4646 = vadd.f32 0.0, %v4645
        %v4647 = vpop.f32.mrb[0].mxu0
        %v4648 = vadd.f32 0.0, %v4647
        %4649 = vmatprep.mubr.bf16.mxu0 %v3007
        %4650 = vmatmul.mubr.bf16.gmra.mrb[0].mxu0 %v3006
        %v4651 = vpop.f32.mrb[0].mxu0
        %v4652 = vadd.f32 0.0, %v4651
        %v4653 = vpop.f32.mrb[0].mxu0
        %v4654 = vadd.f32 0.0, %v4653
        %v4655 = vpop.f32.mrb[0].mxu0
        %v4656 = vadd.f32 0.0, %v4655
        %v4657 = vpop.f32.mrb[0].mxu0
        %v4658 = vadd.f32 0.0, %v4657
        %4659 = vmatprep.mubr.bf16.mxu0 %v3011
        %4660 = vmatmul.mubr.bf16.gmra.mrb[0].mxu0 %v3010
        %v4661 = vpop.f32.mrb[0].mxu0
        %v4662 = vadd.f32 0.0, %v4661
        %v4663 = vpop.f32.mrb[0].mxu0
        %v4664 = vadd.f32 0.0, %v4663
        %v4665 = vpop.f32.mrb[0].mxu0
        %v4666 = vadd.f32 0.0, %v4665
        %v4667 = vpop.f32.mrb[0].mxu0
        %v4668 = vadd.f32 0.0, %v4667
        %4669 = vmatprep.mubr.bf16.mxu0 %v3015
        %4670 = vmatmul.mubr.bf16.gmra.mrb[0].mxu0 %v3014
        %v4671 = vpop.f32.mrb[0].mxu0
        %v4672 = vadd.f32 0.0, %v4671
        %v4673 = vpop.f32.mrb[0].mxu0
        %v4674 = vadd.f32 0.0, %v4673
        %v4675 = vpop.f32.mrb[0].mxu0
        %v4676 = vpop.f32.mrb[0].mxu0
        %4677 = vdwg.mxu0
        %4678 = vmatprep.subr.bf16.mxu0 %v3840
        %4679 = vmatpush1.bf16.msra.mxu0 %v3839
        %4680 = vmatprep.subr.bf16.mxu0 %v3846
        %4681 = vmatpush1.bf16.msra.mxu0 %v3845
        %4682 = vmatprep.subr.bf16.mxu0 %v3852
        %4683 = vmatpush1.bf16.msra.mxu0 %v3851
        %4684 = vmatprep.subr.bf16.mxu0 %v3858
        %4685 = vmatpush1.bf16.msra.mxu0 %v3857
        %4686 = vmatprep.subr.bf16.mxu0 %v3864
        %4687 = vmatpush1.bf16.msra.mxu0 %v3863
        %4688 = vmatprep.subr.bf16.mxu0 %v3870
        %4689 = vmatpush1.bf16.msra.mxu0 %v3869
        %4690 = vmatprep.subr.bf16.mxu0 %v3876
        %4691 = vmatpush1.bf16.msra.mxu0 %v3875
        %4692 = vmatprep.subr.bf16.mxu0 %v3882
        %4693 = vmatpush1.bf16.msra.mxu0 %v3881
        %4694 = vmatprep.subr.bf16.mxu0 %v3888
        %4695 = vmatpush1.bf16.msra.mxu0 %v3887
        %4696 = vmatprep.subr.bf16.mxu0 %v3894
        %4697 = vmatpush1.bf16.msra.mxu0 %v3893
        %4698 = vmatprep.subr.bf16.mxu0 %v3900
        %4699 = vmatpush1.bf16.msra.mxu0 %v3899
        %4700 = vmatprep.subr.bf16.mxu0 %v3906
        %4701 = vmatpush1.bf16.msra.mxu0 %v3905
        %4702 = vmatprep.subr.bf16.mxu0 %v3912
        %4703 = vmatpush1.bf16.msra.mxu0 %v3911
        %4704 = vmatprep.subr.bf16.mxu0 %v3918
        %4705 = vmatpush1.bf16.msra.mxu0 %v3917
        %4706 = vmatprep.subr.bf16.mxu0 0
        %4707 = vmatpush1.bf16.msra.mxu0 0
        %4708 = vmatprep.subr.bf16.mxu0 0
        %4709 = vmatpush1.bf16.msra.mxu0 0
        %4710 = vmatprep.mubr.bf16.mxu0 %v4100
        %4711 = vmatmul.mubr.bf16.gmra.mrb[0].mxu0 %v2988
        %v4712 = vpop.f32.mrb[0].mxu0
        %v4713 = vadd.f32 %v4602, %v4712
        %v4714 = vpop.f32.mrb[0].mxu0
        %v4715 = vadd.f32 %v4604, %v4714
        %v4716 = vpop.f32.mrb[0].mxu0
        %v4717 = vadd.f32 %v4606, %v4716
        %v4718 = vpop.f32.mrb[0].mxu0
        %v4719 = vadd.f32 %v4608, %v4718
        %4720 = vmatprep.mubr.bf16.mxu0 %v4103
        %4721 = vmatmul.mubr.bf16.gmra.mrb[0].mxu0 %v2992
        %v4722 = vpop.f32.mrb[0].mxu0
        %v4723 = vadd.f32 %v4612, %v4722
        %v4724 = vpop.f32.mrb[0].mxu0
        %v4725 = vadd.f32 %v4614, %v4724
        %v4726 = vpop.f32.mrb[0].mxu0
        %v4727 = vadd.f32 %v4616, %v4726
        %v4728 = vpop.f32.mrb[0].mxu0
        %v4729 = vadd.f32 %v4618, %v4728
        %4730 = vmatprep.mubr.bf16.mxu0 %v4106
        %4731 = vmatmul.mubr.bf16.gmra.mrb[0].mxu0 %v2996
        %v4732 = vpop.f32.mrb[0].mxu0
        %v4733 = vadd.f32 %v4622, %v4732
        %v4734 = vpop.f32.mrb[0].mxu0
        %v4735 = vadd.f32 %v4624, %v4734
        %v4736 = vpop.f32.mrb[0].mxu0
        %v4737 = vadd.f32 %v4626, %v4736
        %v4738 = vpop.f32.mrb[0].mxu0
        %v4739 = vadd.f32 %v4628, %v4738
        %4740 = vmatprep.mubr.bf16.mxu0 %v4109
        %4741 = vmatmul.mubr.bf16.gmra.mrb[0].mxu0 %v3000
        %v4742 = vpop.f32.mrb[0].mxu0
        %v4743 = vadd.f32 %v4632, %v4742
        %v4744 = vpop.f32.mrb[0].mxu0
        %v4745 = vadd.f32 %v4634, %v4744
        %v4746 = vpop.f32.mrb[0].mxu0
        %v4747 = vadd.f32 %v4636, %v4746
        %v4748 = vpop.f32.mrb[0].mxu0
        %v4749 = vadd.f32 %v4638, %v4748
        %4750 = vmatprep.mubr.bf16.mxu0 %v4112
        %4751 = vmatmul.mubr.bf16.gmra.mrb[0].mxu0 %v3004
        %v4752 = vpop.f32.mrb[0].mxu0
        %v4753 = vadd.f32 %v4642, %v4752
        %v4754 = vpop.f32.mrb[0].mxu0
        %v4755 = vadd.f32 %v4644, %v4754
        %v4756 = vpop.f32.mrb[0].mxu0
        %v4757 = vadd.f32 %v4646, %v4756
        %v4758 = vpop.f32.mrb[0].mxu0
        %v4759 = vadd.f32 %v4648, %v4758
        %4760 = vmatprep.mubr.bf16.mxu0 %v4115
        %4761 = vmatmul.mubr.bf16.gmra.mrb[0].mxu0 %v3008
        %v4762 = vpop.f32.mrb[0].mxu0
        %v4763 = vadd.f32 %v4652, %v4762
        %v4764 = vpop.f32.mrb[0].mxu0
        %v4765 = vadd.f32 %v4654, %v4764
        %v4766 = vpop.f32.mrb[0].mxu0
        %v4767 = vadd.f32 %v4656, %v4766
        %v4768 = vpop.f32.mrb[0].mxu0
        %v4769 = vadd.f32 %v4658, %v4768
        %4770 = vmatprep.mubr.bf16.mxu0 %v4118
        %4771 = vmatmul.mubr.bf16.gmra.mrb[0].mxu0 %v3012
        %v4772 = vpop.f32.mrb[0].mxu0
        %v4773 = vadd.f32 %v4662, %v4772
        %v4774 = vpop.f32.mrb[0].mxu0
        %v4775 = vadd.f32 %v4664, %v4774
        %v4776 = vpop.f32.mrb[0].mxu0
        %v4777 = vadd.f32 %v4666, %v4776
        %v4778 = vpop.f32.mrb[0].mxu0
        %v4779 = vadd.f32 %v4668, %v4778
        %4780 = vmatprep.mubr.bf16.mxu0 %v4121
        %4781 = vmatmul.mubr.bf16.gmra.mrb[0].mxu0 %v3016
        %v4782 = vpop.f32.mrb[0].mxu0
        %v4783 = vadd.f32 %v4672, %v4782
        %v4784 = vpop.f32.mrb[0].mxu0
        %v4785 = vadd.f32 %v4674, %v4784
        %v4786 = vpop.f32.mrb[0].mxu0
        %v4787 = vpop.f32.mrb[0].mxu0
        %4788 = vdwg.mxu0
        %v4790 = vlaneseq
        %v4791 = vshrl.u32 %v4790, 7
        %v4792 = vsub.s32 0, %v4791
        %v4793 = vrot.slane %v3018, %v4792
        %v4794 = vlaneseq
        %v4795 = vshrl.u32 %v4794, 7
        %v4796 = vsub.s32 1, %v4795
        %v4797 = vrot.slane %v3018, %v4796
        %v4798 = vlaneseq
        %v4799 = vshrl.u32 %v4798, 7
        %v4800 = vsub.s32 2, %v4799
        %v4801 = vrot.slane %v3018, %v4800
        %v4802 = vlaneseq
        %v4803 = vshrl.u32 %v4802, 7
        %v4804 = vsub.s32 3, %v4803
        %v4805 = vrot.slane %v3018, %v4804
        %v4806 = vlaneseq
        %v4807 = vshrl.u32 %v4806, 7
        %v4808 = vsub.s32 4, %v4807
        %v4809 = vrot.slane %v3018, %v4808
        %v4810 = vlaneseq
        %v4811 = vshrl.u32 %v4810, 7
        %v4812 = vsub.s32 5, %v4811
        %v4813 = vrot.slane %v3018, %v4812
        %v4820 = vadd.f32 %v4793, %v4269
        %v4821 = vadd.f32 %v4797, %v4271
        %v4822 = vadd.f32 %v4801, %v4491
        %v4823 = vadd.f32 %v4805, %v4493
        %v4824 = vadd.f32 %v4809, %v4713
        %v4825 = vadd.f32 %v4813, %v4715
        %v4826 = vadd.f32 %v4793, %v4273
        %v4827 = vadd.f32 %v4797, %v4275
        %v4828 = vadd.f32 %v4801, %v4495
        %v4829 = vadd.f32 %v4805, %v4497
        %v4830 = vadd.f32 %v4809, %v4717
        %v4831 = vadd.f32 %v4813, %v4719
        %v4832 = vadd.f32 %v4793, %v4279
        %v4833 = vadd.f32 %v4797, %v4281
        %v4834 = vadd.f32 %v4801, %v4501
        %v4835 = vadd.f32 %v4805, %v4503
        %v4836 = vadd.f32 %v4809, %v4723
        %v4837 = vadd.f32 %v4813, %v4725
        %v4838 = vadd.f32 %v4793, %v4283
        %v4839 = vadd.f32 %v4797, %v4285
        %v4840 = vadd.f32 %v4801, %v4505
        %v4841 = vadd.f32 %v4805, %v4507
        %v4842 = vadd.f32 %v4809, %v4727
        %v4843 = vadd.f32 %v4813, %v4729
        %v4844 = vadd.f32 %v4793, %v4289
        %v4845 = vadd.f32 %v4797, %v4291
        %v4846 = vadd.f32 %v4801, %v4511
        %v4847 = vadd.f32 %v4805, %v4513
        %v4848 = vadd.f32 %v4809, %v4733
        %v4849 = vadd.f32 %v4813, %v4735
        %v4850 = vadd.f32 %v4793, %v4293
        %v4851 = vadd.f32 %v4797, %v4295
        %v4852 = vadd.f32 %v4801, %v4515
        %v4853 = vadd.f32 %v4805, %v4517
        %v4854 = vadd.f32 %v4809, %v4737
        %v4855 = vadd.f32 %v4813, %v4739
        %v4856 = vadd.f32 %v4793, %v4299
        %v4857 = vadd.f32 %v4797, %v4301
        %v4858 = vadd.f32 %v4801, %v4521
        %v4859 = vadd.f32 %v4805, %v4523
        %v4860 = vadd.f32 %v4809, %v4743
        %v4861 = vadd.f32 %v4813, %v4745
        %v4862 = vadd.f32 %v4793, %v4303
        %v4863 = vadd.f32 %v4797, %v4305
        %v4864 = vadd.f32 %v4801, %v4525
        %v4865 = vadd.f32 %v4805, %v4527
        %v4866 = vadd.f32 %v4809, %v4747
        %v4867 = vadd.f32 %v4813, %v4749
        %v4868 = vadd.f32 %v4793, %v4309
        %v4869 = vadd.f32 %v4797, %v4311
        %v4870 = vadd.f32 %v4801, %v4531
        %v4871 = vadd.f32 %v4805, %v4533
        %v4872 = vadd.f32 %v4809, %v4753
        %v4873 = vadd.f32 %v4813, %v4755
        %v4874 = vadd.f32 %v4793, %v4313
        %v4875 = vadd.f32 %v4797, %v4315
        %v4876 = vadd.f32 %v4801, %v4535
        %v4877 = vadd.f32 %v4805, %v4537
        %v4878 = vadd.f32 %v4809, %v4757
        %v4879 = vadd.f32 %v4813, %v4759
        %v4880 = vadd.f32 %v4793, %v4319
        %v4881 = vadd.f32 %v4797, %v4321
        %v4882 = vadd.f32 %v4801, %v4541
        %v4883 = vadd.f32 %v4805, %v4543
        %v4884 = vadd.f32 %v4809, %v4763
        %v4885 = vadd.f32 %v4813, %v4765
        %v4886 = vadd.f32 %v4793, %v4323
        %v4887 = vadd.f32 %v4797, %v4325
        %v4888 = vadd.f32 %v4801, %v4545
        %v4889 = vadd.f32 %v4805, %v4547
        %v4890 = vadd.f32 %v4809, %v4767
        %v4891 = vadd.f32 %v4813, %v4769
        %v4892 = vadd.f32 %v4793, %v4329
        %v4893 = vadd.f32 %v4797, %v4331
        %v4894 = vadd.f32 %v4801, %v4551
        %v4895 = vadd.f32 %v4805, %v4553
        %v4896 = vadd.f32 %v4809, %v4773
        %v4897 = vadd.f32 %v4813, %v4775
        %v4898 = vadd.f32 %v4793, %v4333
        %v4899 = vadd.f32 %v4797, %v4335
        %v4900 = vadd.f32 %v4801, %v4555
        %v4901 = vadd.f32 %v4805, %v4557
        %v4902 = vadd.f32 %v4809, %v4777
        %v4903 = vadd.f32 %v4813, %v4779
        %v4904 = vadd.f32 %v4793, %v4339
        %v4905 = vadd.f32 %v4797, %v4341
        %v4906 = vadd.f32 %v4801, %v4561
        %v4907 = vadd.f32 %v4805, %v4563
        %v4908 = vadd.f32 %v4809, %v4783
        %v4909 = vadd.f32 %v4813, %v4785
        %s4910 = scalar_lea.vmem %s4, 1440
        %v4911 = vld [vmem:[%s4910] sm:$0xff]
        %v4912 = vld [vmem:[%s4910 + $0x8] sm:$0xff]
        %v4913 = vld [vmem:[%s4910 + $0x10] sm:$0xff]
        %v4914 = vld [vmem:[%s4910 + $0x18] sm:$0xff]
        %v4915 = vld [vmem:[%s4910 + $0x20] sm:$0xff]
        %v4916 = vld [vmem:[%s4910 + $0x28] sm:$0xff]
        %v4917 = vld [vmem:[%s4910 + $0x30] sm:$0xff]
        %v4918 = vld [vmem:[%s4910 + $0x38] sm:$0xff]
        %v4919 = vld [vmem:[%s4910 + $0x40] sm:$0xff]
        %v4920 = vld [vmem:[%s4910 + $0x48] sm:$0xff]
        %v4921 = vld [vmem:[%s4910 + $0x50] sm:$0xff]
        %v4922 = vld [vmem:[%s4910 + $0x58] sm:$0xff]
        %v4923 = vld [vmem:[%s4910 + $0x60] sm:$0xff]
        %v4924 = vld [vmem:[%s4910 + $0x68] sm:$0xff]
        %v4925 = vld [vmem:[%s4910 + $0x70] sm:$0xff]
        %v4926 = vld [vmem:[%s4910 + $0x78] sm:$0xff]
        %v4927 = vld [vmem:[%s4910 + $0x80] sm:$0xff]
        %v4928 = vld [vmem:[%s4910 + $0x88] sm:$0xff]
        %v4929 = vld [vmem:[%s4910 + $0x90] sm:$0xff]
        %v4930 = vld [vmem:[%s4910 + $0x98] sm:$0xff]
        %v4931 = vld [vmem:[%s4910 + $0xa0] sm:$0xff]
        %v4932 = vld [vmem:[%s4910 + $0xa8] sm:$0xff]
        %v4933 = vld [vmem:[%s4910 + $0xb0] sm:$0xff]
        %v4934 = vld [vmem:[%s4910 + $0xb8] sm:$0xff]
        %v4935 = vld [vmem:[%s4910 + $0xc0] sm:$0xff]
        %v4936 = vld [vmem:[%s4910 + $0xc8] sm:$0xff]
        %v4937 = vld [vmem:[%s4910 + $0xd0] sm:$0xff]
        %v4938 = vld [vmem:[%s4910 + $0xd8] sm:$0xff]
        %v4939 = vld [vmem:[%s4910 + $0xe0] sm:$0xff]
        %v4940 = vld [vmem:[%s4910 + $0xe8] sm:$0xff]
        %v4941 = vld [vmem:[%s4910 + $0xf0] sm:$0xff]
        %v4942 = vld [vmem:[%s4910 + $0xf8] sm:$0xff]
        %v4943 = vld [vmem:[%s4910 + $0x100] sm:$0xff]
        %v4944 = vld [vmem:[%s4910 + $0x108] sm:$0xff]
        %v4945 = vld [vmem:[%s4910 + $0x110] sm:$0xff]
        %v4946 = vld [vmem:[%s4910 + $0x118] sm:$0xff]
        %v4947 = vld [vmem:[%s4910 + $0x120] sm:$0xff]
        %v4948 = vld [vmem:[%s4910 + $0x128] sm:$0xff]
        %v4949 = vld [vmem:[%s4910 + $0x130] sm:$0xff]
        %v4950 = vld [vmem:[%s4910 + $0x138] sm:$0xff]
        %v4951 = vld [vmem:[%s4910 + $0x140] sm:$0xff]
        %v4952 = vld [vmem:[%s4910 + $0x148] sm:$0xff]
        %v4953 = vld [vmem:[%s4910 + $0x150] sm:$0xff]
        %v4954 = vld [vmem:[%s4910 + $0x158] sm:$0xff]
        %v4955 = vld [vmem:[%s4910 + $0x160] sm:$0xff]
        %v4956 = vld [vmem:[%s4910 + $0x168] sm:$0xff]
        %v4957 = vld [vmem:[%s4910 + $0x170] sm:$0xff]
        %v4958 = vld [vmem:[%s4910 + $0x178] sm:$0xff]
        %v4959 = vld [vmem:[%s4910 + $0x180] sm:$0xff]
        %v4960 = vld [vmem:[%s4910 + $0x188] sm:$0xff]
        %v4961 = vld [vmem:[%s4910 + $0x190] sm:$0xff]
        %v4962 = vld [vmem:[%s4910 + $0x198] sm:$0xff]
        %v4963 = vld [vmem:[%s4910 + $0x1a0] sm:$0xff]
        %v4964 = vld [vmem:[%s4910 + $0x1a8] sm:$0xff]
        %v4965 = vld [vmem:[%s4910 + $0x1b0] sm:$0xff]
        %v4966 = vld [vmem:[%s4910 + $0x1b8] sm:$0xff]
        %v4967 = vld [vmem:[%s4910 + $0x1c0] sm:$0xff]
        %v4968 = vld [vmem:[%s4910 + $0x1c8] sm:$0xff]
        %v4969 = vld [vmem:[%s4910 + $0x1d0] sm:$0xff]
        %v4970 = vld [vmem:[%s4910 + $0x1d8] sm:$0xff]
        %v4971 = vld [vmem:[%s4910 + $0x1e0] sm:$0xff]
        %v4972 = vld [vmem:[%s4910 + $0x1e8] sm:$0xff]
        %v4973 = vld [vmem:[%s4910 + $0x1f0] sm:$0xff]
        %v4974 = vld [vmem:[%s4910 + $0x1f8] sm:$0xff]
        %v4975 = vld [vmem:[%s4910 + $0x200] sm:$0xff]
        %v4976 = vld [vmem:[%s4910 + $0x208] sm:$0xff]
        %v4977 = vld [vmem:[%s4910 + $0x210] sm:$0xff]
        %v4978 = vld [vmem:[%s4910 + $0x218] sm:$0xff]
        %v4979 = vld [vmem:[%s4910 + $0x220] sm:$0xff]
        %v4980 = vld [vmem:[%s4910 + $0x228] sm:$0xff]
        %v4981 = vld [vmem:[%s4910 + $0x230] sm:$0xff]
        %v4982 = vld [vmem:[%s4910 + $0x238] sm:$0xff]
        %v4983 = vld [vmem:[%s4910 + $0x240] sm:$0xff]
        %v4984 = vld [vmem:[%s4910 + $0x248] sm:$0xff]
        %v4985 = vld [vmem:[%s4910 + $0x250] sm:$0xff]
        %v4986 = vld [vmem:[%s4910 + $0x258] sm:$0xff]
        %v4987 = vld [vmem:[%s4910 + $0x260] sm:$0xff]
        %v4988 = vld [vmem:[%s4910 + $0x268] sm:$0xff]
        %v4989 = vld [vmem:[%s4910 + $0x270] sm:$0xff]
        %v4990 = vld [vmem:[%s4910 + $0x278] sm:$0xff]
        %v4991 = vld [vmem:[%s4910 + $0x280] sm:$0xff]
        %v4992 = vld [vmem:[%s4910 + $0x288] sm:$0xff]
        %v4993 = vld [vmem:[%s4910 + $0x290] sm:$0xff]
        %v4994 = vld [vmem:[%s4910 + $0x298] sm:$0xff]
        %v4995 = vld [vmem:[%s4910 + $0x2a0] sm:$0xff]
        %v4996 = vld [vmem:[%s4910 + $0x2a8] sm:$0xff]
        %v4997 = vld [vmem:[%s4910 + $0x2b0] sm:$0xff]
        %v4998 = vld [vmem:[%s4910 + $0x2b8] sm:$0xff]
        %v4999 = vld [vmem:[%s4910 + $0x2c0] sm:$0xff]
        %v5000 = vld [vmem:[%s4910 + $0x2c8] sm:$0xff]
        %v5001 = vld [vmem:[%s4910 + $0x2d0] sm:$0xff]
        %v5002 = vld [vmem:[%s4910 + $0x2d8] sm:$0xff]
        %v5003 = vld [vmem:[%s4910 + $0x2e0] sm:$0xff]
        %v5004 = vld [vmem:[%s4910 + $0x2e8] sm:$0xff]
        %v5005 = vld [vmem:[%s4910 + $0x2f0] sm:$0xff]
        %v5006 = vld [vmem:[%s4910 + $0x2f8] sm:$0xff]
        %v5007 = vld [vmem:[%s4910 + $0x300] sm:$0xff]
        %v5008 = vld [vmem:[%s4910 + $0x308] sm:$0xff]
        %v5009 = vld [vmem:[%s4910 + $0x310] sm:$0xff]
        %v5010 = vld [vmem:[%s4910 + $0x318] sm:$0xff]
        %v5011 = vld [vmem:[%s4910 + $0x320] sm:$0xff]
        %v5012 = vld [vmem:[%s4910 + $0x328] sm:$0xff]
        %v5013 = vld [vmem:[%s4910 + $0x330] sm:$0xff]
        %v5014 = vld [vmem:[%s4910 + $0x338] sm:$0xff]
        %v5015 = vld [vmem:[%s4910 + $0x340] sm:$0xff]
        %v5016 = vld [vmem:[%s4910 + $0x348] sm:$0xff]
        %v5017 = vld [vmem:[%s4910 + $0x350] sm:$0xff]
        %v5018 = vld [vmem:[%s4910 + $0x358] sm:$0xff]
        %v5019 = vld [vmem:[%s4910 + $0x360] sm:$0xff]
        %v5020 = vld [vmem:[%s4910 + $0x368] sm:$0xff]
        %v5021 = vld [vmem:[%s4910 + $0x370] sm:$0xff]
        %v5022 = vld [vmem:[%s4910 + $0x378] sm:$0xff]
        %v5023 = vld [vmem:[%s4910 + $0x380] sm:$0xff]
        %v5024 = vld [vmem:[%s4910 + $0x388] sm:$0xff]
        %v5025 = vld [vmem:[%s4910 + $0x390] sm:$0xff]
        %v5026 = vld [vmem:[%s4910 + $0x398] sm:$0xff]
        %v5027 = vld [vmem:[%s4910 + $0x3a0] sm:$0xff]
        %v5028 = vld [vmem:[%s4910 + $0x3a8] sm:$0xff]
        %v5029 = vld [vmem:[%s4910 + $0x3b0] sm:$0xff]
        %v5030 = vld [vmem:[%s4910 + $0x3b8] sm:$0xff]
        %v5031 = vld [vmem:[%s4910 + $0x3c0] sm:$0xff]
        %v5032 = vld [vmem:[%s4910 + $0x3c8] sm:$0xff]
        %v5033 = vld [vmem:[%s4910 + $0x3d0] sm:$0xff]
        %v5034 = vld [vmem:[%s4910 + $0x3d8] sm:$0xff]
        %v5035 = vld [vmem:[%s4910 + $0x3e0] sm:$0xff]
        %v5036 = vld [vmem:[%s4910 + $0x3e8] sm:$0xff]
        %v5037 = vld [vmem:[%s4910 + $0x3f0] sm:$0xff]
        %v5038 = vld [vmem:[%s4910 + $0x3f8] sm:$0xff]
        %v5039 = vld [vmem:[%s4910 + $0x400] sm:$0xff]
        %v5040 = vld [vmem:[%s4910 + $0x408] sm:$0xff]
        %v5041 = vld [vmem:[%s4910 + $0x410] sm:$0xff]
        %v5042 = vld [vmem:[%s4910 + $0x418] sm:$0xff]
        %v5043 = vld [vmem:[%s4910 + $0x420] sm:$0xff]
        %v5044 = vld [vmem:[%s4910 + $0x428] sm:$0xff]
        %v5045 = vld [vmem:[%s4910 + $0x430] sm:$0xff]
        %v5046 = vld [vmem:[%s4910 + $0x438] sm:$0xff]
        %v5047 = vld [vmem:[%s4910 + $0x440] sm:$0xff]
        %v5048 = vld [vmem:[%s4910 + $0x448] sm:$0xff]
        %v5049 = vld [vmem:[%s4910 + $0x450] sm:$0xff]
        %v5050 = vld [vmem:[%s4910 + $0x458] sm:$0xff]
        %v5051 = vld [vmem:[%s4910 + $0x460] sm:$0xff]
        %v5052 = vld [vmem:[%s4910 + $0x468] sm:$0xff]
        %v5053 = vld [vmem:[%s4910 + $0x470] sm:$0xff]
        %v5054 = vld [vmem:[%s4910 + $0x478] sm:$0xff]
        %v5055 = vld [vmem:[%s4910 + $0x480] sm:$0xff]
        %v5056 = vld [vmem:[%s4910 + $0x488] sm:$0xff]
        %v5057 = vld [vmem:[%s4910 + $0x490] sm:$0xff]
        %v5058 = vld [vmem:[%s4910 + $0x498] sm:$0xff]
        %v5059 = vld [vmem:[%s4910 + $0x4a0] sm:$0xff]
        %v5060 = vld [vmem:[%s4910 + $0x4a8] sm:$0xff]
        %v5061 = vld [vmem:[%s4910 + $0x4b0] sm:$0xff]
        %v5062 = vld [vmem:[%s4910 + $0x4b8] sm:$0xff]
        %v5063 = vld [vmem:[%s4910 + $0x4c0] sm:$0xff]
        %v5064 = vld [vmem:[%s4910 + $0x4c8] sm:$0xff]
        %v5065 = vld [vmem:[%s4910 + $0x4d0] sm:$0xff]
        %v5066 = vld [vmem:[%s4910 + $0x4d8] sm:$0xff]
        %v5067 = vld [vmem:[%s4910 + $0x4e0] sm:$0xff]
        %v5068 = vld [vmem:[%s4910 + $0x4e8] sm:$0xff]
        %v5069 = vld [vmem:[%s4910 + $0x4f0] sm:$0xff]
        %v5070 = vld [vmem:[%s4910 + $0x4f8] sm:$0xff]
        %v5071 = vld [vmem:[%s4910 + $0x500] sm:$0xff]
        %v5072 = vld [vmem:[%s4910 + $0x508] sm:$0xff]
        %v5073 = vld [vmem:[%s4910 + $0x510] sm:$0xff]
        %v5074 = vld [vmem:[%s4910 + $0x518] sm:$0xff]
        %v5075 = vld [vmem:[%s4910 + $0x520] sm:$0xff]
        %v5076 = vld [vmem:[%s4910 + $0x528] sm:$0xff]
        %v5077 = vld [vmem:[%s4910 + $0x530] sm:$0xff]
        %v5078 = vld [vmem:[%s4910 + $0x538] sm:$0xff]
        %v5079 = vld [vmem:[%s4910 + $0x540] sm:$0xff]
        %v5080 = vld [vmem:[%s4910 + $0x548] sm:$0xff]
        %v5081 = vld [vmem:[%s4910 + $0x550] sm:$0xff]
        %v5082 = vld [vmem:[%s4910 + $0x558] sm:$0xff]
        %v5083 = vld [vmem:[%s4910 + $0x560] sm:$0xff]
        %v5084 = vld [vmem:[%s4910 + $0x568] sm:$0xff]
        %v5085 = vld [vmem:[%s4910 + $0x570] sm:$0xff]
        %v5086 = vld [vmem:[%s4910 + $0x578] sm:$0xff]
        %v5087 = vld [vmem:[%s4910 + $0x580] sm:$0xff]
        %v5088 = vld [vmem:[%s4910 + $0x588] sm:$0xff]
        %v5089 = vld [vmem:[%s4910 + $0x590] sm:$0xff]
        %v5090 = vld [vmem:[%s4910 + $0x598] sm:$0xff]
        %v5092 = vshrl.u32 %v2986, 16
        %v5094 = vshll.u32 %v2986, 16
        %v5096 = vrot.slane %v5094, 1
        %v5097 = vor.u32 %v5092, %v5096
        %v5099 = vshll.u32 %v2990, 16
        %v5101 = vrot.slane %v5099, 1
        %v5102 = vsel %vm2042, %v5097, %v5101
        %v5104 = vshrl.u32 %v2987, 16
        %v5106 = vshll.u32 %v2987, 16
        %v5108 = vrot.slane %v5106, 1
        %v5109 = vor.u32 %v5104, %v5108
        %v5111 = vshll.u32 %v2991, 16
        %v5113 = vrot.slane %v5111, 1
        %v5114 = vsel %vm2042, %v5109, %v5113
        %v5116 = vshrl.u32 %v2988, 16
        %v5118 = vshll.u32 %v2988, 16
        %v5120 = vrot.slane %v5118, 1
        %v5121 = vor.u32 %v5116, %v5120
        %v5123 = vshll.u32 %v2992, 16
        %v5125 = vrot.slane %v5123, 1
        %v5126 = vsel %vm2042, %v5121, %v5125
        %v5127 = vshrl.u32 %v2989, 16
        %v5129 = vshll.u32 %v2989, 16
        %v5131 = vrot.slane %v5129, 1
        %v5132 = vor.u32 %v5127, %v5131
        %v5133 = vshll.u32 %v2993, 16
        %v5135 = vrot.slane %v5133, 1
        %v5136 = vsel %vm2042, %v5132, %v5135
        %v5137 = vshrl.u32 %v2990, 16
        %v5139 = vor.u32 %v5137, %v5101
        %v5141 = vshll.u32 %v2994, 16
        %v5143 = vrot.slane %v5141, 1
        %v5144 = vsel %vm2042, %v5139, %v5143
        %v5145 = vshrl.u32 %v2991, 16
        %v5147 = vor.u32 %v5145, %v5113
        %v5149 = vshll.u32 %v2995, 16
        %v5151 = vrot.slane %v5149, 1
        %v5152 = vsel %vm2042, %v5147, %v5151
        %v5153 = vshrl.u32 %v2992, 16
        %v5155 = vor.u32 %v5153, %v5125
        %v5157 = vshll.u32 %v2996, 16
        %v5159 = vrot.slane %v5157, 1
        %v5160 = vsel %vm2042, %v5155, %v5159
        %v5161 = vshrl.u32 %v2993, 16
        %v5163 = vor.u32 %v5161, %v5135
        %v5164 = vshll.u32 %v2997, 16
        %v5166 = vrot.slane %v5164, 1
        %v5167 = vsel %vm2042, %v5163, %v5166
        %v5168 = vshrl.u32 %v2994, 16
        %v5170 = vor.u32 %v5168, %v5143
        %v5172 = vshll.u32 %v2998, 16
        %v5174 = vrot.slane %v5172, 1
        %v5175 = vsel %vm2042, %v5170, %v5174
        %v5176 = vshrl.u32 %v2995, 16
        %v5178 = vor.u32 %v5176, %v5151
        %v5180 = vshll.u32 %v2999, 16
        %v5182 = vrot.slane %v5180, 1
        %v5183 = vsel %vm2042, %v5178, %v5182
        %v5184 = vshrl.u32 %v2996, 16
        %v5186 = vor.u32 %v5184, %v5159
        %v5188 = vshll.u32 %v3000, 16
        %v5190 = vrot.slane %v5188, 1
        %v5191 = vsel %vm2042, %v5186, %v5190
        %v5192 = vshrl.u32 %v2997, 16
        %v5194 = vor.u32 %v5192, %v5166
        %v5195 = vshll.u32 %v3001, 16
        %v5197 = vrot.slane %v5195, 1
        %v5198 = vsel %vm2042, %v5194, %v5197
        %v5199 = vshrl.u32 %v2998, 16
        %v5201 = vor.u32 %v5199, %v5174
        %v5203 = vshll.u32 %v3002, 16
        %v5205 = vrot.slane %v5203, 1
        %v5206 = vsel %vm2042, %v5201, %v5205
        %v5207 = vshrl.u32 %v2999, 16
        %v5209 = vor.u32 %v5207, %v5182
        %v5211 = vshll.u32 %v3003, 16
        %v5213 = vrot.slane %v5211, 1
        %v5214 = vsel %vm2042, %v5209, %v5213
        %v5215 = vshrl.u32 %v3000, 16
        %v5217 = vor.u32 %v5215, %v5190
        %v5219 = vshll.u32 %v3004, 16
        %v5221 = vrot.slane %v5219, 1
        %v5222 = vsel %vm2042, %v5217, %v5221
        %v5223 = vshrl.u32 %v3001, 16
        %v5225 = vor.u32 %v5223, %v5197
        %v5226 = vshll.u32 %v3005, 16
        %v5228 = vrot.slane %v5226, 1
        %v5229 = vsel %vm2042, %v5225, %v5228
        %v5230 = vshrl.u32 %v3002, 16
        %v5232 = vor.u32 %v5230, %v5205
        %v5234 = vshll.u32 %v3006, 16
        %v5236 = vrot.slane %v5234, 1
        %v5237 = vsel %vm2042, %v5232, %v5236
        %v5238 = vshrl.u32 %v3003, 16
        %v5240 = vor.u32 %v5238, %v5213
        %v5242 = vshll.u32 %v3007, 16
        %v5244 = vrot.slane %v5242, 1
        %v5245 = vsel %vm2042, %v5240, %v5244
        %v5246 = vshrl.u32 %v3004, 16
        %v5248 = vor.u32 %v5246, %v5221
        %v5250 = vshll.u32 %v3008, 16
        %v5252 = vrot.slane %v5250, 1
        %v5253 = vsel %vm2042, %v5248, %v5252
        %v5254 = vshrl.u32 %v3005, 16
        %v5256 = vor.u32 %v5254, %v5228
        %v5257 = vshll.u32 %v3009, 16
        %v5259 = vrot.slane %v5257, 1
        %v5260 = vsel %vm2042, %v5256, %v5259
        %v5261 = vshrl.u32 %v3006, 16
        %v5263 = vor.u32 %v5261, %v5236
        %v5265 = vshll.u32 %v3010, 16
        %v5267 = vrot.slane %v5265, 1
        %v5268 = vsel %vm2042, %v5263, %v5267
        %v5269 = vshrl.u32 %v3007, 16
        %v5271 = vor.u32 %v5269, %v5244
        %v5273 = vshll.u32 %v3011, 16
        %v5275 = vrot.slane %v5273, 1
        %v5276 = vsel %vm2042, %v5271, %v5275
        %v5277 = vshrl.u32 %v3008, 16
        %v5279 = vor.u32 %v5277, %v5252
        %v5281 = vshll.u32 %v3012, 16
        %v5283 = vrot.slane %v5281, 1
        %v5284 = vsel %vm2042, %v5279, %v5283
        %v5285 = vshrl.u32 %v3009, 16
        %v5287 = vor.u32 %v5285, %v5259
        %v5288 = vshll.u32 %v3013, 16
        %v5290 = vrot.slane %v5288, 1
        %v5291 = vsel %vm2042, %v5287, %v5290
        %v5292 = vshrl.u32 %v3010, 16
        %v5294 = vor.u32 %v5292, %v5267
        %v5296 = vshll.u32 %v3014, 16
        %v5298 = vrot.slane %v5296, 1
        %v5299 = vsel %vm2042, %v5294, %v5298
        %v5300 = vshrl.u32 %v3011, 16
        %v5302 = vor.u32 %v5300, %v5275
        %v5304 = vshll.u32 %v3015, 16
        %v5306 = vrot.slane %v5304, 1
        %v5307 = vsel %vm2042, %v5302, %v5306
        %v5308 = vshrl.u32 %v3012, 16
        %v5310 = vor.u32 %v5308, %v5283
        %v5312 = vshll.u32 %v3016, 16
        %v5314 = vrot.slane %v5312, 1
        %v5315 = vsel %vm2042, %v5310, %v5314
        %v5316 = vshrl.u32 %v3013, 16
        %v5318 = vor.u32 %v5316, %v5290
        %v5319 = vshll.u32 %v3017, 16
        %v5321 = vrot.slane %v5319, 1
        %v5322 = vsel %vm2042, %v5318, %v5321
        %v5323 = vshrl.u32 %v3014, 16
        %v5325 = vor.u32 %v5323, %v5298
        %v5326 = vshrl.u32 %v3015, 16
        %v5328 = vor.u32 %v5326, %v5306
        %v5329 = vshrl.u32 %v3016, 16
        %v5331 = vor.u32 %v5329, %v5314
        %v5332 = vshrl.u32 %v3017, 16
        %v5334 = vor.u32 %v5332, %v5321
        %v5539 = vunpack.c.l.b16 %v4911
        %v5540 = vunpack.c.h.b16 %v4911
        %v5541 = vunpack.c.l.b16 %v4912
        %v5542 = vunpack.c.h.b16 %v4912
        %v5543 = vunpack.c.l.b16 %v4913
        %v5544 = vunpack.c.h.b16 %v4913
        %v5545 = vunpack.c.l.b16 %v4914
        %v5546 = vunpack.c.h.b16 %v4914
        %v5547 = vunpack.c.l.b16 %v4915
        %v5548 = vunpack.c.h.b16 %v4915
        %v5549 = vunpack.c.l.b16 %v4916
        %v5550 = vunpack.c.h.b16 %v4916
        %v5551 = vunpack.c.l.b16 %v4917
        %v5552 = vunpack.c.h.b16 %v4917
        %v5553 = vunpack.c.l.b16 %v4918
        %v5554 = vunpack.c.h.b16 %v4918
        %v5555 = vunpack.c.l.b16 %v4919
        %v5556 = vunpack.c.h.b16 %v4919
        %v5557 = vunpack.c.l.b16 %v4920
        %v5558 = vunpack.c.h.b16 %v4920
        %v5559 = vunpack.c.l.b16 %v4921
        %v5560 = vunpack.c.h.b16 %v4921
        %v5561 = vunpack.c.l.b16 %v4922
        %v5562 = vunpack.c.h.b16 %v4922
        %v5563 = vunpack.c.l.b16 %v4923
        %v5564 = vunpack.c.h.b16 %v4923
        %v5565 = vunpack.c.l.b16 %v4924
        %v5566 = vunpack.c.h.b16 %v4924
        %v5567 = vunpack.c.l.b16 %v4925
        %v5568 = vunpack.c.h.b16 %v4925
        %v5569 = vunpack.c.l.b16 %v4926
        %v5570 = vunpack.c.h.b16 %v4926
        %v5571 = vunpack.c.l.b16 %v4927
        %v5572 = vunpack.c.h.b16 %v4927
        %v5573 = vunpack.c.l.b16 %v4928
        %v5574 = vunpack.c.h.b16 %v4928
        %v5575 = vunpack.c.l.b16 %v4929
        %v5576 = vunpack.c.h.b16 %v4929
        %v5577 = vunpack.c.l.b16 %v4930
        %v5578 = vunpack.c.h.b16 %v4930
        %v5579 = vunpack.c.l.b16 %v4931
        %v5580 = vunpack.c.h.b16 %v4931
        %v5581 = vunpack.c.l.b16 %v4932
        %v5582 = vunpack.c.h.b16 %v4932
        %v5583 = vunpack.c.l.b16 %v4933
        %v5584 = vunpack.c.h.b16 %v4933
        %v5585 = vunpack.c.l.b16 %v4934
        %v5586 = vunpack.c.h.b16 %v4934
        %v5587 = vunpack.c.l.b16 %v4935
        %v5588 = vunpack.c.h.b16 %v4935
        %v5589 = vunpack.c.l.b16 %v4936
        %v5590 = vunpack.c.h.b16 %v4936
        %v5591 = vunpack.c.l.b16 %v4937
        %v5592 = vunpack.c.h.b16 %v4937
        %v5593 = vunpack.c.l.b16 %v4938
        %v5594 = vunpack.c.h.b16 %v4938
        %v5595 = vunpack.c.l.b16 %v4939
        %v5596 = vunpack.c.h.b16 %v4939
        %v5597 = vunpack.c.l.b16 %v4940
        %v5598 = vunpack.c.h.b16 %v4940
        %v5599 = vunpack.c.l.b16 %v4941
        %v5600 = vunpack.c.h.b16 %v4941
        %v5601 = vunpack.c.l.b16 %v4942
        %v5602 = vunpack.c.h.b16 %v4942
        %v5603 = vunpack.c.l.b16 %v4943
        %v5604 = vunpack.c.h.b16 %v4943
        %v5605 = vunpack.c.l.b16 %v4944
        %v5606 = vunpack.c.h.b16 %v4944
        %v5607 = vunpack.c.l.b16 %v4945
        %v5608 = vunpack.c.h.b16 %v4945
        %v5609 = vunpack.c.l.b16 %v4946
        %v5610 = vunpack.c.h.b16 %v4946
        %v5611 = vunpack.c.l.b16 %v4947
        %v5612 = vunpack.c.h.b16 %v4947
        %v5613 = vunpack.c.l.b16 %v4948
        %v5614 = vunpack.c.h.b16 %v4948
        %v5615 = vunpack.c.l.b16 %v4949
        %v5616 = vunpack.c.h.b16 %v4949
        %v5617 = vunpack.c.l.b16 %v4950
        %v5618 = vunpack.c.h.b16 %v4950
        %v5619 = vunpack.c.l.b16 %v4951
        %v5620 = vunpack.c.h.b16 %v4951
        %v5621 = vunpack.c.l.b16 %v4952
        %v5622 = vunpack.c.h.b16 %v4952
        %v5623 = vunpack.c.l.b16 %v4953
        %v5624 = vunpack.c.h.b16 %v4953
        %v5625 = vunpack.c.l.b16 %v4954
        %v5626 = vunpack.c.h.b16 %v4954
        %v5627 = vunpack.c.l.b16 %v4955
        %v5628 = vunpack.c.h.b16 %v4955
        %v5629 = vunpack.c.l.b16 %v4956
        %v5630 = vunpack.c.h.b16 %v4956
        %v5631 = vunpack.c.l.b16 %v4957
        %v5632 = vunpack.c.h.b16 %v4957
        %v5633 = vunpack.c.l.b16 %v4958
        %v5634 = vunpack.c.h.b16 %v4958
        %v5635 = vunpack.c.l.b16 %v4959
        %v5636 = vunpack.c.h.b16 %v4959
        %v5637 = vunpack.c.l.b16 %v4960
        %v5638 = vunpack.c.h.b16 %v4960
        %v5639 = vunpack.c.l.b16 %v4961
        %v5640 = vunpack.c.h.b16 %v4961
        %v5641 = vunpack.c.l.b16 %v4962
        %v5642 = vunpack.c.h.b16 %v4962
        %v5643 = vunpack.c.l.b16 %v4963
        %v5644 = vunpack.c.h.b16 %v4963
        %v5645 = vunpack.c.l.b16 %v4964
        %v5646 = vunpack.c.h.b16 %v4964
        %v5647 = vunpack.c.l.b16 %v4965
        %v5648 = vunpack.c.h.b16 %v4965
        %v5649 = vunpack.c.l.b16 %v4966
        %v5650 = vunpack.c.h.b16 %v4966
        %v5651 = vunpack.c.l.b16 %v4967
        %v5652 = vunpack.c.h.b16 %v4967
        %v5653 = vunpack.c.l.b16 %v4968
        %v5654 = vunpack.c.h.b16 %v4968
        %v5655 = vunpack.c.l.b16 %v4969
        %v5656 = vunpack.c.h.b16 %v4969
        %v5657 = vunpack.c.l.b16 %v4970
        %v5658 = vunpack.c.h.b16 %v4970
        %v5659 = vunpack.c.l.b16 %v4971
        %v5660 = vunpack.c.h.b16 %v4971
        %v5661 = vunpack.c.l.b16 %v4972
        %v5662 = vunpack.c.h.b16 %v4972
        %v5663 = vunpack.c.l.b16 %v4973
        %v5664 = vunpack.c.h.b16 %v4973
        %v5665 = vunpack.c.l.b16 %v4974
        %v5666 = vunpack.c.h.b16 %v4974
        %v5667 = vunpack.c.l.b16 %v4975
        %v5668 = vunpack.c.h.b16 %v4975
        %v5669 = vunpack.c.l.b16 %v4976
        %v5670 = vunpack.c.h.b16 %v4976
        %v5671 = vunpack.c.l.b16 %v4977
        %v5672 = vunpack.c.h.b16 %v4977
        %v5673 = vunpack.c.l.b16 %v4978
        %v5674 = vunpack.c.h.b16 %v4978
        %v5675 = vunpack.c.l.b16 %v4979
        %v5676 = vunpack.c.h.b16 %v4979
        %v5677 = vunpack.c.l.b16 %v4980
        %v5678 = vunpack.c.h.b16 %v4980
        %v5679 = vunpack.c.l.b16 %v4981
        %v5680 = vunpack.c.h.b16 %v4981
        %v5681 = vunpack.c.l.b16 %v4982
        %v5682 = vunpack.c.h.b16 %v4982
        %v5683 = vunpack.c.l.b16 %v4983
        %v5684 = vunpack.c.h.b16 %v4983
        %v5685 = vunpack.c.l.b16 %v4984
        %v5686 = vunpack.c.h.b16 %v4984
        %v5687 = vunpack.c.l.b16 %v4985
        %v5688 = vunpack.c.h.b16 %v4985
        %v5689 = vunpack.c.l.b16 %v4986
        %v5690 = vunpack.c.h.b16 %v4986
        %v5691 = vunpack.c.l.b16 %v4987
        %v5692 = vunpack.c.h.b16 %v4987
        %v5693 = vunpack.c.l.b16 %v4988
        %v5694 = vunpack.c.h.b16 %v4988
        %v5695 = vunpack.c.l.b16 %v4989
        %v5696 = vunpack.c.h.b16 %v4989
        %v5697 = vunpack.c.l.b16 %v4990
        %v5698 = vunpack.c.h.b16 %v4990
        %v5699 = vunpack.c.l.b16 %v4991
        %v5700 = vunpack.c.h.b16 %v4991
        %v5701 = vunpack.c.l.b16 %v4992
        %v5702 = vunpack.c.h.b16 %v4992
        %v5703 = vunpack.c.l.b16 %v4993
        %v5704 = vunpack.c.h.b16 %v4993
        %v5705 = vunpack.c.l.b16 %v4994
        %v5706 = vunpack.c.h.b16 %v4994
        %v5707 = vunpack.c.l.b16 %v4995
        %v5708 = vunpack.c.h.b16 %v4995
        %v5709 = vunpack.c.l.b16 %v4996
        %v5710 = vunpack.c.h.b16 %v4996
        %v5711 = vunpack.c.l.b16 %v4997
        %v5712 = vunpack.c.h.b16 %v4997
        %v5713 = vunpack.c.l.b16 %v4998
        %v5714 = vunpack.c.h.b16 %v4998
        %v5715 = vunpack.c.l.b16 %v4999
        %v5716 = vunpack.c.h.b16 %v4999
        %v5717 = vunpack.c.l.b16 %v5000
        %v5718 = vunpack.c.h.b16 %v5000
        %v5719 = vunpack.c.l.b16 %v5001
        %v5720 = vunpack.c.h.b16 %v5001
        %v5721 = vunpack.c.l.b16 %v5002
        %v5722 = vunpack.c.h.b16 %v5002
        %v5723 = vunpack.c.l.b16 %v5003
        %v5724 = vunpack.c.h.b16 %v5003
        %v5725 = vunpack.c.l.b16 %v5004
        %v5726 = vunpack.c.h.b16 %v5004
        %v5727 = vunpack.c.l.b16 %v5005
        %v5728 = vunpack.c.h.b16 %v5005
        %v5729 = vunpack.c.l.b16 %v5006
        %v5730 = vunpack.c.h.b16 %v5006
        %v5731 = vunpack.c.l.b16 %v5007
        %v5732 = vunpack.c.h.b16 %v5007
        %v5733 = vunpack.c.l.b16 %v5008
        %v5734 = vunpack.c.h.b16 %v5008
        %v5735 = vunpack.c.l.b16 %v5009
        %v5736 = vunpack.c.h.b16 %v5009
        %v5737 = vunpack.c.l.b16 %v5010
        %v5738 = vunpack.c.h.b16 %v5010
        %v5739 = vunpack.c.l.b16 %v5011
        %v5740 = vunpack.c.h.b16 %v5011
        %v5741 = vunpack.c.l.b16 %v5012
        %v5742 = vunpack.c.h.b16 %v5012
        %v5743 = vunpack.c.l.b16 %v5013
        %v5744 = vunpack.c.h.b16 %v5013
        %v5745 = vunpack.c.l.b16 %v5014
        %v5746 = vunpack.c.h.b16 %v5014
        %v5747 = vunpack.c.l.b16 %v5015
        %v5748 = vunpack.c.h.b16 %v5015
        %v5749 = vunpack.c.l.b16 %v5016
        %v5750 = vunpack.c.h.b16 %v5016
        %v5751 = vunpack.c.l.b16 %v5017
        %v5752 = vunpack.c.h.b16 %v5017
        %v5753 = vunpack.c.l.b16 %v5018
        %v5754 = vunpack.c.h.b16 %v5018
        %v5755 = vunpack.c.l.b16 %v5019
        %v5756 = vunpack.c.h.b16 %v5019
        %v5757 = vunpack.c.l.b16 %v5020
        %v5758 = vunpack.c.h.b16 %v5020
        %v5759 = vunpack.c.l.b16 %v5021
        %v5760 = vunpack.c.h.b16 %v5021
        %v5761 = vunpack.c.l.b16 %v5022
        %v5762 = vunpack.c.h.b16 %v5022
        %v5763 = vunpack.c.l.b16 %v5023
        %v5764 = vunpack.c.h.b16 %v5023
        %v5765 = vunpack.c.l.b16 %v5024
        %v5766 = vunpack.c.h.b16 %v5024
        %v5767 = vunpack.c.l.b16 %v5025
        %v5768 = vunpack.c.h.b16 %v5025
        %v5769 = vunpack.c.l.b16 %v5026
        %v5770 = vunpack.c.h.b16 %v5026
        %v5771 = vunpack.c.l.b16 %v5027
        %v5772 = vunpack.c.h.b16 %v5027
        %v5773 = vunpack.c.l.b16 %v5028
        %v5774 = vunpack.c.h.b16 %v5028
        %v5775 = vunpack.c.l.b16 %v5029
        %v5776 = vunpack.c.h.b16 %v5029
        %v5777 = vunpack.c.l.b16 %v5030
        %v5778 = vunpack.c.h.b16 %v5030
        %v5779 = vunpack.c.l.b16 %v5031
        %v5780 = vunpack.c.h.b16 %v5031
        %v5781 = vunpack.c.l.b16 %v5032
        %v5782 = vunpack.c.h.b16 %v5032
        %v5783 = vunpack.c.l.b16 %v5033
        %v5784 = vunpack.c.h.b16 %v5033
        %v5785 = vunpack.c.l.b16 %v5034
        %v5786 = vunpack.c.h.b16 %v5034
        %v5787 = vunpack.c.l.b16 %v5035
        %v5788 = vunpack.c.h.b16 %v5035
        %v5789 = vunpack.c.l.b16 %v5036
        %v5790 = vunpack.c.h.b16 %v5036
        %v5791 = vunpack.c.l.b16 %v5037
        %v5792 = vunpack.c.h.b16 %v5037
        %v5793 = vunpack.c.l.b16 %v5038
        %v5794 = vunpack.c.h.b16 %v5038
        %v5795 = vunpack.c.l.b16 %v5039
        %v5796 = vunpack.c.h.b16 %v5039
        %v5797 = vunpack.c.l.b16 %v5040
        %v5798 = vunpack.c.h.b16 %v5040
        %v5799 = vunpack.c.l.b16 %v5041
        %v5800 = vunpack.c.h.b16 %v5041
        %v5801 = vunpack.c.l.b16 %v5042
        %v5802 = vunpack.c.h.b16 %v5042
        %v5803 = vunpack.c.l.b16 %v5043
        %v5804 = vunpack.c.h.b16 %v5043
        %v5805 = vunpack.c.l.b16 %v5044
        %v5806 = vunpack.c.h.b16 %v5044
        %v5807 = vunpack.c.l.b16 %v5045
        %v5808 = vunpack.c.h.b16 %v5045
        %v5809 = vunpack.c.l.b16 %v5046
        %v5810 = vunpack.c.h.b16 %v5046
        %v5811 = vunpack.c.l.b16 %v5047
        %v5812 = vunpack.c.h.b16 %v5047
        %v5813 = vunpack.c.l.b16 %v5048
        %v5814 = vunpack.c.h.b16 %v5048
        %v5815 = vunpack.c.l.b16 %v5049
        %v5816 = vunpack.c.h.b16 %v5049
        %v5817 = vunpack.c.l.b16 %v5050
        %v5818 = vunpack.c.h.b16 %v5050
        %v5819 = vunpack.c.l.b16 %v5051
        %v5820 = vunpack.c.h.b16 %v5051
        %v5821 = vunpack.c.l.b16 %v5052
        %v5822 = vunpack.c.h.b16 %v5052
        %v5823 = vunpack.c.l.b16 %v5053
        %v5824 = vunpack.c.h.b16 %v5053
        %v5825 = vunpack.c.l.b16 %v5054
        %v5826 = vunpack.c.h.b16 %v5054
        %v5827 = vunpack.c.l.b16 %v5055
        %v5828 = vunpack.c.h.b16 %v5055
        %v5829 = vunpack.c.l.b16 %v5056
        %v5830 = vunpack.c.h.b16 %v5056
        %v5831 = vunpack.c.l.b16 %v5057
        %v5832 = vunpack.c.h.b16 %v5057
        %v5833 = vunpack.c.l.b16 %v5058
        %v5834 = vunpack.c.h.b16 %v5058
        %v5835 = vunpack.c.l.b16 %v5059
        %v5836 = vunpack.c.h.b16 %v5059
        %v5837 = vunpack.c.l.b16 %v5060
        %v5838 = vunpack.c.h.b16 %v5060
        %v5839 = vunpack.c.l.b16 %v5061
        %v5840 = vunpack.c.h.b16 %v5061
        %v5841 = vunpack.c.l.b16 %v5062
        %v5842 = vunpack.c.h.b16 %v5062
        %v5843 = vunpack.c.l.b16 %v5063
        %v5844 = vunpack.c.h.b16 %v5063
        %v5845 = vunpack.c.l.b16 %v5064
        %v5846 = vunpack.c.h.b16 %v5064
        %v5847 = vunpack.c.l.b16 %v5065
        %v5848 = vunpack.c.h.b16 %v5065
        %v5849 = vunpack.c.l.b16 %v5066
        %v5850 = vunpack.c.h.b16 %v5066
        %v5851 = vunpack.c.l.b16 %v5067
        %v5852 = vunpack.c.h.b16 %v5067
        %v5853 = vunpack.c.l.b16 %v5068
        %v5854 = vunpack.c.h.b16 %v5068
        %v5855 = vunpack.c.l.b16 %v5069
        %v5856 = vunpack.c.h.b16 %v5069
        %v5857 = vunpack.c.l.b16 %v5070
        %v5858 = vunpack.c.h.b16 %v5070
        %v5859 = vunpack.c.l.b16 %v5071
        %v5860 = vunpack.c.h.b16 %v5071
        %v5861 = vunpack.c.l.b16 %v5072
        %v5862 = vunpack.c.h.b16 %v5072
        %v5863 = vunpack.c.l.b16 %v5073
        %v5864 = vunpack.c.h.b16 %v5073
        %v5865 = vunpack.c.l.b16 %v5074
        %v5866 = vunpack.c.h.b16 %v5074
        %v5867 = vunpack.c.l.b16 %v5075
        %v5868 = vunpack.c.h.b16 %v5075
        %v5869 = vunpack.c.l.b16 %v5076
        %v5870 = vunpack.c.h.b16 %v5076
        %v5871 = vunpack.c.l.b16 %v5077
        %v5872 = vunpack.c.h.b16 %v5077
        %v5873 = vunpack.c.l.b16 %v5078
        %v5874 = vunpack.c.h.b16 %v5078
        %v5875 = vunpack.c.l.b16 %v5079
        %v5876 = vunpack.c.h.b16 %v5079
        %v5877 = vunpack.c.l.b16 %v5080
        %v5878 = vunpack.c.h.b16 %v5080
        %v5879 = vunpack.c.l.b16 %v5081
        %v5880 = vunpack.c.h.b16 %v5081
        %v5881 = vunpack.c.l.b16 %v5082
        %v5882 = vunpack.c.h.b16 %v5082
        %v5883 = vunpack.c.l.b16 %v5083
        %v5884 = vunpack.c.h.b16 %v5083
        %v5885 = vunpack.c.l.b16 %v5084
        %v5886 = vunpack.c.h.b16 %v5084
        %v5887 = vunpack.c.l.b16 %v5085
        %v5888 = vunpack.c.h.b16 %v5085
        %v5889 = vunpack.c.l.b16 %v5086
        %v5890 = vunpack.c.h.b16 %v5086
        %v5891 = vunpack.c.l.b16 %v5087
        %v5892 = vunpack.c.h.b16 %v5087
        %v5893 = vunpack.c.l.b16 %v5088
        %v5894 = vunpack.c.h.b16 %v5088
        %v5895 = vunpack.c.l.b16 %v5089
        %v5896 = vunpack.c.h.b16 %v5089
        %v5897 = vunpack.c.l.b16 %v5090
        %v5898 = vunpack.c.h.b16 %v5090
        %v5899 = vpack.c.b16 %v5545, %v5539
        %v5900 = vpack.c.b16 %v5546, %v5540
        %v5901 = vpack.c.b16 %v5547, %v5541
        %v5902 = vpack.c.b16 %v5548, %v5542
        %v5903 = vpack.c.b16 %v5549, %v5543
        %v5904 = vpack.c.b16 %v5550, %v5544
        %v5905 = vpack.c.b16 %v5557, %v5551
        %v5906 = vpack.c.b16 %v5558, %v5552
        %v5907 = vpack.c.b16 %v5559, %v5553
        %v5908 = vpack.c.b16 %v5560, %v5554
        %v5909 = vpack.c.b16 %v5561, %v5555
        %v5910 = vpack.c.b16 %v5562, %v5556
        %v5911 = vpack.c.b16 %v5569, %v5563
        %v5912 = vpack.c.b16 %v5570, %v5564
        %v5913 = vpack.c.b16 %v5571, %v5565
        %v5914 = vpack.c.b16 %v5572, %v5566
        %v5915 = vpack.c.b16 %v5573, %v5567
        %v5916 = vpack.c.b16 %v5574, %v5568
        %v5917 = vpack.c.b16 %v5581, %v5575
        %v5918 = vpack.c.b16 %v5582, %v5576
        %v5919 = vpack.c.b16 %v5583, %v5577
        %v5920 = vpack.c.b16 %v5584, %v5578
        %v5921 = vpack.c.b16 %v5585, %v5579
        %v5922 = vpack.c.b16 %v5586, %v5580
        %v5923 = vpack.c.b16 %v5593, %v5587
        %v5924 = vpack.c.b16 %v5594, %v5588
        %v5925 = vpack.c.b16 %v5595, %v5589
        %v5926 = vpack.c.b16 %v5596, %v5590
        %v5927 = vpack.c.b16 %v5597, %v5591
        %v5928 = vpack.c.b16 %v5598, %v5592
        %v5929 = vpack.c.b16 %v5605, %v5599
        %v5930 = vpack.c.b16 %v5606, %v5600
        %v5931 = vpack.c.b16 %v5607, %v5601
        %v5932 = vpack.c.b16 %v5608, %v5602
        %v5933 = vpack.c.b16 %v5609, %v5603
        %v5934 = vpack.c.b16 %v5610, %v5604
        %v5935 = vpack.c.b16 %v5617, %v5611
        %v5936 = vpack.c.b16 %v5618, %v5612
        %v5937 = vpack.c.b16 %v5619, %v5613
        %v5938 = vpack.c.b16 %v5620, %v5614
        %v5939 = vpack.c.b16 %v5621, %v5615
        %v5940 = vpack.c.b16 %v5622, %v5616
        %v5941 = vpack.c.b16 %v5629, %v5623
        %v5942 = vpack.c.b16 %v5630, %v5624
        %v5943 = vpack.c.b16 %v5631, %v5625
        %v5944 = vpack.c.b16 %v5632, %v5626
        %v5945 = vpack.c.b16 %v5633, %v5627
        %v5946 = vpack.c.b16 %v5634, %v5628
        %v5947 = vpack.c.b16 %v5641, %v5635
        %v5948 = vpack.c.b16 %v5642, %v5636
        %v5949 = vpack.c.b16 %v5643, %v5637
        %v5950 = vpack.c.b16 %v5644, %v5638
        %v5951 = vpack.c.b16 %v5645, %v5639
        %v5952 = vpack.c.b16 %v5646, %v5640
        %v5953 = vpack.c.b16 %v5653, %v5647
        %v5954 = vpack.c.b16 %v5654, %v5648
        %v5955 = vpack.c.b16 %v5655, %v5649
        %v5956 = vpack.c.b16 %v5656, %v5650
        %v5957 = vpack.c.b16 %v5657, %v5651
        %v5958 = vpack.c.b16 %v5658, %v5652
        %v5959 = vpack.c.b16 %v5665, %v5659
        %v5960 = vpack.c.b16 %v5666, %v5660
        %v5961 = vpack.c.b16 %v5667, %v5661
        %v5962 = vpack.c.b16 %v5668, %v5662
        %v5963 = vpack.c.b16 %v5669, %v5663
        %v5964 = vpack.c.b16 %v5670, %v5664
        %v5965 = vpack.c.b16 %v5677, %v5671
        %v5966 = vpack.c.b16 %v5678, %v5672
        %v5967 = vpack.c.b16 %v5679, %v5673
        %v5968 = vpack.c.b16 %v5680, %v5674
        %v5969 = vpack.c.b16 %v5681, %v5675
        %v5970 = vpack.c.b16 %v5682, %v5676
        %v5971 = vpack.c.b16 %v5689, %v5683
        %v5972 = vpack.c.b16 %v5690, %v5684
        %v5973 = vpack.c.b16 %v5691, %v5685
        %v5974 = vpack.c.b16 %v5692, %v5686
        %v5975 = vpack.c.b16 %v5693, %v5687
        %v5976 = vpack.c.b16 %v5694, %v5688
        %v5977 = vpack.c.b16 %v5701, %v5695
        %v5978 = vpack.c.b16 %v5702, %v5696
        %v5979 = vpack.c.b16 %v5703, %v5697
        %v5980 = vpack.c.b16 %v5704, %v5698
        %v5981 = vpack.c.b16 %v5705, %v5699
        %v5982 = vpack.c.b16 %v5706, %v5700
        %v5983 = vpack.c.b16 %v5713, %v5707
        %v5984 = vpack.c.b16 %v5714, %v5708
        %v5985 = vpack.c.b16 %v5715, %v5709
        %v5986 = vpack.c.b16 %v5716, %v5710
        %v5987 = vpack.c.b16 %v5717, %v5711
        %v5988 = vpack.c.b16 %v5718, %v5712
        %v5989 = vpack.c.b16 %v5725, %v5719
        %v5990 = vpack.c.b16 %v5726, %v5720
        %v5991 = vpack.c.b16 %v5727, %v5721
        %v5992 = vpack.c.b16 %v5728, %v5722
        %v5993 = vpack.c.b16 %v5729, %v5723
        %v5994 = vpack.c.b16 %v5730, %v5724
        %v5995 = vpack.c.b16 %v5737, %v5731
        %v5996 = vpack.c.b16 %v5738, %v5732
        %v5997 = vpack.c.b16 %v5739, %v5733
        %v5998 = vpack.c.b16 %v5740, %v5734
        %v5999 = vpack.c.b16 %v5741, %v5735
        %v6000 = vpack.c.b16 %v5742, %v5736
        %v6001 = vpack.c.b16 %v5749, %v5743
        %v6002 = vpack.c.b16 %v5750, %v5744
        %v6003 = vpack.c.b16 %v5751, %v5745
        %v6004 = vpack.c.b16 %v5752, %v5746
        %v6005 = vpack.c.b16 %v5753, %v5747
        %v6006 = vpack.c.b16 %v5754, %v5748
        %v6007 = vpack.c.b16 %v5761, %v5755
        %v6008 = vpack.c.b16 %v5762, %v5756
        %v6009 = vpack.c.b16 %v5763, %v5757
        %v6010 = vpack.c.b16 %v5764, %v5758
        %v6011 = vpack.c.b16 %v5765, %v5759
        %v6012 = vpack.c.b16 %v5766, %v5760
        %v6013 = vpack.c.b16 %v5773, %v5767
        %v6014 = vpack.c.b16 %v5774, %v5768
        %v6015 = vpack.c.b16 %v5775, %v5769
        %v6016 = vpack.c.b16 %v5776, %v5770
        %v6017 = vpack.c.b16 %v5777, %v5771
        %v6018 = vpack.c.b16 %v5778, %v5772
        %v6019 = vpack.c.b16 %v5785, %v5779
        %v6020 = vpack.c.b16 %v5786, %v5780
        %v6021 = vpack.c.b16 %v5787, %v5781
        %v6022 = vpack.c.b16 %v5788, %v5782
        %v6023 = vpack.c.b16 %v5789, %v5783
        %v6024 = vpack.c.b16 %v5790, %v5784
        %v6025 = vpack.c.b16 %v5797, %v5791
        %v6026 = vpack.c.b16 %v5798, %v5792
        %v6027 = vpack.c.b16 %v5799, %v5793
        %v6028 = vpack.c.b16 %v5800, %v5794
        %v6029 = vpack.c.b16 %v5801, %v5795
        %v6030 = vpack.c.b16 %v5802, %v5796
        %v6031 = vpack.c.b16 %v5809, %v5803
        %v6032 = vpack.c.b16 %v5810, %v5804
        %v6033 = vpack.c.b16 %v5811, %v5805
        %v6034 = vpack.c.b16 %v5812, %v5806
        %v6035 = vpack.c.b16 %v5813, %v5807
        %v6036 = vpack.c.b16 %v5814, %v5808
        %v6037 = vpack.c.b16 %v5821, %v5815
        %v6038 = vpack.c.b16 %v5822, %v5816
        %v6039 = vpack.c.b16 %v5823, %v5817
        %v6040 = vpack.c.b16 %v5824, %v5818
        %v6041 = vpack.c.b16 %v5825, %v5819
        %v6042 = vpack.c.b16 %v5826, %v5820
        %v6043 = vpack.c.b16 %v5833, %v5827
        %v6044 = vpack.c.b16 %v5834, %v5828
        %v6045 = vpack.c.b16 %v5835, %v5829
        %v6046 = vpack.c.b16 %v5836, %v5830
        %v6047 = vpack.c.b16 %v5837, %v5831
        %v6048 = vpack.c.b16 %v5838, %v5832
        %v6049 = vpack.c.b16 %v5845, %v5839
        %v6050 = vpack.c.b16 %v5846, %v5840
        %v6051 = vpack.c.b16 %v5847, %v5841
        %v6052 = vpack.c.b16 %v5848, %v5842
        %v6053 = vpack.c.b16 %v5849, %v5843
        %v6054 = vpack.c.b16 %v5850, %v5844
        %v6055 = vpack.c.b16 %v5857, %v5851
        %v6056 = vpack.c.b16 %v5858, %v5852
        %v6057 = vpack.c.b16 %v5859, %v5853
        %v6058 = vpack.c.b16 %v5860, %v5854
        %v6059 = vpack.c.b16 %v5861, %v5855
        %v6060 = vpack.c.b16 %v5862, %v5856
        %v6061 = vpack.c.b16 %v5869, %v5863
        %v6062 = vpack.c.b16 %v5870, %v5864
        %v6063 = vpack.c.b16 %v5871, %v5865
        %v6064 = vpack.c.b16 %v5872, %v5866
        %v6065 = vpack.c.b16 %v5873, %v5867
        %v6066 = vpack.c.b16 %v5874, %v5868
        %v6067 = vpack.c.b16 %v5881, %v5875
        %v6068 = vpack.c.b16 %v5882, %v5876
        %v6069 = vpack.c.b16 %v5883, %v5877
        %v6070 = vpack.c.b16 %v5884, %v5878
        %v6071 = vpack.c.b16 %v5885, %v5879
        %v6072 = vpack.c.b16 %v5886, %v5880
        %v6073 = vpack.c.b16 %v5893, %v5887
        %v6074 = vpack.c.b16 %v5894, %v5888
        %v6075 = vpack.c.b16 %v5895, %v5889
        %v6076 = vpack.c.b16 %v5896, %v5890
        %v6077 = vpack.c.b16 %v5897, %v5891
        %v6078 = vpack.c.b16 %v5898, %v5892
        %v6260 = vsel %vm844, %v5136, 0
        %v6263 = vsel %vm844, %v5167, 0
        %v6266 = vsel %vm844, %v5198, 0
        %v6269 = vsel %vm844, %v5229, 0
        %v6272 = vsel %vm844, %v5260, 0
        %v6275 = vsel %vm844, %v5291, 0
        %v6278 = vsel %vm844, %v5322, 0
        %v6281 = vsel %vm844, %v5334, 0
        %6283 = vmatprep.subr.bf16.mxu0 %v5900
        %6284 = vmatpush1.bf16.msra.mxu0 %v5899
        %6285 = vmatprep.subr.bf16.mxu0 %v5906
        %6286 = vmatpush1.bf16.msra.mxu0 %v5905
        %6287 = vmatprep.subr.bf16.mxu0 %v5912
        %6288 = vmatpush1.bf16.msra.mxu0 %v5911
        %6289 = vmatprep.subr.bf16.mxu0 %v5918
        %6290 = vmatpush1.bf16.msra.mxu0 %v5917
        %6291 = vmatprep.subr.bf16.mxu0 %v5924
        %6292 = vmatpush1.bf16.msra.mxu0 %v5923
        %6293 = vmatprep.subr.bf16.mxu0 %v5930
        %6294 = vmatpush1.bf16.msra.mxu0 %v5929
        %6295 = vmatprep.subr.bf16.mxu0 %v5936
        %6296 = vmatpush1.bf16.msra.mxu0 %v5935
        %6297 = vmatprep.subr.bf16.mxu0 %v5942
        %6298 = vmatpush1.bf16.msra.mxu0 %v5941
        %6299 = vmatprep.subr.bf16.mxu0 %v5948
        %6300 = vmatpush1.bf16.msra.mxu0 %v5947
        %6301 = vmatprep.subr.bf16.mxu0 %v5954
        %6302 = vmatpush1.bf16.msra.mxu0 %v5953
        %6303 = vmatprep.subr.bf16.mxu0 %v5960
        %6304 = vmatpush1.bf16.msra.mxu0 %v5959
        %6305 = vmatprep.subr.bf16.mxu0 %v5966
        %6306 = vmatpush1.bf16.msra.mxu0 %v5965
        %6307 = vmatprep.subr.bf16.mxu0 %v5972
        %6308 = vmatpush1.bf16.msra.mxu0 %v5971
        %6309 = vmatprep.subr.bf16.mxu0 %v5978
        %6310 = vmatpush1.bf16.msra.mxu0 %v5977
        %6311 = vmatprep.subr.bf16.mxu0 %v5984
        %6312 = vmatpush1.bf16.msra.mxu0 %v5983
        %6313 = vmatprep.subr.bf16.mxu0 %v5990
        %6314 = vmatpush1.bf16.msra.mxu0 %v5989
        %6315 = vmatprep.mubr.bf16.mxu0 %v5114
        %6316 = vmatmul.mubr.bf16.gmra.mrb[0].mxu0 %v5102
        %v6317 = vpop.f32.mrb[0].mxu0
        %v6318 = vadd.f32 0.0, %v6317
        %v6319 = vpop.f32.mrb[0].mxu0
        %v6320 = vadd.f32 0.0, %v6319
        %v6321 = vpop.f32.mrb[0].mxu0
        %v6322 = vadd.f32 0.0, %v6321
        %v6323 = vpop.f32.mrb[0].mxu0
        %v6324 = vadd.f32 0.0, %v6323
        %6325 = vmatprep.mubr.bf16.mxu0 %v5152
        %6326 = vmatmul.mubr.bf16.gmra.mrb[0].mxu0 %v5144
        %v6327 = vpop.f32.mrb[0].mxu0
        %v6328 = vadd.f32 0.0, %v6327
        %v6329 = vpop.f32.mrb[0].mxu0
        %v6330 = vadd.f32 0.0, %v6329
        %v6331 = vpop.f32.mrb[0].mxu0
        %v6332 = vadd.f32 0.0, %v6331
        %v6333 = vpop.f32.mrb[0].mxu0
        %v6334 = vadd.f32 0.0, %v6333
        %6335 = vmatprep.mubr.bf16.mxu0 %v5183
        %6336 = vmatmul.mubr.bf16.gmra.mrb[0].mxu0 %v5175
        %v6337 = vpop.f32.mrb[0].mxu0
        %v6338 = vadd.f32 0.0, %v6337
        %v6339 = vpop.f32.mrb[0].mxu0
        %v6340 = vadd.f32 0.0, %v6339
        %v6341 = vpop.f32.mrb[0].mxu0
        %v6342 = vadd.f32 0.0, %v6341
        %v6343 = vpop.f32.mrb[0].mxu0
        %v6344 = vadd.f32 0.0, %v6343
        %6345 = vmatprep.mubr.bf16.mxu0 %v5214
        %6346 = vmatmul.mubr.bf16.gmra.mrb[0].mxu0 %v5206
        %v6347 = vpop.f32.mrb[0].mxu0
        %v6348 = vadd.f32 0.0, %v6347
        %v6349 = vpop.f32.mrb[0].mxu0
        %v6350 = vadd.f32 0.0, %v6349
        %v6351 = vpop.f32.mrb[0].mxu0
        %v6352 = vadd.f32 0.0, %v6351
        %v6353 = vpop.f32.mrb[0].mxu0
        %v6354 = vadd.f32 0.0, %v6353
        %6355 = vmatprep.mubr.bf16.mxu0 %v5245
        %6356 = vmatmul.mubr.bf16.gmra.mrb[0].mxu0 %v5237
        %v6357 = vpop.f32.mrb[0].mxu0
        %v6358 = vadd.f32 0.0, %v6357
        %v6359 = vpop.f32.mrb[0].mxu0
        %v6360 = vadd.f32 0.0, %v6359
        %v6361 = vpop.f32.mrb[0].mxu0
        %v6362 = vadd.f32 0.0, %v6361
        %v6363 = vpop.f32.mrb[0].mxu0
        %v6364 = vadd.f32 0.0, %v6363
        %6365 = vmatprep.mubr.bf16.mxu0 %v5276
        %6366 = vmatmul.mubr.bf16.gmra.mrb[0].mxu0 %v5268
        %v6367 = vpop.f32.mrb[0].mxu0
        %v6368 = vadd.f32 0.0, %v6367
        %v6369 = vpop.f32.mrb[0].mxu0
        %v6370 = vadd.f32 0.0, %v6369
        %v6371 = vpop.f32.mrb[0].mxu0
        %v6372 = vadd.f32 0.0, %v6371
        %v6373 = vpop.f32.mrb[0].mxu0
        %v6374 = vadd.f32 0.0, %v6373
        %6375 = vmatprep.mubr.bf16.mxu0 %v5307
        %6376 = vmatmul.mubr.bf16.gmra.mrb[0].mxu0 %v5299
        %v6377 = vpop.f32.mrb[0].mxu0
        %v6378 = vadd.f32 0.0, %v6377
        %v6379 = vpop.f32.mrb[0].mxu0
        %v6380 = vadd.f32 0.0, %v6379
        %v6381 = vpop.f32.mrb[0].mxu0
        %v6382 = vadd.f32 0.0, %v6381
        %v6383 = vpop.f32.mrb[0].mxu0
        %v6384 = vadd.f32 0.0, %v6383
        %6385 = vmatprep.mubr.bf16.mxu0 %v5328
        %6386 = vmatmul.mubr.bf16.gmra.mrb[0].mxu0 %v5325
        %v6387 = vpop.f32.mrb[0].mxu0
        %v6388 = vadd.f32 0.0, %v6387
        %v6389 = vpop.f32.mrb[0].mxu0
        %v6390 = vadd.f32 0.0, %v6389
        %v6391 = vpop.f32.mrb[0].mxu0
        %v6392 = vpop.f32.mrb[0].mxu0
        %6393 = vdwg.mxu0
        %6394 = vmatprep.subr.bf16.mxu0 %v5996
        %6395 = vmatpush1.bf16.msra.mxu0 %v5995
        %6396 = vmatprep.subr.bf16.mxu0 %v6002
        %6397 = vmatpush1.bf16.msra.mxu0 %v6001
        %6398 = vmatprep.subr.bf16.mxu0 %v6008
        %6399 = vmatpush1.bf16.msra.mxu0 %v6007
        %6400 = vmatprep.subr.bf16.mxu0 %v6014
        %6401 = vmatpush1.bf16.msra.mxu0 %v6013
        %6402 = vmatprep.subr.bf16.mxu0 %v6020
        %6403 = vmatpush1.bf16.msra.mxu0 %v6019
        %6404 = vmatprep.subr.bf16.mxu0 %v6026
        %6405 = vmatpush1.bf16.msra.mxu0 %v6025
        %6406 = vmatprep.subr.bf16.mxu0 %v6032
        %6407 = vmatpush1.bf16.msra.mxu0 %v6031
        %6408 = vmatprep.subr.bf16.mxu0 %v6038
        %6409 = vmatpush1.bf16.msra.mxu0 %v6037
        %6410 = vmatprep.subr.bf16.mxu0 %v6044
        %6411 = vmatpush1.bf16.msra.mxu0 %v6043
        %6412 = vmatprep.subr.bf16.mxu0 %v6050
        %6413 = vmatpush1.bf16.msra.mxu0 %v6049
        %6414 = vmatprep.subr.bf16.mxu0 %v6056
        %6415 = vmatpush1.bf16.msra.mxu0 %v6055
        %6416 = vmatprep.subr.bf16.mxu0 %v6062
        %6417 = vmatpush1.bf16.msra.mxu0 %v6061
        %6418 = vmatprep.subr.bf16.mxu0 %v6068
        %6419 = vmatpush1.bf16.msra.mxu0 %v6067
        %6420 = vmatprep.subr.bf16.mxu0 %v6074
        %6421 = vmatpush1.bf16.msra.mxu0 %v6073
        %6422 = vmatprep.subr.bf16.mxu0 0
        %6423 = vmatpush1.bf16.msra.mxu0 0
        %6424 = vmatprep.subr.bf16.mxu0 0
        %6425 = vmatpush1.bf16.msra.mxu0 0
        %6426 = vmatprep.mubr.bf16.mxu0 %v6260
        %6427 = vmatmul.mubr.bf16.gmra.mrb[0].mxu0 %v5126
        %v6428 = vpop.f32.mrb[0].mxu0
        %v6429 = vadd.f32 %v6318, %v6428
        %v6430 = vpop.f32.mrb[0].mxu0
        %v6431 = vadd.f32 %v6320, %v6430
        %v6432 = vpop.f32.mrb[0].mxu0
        %v6433 = vadd.f32 %v6322, %v6432
        %v6434 = vpop.f32.mrb[0].mxu0
        %v6435 = vadd.f32 %v6324, %v6434
        %6436 = vmatprep.mubr.bf16.mxu0 %v6263
        %6437 = vmatmul.mubr.bf16.gmra.mrb[0].mxu0 %v5160
        %v6438 = vpop.f32.mrb[0].mxu0
        %v6439 = vadd.f32 %v6328, %v6438
        %v6440 = vpop.f32.mrb[0].mxu0
        %v6441 = vadd.f32 %v6330, %v6440
        %v6442 = vpop.f32.mrb[0].mxu0
        %v6443 = vadd.f32 %v6332, %v6442
        %v6444 = vpop.f32.mrb[0].mxu0
        %v6445 = vadd.f32 %v6334, %v6444
        %6446 = vmatprep.mubr.bf16.mxu0 %v6266
        %6447 = vmatmul.mubr.bf16.gmra.mrb[0].mxu0 %v5191
        %v6448 = vpop.f32.mrb[0].mxu0
        %v6449 = vadd.f32 %v6338, %v6448
        %v6450 = vpop.f32.mrb[0].mxu0
        %v6451 = vadd.f32 %v6340, %v6450
        %v6452 = vpop.f32.mrb[0].mxu0
        %v6453 = vadd.f32 %v6342, %v6452
        %v6454 = vpop.f32.mrb[0].mxu0
        %v6455 = vadd.f32 %v6344, %v6454
        %6456 = vmatprep.mubr.bf16.mxu0 %v6269
        %6457 = vmatmul.mubr.bf16.gmra.mrb[0].mxu0 %v5222
        %v6458 = vpop.f32.mrb[0].mxu0
        %v6459 = vadd.f32 %v6348, %v6458
        %v6460 = vpop.f32.mrb[0].mxu0
        %v6461 = vadd.f32 %v6350, %v6460
        %v6462 = vpop.f32.mrb[0].mxu0
        %v6463 = vadd.f32 %v6352, %v6462
        %v6464 = vpop.f32.mrb[0].mxu0
        %v6465 = vadd.f32 %v6354, %v6464
        %6466 = vmatprep.mubr.bf16.mxu0 %v6272
        %6467 = vmatmul.mubr.bf16.gmra.mrb[0].mxu0 %v5253
        %v6468 = vpop.f32.mrb[0].mxu0
        %v6469 = vadd.f32 %v6358, %v6468
        %v6470 = vpop.f32.mrb[0].mxu0
        %v6471 = vadd.f32 %v6360, %v6470
        %v6472 = vpop.f32.mrb[0].mxu0
        %v6473 = vadd.f32 %v6362, %v6472
        %v6474 = vpop.f32.mrb[0].mxu0
        %v6475 = vadd.f32 %v6364, %v6474
        %6476 = vmatprep.mubr.bf16.mxu0 %v6275
        %6477 = vmatmul.mubr.bf16.gmra.mrb[0].mxu0 %v5284
        %v6478 = vpop.f32.mrb[0].mxu0
        %v6479 = vadd.f32 %v6368, %v6478
        %v6480 = vpop.f32.mrb[0].mxu0
        %v6481 = vadd.f32 %v6370, %v6480
        %v6482 = vpop.f32.mrb[0].mxu0
        %v6483 = vadd.f32 %v6372, %v6482
        %v6484 = vpop.f32.mrb[0].mxu0
        %v6485 = vadd.f32 %v6374, %v6484
        %6486 = vmatprep.mubr.bf16.mxu0 %v6278
        %6487 = vmatmul.mubr.bf16.gmra.mrb[0].mxu0 %v5315
        %v6488 = vpop.f32.mrb[0].mxu0
        %v6489 = vadd.f32 %v6378, %v6488
        %v6490 = vpop.f32.mrb[0].mxu0
        %v6491 = vadd.f32 %v6380, %v6490
        %v6492 = vpop.f32.mrb[0].mxu0
        %v6493 = vadd.f32 %v6382, %v6492
        %v6494 = vpop.f32.mrb[0].mxu0
        %v6495 = vadd.f32 %v6384, %v6494
        %6496 = vmatprep.mubr.bf16.mxu0 %v6281
        %6497 = vmatmul.mubr.bf16.gmra.mrb[0].mxu0 %v5331
        %v6498 = vpop.f32.mrb[0].mxu0
        %v6499 = vadd.f32 %v6388, %v6498
        %v6500 = vpop.f32.mrb[0].mxu0
        %v6501 = vadd.f32 %v6390, %v6500
        %v6502 = vpop.f32.mrb[0].mxu0
        %v6503 = vpop.f32.mrb[0].mxu0
        %6504 = vdwg.mxu0
        %6505 = vmatprep.subr.bf16.mxu0 %v5902
        %6506 = vmatpush1.bf16.msra.mxu0 %v5901
        %6507 = vmatprep.subr.bf16.mxu0 %v5908
        %6508 = vmatpush1.bf16.msra.mxu0 %v5907
        %6509 = vmatprep.subr.bf16.mxu0 %v5914
        %6510 = vmatpush1.bf16.msra.mxu0 %v5913
        %6511 = vmatprep.subr.bf16.mxu0 %v5920
        %6512 = vmatpush1.bf16.msra.mxu0 %v5919
        %6513 = vmatprep.subr.bf16.mxu0 %v5926
        %6514 = vmatpush1.bf16.msra.mxu0 %v5925
        %6515 = vmatprep.subr.bf16.mxu0 %v5932
        %6516 = vmatpush1.bf16.msra.mxu0 %v5931
        %6517 = vmatprep.subr.bf16.mxu0 %v5938
        %6518 = vmatpush1.bf16.msra.mxu0 %v5937
        %6519 = vmatprep.subr.bf16.mxu0 %v5944
        %6520 = vmatpush1.bf16.msra.mxu0 %v5943
        %6521 = vmatprep.subr.bf16.mxu0 %v5950
        %6522 = vmatpush1.bf16.msra.mxu0 %v5949
        %6523 = vmatprep.subr.bf16.mxu0 %v5956
        %6524 = vmatpush1.bf16.msra.mxu0 %v5955
        %6525 = vmatprep.subr.bf16.mxu0 %v5962
        %6526 = vmatpush1.bf16.msra.mxu0 %v5961
        %6527 = vmatprep.subr.bf16.mxu0 %v5968
        %6528 = vmatpush1.bf16.msra.mxu0 %v5967
        %6529 = vmatprep.subr.bf16.mxu0 %v5974
        %6530 = vmatpush1.bf16.msra.mxu0 %v5973
        %6531 = vmatprep.subr.bf16.mxu0 %v5980
        %6532 = vmatpush1.bf16.msra.mxu0 %v5979
        %6533 = vmatprep.subr.bf16.mxu0 %v5986
        %6534 = vmatpush1.bf16.msra.mxu0 %v5985
        %6535 = vmatprep.subr.bf16.mxu0 %v5992
        %6536 = vmatpush1.bf16.msra.mxu0 %v5991
        %6537 = vmatprep.mubr.bf16.mxu0 %v5114
        %6538 = vmatmul.mubr.bf16.gmra.mrb[0].mxu0 %v5102
        %v6539 = vpop.f32.mrb[0].mxu0
        %v6540 = vadd.f32 0.0, %v6539
        %v6541 = vpop.f32.mrb[0].mxu0
        %v6542 = vadd.f32 0.0, %v6541
        %v6543 = vpop.f32.mrb[0].mxu0
        %v6544 = vadd.f32 0.0, %v6543
        %v6545 = vpop.f32.mrb[0].mxu0
        %v6546 = vadd.f32 0.0, %v6545
        %6547 = vmatprep.mubr.bf16.mxu0 %v5152
        %6548 = vmatmul.mubr.bf16.gmra.mrb[0].mxu0 %v5144
        %v6549 = vpop.f32.mrb[0].mxu0
        %v6550 = vadd.f32 0.0, %v6549
        %v6551 = vpop.f32.mrb[0].mxu0
        %v6552 = vadd.f32 0.0, %v6551
        %v6553 = vpop.f32.mrb[0].mxu0
        %v6554 = vadd.f32 0.0, %v6553
        %v6555 = vpop.f32.mrb[0].mxu0
        %v6556 = vadd.f32 0.0, %v6555
        %6557 = vmatprep.mubr.bf16.mxu0 %v5183
        %6558 = vmatmul.mubr.bf16.gmra.mrb[0].mxu0 %v5175
        %v6559 = vpop.f32.mrb[0].mxu0
        %v6560 = vadd.f32 0.0, %v6559
        %v6561 = vpop.f32.mrb[0].mxu0
        %v6562 = vadd.f32 0.0, %v6561
        %v6563 = vpop.f32.mrb[0].mxu0
        %v6564 = vadd.f32 0.0, %v6563
        %v6565 = vpop.f32.mrb[0].mxu0
        %v6566 = vadd.f32 0.0, %v6565
        %6567 = vmatprep.mubr.bf16.mxu0 %v5214
        %6568 = vmatmul.mubr.bf16.gmra.mrb[0].mxu0 %v5206
        %v6569 = vpop.f32.mrb[0].mxu0
        %v6570 = vadd.f32 0.0, %v6569
        %v6571 = vpop.f32.mrb[0].mxu0
        %v6572 = vadd.f32 0.0, %v6571
        %v6573 = vpop.f32.mrb[0].mxu0
        %v6574 = vadd.f32 0.0, %v6573
        %v6575 = vpop.f32.mrb[0].mxu0
        %v6576 = vadd.f32 0.0, %v6575
        %6577 = vmatprep.mubr.bf16.mxu0 %v5245
        %6578 = vmatmul.mubr.bf16.gmra.mrb[0].mxu0 %v5237
        %v6579 = vpop.f32.mrb[0].mxu0
        %v6580 = vadd.f32 0.0, %v6579
        %v6581 = vpop.f32.mrb[0].mxu0
        %v6582 = vadd.f32 0.0, %v6581
        %v6583 = vpop.f32.mrb[0].mxu0
        %v6584 = vadd.f32 0.0, %v6583
        %v6585 = vpop.f32.mrb[0].mxu0
        %v6586 = vadd.f32 0.0, %v6585
        %6587 = vmatprep.mubr.bf16.mxu0 %v5276
        %6588 = vmatmul.mubr.bf16.gmra.mrb[0].mxu0 %v5268
        %v6589 = vpop.f32.mrb[0].mxu0
        %v6590 = vadd.f32 0.0, %v6589
        %v6591 = vpop.f32.mrb[0].mxu0
        %v6592 = vadd.f32 0.0, %v6591
        %v6593 = vpop.f32.mrb[0].mxu0
        %v6594 = vadd.f32 0.0, %v6593
        %v6595 = vpop.f32.mrb[0].mxu0
        %v6596 = vadd.f32 0.0, %v6595
        %6597 = vmatprep.mubr.bf16.mxu0 %v5307
        %6598 = vmatmul.mubr.bf16.gmra.mrb[0].mxu0 %v5299
        %v6599 = vpop.f32.mrb[0].mxu0
        %v6600 = vadd.f32 0.0, %v6599
        %v6601 = vpop.f32.mrb[0].mxu0
        %v6602 = vadd.f32 0.0, %v6601
        %v6603 = vpop.f32.mrb[0].mxu0
        %v6604 = vadd.f32 0.0, %v6603
        %v6605 = vpop.f32.mrb[0].mxu0
        %v6606 = vadd.f32 0.0, %v6605
        %6607 = vmatprep.mubr.bf16.mxu0 %v5328
        %6608 = vmatmul.mubr.bf16.gmra.mrb[0].mxu0 %v5325
        %v6609 = vpop.f32.mrb[0].mxu0
        %v6610 = vadd.f32 0.0, %v6609
        %v6611 = vpop.f32.mrb[0].mxu0
        %v6612 = vadd.f32 0.0, %v6611
        %v6613 = vpop.f32.mrb[0].mxu0
        %v6614 = vpop.f32.mrb[0].mxu0
        %6615 = vdwg.mxu0
        %6616 = vmatprep.subr.bf16.mxu0 %v5998
        %6617 = vmatpush1.bf16.msra.mxu0 %v5997
        %6618 = vmatprep.subr.bf16.mxu0 %v6004
        %6619 = vmatpush1.bf16.msra.mxu0 %v6003
        %6620 = vmatprep.subr.bf16.mxu0 %v6010
        %6621 = vmatpush1.bf16.msra.mxu0 %v6009
        %6622 = vmatprep.subr.bf16.mxu0 %v6016
        %6623 = vmatpush1.bf16.msra.mxu0 %v6015
        %6624 = vmatprep.subr.bf16.mxu0 %v6022
        %6625 = vmatpush1.bf16.msra.mxu0 %v6021
        %6626 = vmatprep.subr.bf16.mxu0 %v6028
        %6627 = vmatpush1.bf16.msra.mxu0 %v6027
        %6628 = vmatprep.subr.bf16.mxu0 %v6034
        %6629 = vmatpush1.bf16.msra.mxu0 %v6033
        %6630 = vmatprep.subr.bf16.mxu0 %v6040
        %6631 = vmatpush1.bf16.msra.mxu0 %v6039
        %6632 = vmatprep.subr.bf16.mxu0 %v6046
        %6633 = vmatpush1.bf16.msra.mxu0 %v6045
        %6634 = vmatprep.subr.bf16.mxu0 %v6052
        %6635 = vmatpush1.bf16.msra.mxu0 %v6051
        %6636 = vmatprep.subr.bf16.mxu0 %v6058
        %6637 = vmatpush1.bf16.msra.mxu0 %v6057
        %6638 = vmatprep.subr.bf16.mxu0 %v6064
        %6639 = vmatpush1.bf16.msra.mxu0 %v6063
        %6640 = vmatprep.subr.bf16.mxu0 %v6070
        %6641 = vmatpush1.bf16.msra.mxu0 %v6069
        %6642 = vmatprep.subr.bf16.mxu0 %v6076
        %6643 = vmatpush1.bf16.msra.mxu0 %v6075
        %6644 = vmatprep.subr.bf16.mxu0 0
        %6645 = vmatpush1.bf16.msra.mxu0 0
        %6646 = vmatprep.subr.bf16.mxu0 0
        %6647 = vmatpush1.bf16.msra.mxu0 0
        %6648 = vmatprep.mubr.bf16.mxu0 %v6260
        %6649 = vmatmul.mubr.bf16.gmra.mrb[0].mxu0 %v5126
        %v6650 = vpop.f32.mrb[0].mxu0
        %v6651 = vadd.f32 %v6540, %v6650
        %v6652 = vpop.f32.mrb[0].mxu0
        %v6653 = vadd.f32 %v6542, %v6652
        %v6654 = vpop.f32.mrb[0].mxu0
        %v6655 = vadd.f32 %v6544, %v6654
        %v6656 = vpop.f32.mrb[0].mxu0
        %v6657 = vadd.f32 %v6546, %v6656
        %6658 = vmatprep.mubr.bf16.mxu0 %v6263
        %6659 = vmatmul.mubr.bf16.gmra.mrb[0].mxu0 %v5160
        %v6660 = vpop.f32.mrb[0].mxu0
        %v6661 = vadd.f32 %v6550, %v6660
        %v6662 = vpop.f32.mrb[0].mxu0
        %v6663 = vadd.f32 %v6552, %v6662
        %v6664 = vpop.f32.mrb[0].mxu0
        %v6665 = vadd.f32 %v6554, %v6664
        %v6666 = vpop.f32.mrb[0].mxu0
        %v6667 = vadd.f32 %v6556, %v6666
        %6668 = vmatprep.mubr.bf16.mxu0 %v6266
        %6669 = vmatmul.mubr.bf16.gmra.mrb[0].mxu0 %v5191
        %v6670 = vpop.f32.mrb[0].mxu0
        %v6671 = vadd.f32 %v6560, %v6670
        %v6672 = vpop.f32.mrb[0].mxu0
        %v6673 = vadd.f32 %v6562, %v6672
        %v6674 = vpop.f32.mrb[0].mxu0
        %v6675 = vadd.f32 %v6564, %v6674
        %v6676 = vpop.f32.mrb[0].mxu0
        %v6677 = vadd.f32 %v6566, %v6676
        %6678 = vmatprep.mubr.bf16.mxu0 %v6269
        %6679 = vmatmul.mubr.bf16.gmra.mrb[0].mxu0 %v5222
        %v6680 = vpop.f32.mrb[0].mxu0
        %v6681 = vadd.f32 %v6570, %v6680
        %v6682 = vpop.f32.mrb[0].mxu0
        %v6683 = vadd.f32 %v6572, %v6682
        %v6684 = vpop.f32.mrb[0].mxu0
        %v6685 = vadd.f32 %v6574, %v6684
        %v6686 = vpop.f32.mrb[0].mxu0
        %v6687 = vadd.f32 %v6576, %v6686
        %6688 = vmatprep.mubr.bf16.mxu0 %v6272
        %6689 = vmatmul.mubr.bf16.gmra.mrb[0].mxu0 %v5253
        %v6690 = vpop.f32.mrb[0].mxu0
        %v6691 = vadd.f32 %v6580, %v6690
        %v6692 = vpop.f32.mrb[0].mxu0
        %v6693 = vadd.f32 %v6582, %v6692
        %v6694 = vpop.f32.mrb[0].mxu0
        %v6695 = vadd.f32 %v6584, %v6694
        %v6696 = vpop.f32.mrb[0].mxu0
        %v6697 = vadd.f32 %v6586, %v6696
        %6698 = vmatprep.mubr.bf16.mxu0 %v6275
        %6699 = vmatmul.mubr.bf16.gmra.mrb[0].mxu0 %v5284
        %v6700 = vpop.f32.mrb[0].mxu0
        %v6701 = vadd.f32 %v6590, %v6700
        %v6702 = vpop.f32.mrb[0].mxu0
        %v6703 = vadd.f32 %v6592, %v6702
        %v6704 = vpop.f32.mrb[0].mxu0
        %v6705 = vadd.f32 %v6594, %v6704
        %v6706 = vpop.f32.mrb[0].mxu0
        %v6707 = vadd.f32 %v6596, %v6706
        %6708 = vmatprep.mubr.bf16.mxu0 %v6278
        %6709 = vmatmul.mubr.bf16.gmra.mrb[0].mxu0 %v5315
        %v6710 = vpop.f32.mrb[0].mxu0
        %v6711 = vadd.f32 %v6600, %v6710
        %v6712 = vpop.f32.mrb[0].mxu0
        %v6713 = vadd.f32 %v6602, %v6712
        %v6714 = vpop.f32.mrb[0].mxu0
        %v6715 = vadd.f32 %v6604, %v6714
        %v6716 = vpop.f32.mrb[0].mxu0
        %v6717 = vadd.f32 %v6606, %v6716
        %6718 = vmatprep.mubr.bf16.mxu0 %v6281
        %6719 = vmatmul.mubr.bf16.gmra.mrb[0].mxu0 %v5331
        %v6720 = vpop.f32.mrb[0].mxu0
        %v6721 = vadd.f32 %v6610, %v6720
        %v6722 = vpop.f32.mrb[0].mxu0
        %v6723 = vadd.f32 %v6612, %v6722
        %v6724 = vpop.f32.mrb[0].mxu0
        %v6725 = vpop.f32.mrb[0].mxu0
        %6726 = vdwg.mxu0
        %6727 = vmatprep.subr.bf16.mxu0 %v5904
        %6728 = vmatpush1.bf16.msra.mxu0 %v5903
        %6729 = vmatprep.subr.bf16.mxu0 %v5910
        %6730 = vmatpush1.bf16.msra.mxu0 %v5909
        %6731 = vmatprep.subr.bf16.mxu0 %v5916
        %6732 = vmatpush1.bf16.msra.mxu0 %v5915
        %6733 = vmatprep.subr.bf16.mxu0 %v5922
        %6734 = vmatpush1.bf16.msra.mxu0 %v5921
        %6735 = vmatprep.subr.bf16.mxu0 %v5928
        %6736 = vmatpush1.bf16.msra.mxu0 %v5927
        %6737 = vmatprep.subr.bf16.mxu0 %v5934
        %6738 = vmatpush1.bf16.msra.mxu0 %v5933
        %6739 = vmatprep.subr.bf16.mxu0 %v5940
        %6740 = vmatpush1.bf16.msra.mxu0 %v5939
        %6741 = vmatprep.subr.bf16.mxu0 %v5946
        %6742 = vmatpush1.bf16.msra.mxu0 %v5945
        %6743 = vmatprep.subr.bf16.mxu0 %v5952
        %6744 = vmatpush1.bf16.msra.mxu0 %v5951
        %6745 = vmatprep.subr.bf16.mxu0 %v5958
        %6746 = vmatpush1.bf16.msra.mxu0 %v5957
        %6747 = vmatprep.subr.bf16.mxu0 %v5964
        %6748 = vmatpush1.bf16.msra.mxu0 %v5963
        %6749 = vmatprep.subr.bf16.mxu0 %v5970
        %6750 = vmatpush1.bf16.msra.mxu0 %v5969
        %6751 = vmatprep.subr.bf16.mxu0 %v5976
        %6752 = vmatpush1.bf16.msra.mxu0 %v5975
        %6753 = vmatprep.subr.bf16.mxu0 %v5982
        %6754 = vmatpush1.bf16.msra.mxu0 %v5981
        %6755 = vmatprep.subr.bf16.mxu0 %v5988
        %6756 = vmatpush1.bf16.msra.mxu0 %v5987
        %6757 = vmatprep.subr.bf16.mxu0 %v5994
        %6758 = vmatpush1.bf16.msra.mxu0 %v5993
        %6759 = vmatprep.mubr.bf16.mxu0 %v5114
        %6760 = vmatmul.mubr.bf16.gmra.mrb[0].mxu0 %v5102
        %v6761 = vpop.f32.mrb[0].mxu0
        %v6762 = vadd.f32 0.0, %v6761
        %v6763 = vpop.f32.mrb[0].mxu0
        %v6764 = vadd.f32 0.0, %v6763
        %v6765 = vpop.f32.mrb[0].mxu0
        %v6766 = vadd.f32 0.0, %v6765
        %v6767 = vpop.f32.mrb[0].mxu0
        %v6768 = vadd.f32 0.0, %v6767
        %6769 = vmatprep.mubr.bf16.mxu0 %v5152
        %6770 = vmatmul.mubr.bf16.gmra.mrb[0].mxu0 %v5144
        %v6771 = vpop.f32.mrb[0].mxu0
        %v6772 = vadd.f32 0.0, %v6771
        %v6773 = vpop.f32.mrb[0].mxu0
        %v6774 = vadd.f32 0.0, %v6773
        %v6775 = vpop.f32.mrb[0].mxu0
        %v6776 = vadd.f32 0.0, %v6775
        %v6777 = vpop.f32.mrb[0].mxu0
        %v6778 = vadd.f32 0.0, %v6777
        %6779 = vmatprep.mubr.bf16.mxu0 %v5183
        %6780 = vmatmul.mubr.bf16.gmra.mrb[0].mxu0 %v5175
        %v6781 = vpop.f32.mrb[0].mxu0
        %v6782 = vadd.f32 0.0, %v6781
        %v6783 = vpop.f32.mrb[0].mxu0
        %v6784 = vadd.f32 0.0, %v6783
        %v6785 = vpop.f32.mrb[0].mxu0
        %v6786 = vadd.f32 0.0, %v6785
        %v6787 = vpop.f32.mrb[0].mxu0
        %v6788 = vadd.f32 0.0, %v6787
        %6789 = vmatprep.mubr.bf16.mxu0 %v5214
        %6790 = vmatmul.mubr.bf16.gmra.mrb[0].mxu0 %v5206
        %v6791 = vpop.f32.mrb[0].mxu0
        %v6792 = vadd.f32 0.0, %v6791
        %v6793 = vpop.f32.mrb[0].mxu0
        %v6794 = vadd.f32 0.0, %v6793
        %v6795 = vpop.f32.mrb[0].mxu0
        %v6796 = vadd.f32 0.0, %v6795
        %v6797 = vpop.f32.mrb[0].mxu0
        %v6798 = vadd.f32 0.0, %v6797
        %6799 = vmatprep.mubr.bf16.mxu0 %v5245
        %6800 = vmatmul.mubr.bf16.gmra.mrb[0].mxu0 %v5237
        %v6801 = vpop.f32.mrb[0].mxu0
        %v6802 = vadd.f32 0.0, %v6801
        %v6803 = vpop.f32.mrb[0].mxu0
        %v6804 = vadd.f32 0.0, %v6803
        %v6805 = vpop.f32.mrb[0].mxu0
        %v6806 = vadd.f32 0.0, %v6805
        %v6807 = vpop.f32.mrb[0].mxu0
        %v6808 = vadd.f32 0.0, %v6807
        %6809 = vmatprep.mubr.bf16.mxu0 %v5276
        %6810 = vmatmul.mubr.bf16.gmra.mrb[0].mxu0 %v5268
        %v6811 = vpop.f32.mrb[0].mxu0
        %v6812 = vadd.f32 0.0, %v6811
        %v6813 = vpop.f32.mrb[0].mxu0
        %v6814 = vadd.f32 0.0, %v6813
        %v6815 = vpop.f32.mrb[0].mxu0
        %v6816 = vadd.f32 0.0, %v6815
        %v6817 = vpop.f32.mrb[0].mxu0
        %v6818 = vadd.f32 0.0, %v6817
        %6819 = vmatprep.mubr.bf16.mxu0 %v5307
        %6820 = vmatmul.mubr.bf16.gmra.mrb[0].mxu0 %v5299
        %v6821 = vpop.f32.mrb[0].mxu0
        %v6822 = vadd.f32 0.0, %v6821
        %v6823 = vpop.f32.mrb[0].mxu0
        %v6824 = vadd.f32 0.0, %v6823
        %v6825 = vpop.f32.mrb[0].mxu0
        %v6826 = vadd.f32 0.0, %v6825
        %v6827 = vpop.f32.mrb[0].mxu0
        %v6828 = vadd.f32 0.0, %v6827
        %6829 = vmatprep.mubr.bf16.mxu0 %v5328
        %6830 = vmatmul.mubr.bf16.gmra.mrb[0].mxu0 %v5325
        %v6831 = vpop.f32.mrb[0].mxu0
        %v6832 = vadd.f32 0.0, %v6831
        %v6833 = vpop.f32.mrb[0].mxu0
        %v6834 = vadd.f32 0.0, %v6833
        %v6835 = vpop.f32.mrb[0].mxu0
        %v6836 = vpop.f32.mrb[0].mxu0
        %6837 = vdwg.mxu0
        %6838 = vmatprep.subr.bf16.mxu0 %v6000
        %6839 = vmatpush1.bf16.msra.mxu0 %v5999
        %6840 = vmatprep.subr.bf16.mxu0 %v6006
        %6841 = vmatpush1.bf16.msra.mxu0 %v6005
        %6842 = vmatprep.subr.bf16.mxu0 %v6012
        %6843 = vmatpush1.bf16.msra.mxu0 %v6011
        %6844 = vmatprep.subr.bf16.mxu0 %v6018
        %6845 = vmatpush1.bf16.msra.mxu0 %v6017
        %6846 = vmatprep.subr.bf16.mxu0 %v6024
        %6847 = vmatpush1.bf16.msra.mxu0 %v6023
        %6848 = vmatprep.subr.bf16.mxu0 %v6030
        %6849 = vmatpush1.bf16.msra.mxu0 %v6029
        %6850 = vmatprep.subr.bf16.mxu0 %v6036
        %6851 = vmatpush1.bf16.msra.mxu0 %v6035
        %6852 = vmatprep.subr.bf16.mxu0 %v6042
        %6853 = vmatpush1.bf16.msra.mxu0 %v6041
        %6854 = vmatprep.subr.bf16.mxu0 %v6048
        %6855 = vmatpush1.bf16.msra.mxu0 %v6047
        %6856 = vmatprep.subr.bf16.mxu0 %v6054
        %6857 = vmatpush1.bf16.msra.mxu0 %v6053
        %6858 = vmatprep.subr.bf16.mxu0 %v6060
        %6859 = vmatpush1.bf16.msra.mxu0 %v6059
        %6860 = vmatprep.subr.bf16.mxu0 %v6066
        %6861 = vmatpush1.bf16.msra.mxu0 %v6065
        %6862 = vmatprep.subr.bf16.mxu0 %v6072
        %6863 = vmatpush1.bf16.msra.mxu0 %v6071
        %6864 = vmatprep.subr.bf16.mxu0 %v6078
        %6865 = vmatpush1.bf16.msra.mxu0 %v6077
        %6866 = vmatprep.subr.bf16.mxu0 0
        %6867 = vmatpush1.bf16.msra.mxu0 0
        %6868 = vmatprep.subr.bf16.mxu0 0
        %6869 = vmatpush1.bf16.msra.mxu0 0
        %6870 = vmatprep.mubr.bf16.mxu0 %v6260
        %6871 = vmatmul.mubr.bf16.gmra.mrb[0].mxu0 %v5126
        %v6872 = vpop.f32.mrb[0].mxu0
        %v6873 = vadd.f32 %v6762, %v6872
        %v6874 = vpop.f32.mrb[0].mxu0
        %v6875 = vadd.f32 %v6764, %v6874
        %v6876 = vpop.f32.mrb[0].mxu0
        %v6877 = vadd.f32 %v6766, %v6876
        %v6878 = vpop.f32.mrb[0].mxu0
        %v6879 = vadd.f32 %v6768, %v6878
        %6880 = vmatprep.mubr.bf16.mxu0 %v6263
        %6881 = vmatmul.mubr.bf16.gmra.mrb[0].mxu0 %v5160
        %v6882 = vpop.f32.mrb[0].mxu0
        %v6883 = vadd.f32 %v6772, %v6882
        %v6884 = vpop.f32.mrb[0].mxu0
        %v6885 = vadd.f32 %v6774, %v6884
        %v6886 = vpop.f32.mrb[0].mxu0
        %v6887 = vadd.f32 %v6776, %v6886
        %v6888 = vpop.f32.mrb[0].mxu0
        %v6889 = vadd.f32 %v6778, %v6888
        %6890 = vmatprep.mubr.bf16.mxu0 %v6266
        %6891 = vmatmul.mubr.bf16.gmra.mrb[0].mxu0 %v5191
        %v6892 = vpop.f32.mrb[0].mxu0
        %v6893 = vadd.f32 %v6782, %v6892
        %v6894 = vpop.f32.mrb[0].mxu0
        %v6895 = vadd.f32 %v6784, %v6894
        %v6896 = vpop.f32.mrb[0].mxu0
        %v6897 = vadd.f32 %v6786, %v6896
        %v6898 = vpop.f32.mrb[0].mxu0
        %v6899 = vadd.f32 %v6788, %v6898
        %6900 = vmatprep.mubr.bf16.mxu0 %v6269
        %6901 = vmatmul.mubr.bf16.gmra.mrb[0].mxu0 %v5222
        %v6902 = vpop.f32.mrb[0].mxu0
        %v6903 = vadd.f32 %v6792, %v6902
        %v6904 = vpop.f32.mrb[0].mxu0
        %v6905 = vadd.f32 %v6794, %v6904
        %v6906 = vpop.f32.mrb[0].mxu0
        %v6907 = vadd.f32 %v6796, %v6906
        %v6908 = vpop.f32.mrb[0].mxu0
        %v6909 = vadd.f32 %v6798, %v6908
        %6910 = vmatprep.mubr.bf16.mxu0 %v6272
        %6911 = vmatmul.mubr.bf16.gmra.mrb[0].mxu0 %v5253
        %v6912 = vpop.f32.mrb[0].mxu0
        %v6913 = vadd.f32 %v6802, %v6912
        %v6914 = vpop.f32.mrb[0].mxu0
        %v6915 = vadd.f32 %v6804, %v6914
        %v6916 = vpop.f32.mrb[0].mxu0
        %v6917 = vadd.f32 %v6806, %v6916
        %v6918 = vpop.f32.mrb[0].mxu0
        %v6919 = vadd.f32 %v6808, %v6918
        %6920 = vmatprep.mubr.bf16.mxu0 %v6275
        %6921 = vmatmul.mubr.bf16.gmra.mrb[0].mxu0 %v5284
        %v6922 = vpop.f32.mrb[0].mxu0
        %v6923 = vadd.f32 %v6812, %v6922
        %v6924 = vpop.f32.mrb[0].mxu0
        %v6925 = vadd.f32 %v6814, %v6924
        %v6926 = vpop.f32.mrb[0].mxu0
        %v6927 = vadd.f32 %v6816, %v6926
        %v6928 = vpop.f32.mrb[0].mxu0
        %v6929 = vadd.f32 %v6818, %v6928
        %6930 = vmatprep.mubr.bf16.mxu0 %v6278
        %6931 = vmatmul.mubr.bf16.gmra.mrb[0].mxu0 %v5315
        %v6932 = vpop.f32.mrb[0].mxu0
        %v6933 = vadd.f32 %v6822, %v6932
        %v6934 = vpop.f32.mrb[0].mxu0
        %v6935 = vadd.f32 %v6824, %v6934
        %v6936 = vpop.f32.mrb[0].mxu0
        %v6937 = vadd.f32 %v6826, %v6936
        %v6938 = vpop.f32.mrb[0].mxu0
        %v6939 = vadd.f32 %v6828, %v6938
        %6940 = vmatprep.mubr.bf16.mxu0 %v6281
        %6941 = vmatmul.mubr.bf16.gmra.mrb[0].mxu0 %v5331
        %v6942 = vpop.f32.mrb[0].mxu0
        %v6943 = vadd.f32 %v6832, %v6942
        %v6944 = vpop.f32.mrb[0].mxu0
        %v6945 = vadd.f32 %v6834, %v6944
        %v6946 = vpop.f32.mrb[0].mxu0
        %v6947 = vpop.f32.mrb[0].mxu0
        %6948 = vdwg.mxu0
        %v6949 = vadd.f32 %v4820, %v6429
        %v6950 = vadd.f32 %v4821, %v6431
        %v6951 = vadd.f32 %v4822, %v6651
        %v6952 = vadd.f32 %v4823, %v6653
        %v6953 = vadd.f32 %v4824, %v6873
        %v6954 = vadd.f32 %v4825, %v6875
        %v6955 = vadd.f32 %v4826, %v6433
        %v6956 = vadd.f32 %v4827, %v6435
        %v6957 = vadd.f32 %v4828, %v6655
        %v6958 = vadd.f32 %v4829, %v6657
        %v6959 = vadd.f32 %v4830, %v6877
        %v6960 = vadd.f32 %v4831, %v6879
        %v6961 = vadd.f32 %v4832, %v6439
        %v6962 = vadd.f32 %v4833, %v6441
        %v6963 = vadd.f32 %v4834, %v6661
        %v6964 = vadd.f32 %v4835, %v6663
        %v6965 = vadd.f32 %v4836, %v6883
        %v6966 = vadd.f32 %v4837, %v6885
        %v6967 = vadd.f32 %v4838, %v6443
        %v6968 = vadd.f32 %v4839, %v6445
        %v6969 = vadd.f32 %v4840, %v6665
        %v6970 = vadd.f32 %v4841, %v6667
        %v6971 = vadd.f32 %v4842, %v6887
        %v6972 = vadd.f32 %v4843, %v6889
        %v6973 = vadd.f32 %v4844, %v6449
        %v6974 = vadd.f32 %v4845, %v6451
        %v6975 = vadd.f32 %v4846, %v6671
        %v6976 = vadd.f32 %v4847, %v6673
        %v6977 = vadd.f32 %v4848, %v6893
        %v6978 = vadd.f32 %v4849, %v6895
        %v6979 = vadd.f32 %v4850, %v6453
        %v6980 = vadd.f32 %v4851, %v6455
        %v6981 = vadd.f32 %v4852, %v6675
        %v6982 = vadd.f32 %v4853, %v6677
        %v6983 = vadd.f32 %v4854, %v6897
        %v6984 = vadd.f32 %v4855, %v6899
        %v6985 = vadd.f32 %v4856, %v6459
        %v6986 = vadd.f32 %v4857, %v6461
        %v6987 = vadd.f32 %v4858, %v6681
        %v6988 = vadd.f32 %v4859, %v6683
        %v6989 = vadd.f32 %v4860, %v6903
        %v6990 = vadd.f32 %v4861, %v6905
        %v6991 = vadd.f32 %v4862, %v6463
        %v6992 = vadd.f32 %v4863, %v6465
        %v6993 = vadd.f32 %v4864, %v6685
        %v6994 = vadd.f32 %v4865, %v6687
        %v6995 = vadd.f32 %v4866, %v6907
        %v6996 = vadd.f32 %v4867, %v6909
        %v6997 = vadd.f32 %v4868, %v6469
        %v6998 = vadd.f32 %v4869, %v6471
        %v6999 = vadd.f32 %v4870, %v6691
        %v7000 = vadd.f32 %v4871, %v6693
        %v7001 = vadd.f32 %v4872, %v6913
        %v7002 = vadd.f32 %v4873, %v6915
        %v7003 = vadd.f32 %v4874, %v6473
        %v7004 = vadd.f32 %v4875, %v6475
        %v7005 = vadd.f32 %v4876, %v6695
        %v7006 = vadd.f32 %v4877, %v6697
        %v7007 = vadd.f32 %v4878, %v6917
        %v7008 = vadd.f32 %v4879, %v6919
        %v7009 = vadd.f32 %v4880, %v6479
        %v7010 = vadd.f32 %v4881, %v6481
        %v7011 = vadd.f32 %v4882, %v6701
        %v7012 = vadd.f32 %v4883, %v6703
        %v7013 = vadd.f32 %v4884, %v6923
        %v7014 = vadd.f32 %v4885, %v6925
        %v7015 = vadd.f32 %v4886, %v6483
        %v7016 = vadd.f32 %v4887, %v6485
        %v7017 = vadd.f32 %v4888, %v6705
        %v7018 = vadd.f32 %v4889, %v6707
        %v7019 = vadd.f32 %v4890, %v6927
        %v7020 = vadd.f32 %v4891, %v6929
        %v7021 = vadd.f32 %v4892, %v6489
        %v7022 = vadd.f32 %v4893, %v6491
        %v7023 = vadd.f32 %v4894, %v6711
        %v7024 = vadd.f32 %v4895, %v6713
        %v7025 = vadd.f32 %v4896, %v6933
        %v7026 = vadd.f32 %v4897, %v6935
        %v7027 = vadd.f32 %v4898, %v6493
        %v7028 = vadd.f32 %v4899, %v6495
        %v7029 = vadd.f32 %v4900, %v6715
        %v7030 = vadd.f32 %v4901, %v6717
        %v7031 = vadd.f32 %v4902, %v6937
        %v7032 = vadd.f32 %v4903, %v6939
        %v7033 = vadd.f32 %v4904, %v6499
        %v7034 = vadd.f32 %v4905, %v6501
        %v7035 = vadd.f32 %v4906, %v6721
        %v7036 = vadd.f32 %v4907, %v6723
        %v7037 = vadd.f32 %v4908, %v6943
        %v7038 = vadd.f32 %v4909, %v6945
        %s7039 = scalar_lea.vmem %s4, 2880
        %v7040 = vld [vmem:[%s7039] sm:$0xff]
        %v7041 = vld [vmem:[%s7039 + $0x8] sm:$0xff]
        %v7042 = vld [vmem:[%s7039 + $0x10] sm:$0xff]
        %v7043 = vld [vmem:[%s7039 + $0x18] sm:$0xff]
        %v7044 = vld [vmem:[%s7039 + $0x20] sm:$0xff]
        %v7045 = vld [vmem:[%s7039 + $0x28] sm:$0xff]
        %v7046 = vld [vmem:[%s7039 + $0x30] sm:$0xff]
        %v7047 = vld [vmem:[%s7039 + $0x38] sm:$0xff]
        %v7048 = vld [vmem:[%s7039 + $0x40] sm:$0xff]
        %v7049 = vld [vmem:[%s7039 + $0x48] sm:$0xff]
        %v7050 = vld [vmem:[%s7039 + $0x50] sm:$0xff]
        %v7051 = vld [vmem:[%s7039 + $0x58] sm:$0xff]
        %v7052 = vld [vmem:[%s7039 + $0x60] sm:$0xff]
        %v7053 = vld [vmem:[%s7039 + $0x68] sm:$0xff]
        %v7054 = vld [vmem:[%s7039 + $0x70] sm:$0xff]
        %v7055 = vld [vmem:[%s7039 + $0x78] sm:$0xff]
        %v7056 = vld [vmem:[%s7039 + $0x80] sm:$0xff]
        %v7057 = vld [vmem:[%s7039 + $0x88] sm:$0xff]
        %v7058 = vld [vmem:[%s7039 + $0x90] sm:$0xff]
        %v7059 = vld [vmem:[%s7039 + $0x98] sm:$0xff]
        %v7060 = vld [vmem:[%s7039 + $0xa0] sm:$0xff]
        %v7061 = vld [vmem:[%s7039 + $0xa8] sm:$0xff]
        %v7062 = vld [vmem:[%s7039 + $0xb0] sm:$0xff]
        %v7063 = vld [vmem:[%s7039 + $0xb8] sm:$0xff]
        %v7064 = vld [vmem:[%s7039 + $0xc0] sm:$0xff]
        %v7065 = vld [vmem:[%s7039 + $0xc8] sm:$0xff]
        %v7066 = vld [vmem:[%s7039 + $0xd0] sm:$0xff]
        %v7067 = vld [vmem:[%s7039 + $0xd8] sm:$0xff]
        %v7068 = vld [vmem:[%s7039 + $0xe0] sm:$0xff]
        %v7069 = vld [vmem:[%s7039 + $0xe8] sm:$0xff]
        %v7070 = vld [vmem:[%s7039 + $0xf0] sm:$0xff]
        %v7071 = vld [vmem:[%s7039 + $0xf8] sm:$0xff]
        %v7072 = vld [vmem:[%s7039 + $0x100] sm:$0xff]
        %v7073 = vld [vmem:[%s7039 + $0x108] sm:$0xff]
        %v7074 = vld [vmem:[%s7039 + $0x110] sm:$0xff]
        %v7075 = vld [vmem:[%s7039 + $0x118] sm:$0xff]
        %v7076 = vld [vmem:[%s7039 + $0x120] sm:$0xff]
        %v7077 = vld [vmem:[%s7039 + $0x128] sm:$0xff]
        %v7078 = vld [vmem:[%s7039 + $0x130] sm:$0xff]
        %v7079 = vld [vmem:[%s7039 + $0x138] sm:$0xff]
        %v7080 = vld [vmem:[%s7039 + $0x140] sm:$0xff]
        %v7081 = vld [vmem:[%s7039 + $0x148] sm:$0xff]
        %v7082 = vld [vmem:[%s7039 + $0x150] sm:$0xff]
        %v7083 = vld [vmem:[%s7039 + $0x158] sm:$0xff]
        %v7084 = vld [vmem:[%s7039 + $0x160] sm:$0xff]
        %v7085 = vld [vmem:[%s7039 + $0x168] sm:$0xff]
        %v7086 = vld [vmem:[%s7039 + $0x170] sm:$0xff]
        %v7087 = vld [vmem:[%s7039 + $0x178] sm:$0xff]
        %v7088 = vld [vmem:[%s7039 + $0x180] sm:$0xff]
        %v7089 = vld [vmem:[%s7039 + $0x188] sm:$0xff]
        %v7090 = vld [vmem:[%s7039 + $0x190] sm:$0xff]
        %v7091 = vld [vmem:[%s7039 + $0x198] sm:$0xff]
        %v7092 = vld [vmem:[%s7039 + $0x1a0] sm:$0xff]
        %v7093 = vld [vmem:[%s7039 + $0x1a8] sm:$0xff]
        %v7094 = vld [vmem:[%s7039 + $0x1b0] sm:$0xff]
        %v7095 = vld [vmem:[%s7039 + $0x1b8] sm:$0xff]
        %v7096 = vld [vmem:[%s7039 + $0x1c0] sm:$0xff]
        %v7097 = vld [vmem:[%s7039 + $0x1c8] sm:$0xff]
        %v7098 = vld [vmem:[%s7039 + $0x1d0] sm:$0xff]
        %v7099 = vld [vmem:[%s7039 + $0x1d8] sm:$0xff]
        %v7100 = vld [vmem:[%s7039 + $0x1e0] sm:$0xff]
        %v7101 = vld [vmem:[%s7039 + $0x1e8] sm:$0xff]
        %v7102 = vld [vmem:[%s7039 + $0x1f0] sm:$0xff]
        %v7103 = vld [vmem:[%s7039 + $0x1f8] sm:$0xff]
        %v7104 = vld [vmem:[%s7039 + $0x200] sm:$0xff]
        %v7105 = vld [vmem:[%s7039 + $0x208] sm:$0xff]
        %v7106 = vld [vmem:[%s7039 + $0x210] sm:$0xff]
        %v7107 = vld [vmem:[%s7039 + $0x218] sm:$0xff]
        %v7108 = vld [vmem:[%s7039 + $0x220] sm:$0xff]
        %v7109 = vld [vmem:[%s7039 + $0x228] sm:$0xff]
        %v7110 = vld [vmem:[%s7039 + $0x230] sm:$0xff]
        %v7111 = vld [vmem:[%s7039 + $0x238] sm:$0xff]
        %v7112 = vld [vmem:[%s7039 + $0x240] sm:$0xff]
        %v7113 = vld [vmem:[%s7039 + $0x248] sm:$0xff]
        %v7114 = vld [vmem:[%s7039 + $0x250] sm:$0xff]
        %v7115 = vld [vmem:[%s7039 + $0x258] sm:$0xff]
        %v7116 = vld [vmem:[%s7039 + $0x260] sm:$0xff]
        %v7117 = vld [vmem:[%s7039 + $0x268] sm:$0xff]
        %v7118 = vld [vmem:[%s7039 + $0x270] sm:$0xff]
        %v7119 = vld [vmem:[%s7039 + $0x278] sm:$0xff]
        %v7120 = vld [vmem:[%s7039 + $0x280] sm:$0xff]
        %v7121 = vld [vmem:[%s7039 + $0x288] sm:$0xff]
        %v7122 = vld [vmem:[%s7039 + $0x290] sm:$0xff]
        %v7123 = vld [vmem:[%s7039 + $0x298] sm:$0xff]
        %v7124 = vld [vmem:[%s7039 + $0x2a0] sm:$0xff]
        %v7125 = vld [vmem:[%s7039 + $0x2a8] sm:$0xff]
        %v7126 = vld [vmem:[%s7039 + $0x2b0] sm:$0xff]
        %v7127 = vld [vmem:[%s7039 + $0x2b8] sm:$0xff]
        %v7128 = vld [vmem:[%s7039 + $0x2c0] sm:$0xff]
        %v7129 = vld [vmem:[%s7039 + $0x2c8] sm:$0xff]
        %v7130 = vld [vmem:[%s7039 + $0x2d0] sm:$0xff]
        %v7131 = vld [vmem:[%s7039 + $0x2d8] sm:$0xff]
        %v7132 = vld [vmem:[%s7039 + $0x2e0] sm:$0xff]
        %v7133 = vld [vmem:[%s7039 + $0x2e8] sm:$0xff]
        %v7134 = vld [vmem:[%s7039 + $0x2f0] sm:$0xff]
        %v7135 = vld [vmem:[%s7039 + $0x2f8] sm:$0xff]
        %v7136 = vld [vmem:[%s7039 + $0x300] sm:$0xff]
        %v7137 = vld [vmem:[%s7039 + $0x308] sm:$0xff]
        %v7138 = vld [vmem:[%s7039 + $0x310] sm:$0xff]
        %v7139 = vld [vmem:[%s7039 + $0x318] sm:$0xff]
        %v7140 = vld [vmem:[%s7039 + $0x320] sm:$0xff]
        %v7141 = vld [vmem:[%s7039 + $0x328] sm:$0xff]
        %v7142 = vld [vmem:[%s7039 + $0x330] sm:$0xff]
        %v7143 = vld [vmem:[%s7039 + $0x338] sm:$0xff]
        %v7144 = vld [vmem:[%s7039 + $0x340] sm:$0xff]
        %v7145 = vld [vmem:[%s7039 + $0x348] sm:$0xff]
        %v7146 = vld [vmem:[%s7039 + $0x350] sm:$0xff]
        %v7147 = vld [vmem:[%s7039 + $0x358] sm:$0xff]
        %v7148 = vld [vmem:[%s7039 + $0x360] sm:$0xff]
        %v7149 = vld [vmem:[%s7039 + $0x368] sm:$0xff]
        %v7150 = vld [vmem:[%s7039 + $0x370] sm:$0xff]
        %v7151 = vld [vmem:[%s7039 + $0x378] sm:$0xff]
        %v7152 = vld [vmem:[%s7039 + $0x380] sm:$0xff]
        %v7153 = vld [vmem:[%s7039 + $0x388] sm:$0xff]
        %v7154 = vld [vmem:[%s7039 + $0x390] sm:$0xff]
        %v7155 = vld [vmem:[%s7039 + $0x398] sm:$0xff]
        %v7156 = vld [vmem:[%s7039 + $0x3a0] sm:$0xff]
        %v7157 = vld [vmem:[%s7039 + $0x3a8] sm:$0xff]
        %v7158 = vld [vmem:[%s7039 + $0x3b0] sm:$0xff]
        %v7159 = vld [vmem:[%s7039 + $0x3b8] sm:$0xff]
        %v7160 = vld [vmem:[%s7039 + $0x3c0] sm:$0xff]
        %v7161 = vld [vmem:[%s7039 + $0x3c8] sm:$0xff]
        %v7162 = vld [vmem:[%s7039 + $0x3d0] sm:$0xff]
        %v7163 = vld [vmem:[%s7039 + $0x3d8] sm:$0xff]
        %v7164 = vld [vmem:[%s7039 + $0x3e0] sm:$0xff]
        %v7165 = vld [vmem:[%s7039 + $0x3e8] sm:$0xff]
        %v7166 = vld [vmem:[%s7039 + $0x3f0] sm:$0xff]
        %v7167 = vld [vmem:[%s7039 + $0x3f8] sm:$0xff]
        %v7168 = vld [vmem:[%s7039 + $0x400] sm:$0xff]
        %v7169 = vld [vmem:[%s7039 + $0x408] sm:$0xff]
        %v7170 = vld [vmem:[%s7039 + $0x410] sm:$0xff]
        %v7171 = vld [vmem:[%s7039 + $0x418] sm:$0xff]
        %v7172 = vld [vmem:[%s7039 + $0x420] sm:$0xff]
        %v7173 = vld [vmem:[%s7039 + $0x428] sm:$0xff]
        %v7174 = vld [vmem:[%s7039 + $0x430] sm:$0xff]
        %v7175 = vld [vmem:[%s7039 + $0x438] sm:$0xff]
        %v7176 = vld [vmem:[%s7039 + $0x440] sm:$0xff]
        %v7177 = vld [vmem:[%s7039 + $0x448] sm:$0xff]
        %v7178 = vld [vmem:[%s7039 + $0x450] sm:$0xff]
        %v7179 = vld [vmem:[%s7039 + $0x458] sm:$0xff]
        %v7180 = vld [vmem:[%s7039 + $0x460] sm:$0xff]
        %v7181 = vld [vmem:[%s7039 + $0x468] sm:$0xff]
        %v7182 = vld [vmem:[%s7039 + $0x470] sm:$0xff]
        %v7183 = vld [vmem:[%s7039 + $0x478] sm:$0xff]
        %v7184 = vld [vmem:[%s7039 + $0x480] sm:$0xff]
        %v7185 = vld [vmem:[%s7039 + $0x488] sm:$0xff]
        %v7186 = vld [vmem:[%s7039 + $0x490] sm:$0xff]
        %v7187 = vld [vmem:[%s7039 + $0x498] sm:$0xff]
        %v7188 = vld [vmem:[%s7039 + $0x4a0] sm:$0xff]
        %v7189 = vld [vmem:[%s7039 + $0x4a8] sm:$0xff]
        %v7190 = vld [vmem:[%s7039 + $0x4b0] sm:$0xff]
        %v7191 = vld [vmem:[%s7039 + $0x4b8] sm:$0xff]
        %v7192 = vld [vmem:[%s7039 + $0x4c0] sm:$0xff]
        %v7193 = vld [vmem:[%s7039 + $0x4c8] sm:$0xff]
        %v7194 = vld [vmem:[%s7039 + $0x4d0] sm:$0xff]
        %v7195 = vld [vmem:[%s7039 + $0x4d8] sm:$0xff]
        %v7196 = vld [vmem:[%s7039 + $0x4e0] sm:$0xff]
        %v7197 = vld [vmem:[%s7039 + $0x4e8] sm:$0xff]
        %v7198 = vld [vmem:[%s7039 + $0x4f0] sm:$0xff]
        %v7199 = vld [vmem:[%s7039 + $0x4f8] sm:$0xff]
        %v7200 = vld [vmem:[%s7039 + $0x500] sm:$0xff]
        %v7201 = vld [vmem:[%s7039 + $0x508] sm:$0xff]
        %v7202 = vld [vmem:[%s7039 + $0x510] sm:$0xff]
        %v7203 = vld [vmem:[%s7039 + $0x518] sm:$0xff]
        %v7204 = vld [vmem:[%s7039 + $0x520] sm:$0xff]
        %v7205 = vld [vmem:[%s7039 + $0x528] sm:$0xff]
        %v7206 = vld [vmem:[%s7039 + $0x530] sm:$0xff]
        %v7207 = vld [vmem:[%s7039 + $0x538] sm:$0xff]
        %v7208 = vld [vmem:[%s7039 + $0x540] sm:$0xff]
        %v7209 = vld [vmem:[%s7039 + $0x548] sm:$0xff]
        %v7210 = vld [vmem:[%s7039 + $0x550] sm:$0xff]
        %v7211 = vld [vmem:[%s7039 + $0x558] sm:$0xff]
        %v7212 = vld [vmem:[%s7039 + $0x560] sm:$0xff]
        %v7213 = vld [vmem:[%s7039 + $0x568] sm:$0xff]
        %v7214 = vld [vmem:[%s7039 + $0x570] sm:$0xff]
        %v7215 = vld [vmem:[%s7039 + $0x578] sm:$0xff]
        %v7216 = vld [vmem:[%s7039 + $0x580] sm:$0xff]
        %v7217 = vld [vmem:[%s7039 + $0x588] sm:$0xff]
        %v7218 = vld [vmem:[%s7039 + $0x590] sm:$0xff]
        %v7219 = vld [vmem:[%s7039 + $0x598] sm:$0xff]
        %vm7252 = vcmask 1046528
        %v7253 = vrot.slane %v2986, 1
        %v7254 = vrot.slane %v2990, 1
        %v7255 = vsel %vm7252, %v7253, %v7254
        %v7256 = vrot.slane %v2987, 1
        %v7257 = vrot.slane %v2991, 1
        %v7258 = vsel %vm7252, %v7256, %v7257
        %v7259 = vrot.slane %v2988, 1
        %v7260 = vrot.slane %v2992, 1
        %v7261 = vsel %vm7252, %v7259, %v7260
        %v7262 = vrot.slane %v2989, 1
        %v7263 = vrot.slane %v2993, 1
        %v7264 = vsel %vm7252, %v7262, %v7263
        %v7265 = vrot.slane %v2994, 1
        %v7266 = vsel %vm7252, %v7254, %v7265
        %v7267 = vrot.slane %v2995, 1
        %v7268 = vsel %vm7252, %v7257, %v7267
        %v7269 = vrot.slane %v2996, 1
        %v7270 = vsel %vm7252, %v7260, %v7269
        %v7271 = vrot.slane %v2997, 1
        %v7272 = vsel %vm7252, %v7263, %v7271
        %v7273 = vrot.slane %v2998, 1
        %v7274 = vsel %vm7252, %v7265, %v7273
        %v7275 = vrot.slane %v2999, 1
        %v7276 = vsel %vm7252, %v7267, %v7275
        %v7277 = vrot.slane %v3000, 1
        %v7278 = vsel %vm7252, %v7269, %v7277
        %v7279 = vrot.slane %v3001, 1
        %v7280 = vsel %vm7252, %v7271, %v7279
        %v7281 = vrot.slane %v3002, 1
        %v7282 = vsel %vm7252, %v7273, %v7281
        %v7283 = vrot.slane %v3003, 1
        %v7284 = vsel %vm7252, %v7275, %v7283
        %v7285 = vrot.slane %v3004, 1
        %v7286 = vsel %vm7252, %v7277, %v7285
        %v7287 = vrot.slane %v3005, 1
        %v7288 = vsel %vm7252, %v7279, %v7287
        %v7289 = vrot.slane %v3006, 1
        %v7290 = vsel %vm7252, %v7281, %v7289
        %v7291 = vrot.slane %v3007, 1
        %v7292 = vsel %vm7252, %v7283, %v7291
        %v7293 = vrot.slane %v3008, 1
        %v7294 = vsel %vm7252, %v7285, %v7293
        %v7295 = vrot.slane %v3009, 1
        %v7296 = vsel %vm7252, %v7287, %v7295
        %v7297 = vrot.slane %v3010, 1
        %v7298 = vsel %vm7252, %v7289, %v7297
        %v7299 = vrot.slane %v3011, 1
        %v7300 = vsel %vm7252, %v7291, %v7299
        %v7301 = vrot.slane %v3012, 1
        %v7302 = vsel %vm7252, %v7293, %v7301
        %v7303 = vrot.slane %v3013, 1
        %v7304 = vsel %vm7252, %v7295, %v7303
        %v7305 = vrot.slane %v3014, 1
        %v7306 = vsel %vm7252, %v7297, %v7305
        %v7307 = vrot.slane %v3015, 1
        %v7308 = vsel %vm7252, %v7299, %v7307
        %v7309 = vrot.slane %v3016, 1
        %v7310 = vsel %vm7252, %v7301, %v7309
        %v7311 = vrot.slane %v3017, 1
        %v7312 = vsel %vm7252, %v7303, %v7311
        %v7517 = vunpack.c.l.b16 %v7040
        %v7518 = vunpack.c.h.b16 %v7040
        %v7519 = vunpack.c.l.b16 %v7041
        %v7520 = vunpack.c.h.b16 %v7041
        %v7521 = vunpack.c.l.b16 %v7042
        %v7522 = vunpack.c.h.b16 %v7042
        %v7523 = vunpack.c.l.b16 %v7043
        %v7524 = vunpack.c.h.b16 %v7043
        %v7525 = vunpack.c.l.b16 %v7044
        %v7526 = vunpack.c.h.b16 %v7044
        %v7527 = vunpack.c.l.b16 %v7045
        %v7528 = vunpack.c.h.b16 %v7045
        %v7529 = vunpack.c.l.b16 %v7046
        %v7530 = vunpack.c.h.b16 %v7046
        %v7531 = vunpack.c.l.b16 %v7047
        %v7532 = vunpack.c.h.b16 %v7047
        %v7533 = vunpack.c.l.b16 %v7048
        %v7534 = vunpack.c.h.b16 %v7048
        %v7535 = vunpack.c.l.b16 %v7049
        %v7536 = vunpack.c.h.b16 %v7049
        %v7537 = vunpack.c.l.b16 %v7050
        %v7538 = vunpack.c.h.b16 %v7050
        %v7539 = vunpack.c.l.b16 %v7051
        %v7540 = vunpack.c.h.b16 %v7051
        %v7541 = vunpack.c.l.b16 %v7052
        %v7542 = vunpack.c.h.b16 %v7052
        %v7543 = vunpack.c.l.b16 %v7053
        %v7544 = vunpack.c.h.b16 %v7053
        %v7545 = vunpack.c.l.b16 %v7054
        %v7546 = vunpack.c.h.b16 %v7054
        %v7547 = vunpack.c.l.b16 %v7055
        %v7548 = vunpack.c.h.b16 %v7055
        %v7549 = vunpack.c.l.b16 %v7056
        %v7550 = vunpack.c.h.b16 %v7056
        %v7551 = vunpack.c.l.b16 %v7057
        %v7552 = vunpack.c.h.b16 %v7057
        %v7553 = vunpack.c.l.b16 %v7058
        %v7554 = vunpack.c.h.b16 %v7058
        %v7555 = vunpack.c.l.b16 %v7059
        %v7556 = vunpack.c.h.b16 %v7059
        %v7557 = vunpack.c.l.b16 %v7060
        %v7558 = vunpack.c.h.b16 %v7060
        %v7559 = vunpack.c.l.b16 %v7061
        %v7560 = vunpack.c.h.b16 %v7061
        %v7561 = vunpack.c.l.b16 %v7062
        %v7562 = vunpack.c.h.b16 %v7062
        %v7563 = vunpack.c.l.b16 %v7063
        %v7564 = vunpack.c.h.b16 %v7063
        %v7565 = vunpack.c.l.b16 %v7064
        %v7566 = vunpack.c.h.b16 %v7064
        %v7567 = vunpack.c.l.b16 %v7065
        %v7568 = vunpack.c.h.b16 %v7065
        %v7569 = vunpack.c.l.b16 %v7066
        %v7570 = vunpack.c.h.b16 %v7066
        %v7571 = vunpack.c.l.b16 %v7067
        %v7572 = vunpack.c.h.b16 %v7067
        %v7573 = vunpack.c.l.b16 %v7068
        %v7574 = vunpack.c.h.b16 %v7068
        %v7575 = vunpack.c.l.b16 %v7069
        %v7576 = vunpack.c.h.b16 %v7069
        %v7577 = vunpack.c.l.b16 %v7070
        %v7578 = vunpack.c.h.b16 %v7070
        %v7579 = vunpack.c.l.b16 %v7071
        %v7580 = vunpack.c.h.b16 %v7071
        %v7581 = vunpack.c.l.b16 %v7072
        %v7582 = vunpack.c.h.b16 %v7072
        %v7583 = vunpack.c.l.b16 %v7073
        %v7584 = vunpack.c.h.b16 %v7073
        %v7585 = vunpack.c.l.b16 %v7074
        %v7586 = vunpack.c.h.b16 %v7074
        %v7587 = vunpack.c.l.b16 %v7075
        %v7588 = vunpack.c.h.b16 %v7075
        %v7589 = vunpack.c.l.b16 %v7076
        %v7590 = vunpack.c.h.b16 %v7076
        %v7591 = vunpack.c.l.b16 %v7077
        %v7592 = vunpack.c.h.b16 %v7077
        %v7593 = vunpack.c.l.b16 %v7078
        %v7594 = vunpack.c.h.b16 %v7078
        %v7595 = vunpack.c.l.b16 %v7079
        %v7596 = vunpack.c.h.b16 %v7079
        %v7597 = vunpack.c.l.b16 %v7080
        %v7598 = vunpack.c.h.b16 %v7080
        %v7599 = vunpack.c.l.b16 %v7081
        %v7600 = vunpack.c.h.b16 %v7081
        %v7601 = vunpack.c.l.b16 %v7082
        %v7602 = vunpack.c.h.b16 %v7082
        %v7603 = vunpack.c.l.b16 %v7083
        %v7604 = vunpack.c.h.b16 %v7083
        %v7605 = vunpack.c.l.b16 %v7084
        %v7606 = vunpack.c.h.b16 %v7084
        %v7607 = vunpack.c.l.b16 %v7085
        %v7608 = vunpack.c.h.b16 %v7085
        %v7609 = vunpack.c.l.b16 %v7086
        %v7610 = vunpack.c.h.b16 %v7086
        %v7611 = vunpack.c.l.b16 %v7087
        %v7612 = vunpack.c.h.b16 %v7087
        %v7613 = vunpack.c.l.b16 %v7088
        %v7614 = vunpack.c.h.b16 %v7088
        %v7615 = vunpack.c.l.b16 %v7089
        %v7616 = vunpack.c.h.b16 %v7089
        %v7617 = vunpack.c.l.b16 %v7090
        %v7618 = vunpack.c.h.b16 %v7090
        %v7619 = vunpack.c.l.b16 %v7091
        %v7620 = vunpack.c.h.b16 %v7091
        %v7621 = vunpack.c.l.b16 %v7092
        %v7622 = vunpack.c.h.b16 %v7092
        %v7623 = vunpack.c.l.b16 %v7093
        %v7624 = vunpack.c.h.b16 %v7093
        %v7625 = vunpack.c.l.b16 %v7094
        %v7626 = vunpack.c.h.b16 %v7094
        %v7627 = vunpack.c.l.b16 %v7095
        %v7628 = vunpack.c.h.b16 %v7095
        %v7629 = vunpack.c.l.b16 %v7096
        %v7630 = vunpack.c.h.b16 %v7096
        %v7631 = vunpack.c.l.b16 %v7097
        %v7632 = vunpack.c.h.b16 %v7097
        %v7633 = vunpack.c.l.b16 %v7098
        %v7634 = vunpack.c.h.b16 %v7098
        %v7635 = vunpack.c.l.b16 %v7099
        %v7636 = vunpack.c.h.b16 %v7099
        %v7637 = vunpack.c.l.b16 %v7100
        %v7638 = vunpack.c.h.b16 %v7100
        %v7639 = vunpack.c.l.b16 %v7101
        %v7640 = vunpack.c.h.b16 %v7101
        %v7641 = vunpack.c.l.b16 %v7102
        %v7642 = vunpack.c.h.b16 %v7102
        %v7643 = vunpack.c.l.b16 %v7103
        %v7644 = vunpack.c.h.b16 %v7103
        %v7645 = vunpack.c.l.b16 %v7104
        %v7646 = vunpack.c.h.b16 %v7104
        %v7647 = vunpack.c.l.b16 %v7105
        %v7648 = vunpack.c.h.b16 %v7105
        %v7649 = vunpack.c.l.b16 %v7106
        %v7650 = vunpack.c.h.b16 %v7106
        %v7651 = vunpack.c.l.b16 %v7107
        %v7652 = vunpack.c.h.b16 %v7107
        %v7653 = vunpack.c.l.b16 %v7108
        %v7654 = vunpack.c.h.b16 %v7108
        %v7655 = vunpack.c.l.b16 %v7109
        %v7656 = vunpack.c.h.b16 %v7109
        %v7657 = vunpack.c.l.b16 %v7110
        %v7658 = vunpack.c.h.b16 %v7110
        %v7659 = vunpack.c.l.b16 %v7111
        %v7660 = vunpack.c.h.b16 %v7111
        %v7661 = vunpack.c.l.b16 %v7112
        %v7662 = vunpack.c.h.b16 %v7112
        %v7663 = vunpack.c.l.b16 %v7113
        %v7664 = vunpack.c.h.b16 %v7113
        %v7665 = vunpack.c.l.b16 %v7114
        %v7666 = vunpack.c.h.b16 %v7114
        %v7667 = vunpack.c.l.b16 %v7115
        %v7668 = vunpack.c.h.b16 %v7115
        %v7669 = vunpack.c.l.b16 %v7116
        %v7670 = vunpack.c.h.b16 %v7116
        %v7671 = vunpack.c.l.b16 %v7117
        %v7672 = vunpack.c.h.b16 %v7117
        %v7673 = vunpack.c.l.b16 %v7118
        %v7674 = vunpack.c.h.b16 %v7118
        %v7675 = vunpack.c.l.b16 %v7119
        %v7676 = vunpack.c.h.b16 %v7119
        %v7677 = vunpack.c.l.b16 %v7120
        %v7678 = vunpack.c.h.b16 %v7120
        %v7679 = vunpack.c.l.b16 %v7121
        %v7680 = vunpack.c.h.b16 %v7121
        %v7681 = vunpack.c.l.b16 %v7122
        %v7682 = vunpack.c.h.b16 %v7122
        %v7683 = vunpack.c.l.b16 %v7123
        %v7684 = vunpack.c.h.b16 %v7123
        %v7685 = vunpack.c.l.b16 %v7124
        %v7686 = vunpack.c.h.b16 %v7124
        %v7687 = vunpack.c.l.b16 %v7125
        %v7688 = vunpack.c.h.b16 %v7125
        %v7689 = vunpack.c.l.b16 %v7126
        %v7690 = vunpack.c.h.b16 %v7126
        %v7691 = vunpack.c.l.b16 %v7127
        %v7692 = vunpack.c.h.b16 %v7127
        %v7693 = vunpack.c.l.b16 %v7128
        %v7694 = vunpack.c.h.b16 %v7128
        %v7695 = vunpack.c.l.b16 %v7129
        %v7696 = vunpack.c.h.b16 %v7129
        %v7697 = vunpack.c.l.b16 %v7130
        %v7698 = vunpack.c.h.b16 %v7130
        %v7699 = vunpack.c.l.b16 %v7131
        %v7700 = vunpack.c.h.b16 %v7131
        %v7701 = vunpack.c.l.b16 %v7132
        %v7702 = vunpack.c.h.b16 %v7132
        %v7703 = vunpack.c.l.b16 %v7133
        %v7704 = vunpack.c.h.b16 %v7133
        %v7705 = vunpack.c.l.b16 %v7134
        %v7706 = vunpack.c.h.b16 %v7134
        %v7707 = vunpack.c.l.b16 %v7135
        %v7708 = vunpack.c.h.b16 %v7135
        %v7709 = vunpack.c.l.b16 %v7136
        %v7710 = vunpack.c.h.b16 %v7136
        %v7711 = vunpack.c.l.b16 %v7137
        %v7712 = vunpack.c.h.b16 %v7137
        %v7713 = vunpack.c.l.b16 %v7138
        %v7714 = vunpack.c.h.b16 %v7138
        %v7715 = vunpack.c.l.b16 %v7139
        %v7716 = vunpack.c.h.b16 %v7139
        %v7717 = vunpack.c.l.b16 %v7140
        %v7718 = vunpack.c.h.b16 %v7140
        %v7719 = vunpack.c.l.b16 %v7141
        %v7720 = vunpack.c.h.b16 %v7141
        %v7721 = vunpack.c.l.b16 %v7142
        %v7722 = vunpack.c.h.b16 %v7142
        %v7723 = vunpack.c.l.b16 %v7143
        %v7724 = vunpack.c.h.b16 %v7143
        %v7725 = vunpack.c.l.b16 %v7144
        %v7726 = vunpack.c.h.b16 %v7144
        %v7727 = vunpack.c.l.b16 %v7145
        %v7728 = vunpack.c.h.b16 %v7145
        %v7729 = vunpack.c.l.b16 %v7146
        %v7730 = vunpack.c.h.b16 %v7146
        %v7731 = vunpack.c.l.b16 %v7147
        %v7732 = vunpack.c.h.b16 %v7147
        %v7733 = vunpack.c.l.b16 %v7148
        %v7734 = vunpack.c.h.b16 %v7148
        %v7735 = vunpack.c.l.b16 %v7149
        %v7736 = vunpack.c.h.b16 %v7149
        %v7737 = vunpack.c.l.b16 %v7150
        %v7738 = vunpack.c.h.b16 %v7150
        %v7739 = vunpack.c.l.b16 %v7151
        %v7740 = vunpack.c.h.b16 %v7151
        %v7741 = vunpack.c.l.b16 %v7152
        %v7742 = vunpack.c.h.b16 %v7152
        %v7743 = vunpack.c.l.b16 %v7153
        %v7744 = vunpack.c.h.b16 %v7153
        %v7745 = vunpack.c.l.b16 %v7154
        %v7746 = vunpack.c.h.b16 %v7154
        %v7747 = vunpack.c.l.b16 %v7155
        %v7748 = vunpack.c.h.b16 %v7155
        %v7749 = vunpack.c.l.b16 %v7156
        %v7750 = vunpack.c.h.b16 %v7156
        %v7751 = vunpack.c.l.b16 %v7157
        %v7752 = vunpack.c.h.b16 %v7157
        %v7753 = vunpack.c.l.b16 %v7158
        %v7754 = vunpack.c.h.b16 %v7158
        %v7755 = vunpack.c.l.b16 %v7159
        %v7756 = vunpack.c.h.b16 %v7159
        %v7757 = vunpack.c.l.b16 %v7160
        %v7758 = vunpack.c.h.b16 %v7160
        %v7759 = vunpack.c.l.b16 %v7161
        %v7760 = vunpack.c.h.b16 %v7161
        %v7761 = vunpack.c.l.b16 %v7162
        %v7762 = vunpack.c.h.b16 %v7162
        %v7763 = vunpack.c.l.b16 %v7163
        %v7764 = vunpack.c.h.b16 %v7163
        %v7765 = vunpack.c.l.b16 %v7164
        %v7766 = vunpack.c.h.b16 %v7164
        %v7767 = vunpack.c.l.b16 %v7165
        %v7768 = vunpack.c.h.b16 %v7165
        %v7769 = vunpack.c.l.b16 %v7166
        %v7770 = vunpack.c.h.b16 %v7166
        %v7771 = vunpack.c.l.b16 %v7167
        %v7772 = vunpack.c.h.b16 %v7167
        %v7773 = vunpack.c.l.b16 %v7168
        %v7774 = vunpack.c.h.b16 %v7168
        %v7775 = vunpack.c.l.b16 %v7169
        %v7776 = vunpack.c.h.b16 %v7169
        %v7777 = vunpack.c.l.b16 %v7170
        %v7778 = vunpack.c.h.b16 %v7170
        %v7779 = vunpack.c.l.b16 %v7171
        %v7780 = vunpack.c.h.b16 %v7171
        %v7781 = vunpack.c.l.b16 %v7172
        %v7782 = vunpack.c.h.b16 %v7172
        %v7783 = vunpack.c.l.b16 %v7173
        %v7784 = vunpack.c.h.b16 %v7173
        %v7785 = vunpack.c.l.b16 %v7174
        %v7786 = vunpack.c.h.b16 %v7174
        %v7787 = vunpack.c.l.b16 %v7175
        %v7788 = vunpack.c.h.b16 %v7175
        %v7789 = vunpack.c.l.b16 %v7176
        %v7790 = vunpack.c.h.b16 %v7176
        %v7791 = vunpack.c.l.b16 %v7177
        %v7792 = vunpack.c.h.b16 %v7177
        %v7793 = vunpack.c.l.b16 %v7178
        %v7794 = vunpack.c.h.b16 %v7178
        %v7795 = vunpack.c.l.b16 %v7179
        %v7796 = vunpack.c.h.b16 %v7179
        %v7797 = vunpack.c.l.b16 %v7180
        %v7798 = vunpack.c.h.b16 %v7180
        %v7799 = vunpack.c.l.b16 %v7181
        %v7800 = vunpack.c.h.b16 %v7181
        %v7801 = vunpack.c.l.b16 %v7182
        %v7802 = vunpack.c.h.b16 %v7182
        %v7803 = vunpack.c.l.b16 %v7183
        %v7804 = vunpack.c.h.b16 %v7183
        %v7805 = vunpack.c.l.b16 %v7184
        %v7806 = vunpack.c.h.b16 %v7184
        %v7807 = vunpack.c.l.b16 %v7185
        %v7808 = vunpack.c.h.b16 %v7185
        %v7809 = vunpack.c.l.b16 %v7186
        %v7810 = vunpack.c.h.b16 %v7186
        %v7811 = vunpack.c.l.b16 %v7187
        %v7812 = vunpack.c.h.b16 %v7187
        %v7813 = vunpack.c.l.b16 %v7188
        %v7814 = vunpack.c.h.b16 %v7188
        %v7815 = vunpack.c.l.b16 %v7189
        %v7816 = vunpack.c.h.b16 %v7189
        %v7817 = vunpack.c.l.b16 %v7190
        %v7818 = vunpack.c.h.b16 %v7190
        %v7819 = vunpack.c.l.b16 %v7191
        %v7820 = vunpack.c.h.b16 %v7191
        %v7821 = vunpack.c.l.b16 %v7192
        %v7822 = vunpack.c.h.b16 %v7192
        %v7823 = vunpack.c.l.b16 %v7193
        %v7824 = vunpack.c.h.b16 %v7193
        %v7825 = vunpack.c.l.b16 %v7194
        %v7826 = vunpack.c.h.b16 %v7194
        %v7827 = vunpack.c.l.b16 %v7195
        %v7828 = vunpack.c.h.b16 %v7195
        %v7829 = vunpack.c.l.b16 %v7196
        %v7830 = vunpack.c.h.b16 %v7196
        %v7831 = vunpack.c.l.b16 %v7197
        %v7832 = vunpack.c.h.b16 %v7197
        %v7833 = vunpack.c.l.b16 %v7198
        %v7834 = vunpack.c.h.b16 %v7198
        %v7835 = vunpack.c.l.b16 %v7199
        %v7836 = vunpack.c.h.b16 %v7199
        %v7837 = vunpack.c.l.b16 %v7200
        %v7838 = vunpack.c.h.b16 %v7200
        %v7839 = vunpack.c.l.b16 %v7201
        %v7840 = vunpack.c.h.b16 %v7201
        %v7841 = vunpack.c.l.b16 %v7202
        %v7842 = vunpack.c.h.b16 %v7202
        %v7843 = vunpack.c.l.b16 %v7203
        %v7844 = vunpack.c.h.b16 %v7203
        %v7845 = vunpack.c.l.b16 %v7204
        %v7846 = vunpack.c.h.b16 %v7204
        %v7847 = vunpack.c.l.b16 %v7205
        %v7848 = vunpack.c.h.b16 %v7205
        %v7849 = vunpack.c.l.b16 %v7206
        %v7850 = vunpack.c.h.b16 %v7206
        %v7851 = vunpack.c.l.b16 %v7207
        %v7852 = vunpack.c.h.b16 %v7207
        %v7853 = vunpack.c.l.b16 %v7208
        %v7854 = vunpack.c.h.b16 %v7208
        %v7855 = vunpack.c.l.b16 %v7209
        %v7856 = vunpack.c.h.b16 %v7209
        %v7857 = vunpack.c.l.b16 %v7210
        %v7858 = vunpack.c.h.b16 %v7210
        %v7859 = vunpack.c.l.b16 %v7211
        %v7860 = vunpack.c.h.b16 %v7211
        %v7861 = vunpack.c.l.b16 %v7212
        %v7862 = vunpack.c.h.b16 %v7212
        %v7863 = vunpack.c.l.b16 %v7213
        %v7864 = vunpack.c.h.b16 %v7213
        %v7865 = vunpack.c.l.b16 %v7214
        %v7866 = vunpack.c.h.b16 %v7214
        %v7867 = vunpack.c.l.b16 %v7215
        %v7868 = vunpack.c.h.b16 %v7215
        %v7869 = vunpack.c.l.b16 %v7216
        %v7870 = vunpack.c.h.b16 %v7216
        %v7871 = vunpack.c.l.b16 %v7217
        %v7872 = vunpack.c.h.b16 %v7217
        %v7873 = vunpack.c.l.b16 %v7218
        %v7874 = vunpack.c.h.b16 %v7218
        %v7875 = vunpack.c.l.b16 %v7219
        %v7876 = vunpack.c.h.b16 %v7219
        %v7877 = vpack.c.b16 %v7523, %v7517
        %v7878 = vpack.c.b16 %v7524, %v7518
        %v7879 = vpack.c.b16 %v7525, %v7519
        %v7880 = vpack.c.b16 %v7526, %v7520
        %v7881 = vpack.c.b16 %v7527, %v7521
        %v7882 = vpack.c.b16 %v7528, %v7522
        %v7883 = vpack.c.b16 %v7535, %v7529
        %v7884 = vpack.c.b16 %v7536, %v7530
        %v7885 = vpack.c.b16 %v7537, %v7531
        %v7886 = vpack.c.b16 %v7538, %v7532
        %v7887 = vpack.c.b16 %v7539, %v7533
        %v7888 = vpack.c.b16 %v7540, %v7534
        %v7889 = vpack.c.b16 %v7547, %v7541
        %v7890 = vpack.c.b16 %v7548, %v7542
        %v7891 = vpack.c.b16 %v7549, %v7543
        %v7892 = vpack.c.b16 %v7550, %v7544
        %v7893 = vpack.c.b16 %v7551, %v7545
        %v7894 = vpack.c.b16 %v7552, %v7546
        %v7895 = vpack.c.b16 %v7559, %v7553
        %v7896 = vpack.c.b16 %v7560, %v7554
        %v7897 = vpack.c.b16 %v7561, %v7555
        %v7898 = vpack.c.b16 %v7562, %v7556
        %v7899 = vpack.c.b16 %v7563, %v7557
        %v7900 = vpack.c.b16 %v7564, %v7558
        %v7901 = vpack.c.b16 %v7571, %v7565
        %v7902 = vpack.c.b16 %v7572, %v7566
        %v7903 = vpack.c.b16 %v7573, %v7567
        %v7904 = vpack.c.b16 %v7574, %v7568
        %v7905 = vpack.c.b16 %v7575, %v7569
        %v7906 = vpack.c.b16 %v7576, %v7570
        %v7907 = vpack.c.b16 %v7583, %v7577
        %v7908 = vpack.c.b16 %v7584, %v7578
        %v7909 = vpack.c.b16 %v7585, %v7579
        %v7910 = vpack.c.b16 %v7586, %v7580
        %v7911 = vpack.c.b16 %v7587, %v7581
        %v7912 = vpack.c.b16 %v7588, %v7582
        %v7913 = vpack.c.b16 %v7595, %v7589
        %v7914 = vpack.c.b16 %v7596, %v7590
        %v7915 = vpack.c.b16 %v7597, %v7591
        %v7916 = vpack.c.b16 %v7598, %v7592
        %v7917 = vpack.c.b16 %v7599, %v7593
        %v7918 = vpack.c.b16 %v7600, %v7594
        %v7919 = vpack.c.b16 %v7607, %v7601
        %v7920 = vpack.c.b16 %v7608, %v7602
        %v7921 = vpack.c.b16 %v7609, %v7603
        %v7922 = vpack.c.b16 %v7610, %v7604
        %v7923 = vpack.c.b16 %v7611, %v7605
        %v7924 = vpack.c.b16 %v7612, %v7606
        %v7925 = vpack.c.b16 %v7619, %v7613
        %v7926 = vpack.c.b16 %v7620, %v7614
        %v7927 = vpack.c.b16 %v7621, %v7615
        %v7928 = vpack.c.b16 %v7622, %v7616
        %v7929 = vpack.c.b16 %v7623, %v7617
        %v7930 = vpack.c.b16 %v7624, %v7618
        %v7931 = vpack.c.b16 %v7631, %v7625
        %v7932 = vpack.c.b16 %v7632, %v7626
        %v7933 = vpack.c.b16 %v7633, %v7627
        %v7934 = vpack.c.b16 %v7634, %v7628
        %v7935 = vpack.c.b16 %v7635, %v7629
        %v7936 = vpack.c.b16 %v7636, %v7630
        %v7937 = vpack.c.b16 %v7643, %v7637
        %v7938 = vpack.c.b16 %v7644, %v7638
        %v7939 = vpack.c.b16 %v7645, %v7639
        %v7940 = vpack.c.b16 %v7646, %v7640
        %v7941 = vpack.c.b16 %v7647, %v7641
        %v7942 = vpack.c.b16 %v7648, %v7642
        %v7943 = vpack.c.b16 %v7655, %v7649
        %v7944 = vpack.c.b16 %v7656, %v7650
        %v7945 = vpack.c.b16 %v7657, %v7651
        %v7946 = vpack.c.b16 %v7658, %v7652
        %v7947 = vpack.c.b16 %v7659, %v7653
        %v7948 = vpack.c.b16 %v7660, %v7654
        %v7949 = vpack.c.b16 %v7667, %v7661
        %v7950 = vpack.c.b16 %v7668, %v7662
        %v7951 = vpack.c.b16 %v7669, %v7663
        %v7952 = vpack.c.b16 %v7670, %v7664
        %v7953 = vpack.c.b16 %v7671, %v7665
        %v7954 = vpack.c.b16 %v7672, %v7666
        %v7955 = vpack.c.b16 %v7679, %v7673
        %v7956 = vpack.c.b16 %v7680, %v7674
        %v7957 = vpack.c.b16 %v7681, %v7675
        %v7958 = vpack.c.b16 %v7682, %v7676
        %v7959 = vpack.c.b16 %v7683, %v7677
        %v7960 = vpack.c.b16 %v7684, %v7678
        %v7961 = vpack.c.b16 %v7691, %v7685
        %v7962 = vpack.c.b16 %v7692, %v7686
        %v7963 = vpack.c.b16 %v7693, %v7687
        %v7964 = vpack.c.b16 %v7694, %v7688
        %v7965 = vpack.c.b16 %v7695, %v7689
        %v7966 = vpack.c.b16 %v7696, %v7690
        %v7967 = vpack.c.b16 %v7703, %v7697
        %v7968 = vpack.c.b16 %v7704, %v7698
        %v7969 = vpack.c.b16 %v7705, %v7699
        %v7970 = vpack.c.b16 %v7706, %v7700
        %v7971 = vpack.c.b16 %v7707, %v7701
        %v7972 = vpack.c.b16 %v7708, %v7702
        %v7973 = vpack.c.b16 %v7715, %v7709
        %v7974 = vpack.c.b16 %v7716, %v7710
        %v7975 = vpack.c.b16 %v7717, %v7711
        %v7976 = vpack.c.b16 %v7718, %v7712
        %v7977 = vpack.c.b16 %v7719, %v7713
        %v7978 = vpack.c.b16 %v7720, %v7714
        %v7979 = vpack.c.b16 %v7727, %v7721
        %v7980 = vpack.c.b16 %v7728, %v7722
        %v7981 = vpack.c.b16 %v7729, %v7723
        %v7982 = vpack.c.b16 %v7730, %v7724
        %v7983 = vpack.c.b16 %v7731, %v7725
        %v7984 = vpack.c.b16 %v7732, %v7726
        %v7985 = vpack.c.b16 %v7739, %v7733
        %v7986 = vpack.c.b16 %v7740, %v7734
        %v7987 = vpack.c.b16 %v7741, %v7735
        %v7988 = vpack.c.b16 %v7742, %v7736
        %v7989 = vpack.c.b16 %v7743, %v7737
        %v7990 = vpack.c.b16 %v7744, %v7738
        %v7991 = vpack.c.b16 %v7751, %v7745
        %v7992 = vpack.c.b16 %v7752, %v7746
        %v7993 = vpack.c.b16 %v7753, %v7747
        %v7994 = vpack.c.b16 %v7754, %v7748
        %v7995 = vpack.c.b16 %v7755, %v7749
        %v7996 = vpack.c.b16 %v7756, %v7750
        %v7997 = vpack.c.b16 %v7763, %v7757
        %v7998 = vpack.c.b16 %v7764, %v7758
        %v7999 = vpack.c.b16 %v7765, %v7759
        %v8000 = vpack.c.b16 %v7766, %v7760
        %v8001 = vpack.c.b16 %v7767, %v7761
        %v8002 = vpack.c.b16 %v7768, %v7762
        %v8003 = vpack.c.b16 %v7775, %v7769
        %v8004 = vpack.c.b16 %v7776, %v7770
        %v8005 = vpack.c.b16 %v7777, %v7771
        %v8006 = vpack.c.b16 %v7778, %v7772
        %v8007 = vpack.c.b16 %v7779, %v7773
        %v8008 = vpack.c.b16 %v7780, %v7774
        %v8009 = vpack.c.b16 %v7787, %v7781
        %v8010 = vpack.c.b16 %v7788, %v7782
        %v8011 = vpack.c.b16 %v7789, %v7783
        %v8012 = vpack.c.b16 %v7790, %v7784
        %v8013 = vpack.c.b16 %v7791, %v7785
        %v8014 = vpack.c.b16 %v7792, %v7786
        %v8015 = vpack.c.b16 %v7799, %v7793
        %v8016 = vpack.c.b16 %v7800, %v7794
        %v8017 = vpack.c.b16 %v7801, %v7795
        %v8018 = vpack.c.b16 %v7802, %v7796
        %v8019 = vpack.c.b16 %v7803, %v7797
        %v8020 = vpack.c.b16 %v7804, %v7798
        %v8021 = vpack.c.b16 %v7811, %v7805
        %v8022 = vpack.c.b16 %v7812, %v7806
        %v8023 = vpack.c.b16 %v7813, %v7807
        %v8024 = vpack.c.b16 %v7814, %v7808
        %v8025 = vpack.c.b16 %v7815, %v7809
        %v8026 = vpack.c.b16 %v7816, %v7810
        %v8027 = vpack.c.b16 %v7823, %v7817
        %v8028 = vpack.c.b16 %v7824, %v7818
        %v8029 = vpack.c.b16 %v7825, %v7819
        %v8030 = vpack.c.b16 %v7826, %v7820
        %v8031 = vpack.c.b16 %v7827, %v7821
        %v8032 = vpack.c.b16 %v7828, %v7822
        %v8033 = vpack.c.b16 %v7835, %v7829
        %v8034 = vpack.c.b16 %v7836, %v7830
        %v8035 = vpack.c.b16 %v7837, %v7831
        %v8036 = vpack.c.b16 %v7838, %v7832
        %v8037 = vpack.c.b16 %v7839, %v7833
        %v8038 = vpack.c.b16 %v7840, %v7834
        %v8039 = vpack.c.b16 %v7847, %v7841
        %v8040 = vpack.c.b16 %v7848, %v7842
        %v8041 = vpack.c.b16 %v7849, %v7843
        %v8042 = vpack.c.b16 %v7850, %v7844
        %v8043 = vpack.c.b16 %v7851, %v7845
        %v8044 = vpack.c.b16 %v7852, %v7846
        %v8045 = vpack.c.b16 %v7859, %v7853
        %v8046 = vpack.c.b16 %v7860, %v7854
        %v8047 = vpack.c.b16 %v7861, %v7855
        %v8048 = vpack.c.b16 %v7862, %v7856
        %v8049 = vpack.c.b16 %v7863, %v7857
        %v8050 = vpack.c.b16 %v7864, %v7858
        %v8051 = vpack.c.b16 %v7871, %v7865
        %v8052 = vpack.c.b16 %v7872, %v7866
        %v8053 = vpack.c.b16 %v7873, %v7867
        %v8054 = vpack.c.b16 %v7874, %v7868
        %v8055 = vpack.c.b16 %v7875, %v7869
        %v8056 = vpack.c.b16 %v7876, %v7870
        %v8238 = vsel %vm844, %v7264, 0
        %v8241 = vsel %vm844, %v7272, 0
        %v8244 = vsel %vm844, %v7280, 0
        %v8247 = vsel %vm844, %v7288, 0
        %v8250 = vsel %vm844, %v7296, 0
        %v8253 = vsel %vm844, %v7304, 0
        %v8256 = vsel %vm844, %v7312, 0
        %v8259 = vsel %vm844, %v7311, 0
        %8261 = vmatprep.subr.bf16.mxu0 %v7878
        %8262 = vmatpush1.bf16.msra.mxu0 %v7877
        %8263 = vmatprep.subr.bf16.mxu0 %v7884
        %8264 = vmatpush1.bf16.msra.mxu0 %v7883
        %8265 = vmatprep.subr.bf16.mxu0 %v7890
        %8266 = vmatpush1.bf16.msra.mxu0 %v7889
        %8267 = vmatprep.subr.bf16.mxu0 %v7896
        %8268 = vmatpush1.bf16.msra.mxu0 %v7895
        %8269 = vmatprep.subr.bf16.mxu0 %v7902
        %8270 = vmatpush1.bf16.msra.mxu0 %v7901
        %8271 = vmatprep.subr.bf16.mxu0 %v7908
        %8272 = vmatpush1.bf16.msra.mxu0 %v7907
        %8273 = vmatprep.subr.bf16.mxu0 %v7914
        %8274 = vmatpush1.bf16.msra.mxu0 %v7913
        %8275 = vmatprep.subr.bf16.mxu0 %v7920
        %8276 = vmatpush1.bf16.msra.mxu0 %v7919
        %8277 = vmatprep.subr.bf16.mxu0 %v7926
        %8278 = vmatpush1.bf16.msra.mxu0 %v7925
        %8279 = vmatprep.subr.bf16.mxu0 %v7932
        %8280 = vmatpush1.bf16.msra.mxu0 %v7931
        %8281 = vmatprep.subr.bf16.mxu0 %v7938
        %8282 = vmatpush1.bf16.msra.mxu0 %v7937
        %8283 = vmatprep.subr.bf16.mxu0 %v7944
        %8284 = vmatpush1.bf16.msra.mxu0 %v7943
        %8285 = vmatprep.subr.bf16.mxu0 %v7950
        %8286 = vmatpush1.bf16.msra.mxu0 %v7949
        %8287 = vmatprep.subr.bf16.mxu0 %v7956
        %8288 = vmatpush1.bf16.msra.mxu0 %v7955
        %8289 = vmatprep.subr.bf16.mxu0 %v7962
        %8290 = vmatpush1.bf16.msra.mxu0 %v7961
        %8291 = vmatprep.subr.bf16.mxu0 %v7968
        %8292 = vmatpush1.bf16.msra.mxu0 %v7967
        %8293 = vmatprep.mubr.bf16.mxu0 %v7258
        %8294 = vmatmul.mubr.bf16.gmra.mrb[0].mxu0 %v7255
        %v8295 = vpop.f32.mrb[0].mxu0
        %v8296 = vadd.f32 0.0, %v8295
        %v8297 = vpop.f32.mrb[0].mxu0
        %v8298 = vadd.f32 0.0, %v8297
        %v8299 = vpop.f32.mrb[0].mxu0
        %v8300 = vadd.f32 0.0, %v8299
        %v8301 = vpop.f32.mrb[0].mxu0
        %v8302 = vadd.f32 0.0, %v8301
        %8303 = vmatprep.mubr.bf16.mxu0 %v7268
        %8304 = vmatmul.mubr.bf16.gmra.mrb[0].mxu0 %v7266
        %v8305 = vpop.f32.mrb[0].mxu0
        %v8306 = vadd.f32 0.0, %v8305
        %v8307 = vpop.f32.mrb[0].mxu0
        %v8308 = vadd.f32 0.0, %v8307
        %v8309 = vpop.f32.mrb[0].mxu0
        %v8310 = vadd.f32 0.0, %v8309
        %v8311 = vpop.f32.mrb[0].mxu0
        %v8312 = vadd.f32 0.0, %v8311
        %8313 = vmatprep.mubr.bf16.mxu0 %v7276
        %8314 = vmatmul.mubr.bf16.gmra.mrb[0].mxu0 %v7274
        %v8315 = vpop.f32.mrb[0].mxu0
        %v8316 = vadd.f32 0.0, %v8315
        %v8317 = vpop.f32.mrb[0].mxu0
        %v8318 = vadd.f32 0.0, %v8317
        %v8319 = vpop.f32.mrb[0].mxu0
        %v8320 = vadd.f32 0.0, %v8319
        %v8321 = vpop.f32.mrb[0].mxu0
        %v8322 = vadd.f32 0.0, %v8321
        %8323 = vmatprep.mubr.bf16.mxu0 %v7284
        %8324 = vmatmul.mubr.bf16.gmra.mrb[0].mxu0 %v7282
        %v8325 = vpop.f32.mrb[0].mxu0
        %v8326 = vadd.f32 0.0, %v8325
        %v8327 = vpop.f32.mrb[0].mxu0
        %v8328 = vadd.f32 0.0, %v8327
        %v8329 = vpop.f32.mrb[0].mxu0
        %v8330 = vadd.f32 0.0, %v8329
        %v8331 = vpop.f32.mrb[0].mxu0
        %v8332 = vadd.f32 0.0, %v8331
        %8333 = vmatprep.mubr.bf16.mxu0 %v7292
        %8334 = vmatmul.mubr.bf16.gmra.mrb[0].mxu0 %v7290
        %v8335 = vpop.f32.mrb[0].mxu0
        %v8336 = vadd.f32 0.0, %v8335
        %v8337 = vpop.f32.mrb[0].mxu0
        %v8338 = vadd.f32 0.0, %v8337
        %v8339 = vpop.f32.mrb[0].mxu0
        %v8340 = vadd.f32 0.0, %v8339
        %v8341 = vpop.f32.mrb[0].mxu0
        %v8342 = vadd.f32 0.0, %v8341
        %8343 = vmatprep.mubr.bf16.mxu0 %v7300
        %8344 = vmatmul.mubr.bf16.gmra.mrb[0].mxu0 %v7298
        %v8345 = vpop.f32.mrb[0].mxu0
        %v8346 = vadd.f32 0.0, %v8345
        %v8347 = vpop.f32.mrb[0].mxu0
        %v8348 = vadd.f32 0.0, %v8347
        %v8349 = vpop.f32.mrb[0].mxu0
        %v8350 = vadd.f32 0.0, %v8349
        %v8351 = vpop.f32.mrb[0].mxu0
        %v8352 = vadd.f32 0.0, %v8351
        %8353 = vmatprep.mubr.bf16.mxu0 %v7308
        %8354 = vmatmul.mubr.bf16.gmra.mrb[0].mxu0 %v7306
        %v8355 = vpop.f32.mrb[0].mxu0
        %v8356 = vadd.f32 0.0, %v8355
        %v8357 = vpop.f32.mrb[0].mxu0
        %v8358 = vadd.f32 0.0, %v8357
        %v8359 = vpop.f32.mrb[0].mxu0
        %v8360 = vadd.f32 0.0, %v8359
        %v8361 = vpop.f32.mrb[0].mxu0
        %v8362 = vadd.f32 0.0, %v8361
        %8363 = vmatprep.mubr.bf16.mxu0 %v7307
        %8364 = vmatmul.mubr.bf16.gmra.mrb[0].mxu0 %v7305
        %v8365 = vpop.f32.mrb[0].mxu0
        %v8366 = vadd.f32 0.0, %v8365
        %v8367 = vpop.f32.mrb[0].mxu0
        %v8368 = vadd.f32 0.0, %v8367
        %v8369 = vpop.f32.mrb[0].mxu0
        %v8370 = vpop.f32.mrb[0].mxu0
        %8371 = vdwg.mxu0
        %8372 = vmatprep.subr.bf16.mxu0 %v7974
        %8373 = vmatpush1.bf16.msra.mxu0 %v7973
        %8374 = vmatprep.subr.bf16.mxu0 %v7980
        %8375 = vmatpush1.bf16.msra.mxu0 %v7979
        %8376 = vmatprep.subr.bf16.mxu0 %v7986
        %8377 = vmatpush1.bf16.msra.mxu0 %v7985
        %8378 = vmatprep.subr.bf16.mxu0 %v7992
        %8379 = vmatpush1.bf16.msra.mxu0 %v7991
        %8380 = vmatprep.subr.bf16.mxu0 %v7998
        %8381 = vmatpush1.bf16.msra.mxu0 %v7997
        %8382 = vmatprep.subr.bf16.mxu0 %v8004
        %8383 = vmatpush1.bf16.msra.mxu0 %v8003
        %8384 = vmatprep.subr.bf16.mxu0 %v8010
        %8385 = vmatpush1.bf16.msra.mxu0 %v8009
        %8386 = vmatprep.subr.bf16.mxu0 %v8016
        %8387 = vmatpush1.bf16.msra.mxu0 %v8015
        %8388 = vmatprep.subr.bf16.mxu0 %v8022
        %8389 = vmatpush1.bf16.msra.mxu0 %v8021
        %8390 = vmatprep.subr.bf16.mxu0 %v8028
        %8391 = vmatpush1.bf16.msra.mxu0 %v8027
        %8392 = vmatprep.subr.bf16.mxu0 %v8034
        %8393 = vmatpush1.bf16.msra.mxu0 %v8033
        %8394 = vmatprep.subr.bf16.mxu0 %v8040
        %8395 = vmatpush1.bf16.msra.mxu0 %v8039
        %8396 = vmatprep.subr.bf16.mxu0 %v8046
        %8397 = vmatpush1.bf16.msra.mxu0 %v8045
        %8398 = vmatprep.subr.bf16.mxu0 %v8052
        %8399 = vmatpush1.bf16.msra.mxu0 %v8051
        %8400 = vmatprep.subr.bf16.mxu0 0
        %8401 = vmatpush1.bf16.msra.mxu0 0
        %8402 = vmatprep.subr.bf16.mxu0 0
        %8403 = vmatpush1.bf16.msra.mxu0 0
        %8404 = vmatprep.mubr.bf16.mxu0 %v8238
        %8405 = vmatmul.mubr.bf16.gmra.mrb[0].mxu0 %v7261
        %v8406 = vpop.f32.mrb[0].mxu0
        %v8407 = vadd.f32 %v8296, %v8406
        %v8408 = vpop.f32.mrb[0].mxu0
        %v8409 = vadd.f32 %v8298, %v8408
        %v8410 = vpop.f32.mrb[0].mxu0
        %v8411 = vadd.f32 %v8300, %v8410
        %v8412 = vpop.f32.mrb[0].mxu0
        %v8413 = vadd.f32 %v8302, %v8412
        %8414 = vmatprep.mubr.bf16.mxu0 %v8241
        %8415 = vmatmul.mubr.bf16.gmra.mrb[0].mxu0 %v7270
        %v8416 = vpop.f32.mrb[0].mxu0
        %v8417 = vadd.f32 %v8306, %v8416
        %v8418 = vpop.f32.mrb[0].mxu0
        %v8419 = vadd.f32 %v8308, %v8418
        %v8420 = vpop.f32.mrb[0].mxu0
        %v8421 = vadd.f32 %v8310, %v8420
        %v8422 = vpop.f32.mrb[0].mxu0
        %v8423 = vadd.f32 %v8312, %v8422
        %8424 = vmatprep.mubr.bf16.mxu0 %v8244
        %8425 = vmatmul.mubr.bf16.gmra.mrb[0].mxu0 %v7278
        %v8426 = vpop.f32.mrb[0].mxu0
        %v8427 = vadd.f32 %v8316, %v8426
        %v8428 = vpop.f32.mrb[0].mxu0
        %v8429 = vadd.f32 %v8318, %v8428
        %v8430 = vpop.f32.mrb[0].mxu0
        %v8431 = vadd.f32 %v8320, %v8430
        %v8432 = vpop.f32.mrb[0].mxu0
        %v8433 = vadd.f32 %v8322, %v8432
        %8434 = vmatprep.mubr.bf16.mxu0 %v8247
        %8435 = vmatmul.mubr.bf16.gmra.mrb[0].mxu0 %v7286
        %v8436 = vpop.f32.mrb[0].mxu0
        %v8437 = vadd.f32 %v8326, %v8436
        %v8438 = vpop.f32.mrb[0].mxu0
        %v8439 = vadd.f32 %v8328, %v8438
        %v8440 = vpop.f32.mrb[0].mxu0
        %v8441 = vadd.f32 %v8330, %v8440
        %v8442 = vpop.f32.mrb[0].mxu0
        %v8443 = vadd.f32 %v8332, %v8442
        %8444 = vmatprep.mubr.bf16.mxu0 %v8250
        %8445 = vmatmul.mubr.bf16.gmra.mrb[0].mxu0 %v7294
        %v8446 = vpop.f32.mrb[0].mxu0
        %v8447 = vadd.f32 %v8336, %v8446
        %v8448 = vpop.f32.mrb[0].mxu0
        %v8449 = vadd.f32 %v8338, %v8448
        %v8450 = vpop.f32.mrb[0].mxu0
        %v8451 = vadd.f32 %v8340, %v8450
        %v8452 = vpop.f32.mrb[0].mxu0
        %v8453 = vadd.f32 %v8342, %v8452
        %8454 = vmatprep.mubr.bf16.mxu0 %v8253
        %8455 = vmatmul.mubr.bf16.gmra.mrb[0].mxu0 %v7302
        %v8456 = vpop.f32.mrb[0].mxu0
        %v8457 = vadd.f32 %v8346, %v8456
        %v8458 = vpop.f32.mrb[0].mxu0
        %v8459 = vadd.f32 %v8348, %v8458
        %v8460 = vpop.f32.mrb[0].mxu0
        %v8461 = vadd.f32 %v8350, %v8460
        %v8462 = vpop.f32.mrb[0].mxu0
        %v8463 = vadd.f32 %v8352, %v8462
        %8464 = vmatprep.mubr.bf16.mxu0 %v8256
        %8465 = vmatmul.mubr.bf16.gmra.mrb[0].mxu0 %v7310
        %v8466 = vpop.f32.mrb[0].mxu0
        %v8467 = vadd.f32 %v8356, %v8466
        %v8468 = vpop.f32.mrb[0].mxu0
        %v8469 = vadd.f32 %v8358, %v8468
        %v8470 = vpop.f32.mrb[0].mxu0
        %v8471 = vadd.f32 %v8360, %v8470
        %v8472 = vpop.f32.mrb[0].mxu0
        %v8473 = vadd.f32 %v8362, %v8472
        %8474 = vmatprep.mubr.bf16.mxu0 %v8259
        %8475 = vmatmul.mubr.bf16.gmra.mrb[0].mxu0 %v7309
        %v8476 = vpop.f32.mrb[0].mxu0
        %v8477 = vadd.f32 %v8366, %v8476
        %v8478 = vpop.f32.mrb[0].mxu0
        %v8479 = vadd.f32 %v8368, %v8478
        %v8480 = vpop.f32.mrb[0].mxu0
        %v8481 = vpop.f32.mrb[0].mxu0
        %8482 = vdwg.mxu0
        %8483 = vmatprep.subr.bf16.mxu0 %v7880
        %8484 = vmatpush1.bf16.msra.mxu0 %v7879
        %8485 = vmatprep.subr.bf16.mxu0 %v7886
        %8486 = vmatpush1.bf16.msra.mxu0 %v7885
        %8487 = vmatprep.subr.bf16.mxu0 %v7892
        %8488 = vmatpush1.bf16.msra.mxu0 %v7891
        %8489 = vmatprep.subr.bf16.mxu0 %v7898
        %8490 = vmatpush1.bf16.msra.mxu0 %v7897
        %8491 = vmatprep.subr.bf16.mxu0 %v7904
        %8492 = vmatpush1.bf16.msra.mxu0 %v7903
        %8493 = vmatprep.subr.bf16.mxu0 %v7910
        %8494 = vmatpush1.bf16.msra.mxu0 %v7909
        %8495 = vmatprep.subr.bf16.mxu0 %v7916
        %8496 = vmatpush1.bf16.msra.mxu0 %v7915
        %8497 = vmatprep.subr.bf16.mxu0 %v7922
        %8498 = vmatpush1.bf16.msra.mxu0 %v7921
        %8499 = vmatprep.subr.bf16.mxu0 %v7928
        %8500 = vmatpush1.bf16.msra.mxu0 %v7927
        %8501 = vmatprep.subr.bf16.mxu0 %v7934
        %8502 = vmatpush1.bf16.msra.mxu0 %v7933
        %8503 = vmatprep.subr.bf16.mxu0 %v7940
        %8504 = vmatpush1.bf16.msra.mxu0 %v7939
        %8505 = vmatprep.subr.bf16.mxu0 %v7946
        %8506 = vmatpush1.bf16.msra.mxu0 %v7945
        %8507 = vmatprep.subr.bf16.mxu0 %v7952
        %8508 = vmatpush1.bf16.msra.mxu0 %v7951
        %8509 = vmatprep.subr.bf16.mxu0 %v7958
        %8510 = vmatpush1.bf16.msra.mxu0 %v7957
        %8511 = vmatprep.subr.bf16.mxu0 %v7964
        %8512 = vmatpush1.bf16.msra.mxu0 %v7963
        %8513 = vmatprep.subr.bf16.mxu0 %v7970
        %8514 = vmatpush1.bf16.msra.mxu0 %v7969
        %8515 = vmatprep.mubr.bf16.mxu0 %v7258
        %8516 = vmatmul.mubr.bf16.gmra.mrb[0].mxu0 %v7255
        %v8517 = vpop.f32.mrb[0].mxu0
        %v8518 = vadd.f32 0.0, %v8517
        %v8519 = vpop.f32.mrb[0].mxu0
        %v8520 = vadd.f32 0.0, %v8519
        %v8521 = vpop.f32.mrb[0].mxu0
        %v8522 = vadd.f32 0.0, %v8521
        %v8523 = vpop.f32.mrb[0].mxu0
        %v8524 = vadd.f32 0.0, %v8523
        %8525 = vmatprep.mubr.bf16.mxu0 %v7268
        %8526 = vmatmul.mubr.bf16.gmra.mrb[0].mxu0 %v7266
        %v8527 = vpop.f32.mrb[0].mxu0
        %v8528 = vadd.f32 0.0, %v8527
        %v8529 = vpop.f32.mrb[0].mxu0
        %v8530 = vadd.f32 0.0, %v8529
        %v8531 = vpop.f32.mrb[0].mxu0
        %v8532 = vadd.f32 0.0, %v8531
        %v8533 = vpop.f32.mrb[0].mxu0
        %v8534 = vadd.f32 0.0, %v8533
        %8535 = vmatprep.mubr.bf16.mxu0 %v7276
        %8536 = vmatmul.mubr.bf16.gmra.mrb[0].mxu0 %v7274
        %v8537 = vpop.f32.mrb[0].mxu0
        %v8538 = vadd.f32 0.0, %v8537
        %v8539 = vpop.f32.mrb[0].mxu0
        %v8540 = vadd.f32 0.0, %v8539
        %v8541 = vpop.f32.mrb[0].mxu0
        %v8542 = vadd.f32 0.0, %v8541
        %v8543 = vpop.f32.mrb[0].mxu0
        %v8544 = vadd.f32 0.0, %v8543
        %8545 = vmatprep.mubr.bf16.mxu0 %v7284
        %8546 = vmatmul.mubr.bf16.gmra.mrb[0].mxu0 %v7282
        %v8547 = vpop.f32.mrb[0].mxu0
        %v8548 = vadd.f32 0.0, %v8547
        %v8549 = vpop.f32.mrb[0].mxu0
        %v8550 = vadd.f32 0.0, %v8549
        %v8551 = vpop.f32.mrb[0].mxu0
        %v8552 = vadd.f32 0.0, %v8551
        %v8553 = vpop.f32.mrb[0].mxu0
        %v8554 = vadd.f32 0.0, %v8553
        %8555 = vmatprep.mubr.bf16.mxu0 %v7292
        %8556 = vmatmul.mubr.bf16.gmra.mrb[0].mxu0 %v7290
        %v8557 = vpop.f32.mrb[0].mxu0
        %v8558 = vadd.f32 0.0, %v8557
        %v8559 = vpop.f32.mrb[0].mxu0
        %v8560 = vadd.f32 0.0, %v8559
        %v8561 = vpop.f32.mrb[0].mxu0
        %v8562 = vadd.f32 0.0, %v8561
        %v8563 = vpop.f32.mrb[0].mxu0
        %v8564 = vadd.f32 0.0, %v8563
        %8565 = vmatprep.mubr.bf16.mxu0 %v7300
        %8566 = vmatmul.mubr.bf16.gmra.mrb[0].mxu0 %v7298
        %v8567 = vpop.f32.mrb[0].mxu0
        %v8568 = vadd.f32 0.0, %v8567
        %v8569 = vpop.f32.mrb[0].mxu0
        %v8570 = vadd.f32 0.0, %v8569
        %v8571 = vpop.f32.mrb[0].mxu0
        %v8572 = vadd.f32 0.0, %v8571
        %v8573 = vpop.f32.mrb[0].mxu0
        %v8574 = vadd.f32 0.0, %v8573
        %8575 = vmatprep.mubr.bf16.mxu0 %v7308
        %8576 = vmatmul.mubr.bf16.gmra.mrb[0].mxu0 %v7306
        %v8577 = vpop.f32.mrb[0].mxu0
        %v8578 = vadd.f32 0.0, %v8577
        %v8579 = vpop.f32.mrb[0].mxu0
        %v8580 = vadd.f32 0.0, %v8579
        %v8581 = vpop.f32.mrb[0].mxu0
        %v8582 = vadd.f32 0.0, %v8581
        %v8583 = vpop.f32.mrb[0].mxu0
        %v8584 = vadd.f32 0.0, %v8583
        %8585 = vmatprep.mubr.bf16.mxu0 %v7307
        %8586 = vmatmul.mubr.bf16.gmra.mrb[0].mxu0 %v7305
        %v8587 = vpop.f32.mrb[0].mxu0
        %v8588 = vadd.f32 0.0, %v8587
        %v8589 = vpop.f32.mrb[0].mxu0
        %v8590 = vadd.f32 0.0, %v8589
        %v8591 = vpop.f32.mrb[0].mxu0
        %v8592 = vpop.f32.mrb[0].mxu0
        %8593 = vdwg.mxu0
        %8594 = vmatprep.subr.bf16.mxu0 %v7976
        %8595 = vmatpush1.bf16.msra.mxu0 %v7975
        %8596 = vmatprep.subr.bf16.mxu0 %v7982
        %8597 = vmatpush1.bf16.msra.mxu0 %v7981
        %8598 = vmatprep.subr.bf16.mxu0 %v7988
        %8599 = vmatpush1.bf16.msra.mxu0 %v7987
        %8600 = vmatprep.subr.bf16.mxu0 %v7994
        %8601 = vmatpush1.bf16.msra.mxu0 %v7993
        %8602 = vmatprep.subr.bf16.mxu0 %v8000
        %8603 = vmatpush1.bf16.msra.mxu0 %v7999
        %8604 = vmatprep.subr.bf16.mxu0 %v8006
        %8605 = vmatpush1.bf16.msra.mxu0 %v8005
        %8606 = vmatprep.subr.bf16.mxu0 %v8012
        %8607 = vmatpush1.bf16.msra.mxu0 %v8011
        %8608 = vmatprep.subr.bf16.mxu0 %v8018
        %8609 = vmatpush1.bf16.msra.mxu0 %v8017
        %8610 = vmatprep.subr.bf16.mxu0 %v8024
        %8611 = vmatpush1.bf16.msra.mxu0 %v8023
        %8612 = vmatprep.subr.bf16.mxu0 %v8030
        %8613 = vmatpush1.bf16.msra.mxu0 %v8029
        %8614 = vmatprep.subr.bf16.mxu0 %v8036
        %8615 = vmatpush1.bf16.msra.mxu0 %v8035
        %8616 = vmatprep.subr.bf16.mxu0 %v8042
        %8617 = vmatpush1.bf16.msra.mxu0 %v8041
        %8618 = vmatprep.subr.bf16.mxu0 %v8048
        %8619 = vmatpush1.bf16.msra.mxu0 %v8047
        %8620 = vmatprep.subr.bf16.mxu0 %v8054
        %8621 = vmatpush1.bf16.msra.mxu0 %v8053
        %8622 = vmatprep.subr.bf16.mxu0 0
        %8623 = vmatpush1.bf16.msra.mxu0 0
        %8624 = vmatprep.subr.bf16.mxu0 0
        %8625 = vmatpush1.bf16.msra.mxu0 0
        %8626 = vmatprep.mubr.bf16.mxu0 %v8238
        %8627 = vmatmul.mubr.bf16.gmra.mrb[0].mxu0 %v7261
        %v8628 = vpop.f32.mrb[0].mxu0
        %v8629 = vadd.f32 %v8518, %v8628
        %v8630 = vpop.f32.mrb[0].mxu0
        %v8631 = vadd.f32 %v8520, %v8630
        %v8632 = vpop.f32.mrb[0].mxu0
        %v8633 = vadd.f32 %v8522, %v8632
        %v8634 = vpop.f32.mrb[0].mxu0
        %v8635 = vadd.f32 %v8524, %v8634
        %8636 = vmatprep.mubr.bf16.mxu0 %v8241
        %8637 = vmatmul.mubr.bf16.gmra.mrb[0].mxu0 %v7270
        %v8638 = vpop.f32.mrb[0].mxu0
        %v8639 = vadd.f32 %v8528, %v8638
        %v8640 = vpop.f32.mrb[0].mxu0
        %v8641 = vadd.f32 %v8530, %v8640
        %v8642 = vpop.f32.mrb[0].mxu0
        %v8643 = vadd.f32 %v8532, %v8642
        %v8644 = vpop.f32.mrb[0].mxu0
        %v8645 = vadd.f32 %v8534, %v8644
        %8646 = vmatprep.mubr.bf16.mxu0 %v8244
        %8647 = vmatmul.mubr.bf16.gmra.mrb[0].mxu0 %v7278
        %v8648 = vpop.f32.mrb[0].mxu0
        %v8649 = vadd.f32 %v8538, %v8648
        %v8650 = vpop.f32.mrb[0].mxu0
        %v8651 = vadd.f32 %v8540, %v8650
        %v8652 = vpop.f32.mrb[0].mxu0
        %v8653 = vadd.f32 %v8542, %v8652
        %v8654 = vpop.f32.mrb[0].mxu0
        %v8655 = vadd.f32 %v8544, %v8654
        %8656 = vmatprep.mubr.bf16.mxu0 %v8247
        %8657 = vmatmul.mubr.bf16.gmra.mrb[0].mxu0 %v7286
        %v8658 = vpop.f32.mrb[0].mxu0
        %v8659 = vadd.f32 %v8548, %v8658
        %v8660 = vpop.f32.mrb[0].mxu0
        %v8661 = vadd.f32 %v8550, %v8660
        %v8662 = vpop.f32.mrb[0].mxu0
        %v8663 = vadd.f32 %v8552, %v8662
        %v8664 = vpop.f32.mrb[0].mxu0
        %v8665 = vadd.f32 %v8554, %v8664
        %8666 = vmatprep.mubr.bf16.mxu0 %v8250
        %8667 = vmatmul.mubr.bf16.gmra.mrb[0].mxu0 %v7294
        %v8668 = vpop.f32.mrb[0].mxu0
        %v8669 = vadd.f32 %v8558, %v8668
        %v8670 = vpop.f32.mrb[0].mxu0
        %v8671 = vadd.f32 %v8560, %v8670
        %v8672 = vpop.f32.mrb[0].mxu0
        %v8673 = vadd.f32 %v8562, %v8672
        %v8674 = vpop.f32.mrb[0].mxu0
        %v8675 = vadd.f32 %v8564, %v8674
        %8676 = vmatprep.mubr.bf16.mxu0 %v8253
        %8677 = vmatmul.mubr.bf16.gmra.mrb[0].mxu0 %v7302
        %v8678 = vpop.f32.mrb[0].mxu0
        %v8679 = vadd.f32 %v8568, %v8678
        %v8680 = vpop.f32.mrb[0].mxu0
        %v8681 = vadd.f32 %v8570, %v8680
        %v8682 = vpop.f32.mrb[0].mxu0
        %v8683 = vadd.f32 %v8572, %v8682
        %v8684 = vpop.f32.mrb[0].mxu0
        %v8685 = vadd.f32 %v8574, %v8684
        %8686 = vmatprep.mubr.bf16.mxu0 %v8256
        %8687 = vmatmul.mubr.bf16.gmra.mrb[0].mxu0 %v7310
        %v8688 = vpop.f32.mrb[0].mxu0
        %v8689 = vadd.f32 %v8578, %v8688
        %v8690 = vpop.f32.mrb[0].mxu0
        %v8691 = vadd.f32 %v8580, %v8690
        %v8692 = vpop.f32.mrb[0].mxu0
        %v8693 = vadd.f32 %v8582, %v8692
        %v8694 = vpop.f32.mrb[0].mxu0
        %v8695 = vadd.f32 %v8584, %v8694
        %8696 = vmatprep.mubr.bf16.mxu0 %v8259
        %8697 = vmatmul.mubr.bf16.gmra.mrb[0].mxu0 %v7309
        %v8698 = vpop.f32.mrb[0].mxu0
        %v8699 = vadd.f32 %v8588, %v8698
        %v8700 = vpop.f32.mrb[0].mxu0
        %v8701 = vadd.f32 %v8590, %v8700
        %v8702 = vpop.f32.mrb[0].mxu0
        %v8703 = vpop.f32.mrb[0].mxu0
        %8704 = vdwg.mxu0
        %8705 = vmatprep.subr.bf16.mxu0 %v7882
        %8706 = vmatpush1.bf16.msra.mxu0 %v7881
        %8707 = vmatprep.subr.bf16.mxu0 %v7888
        %8708 = vmatpush1.bf16.msra.mxu0 %v7887
        %8709 = vmatprep.subr.bf16.mxu0 %v7894
        %8710 = vmatpush1.bf16.msra.mxu0 %v7893
        %8711 = vmatprep.subr.bf16.mxu0 %v7900
        %8712 = vmatpush1.bf16.msra.mxu0 %v7899
        %8713 = vmatprep.subr.bf16.mxu0 %v7906
        %8714 = vmatpush1.bf16.msra.mxu0 %v7905
        %8715 = vmatprep.subr.bf16.mxu0 %v7912
        %8716 = vmatpush1.bf16.msra.mxu0 %v7911
        %8717 = vmatprep.subr.bf16.mxu0 %v7918
        %8718 = vmatpush1.bf16.msra.mxu0 %v7917
        %8719 = vmatprep.subr.bf16.mxu0 %v7924
        %8720 = vmatpush1.bf16.msra.mxu0 %v7923
        %8721 = vmatprep.subr.bf16.mxu0 %v7930
        %8722 = vmatpush1.bf16.msra.mxu0 %v7929
        %8723 = vmatprep.subr.bf16.mxu0 %v7936
        %8724 = vmatpush1.bf16.msra.mxu0 %v7935
        %8725 = vmatprep.subr.bf16.mxu0 %v7942
        %8726 = vmatpush1.bf16.msra.mxu0 %v7941
        %8727 = vmatprep.subr.bf16.mxu0 %v7948
        %8728 = vmatpush1.bf16.msra.mxu0 %v7947
        %8729 = vmatprep.subr.bf16.mxu0 %v7954
        %8730 = vmatpush1.bf16.msra.mxu0 %v7953
        %8731 = vmatprep.subr.bf16.mxu0 %v7960
        %8732 = vmatpush1.bf16.msra.mxu0 %v7959
        %8733 = vmatprep.subr.bf16.mxu0 %v7966
        %8734 = vmatpush1.bf16.msra.mxu0 %v7965
        %8735 = vmatprep.subr.bf16.mxu0 %v7972
        %8736 = vmatpush1.bf16.msra.mxu0 %v7971
        %8737 = vmatprep.mubr.bf16.mxu0 %v7258
        %8738 = vmatmul.mubr.bf16.gmra.mrb[0].mxu0 %v7255
        %v8739 = vpop.f32.mrb[0].mxu0
        %v8740 = vadd.f32 0.0, %v8739
        %v8741 = vpop.f32.mrb[0].mxu0
        %v8742 = vadd.f32 0.0, %v8741
        %v8743 = vpop.f32.mrb[0].mxu0
        %v8744 = vadd.f32 0.0, %v8743
        %v8745 = vpop.f32.mrb[0].mxu0
        %v8746 = vadd.f32 0.0, %v8745
        %8747 = vmatprep.mubr.bf16.mxu0 %v7268
        %8748 = vmatmul.mubr.bf16.gmra.mrb[0].mxu0 %v7266
        %v8749 = vpop.f32.mrb[0].mxu0
        %v8750 = vadd.f32 0.0, %v8749
        %v8751 = vpop.f32.mrb[0].mxu0
        %v8752 = vadd.f32 0.0, %v8751
        %v8753 = vpop.f32.mrb[0].mxu0
        %v8754 = vadd.f32 0.0, %v8753
        %v8755 = vpop.f32.mrb[0].mxu0
        %v8756 = vadd.f32 0.0, %v8755
        %8757 = vmatprep.mubr.bf16.mxu0 %v7276
        %8758 = vmatmul.mubr.bf16.gmra.mrb[0].mxu0 %v7274
        %v8759 = vpop.f32.mrb[0].mxu0
        %v8760 = vadd.f32 0.0, %v8759
        %v8761 = vpop.f32.mrb[0].mxu0
        %v8762 = vadd.f32 0.0, %v8761
        %v8763 = vpop.f32.mrb[0].mxu0
        %v8764 = vadd.f32 0.0, %v8763
        %v8765 = vpop.f32.mrb[0].mxu0
        %v8766 = vadd.f32 0.0, %v8765
        %8767 = vmatprep.mubr.bf16.mxu0 %v7284
        %8768 = vmatmul.mubr.bf16.gmra.mrb[0].mxu0 %v7282
        %v8769 = vpop.f32.mrb[0].mxu0
        %v8770 = vadd.f32 0.0, %v8769
        %v8771 = vpop.f32.mrb[0].mxu0
        %v8772 = vadd.f32 0.0, %v8771
        %v8773 = vpop.f32.mrb[0].mxu0
        %v8774 = vadd.f32 0.0, %v8773
        %v8775 = vpop.f32.mrb[0].mxu0
        %v8776 = vadd.f32 0.0, %v8775
        %8777 = vmatprep.mubr.bf16.mxu0 %v7292
        %8778 = vmatmul.mubr.bf16.gmra.mrb[0].mxu0 %v7290
        %v8779 = vpop.f32.mrb[0].mxu0
        %v8780 = vadd.f32 0.0, %v8779
        %v8781 = vpop.f32.mrb[0].mxu0
        %v8782 = vadd.f32 0.0, %v8781
        %v8783 = vpop.f32.mrb[0].mxu0
        %v8784 = vadd.f32 0.0, %v8783
        %v8785 = vpop.f32.mrb[0].mxu0
        %v8786 = vadd.f32 0.0, %v8785
        %8787 = vmatprep.mubr.bf16.mxu0 %v7300
        %8788 = vmatmul.mubr.bf16.gmra.mrb[0].mxu0 %v7298
        %v8789 = vpop.f32.mrb[0].mxu0
        %v8790 = vadd.f32 0.0, %v8789
        %v8791 = vpop.f32.mrb[0].mxu0
        %v8792 = vadd.f32 0.0, %v8791
        %v8793 = vpop.f32.mrb[0].mxu0
        %v8794 = vadd.f32 0.0, %v8793
        %v8795 = vpop.f32.mrb[0].mxu0
        %v8796 = vadd.f32 0.0, %v8795
        %8797 = vmatprep.mubr.bf16.mxu0 %v7308
        %8798 = vmatmul.mubr.bf16.gmra.mrb[0].mxu0 %v7306
        %v8799 = vpop.f32.mrb[0].mxu0
        %v8800 = vadd.f32 0.0, %v8799
        %v8801 = vpop.f32.mrb[0].mxu0
        %v8802 = vadd.f32 0.0, %v8801
        %v8803 = vpop.f32.mrb[0].mxu0
        %v8804 = vadd.f32 0.0, %v8803
        %v8805 = vpop.f32.mrb[0].mxu0
        %v8806 = vadd.f32 0.0, %v8805
        %8807 = vmatprep.mubr.bf16.mxu0 %v7307
        %8808 = vmatmul.mubr.bf16.gmra.mrb[0].mxu0 %v7305
        %v8809 = vpop.f32.mrb[0].mxu0
        %v8810 = vadd.f32 0.0, %v8809
        %v8811 = vpop.f32.mrb[0].mxu0
        %v8812 = vadd.f32 0.0, %v8811
        %v8813 = vpop.f32.mrb[0].mxu0
        %v8814 = vpop.f32.mrb[0].mxu0
        %8815 = vdwg.mxu0
        %8816 = vmatprep.subr.bf16.mxu0 %v7978
        %8817 = vmatpush1.bf16.msra.mxu0 %v7977
        %8818 = vmatprep.subr.bf16.mxu0 %v7984
        %8819 = vmatpush1.bf16.msra.mxu0 %v7983
        %8820 = vmatprep.subr.bf16.mxu0 %v7990
        %8821 = vmatpush1.bf16.msra.mxu0 %v7989
        %8822 = vmatprep.subr.bf16.mxu0 %v7996
        %8823 = vmatpush1.bf16.msra.mxu0 %v7995
        %8824 = vmatprep.subr.bf16.mxu0 %v8002
        %8825 = vmatpush1.bf16.msra.mxu0 %v8001
        %8826 = vmatprep.subr.bf16.mxu0 %v8008
        %8827 = vmatpush1.bf16.msra.mxu0 %v8007
        %8828 = vmatprep.subr.bf16.mxu0 %v8014
        %8829 = vmatpush1.bf16.msra.mxu0 %v8013
        %8830 = vmatprep.subr.bf16.mxu0 %v8020
        %8831 = vmatpush1.bf16.msra.mxu0 %v8019
        %8832 = vmatprep.subr.bf16.mxu0 %v8026
        %8833 = vmatpush1.bf16.msra.mxu0 %v8025
        %8834 = vmatprep.subr.bf16.mxu0 %v8032
        %8835 = vmatpush1.bf16.msra.mxu0 %v8031
        %8836 = vmatprep.subr.bf16.mxu0 %v8038
        %8837 = vmatpush1.bf16.msra.mxu0 %v8037
        %8838 = vmatprep.subr.bf16.mxu0 %v8044
        %8839 = vmatpush1.bf16.msra.mxu0 %v8043
        %8840 = vmatprep.subr.bf16.mxu0 %v8050
        %8841 = vmatpush1.bf16.msra.mxu0 %v8049
        %8842 = vmatprep.subr.bf16.mxu0 %v8056
        %8843 = vmatpush1.bf16.msra.mxu0 %v8055
        %8844 = vmatprep.subr.bf16.mxu0 0
        %8845 = vmatpush1.bf16.msra.mxu0 0
        %8846 = vmatprep.subr.bf16.mxu0 0
        %8847 = vmatpush1.bf16.msra.mxu0 0
        %8848 = vmatprep.mubr.bf16.mxu0 %v8238
        %8849 = vmatmul.mubr.bf16.gmra.mrb[0].mxu0 %v7261
        %v8850 = vpop.f32.mrb[0].mxu0
        %v8851 = vadd.f32 %v8740, %v8850
        %v8852 = vpop.f32.mrb[0].mxu0
        %v8853 = vadd.f32 %v8742, %v8852
        %v8854 = vpop.f32.mrb[0].mxu0
        %v8855 = vadd.f32 %v8744, %v8854
        %v8856 = vpop.f32.mrb[0].mxu0
        %v8857 = vadd.f32 %v8746, %v8856
        %8858 = vmatprep.mubr.bf16.mxu0 %v8241
        %8859 = vmatmul.mubr.bf16.gmra.mrb[0].mxu0 %v7270
        %v8860 = vpop.f32.mrb[0].mxu0
        %v8861 = vadd.f32 %v8750, %v8860
        %v8862 = vpop.f32.mrb[0].mxu0
        %v8863 = vadd.f32 %v8752, %v8862
        %v8864 = vpop.f32.mrb[0].mxu0
        %v8865 = vadd.f32 %v8754, %v8864
        %v8866 = vpop.f32.mrb[0].mxu0
        %v8867 = vadd.f32 %v8756, %v8866
        %8868 = vmatprep.mubr.bf16.mxu0 %v8244
        %8869 = vmatmul.mubr.bf16.gmra.mrb[0].mxu0 %v7278
        %v8870 = vpop.f32.mrb[0].mxu0
        %v8871 = vadd.f32 %v8760, %v8870
        %v8872 = vpop.f32.mrb[0].mxu0
        %v8873 = vadd.f32 %v8762, %v8872
        %v8874 = vpop.f32.mrb[0].mxu0
        %v8875 = vadd.f32 %v8764, %v8874
        %v8876 = vpop.f32.mrb[0].mxu0
        %v8877 = vadd.f32 %v8766, %v8876
        %8878 = vmatprep.mubr.bf16.mxu0 %v8247
        %8879 = vmatmul.mubr.bf16.gmra.mrb[0].mxu0 %v7286
        %v8880 = vpop.f32.mrb[0].mxu0
        %v8881 = vadd.f32 %v8770, %v8880
        %v8882 = vpop.f32.mrb[0].mxu0
        %v8883 = vadd.f32 %v8772, %v8882
        %v8884 = vpop.f32.mrb[0].mxu0
        %v8885 = vadd.f32 %v8774, %v8884
        %v8886 = vpop.f32.mrb[0].mxu0
        %v8887 = vadd.f32 %v8776, %v8886
        %8888 = vmatprep.mubr.bf16.mxu0 %v8250
        %8889 = vmatmul.mubr.bf16.gmra.mrb[0].mxu0 %v7294
        %v8890 = vpop.f32.mrb[0].mxu0
        %v8891 = vadd.f32 %v8780, %v8890
        %v8892 = vpop.f32.mrb[0].mxu0
        %v8893 = vadd.f32 %v8782, %v8892
        %v8894 = vpop.f32.mrb[0].mxu0
        %v8895 = vadd.f32 %v8784, %v8894
        %v8896 = vpop.f32.mrb[0].mxu0
        %v8897 = vadd.f32 %v8786, %v8896
        %8898 = vmatprep.mubr.bf16.mxu0 %v8253
        %8899 = vmatmul.mubr.bf16.gmra.mrb[0].mxu0 %v7302
        %v8900 = vpop.f32.mrb[0].mxu0
        %v8901 = vadd.f32 %v8790, %v8900
        %v8902 = vpop.f32.mrb[0].mxu0
        %v8903 = vadd.f32 %v8792, %v8902
        %v8904 = vpop.f32.mrb[0].mxu0
        %v8905 = vadd.f32 %v8794, %v8904
        %v8906 = vpop.f32.mrb[0].mxu0
        %v8907 = vadd.f32 %v8796, %v8906
        %8908 = vmatprep.mubr.bf16.mxu0 %v8256
        %8909 = vmatmul.mubr.bf16.gmra.mrb[0].mxu0 %v7310
        %v8910 = vpop.f32.mrb[0].mxu0
        %v8911 = vadd.f32 %v8800, %v8910
        %v8912 = vpop.f32.mrb[0].mxu0
        %v8913 = vadd.f32 %v8802, %v8912
        %v8914 = vpop.f32.mrb[0].mxu0
        %v8915 = vadd.f32 %v8804, %v8914
        %v8916 = vpop.f32.mrb[0].mxu0
        %v8917 = vadd.f32 %v8806, %v8916
        %8918 = vmatprep.mubr.bf16.mxu0 %v8259
        %8919 = vmatmul.mubr.bf16.gmra.mrb[0].mxu0 %v7309
        %v8920 = vpop.f32.mrb[0].mxu0
        %v8921 = vadd.f32 %v8810, %v8920
        %v8922 = vpop.f32.mrb[0].mxu0
        %v8923 = vadd.f32 %v8812, %v8922
        %v8924 = vpop.f32.mrb[0].mxu0
        %v8925 = vpop.f32.mrb[0].mxu0
        %8926 = vdwg.mxu0
        %v8927 = vadd.f32 %v6949, %v8407
        %v8928 = vadd.f32 %v6950, %v8409
        %v8929 = vadd.f32 %v6951, %v8629
        %v8930 = vadd.f32 %v6952, %v8631
        %v8931 = vadd.f32 %v6953, %v8851
        %v8932 = vadd.f32 %v6954, %v8853
        %v8933 = vadd.f32 %v6955, %v8411
        %v8934 = vadd.f32 %v6956, %v8413
        %v8935 = vadd.f32 %v6957, %v8633
        %v8936 = vadd.f32 %v6958, %v8635
        %v8937 = vadd.f32 %v6959, %v8855
        %v8938 = vadd.f32 %v6960, %v8857
        %v8939 = vadd.f32 %v6961, %v8417
        %v8940 = vadd.f32 %v6962, %v8419
        %v8941 = vadd.f32 %v6963, %v8639
        %v8942 = vadd.f32 %v6964, %v8641
        %v8943 = vadd.f32 %v6965, %v8861
        %v8944 = vadd.f32 %v6966, %v8863
        %v8945 = vadd.f32 %v6967, %v8421
        %v8946 = vadd.f32 %v6968, %v8423
        %v8947 = vadd.f32 %v6969, %v8643
        %v8948 = vadd.f32 %v6970, %v8645
        %v8949 = vadd.f32 %v6971, %v8865
        %v8950 = vadd.f32 %v6972, %v8867
        %v8951 = vadd.f32 %v6973, %v8427
        %v8952 = vadd.f32 %v6974, %v8429
        %v8953 = vadd.f32 %v6975, %v8649
        %v8954 = vadd.f32 %v6976, %v8651
        %v8955 = vadd.f32 %v6977, %v8871
        %v8956 = vadd.f32 %v6978, %v8873
        %v8957 = vadd.f32 %v6979, %v8431
        %v8958 = vadd.f32 %v6980, %v8433
        %v8959 = vadd.f32 %v6981, %v8653
        %v8960 = vadd.f32 %v6982, %v8655
        %v8961 = vadd.f32 %v6983, %v8875
        %v8962 = vadd.f32 %v6984, %v8877
        %v8963 = vadd.f32 %v6985, %v8437
        %v8964 = vadd.f32 %v6986, %v8439
        %v8965 = vadd.f32 %v6987, %v8659
        %v8966 = vadd.f32 %v6988, %v8661
        %v8967 = vadd.f32 %v6989, %v8881
        %v8968 = vadd.f32 %v6990, %v8883
        %v8969 = vadd.f32 %v6991, %v8441
        %v8970 = vadd.f32 %v6992, %v8443
        %v8971 = vadd.f32 %v6993, %v8663
        %v8972 = vadd.f32 %v6994, %v8665
        %v8973 = vadd.f32 %v6995, %v8885
        %v8974 = vadd.f32 %v6996, %v8887
        %v8975 = vadd.f32 %v6997, %v8447
        %v8976 = vadd.f32 %v6998, %v8449
        %v8977 = vadd.f32 %v6999, %v8669
        %v8978 = vadd.f32 %v7000, %v8671
        %v8979 = vadd.f32 %v7001, %v8891
        %v8980 = vadd.f32 %v7002, %v8893
        %v8981 = vadd.f32 %v7003, %v8451
        %v8982 = vadd.f32 %v7004, %v8453
        %v8983 = vadd.f32 %v7005, %v8673
        %v8984 = vadd.f32 %v7006, %v8675
        %v8985 = vadd.f32 %v7007, %v8895
        %v8986 = vadd.f32 %v7008, %v8897
        %v8987 = vadd.f32 %v7009, %v8457
        %v8988 = vadd.f32 %v7010, %v8459
        %v8989 = vadd.f32 %v7011, %v8679
        %v8990 = vadd.f32 %v7012, %v8681
        %v8991 = vadd.f32 %v7013, %v8901
        %v8992 = vadd.f32 %v7014, %v8903
        %v8993 = vadd.f32 %v7015, %v8461
        %v8994 = vadd.f32 %v7016, %v8463
        %v8995 = vadd.f32 %v7017, %v8683
        %v8996 = vadd.f32 %v7018, %v8685
        %v8997 = vadd.f32 %v7019, %v8905
        %v8998 = vadd.f32 %v7020, %v8907
        %v8999 = vadd.f32 %v7021, %v8467
        %v9000 = vadd.f32 %v7022, %v8469
        %v9001 = vadd.f32 %v7023, %v8689
        %v9002 = vadd.f32 %v7024, %v8691
        %v9003 = vadd.f32 %v7025, %v8911
        %v9004 = vadd.f32 %v7026, %v8913
        %v9005 = vadd.f32 %v7027, %v8471
        %v9006 = vadd.f32 %v7028, %v8473
        %v9007 = vadd.f32 %v7029, %v8693
        %v9008 = vadd.f32 %v7030, %v8695
        %v9009 = vadd.f32 %v7031, %v8915
        %v9010 = vadd.f32 %v7032, %v8917
        %v9011 = vadd.f32 %v7033, %v8477
        %v9012 = vadd.f32 %v7034, %v8479
        %v9013 = vadd.f32 %v7035, %v8699
        %v9014 = vadd.f32 %v7036, %v8701
        %v9015 = vadd.f32 %v7037, %v8921
        %v9016 = vadd.f32 %v7038, %v8923
        %v9017 = vmax.f32 %v8927, 0.0
        %v9018 = vmax.f32 %v8928, 0.0
        %v9019 = vmax.f32 %v8929, 0.0
        %v9020 = vmax.f32 %v8930, 0.0
        %v9021 = vmax.f32 %v8931, 0.0
        %v9022 = vmax.f32 %v8932, 0.0
        %v9023 = vmax.f32 %v8933, 0.0
        %v9024 = vmax.f32 %v8934, 0.0
        %v9025 = vmax.f32 %v8935, 0.0
        %v9026 = vmax.f32 %v8936, 0.0
        %v9027 = vmax.f32 %v8937, 0.0
        %v9028 = vmax.f32 %v8938, 0.0
        %v9029 = vmax.f32 %v8939, 0.0
        %v9030 = vmax.f32 %v8940, 0.0
        %v9031 = vmax.f32 %v8941, 0.0
        %v9032 = vmax.f32 %v8942, 0.0
        %v9033 = vmax.f32 %v8943, 0.0
        %v9034 = vmax.f32 %v8944, 0.0
        %v9035 = vmax.f32 %v8945, 0.0
        %v9036 = vmax.f32 %v8946, 0.0
        %v9037 = vmax.f32 %v8947, 0.0
        %v9038 = vmax.f32 %v8948, 0.0
        %v9039 = vmax.f32 %v8949, 0.0
        %v9040 = vmax.f32 %v8950, 0.0
        %v9041 = vmax.f32 %v8951, 0.0
        %v9042 = vmax.f32 %v8952, 0.0
        %v9043 = vmax.f32 %v8953, 0.0
        %v9044 = vmax.f32 %v8954, 0.0
        %v9045 = vmax.f32 %v8955, 0.0
        %v9046 = vmax.f32 %v8956, 0.0
        %v9047 = vmax.f32 %v8957, 0.0
        %v9048 = vmax.f32 %v8958, 0.0
        %v9049 = vmax.f32 %v8959, 0.0
        %v9050 = vmax.f32 %v8960, 0.0
        %v9051 = vmax.f32 %v8961, 0.0
        %v9052 = vmax.f32 %v8962, 0.0
        %v9053 = vmax.f32 %v8963, 0.0
        %v9054 = vmax.f32 %v8964, 0.0
        %v9055 = vmax.f32 %v8965, 0.0
        %v9056 = vmax.f32 %v8966, 0.0
        %v9057 = vmax.f32 %v8967, 0.0
        %v9058 = vmax.f32 %v8968, 0.0
        %v9059 = vmax.f32 %v8969, 0.0
        %v9060 = vmax.f32 %v8970, 0.0
        %v9061 = vmax.f32 %v8971, 0.0
        %v9062 = vmax.f32 %v8972, 0.0
        %v9063 = vmax.f32 %v8973, 0.0
        %v9064 = vmax.f32 %v8974, 0.0
        %v9065 = vmax.f32 %v8975, 0.0
        %v9066 = vmax.f32 %v8976, 0.0
        %v9067 = vmax.f32 %v8977, 0.0
        %v9068 = vmax.f32 %v8978, 0.0
        %v9069 = vmax.f32 %v8979, 0.0
        %v9070 = vmax.f32 %v8980, 0.0
        %v9071 = vmax.f32 %v8981, 0.0
        %v9072 = vmax.f32 %v8982, 0.0
        %v9073 = vmax.f32 %v8983, 0.0
        %v9074 = vmax.f32 %v8984, 0.0
        %v9075 = vmax.f32 %v8985, 0.0
        %v9076 = vmax.f32 %v8986, 0.0
        %v9077 = vmax.f32 %v8987, 0.0
        %v9078 = vmax.f32 %v8988, 0.0
        %v9079 = vmax.f32 %v8989, 0.0
        %v9080 = vmax.f32 %v8990, 0.0
        %v9081 = vmax.f32 %v8991, 0.0
        %v9082 = vmax.f32 %v8992, 0.0
        %v9083 = vmax.f32 %v8993, 0.0
        %v9084 = vmax.f32 %v8994, 0.0
        %v9085 = vmax.f32 %v8995, 0.0
        %v9086 = vmax.f32 %v8996, 0.0
        %v9087 = vmax.f32 %v8997, 0.0
        %v9088 = vmax.f32 %v8998, 0.0
        %v9089 = vmax.f32 %v8999, 0.0
        %v9090 = vmax.f32 %v9000, 0.0
        %v9091 = vmax.f32 %v9001, 0.0
        %v9092 = vmax.f32 %v9002, 0.0
        %v9093 = vmax.f32 %v9003, 0.0
        %v9094 = vmax.f32 %v9004, 0.0
        %v9095 = vmax.f32 %v9005, 0.0
        %v9096 = vmax.f32 %v9006, 0.0
        %v9097 = vmax.f32 %v9007, 0.0
        %v9098 = vmax.f32 %v9008, 0.0
        %v9099 = vmax.f32 %v9009, 0.0
        %v9100 = vmax.f32 %v9010, 0.0
        %v9101 = vmax.f32 %v9011, 0.0
        %v9102 = vmax.f32 %v9012, 0.0
        %v9103 = vmax.f32 %v9013, 0.0
        %v9104 = vmax.f32 %v9014, 0.0
        %v9105 = vmax.f32 %v9015, 0.0
        %v9106 = vmax.f32 %v9016, 0.0
        %v9107 = vpack.c.bf16 %v9023, %v9017
        %v9108 = vpack.c.bf16 %v9024, %v9018
        %v9109 = vpack.c.bf16 %v9025, %v9019
        %v9110 = vpack.c.bf16 %v9026, %v9020
        %v9111 = vpack.c.bf16 %v9027, %v9021
        %v9112 = vpack.c.bf16 %v9028, %v9022
        %v9113 = vpack.c.bf16 %v9035, %v9029
        %v9114 = vpack.c.bf16 %v9036, %v9030
        %v9115 = vpack.c.bf16 %v9037, %v9031
        %v9116 = vpack.c.bf16 %v9038, %v9032
        %v9117 = vpack.c.bf16 %v9039, %v9033
        %v9118 = vpack.c.bf16 %v9040, %v9034
        %v9119 = vpack.c.bf16 %v9047, %v9041
        %v9120 = vpack.c.bf16 %v9048, %v9042
        %v9121 = vpack.c.bf16 %v9049, %v9043
        %v9122 = vpack.c.bf16 %v9050, %v9044
        %v9123 = vpack.c.bf16 %v9051, %v9045
        %v9124 = vpack.c.bf16 %v9052, %v9046
        %v9125 = vpack.c.bf16 %v9059, %v9053
        %v9126 = vpack.c.bf16 %v9060, %v9054
        %v9127 = vpack.c.bf16 %v9061, %v9055
        %v9128 = vpack.c.bf16 %v9062, %v9056
        %v9129 = vpack.c.bf16 %v9063, %v9057
        %v9130 = vpack.c.bf16 %v9064, %v9058
        %v9131 = vpack.c.bf16 %v9071, %v9065
        %v9132 = vpack.c.bf16 %v9072, %v9066
        %v9133 = vpack.c.bf16 %v9073, %v9067
        %v9134 = vpack.c.bf16 %v9074, %v9068
        %v9135 = vpack.c.bf16 %v9075, %v9069
        %v9136 = vpack.c.bf16 %v9076, %v9070
        %v9137 = vpack.c.bf16 %v9083, %v9077
        %v9138 = vpack.c.bf16 %v9084, %v9078
        %v9139 = vpack.c.bf16 %v9085, %v9079
        %v9140 = vpack.c.bf16 %v9086, %v9080
        %v9141 = vpack.c.bf16 %v9087, %v9081
        %v9142 = vpack.c.bf16 %v9088, %v9082
        %v9143 = vpack.c.bf16 %v9095, %v9089
        %v9144 = vpack.c.bf16 %v9096, %v9090
        %v9145 = vpack.c.bf16 %v9097, %v9091
        %v9146 = vpack.c.bf16 %v9098, %v9092
        %v9147 = vpack.c.bf16 %v9099, %v9093
        %v9148 = vpack.c.bf16 %v9100, %v9094
        %v9149 = vpack.c.bf16 %v9101, %v9101
        %v9150 = vpack.c.bf16 %v9102, %v9102
        %v9151 = vpack.c.bf16 %v9103, %v9103
        %v9152 = vpack.c.bf16 %v9104, %v9104
        %v9153 = vpack.c.bf16 %v9105, %v9105
        %v9154 = vpack.c.bf16 %v9106, %v9106
        %v9155 = vmax.bf16 %v9107, %v9110
        %v9156 = vmax.bf16 %v9108, %v9111
        %v9157 = vmax.bf16 %v9109, %v9112
        %v9158 = vmax.bf16 %v9113, %v9116
        %v9159 = vmax.bf16 %v9114, %v9117
        %v9160 = vmax.bf16 %v9115, %v9118
        %v9161 = vmax.bf16 %v9119, %v9122
        %v9162 = vmax.bf16 %v9120, %v9123
        %v9163 = vmax.bf16 %v9121, %v9124
        %v9164 = vmax.bf16 %v9125, %v9128
        %v9165 = vmax.bf16 %v9126, %v9129
        %v9166 = vmax.bf16 %v9127, %v9130
        %v9167 = vmax.bf16 %v9131, %v9134
        %v9168 = vmax.bf16 %v9132, %v9135
        %v9169 = vmax.bf16 %v9133, %v9136
        %v9170 = vmax.bf16 %v9137, %v9140
        %v9171 = vmax.bf16 %v9138, %v9141
        %v9172 = vmax.bf16 %v9139, %v9142
        %v9173 = vmax.bf16 %v9143, %v9146
        %v9174 = vmax.bf16 %v9144, %v9147
        %v9175 = vmax.bf16 %v9145, %v9148
        %v9176 = vmax.bf16 %v9149, %v9152
        %v9177 = vmax.bf16 %v9150, %v9153
        %v9178 = vmax.bf16 %v9151, %v9154
        %v9180 = vshrl.u32 %v9155, 16
        %v9182 = vshll.u32 %v9155, 16
        %v9184 = vrot.slane %v9182, 1
        %v9185 = vor.u32 %v9180, %v9184
        %v9187 = vshll.u32 %v9158, 16
        %v9189 = vrot.slane %v9187, 1
        %v9190 = vsel %vm2042, %v9185, %v9189
        %v9192 = vshrl.u32 %v9156, 16
        %v9194 = vshll.u32 %v9156, 16
        %v9196 = vrot.slane %v9194, 1
        %v9197 = vor.u32 %v9192, %v9196
        %v9199 = vshll.u32 %v9159, 16
        %v9201 = vrot.slane %v9199, 1
        %v9202 = vsel %vm2042, %v9197, %v9201
        %v9204 = vshrl.u32 %v9157, 16
        %v9206 = vshll.u32 %v9157, 16
        %v9208 = vrot.slane %v9206, 1
        %v9209 = vor.u32 %v9204, %v9208
        %v9211 = vshll.u32 %v9160, 16
        %v9213 = vrot.slane %v9211, 1
        %v9214 = vsel %vm2042, %v9209, %v9213
        %v9215 = vshrl.u32 %v9158, 16
        %v9217 = vor.u32 %v9215, %v9189
        %v9219 = vshll.u32 %v9161, 16
        %v9221 = vrot.slane %v9219, 1
        %v9222 = vsel %vm2042, %v9217, %v9221
        %v9223 = vshrl.u32 %v9159, 16
        %v9225 = vor.u32 %v9223, %v9201
        %v9227 = vshll.u32 %v9162, 16
        %v9229 = vrot.slane %v9227, 1
        %v9230 = vsel %vm2042, %v9225, %v9229
        %v9231 = vshrl.u32 %v9160, 16
        %v9233 = vor.u32 %v9231, %v9213
        %v9235 = vshll.u32 %v9163, 16
        %v9237 = vrot.slane %v9235, 1
        %v9238 = vsel %vm2042, %v9233, %v9237
        %v9239 = vshrl.u32 %v9161, 16
        %v9241 = vor.u32 %v9239, %v9221
        %v9243 = vshll.u32 %v9164, 16
        %v9245 = vrot.slane %v9243, 1
        %v9246 = vsel %vm2042, %v9241, %v9245
        %v9247 = vshrl.u32 %v9162, 16
        %v9249 = vor.u32 %v9247, %v9229
        %v9251 = vshll.u32 %v9165, 16
        %v9253 = vrot.slane %v9251, 1
        %v9254 = vsel %vm2042, %v9249, %v9253
        %v9255 = vshrl.u32 %v9163, 16
        %v9257 = vor.u32 %v9255, %v9237
        %v9259 = vshll.u32 %v9166, 16
        %v9261 = vrot.slane %v9259, 1
        %v9262 = vsel %vm2042, %v9257, %v9261
        %v9263 = vshrl.u32 %v9164, 16
        %v9265 = vor.u32 %v9263, %v9245
        %v9267 = vshll.u32 %v9167, 16
        %v9269 = vrot.slane %v9267, 1
        %v9270 = vsel %vm2042, %v9265, %v9269
        %v9271 = vshrl.u32 %v9165, 16
        %v9273 = vor.u32 %v9271, %v9253
        %v9275 = vshll.u32 %v9168, 16
        %v9277 = vrot.slane %v9275, 1
        %v9278 = vsel %vm2042, %v9273, %v9277
        %v9279 = vshrl.u32 %v9166, 16
        %v9281 = vor.u32 %v9279, %v9261
        %v9283 = vshll.u32 %v9169, 16
        %v9285 = vrot.slane %v9283, 1
        %v9286 = vsel %vm2042, %v9281, %v9285
        %v9287 = vshrl.u32 %v9167, 16
        %v9289 = vor.u32 %v9287, %v9269
        %v9291 = vshll.u32 %v9170, 16
        %v9293 = vrot.slane %v9291, 1
        %v9294 = vsel %vm2042, %v9289, %v9293
        %v9295 = vshrl.u32 %v9168, 16
        %v9297 = vor.u32 %v9295, %v9277
        %v9299 = vshll.u32 %v9171, 16
        %v9301 = vrot.slane %v9299, 1
        %v9302 = vsel %vm2042, %v9297, %v9301
        %v9303 = vshrl.u32 %v9169, 16
        %v9305 = vor.u32 %v9303, %v9285
        %v9307 = vshll.u32 %v9172, 16
        %v9309 = vrot.slane %v9307, 1
        %v9310 = vsel %vm2042, %v9305, %v9309
        %v9311 = vshrl.u32 %v9170, 16
        %v9313 = vor.u32 %v9311, %v9293
        %v9315 = vshll.u32 %v9173, 16
        %v9317 = vrot.slane %v9315, 1
        %v9318 = vsel %vm2042, %v9313, %v9317
        %v9319 = vshrl.u32 %v9171, 16
        %v9321 = vor.u32 %v9319, %v9301
        %v9323 = vshll.u32 %v9174, 16
        %v9325 = vrot.slane %v9323, 1
        %v9326 = vsel %vm2042, %v9321, %v9325
        %v9327 = vshrl.u32 %v9172, 16
        %v9329 = vor.u32 %v9327, %v9309
        %v9331 = vshll.u32 %v9175, 16
        %v9333 = vrot.slane %v9331, 1
        %v9334 = vsel %vm2042, %v9329, %v9333
        %v9335 = vshrl.u32 %v9173, 16
        %v9337 = vor.u32 %v9335, %v9317
        %v9339 = vshll.u32 %v9176, 16
        %v9341 = vrot.slane %v9339, 1
        %v9342 = vsel %vm2042, %v9337, %v9341
        %v9343 = vshrl.u32 %v9174, 16
        %v9345 = vor.u32 %v9343, %v9325
        %v9347 = vshll.u32 %v9177, 16
        %v9349 = vrot.slane %v9347, 1
        %v9350 = vsel %vm2042, %v9345, %v9349
        %v9351 = vshrl.u32 %v9175, 16
        %v9353 = vor.u32 %v9351, %v9333
        %v9355 = vshll.u32 %v9178, 16
        %v9357 = vrot.slane %v9355, 1
        %v9358 = vsel %vm2042, %v9353, %v9357
        %v9359 = vshrl.u32 %v9176, 16
        %v9361 = vor.u32 %v9359, %v9341
        %v9362 = vshrl.u32 %v9177, 16
        %v9364 = vor.u32 %v9362, %v9349
        %v9365 = vshrl.u32 %v9178, 16
        %v9367 = vor.u32 %v9365, %v9357
        %v9392 = vmax.bf16 %v9155, %v9190
        %v9393 = vmax.bf16 %v9156, %v9202
        %v9394 = vmax.bf16 %v9157, %v9214
        %v9395 = vmax.bf16 %v9158, %v9222
        %v9396 = vmax.bf16 %v9159, %v9230
        %v9397 = vmax.bf16 %v9160, %v9238
        %v9398 = vmax.bf16 %v9161, %v9246
        %v9399 = vmax.bf16 %v9162, %v9254
        %v9400 = vmax.bf16 %v9163, %v9262
        %v9401 = vmax.bf16 %v9164, %v9270
        %v9402 = vmax.bf16 %v9165, %v9278
        %v9403 = vmax.bf16 %v9166, %v9286
        %v9404 = vmax.bf16 %v9167, %v9294
        %v9405 = vmax.bf16 %v9168, %v9302
        %v9406 = vmax.bf16 %v9169, %v9310
        %v9407 = vmax.bf16 %v9170, %v9318
        %v9408 = vmax.bf16 %v9171, %v9326
        %v9409 = vmax.bf16 %v9172, %v9334
        %v9410 = vmax.bf16 %v9173, %v9342
        %v9411 = vmax.bf16 %v9174, %v9350
        %v9412 = vmax.bf16 %v9175, %v9358
        %v9413 = vmax.bf16 %v9176, %v9361
        %v9414 = vmax.bf16 %v9177, %v9364
        %v9415 = vmax.bf16 %v9178, %v9367
        %v9416 = vld [vmem:[%s6] sm:$0xf]
        %v9417 = vld [vmem:[%s6 + $0x4] sm:$0xf]
        %v9418 = vld [vmem:[%s6 + $0x8] sm:$0xf]
        %v9419 = vld [vmem:[%s6 + $0xc] sm:$0xf]
        %v9420 = vld [vmem:[%s6 + $0x10] sm:$0xf]
        %v9421 = vld [vmem:[%s6 + $0x14] sm:$0xf]
        %v9428 = vunpack.c.l.b16 %v9416
        %v9429 = vunpack.c.l.b16 %v9417
        %v9430 = vunpack.c.l.b16 %v9418
        %v9431 = vunpack.c.l.b16 %v9419
        %v9432 = vunpack.c.l.b16 %v9420
        %v9433 = vunpack.c.l.b16 %v9421
        %v9434 = vpack.c.b16 %v9429, %v9428
        %v9435 = vpack.c.b16 %v9431, %v9430
        %v9436 = vpack.c.b16 %v9433, %v9432
        %vm9437 = vcmask 957440
        %v9439 = vsel %vm9437, %v9434, 0
        %v9442 = vsel %vm9437, %v9435, 0
        %v9445 = vsel %vm9437, %v9436, 0
        %vm9447 = vcmask 1041408
        %vm9448 = vcmask 1042432
        %v9449 = vsel %vm9447, 4294967295, 65535
        %v9450 = vsel %vm9448, %v9449, 0
        %v9452 = vand.u32 %v9413, %v9450
        %v9455 = vand.u32 %v9414, %v9450
        %v9458 = vand.u32 %v9415, %v9450
        %9460 = vmatprep.subr.bf16.mxu0 %v9393
        %9461 = vmatpush1.bf16.msra.mxu0 %v9392
        %9462 = vmatprep.subr.bf16.mxu0 %v9396
        %9463 = vmatpush1.bf16.msra.mxu0 %v9395
        %9464 = vmatprep.subr.bf16.mxu0 %v9399
        %9465 = vmatpush1.bf16.msra.mxu0 %v9398
        %9466 = vmatprep.subr.bf16.mxu0 %v9402
        %9467 = vmatpush1.bf16.msra.mxu0 %v9401
        %9468 = vmatprep.subr.bf16.mxu0 %v9405
        %9469 = vmatpush1.bf16.msra.mxu0 %v9404
        %9470 = vmatprep.subr.bf16.mxu0 %v9408
        %9471 = vmatpush1.bf16.msra.mxu0 %v9407
        %9472 = vmatprep.subr.bf16.mxu0 %v9411
        %9473 = vmatpush1.bf16.msra.mxu0 %v9410
        %9474 = vmatprep.subr.bf16.mxu0 %v9455
        %9475 = vmatpush1.bf16.msra.mxu0 %v9452
        %9476 = vmatprep.subr.bf16.mxu0 0
        %9477 = vmatpush1.bf16.msra.mxu0 0
        %9478 = vmatprep.subr.bf16.mxu0 0
        %9479 = vmatpush1.bf16.msra.mxu0 0
        %9480 = vmatprep.subr.bf16.mxu0 0
        %9481 = vmatpush1.bf16.msra.mxu0 0
        %9482 = vmatprep.subr.bf16.mxu0 0
        %9483 = vmatpush1.bf16.msra.mxu0 0
        %9484 = vmatprep.subr.bf16.mxu0 0
        %9485 = vmatpush1.bf16.msra.mxu0 0
        %9486 = vmatprep.subr.bf16.mxu0 0
        %9487 = vmatpush1.bf16.msra.mxu0 0
        %9488 = vmatprep.subr.bf16.mxu0 0
        %9489 = vmatpush1.bf16.msra.mxu0 0
        %9490 = vmatprep.subr.bf16.mxu0 0
        %9491 = vmatpush1.bf16.msra.mxu0 0
        %9492 = vmatprep.mubr.bf16.mxu0 0
        %9493 = vmatmul.mubr.bf16.gmra.mrb[0].mxu0 %v9439
        %v9494 = vpop.f32.mrb[0].mxu0
        %v9495 = vadd.f32 0.0, %v9494
        %v9496 = vpop.f32.mrb[0].mxu0
        %v9497 = vadd.f32 0.0, %v9496
        %v9498 = vpop.f32.mrb[0].mxu0
        %v9499 = vadd.f32 0.0, %v9498
        %v9500 = vpop.f32.mrb[0].mxu0
        %v9501 = vadd.f32 0.0, %v9500
        %9502 = vmatprep.mubr.bf16.mxu0 0
        %9503 = vmatmul.mubr.bf16.gmra.mrb[0].mxu0 %v9442
        %v9504 = vpop.f32.mrb[0].mxu0
        %v9505 = vadd.f32 0.0, %v9504
        %v9506 = vpop.f32.mrb[0].mxu0
        %v9507 = vadd.f32 0.0, %v9506
        %v9508 = vpop.f32.mrb[0].mxu0
        %v9509 = vadd.f32 0.0, %v9508
        %v9510 = vpop.f32.mrb[0].mxu0
        %v9511 = vadd.f32 0.0, %v9510
        %9512 = vmatprep.mubr.bf16.mxu0 0
        %9513 = vmatmul.mubr.bf16.gmra.mrb[0].mxu0 %v9445
        %v9514 = vpop.f32.mrb[0].mxu0
        %v9515 = vadd.f32 0.0, %v9514
        %v9516 = vpop.f32.mrb[0].mxu0
        %v9517 = vadd.f32 0.0, %v9516
        %v9518 = vpop.f32.mrb[0].mxu0
        %v9519 = vadd.f32 0.0, %v9518
        %v9520 = vpop.f32.mrb[0].mxu0
        %v9521 = vadd.f32 0.0, %v9520
        %9522 = vdwg.mxu0
        %9523 = vmatprep.subr.bf16.mxu0 0
        %9524 = vmatpush1.bf16.msra.mxu0 %v9394
        %9525 = vmatprep.subr.bf16.mxu0 0
        %9526 = vmatpush1.bf16.msra.mxu0 %v9397
        %9527 = vmatprep.subr.bf16.mxu0 0
        %9528 = vmatpush1.bf16.msra.mxu0 %v9400
        %9529 = vmatprep.subr.bf16.mxu0 0
        %9530 = vmatpush1.bf16.msra.mxu0 %v9403
        %9531 = vmatprep.subr.bf16.mxu0 0
        %9532 = vmatpush1.bf16.msra.mxu0 %v9406
        %9533 = vmatprep.subr.bf16.mxu0 0
        %9534 = vmatpush1.bf16.msra.mxu0 %v9409
        %9535 = vmatprep.subr.bf16.mxu0 0
        %9536 = vmatpush1.bf16.msra.mxu0 %v9412
        %9537 = vmatprep.subr.bf16.mxu0 0
        %9538 = vmatpush1.bf16.msra.mxu0 %v9458
        %9539 = vmatprep.subr.bf16.mxu0 0
        %9540 = vmatpush1.bf16.msra.mxu0 0
        %9541 = vmatprep.subr.bf16.mxu0 0
        %9542 = vmatpush1.bf16.msra.mxu0 0
        %9543 = vmatprep.subr.bf16.mxu0 0
        %9544 = vmatpush1.bf16.msra.mxu0 0
        %9545 = vmatprep.subr.bf16.mxu0 0
        %9546 = vmatpush1.bf16.msra.mxu0 0
        %9547 = vmatprep.subr.bf16.mxu0 0
        %9548 = vmatpush1.bf16.msra.mxu0 0
        %9549 = vmatprep.subr.bf16.mxu0 0
        %9550 = vmatpush1.bf16.msra.mxu0 0
        %9551 = vmatprep.subr.bf16.mxu0 0
        %9552 = vmatpush1.bf16.msra.mxu0 0
        %9553 = vmatprep.subr.bf16.mxu0 0
        %9554 = vmatpush1.bf16.msra.mxu0 0
        %9555 = vmatprep.mubr.bf16.mxu0 0
        %9556 = vmatmul.mubr.bf16.gmra.mrb[0].mxu0 %v9439
        %v9557 = vpop.f32.mrb[0].mxu0
        %v9558 = vadd.f32 0.0, %v9557
        %v9559 = vpop.f32.mrb[0].mxu0
        %v9560 = vpop.f32.mrb[0].mxu0
        %v9561 = vadd.f32 0.0, %v9560
        %v9562 = vpop.f32.mrb[0].mxu0
        %9563 = vmatprep.mubr.bf16.mxu0 0
        %9564 = vmatmul.mubr.bf16.gmra.mrb[0].mxu0 %v9442
        %v9565 = vpop.f32.mrb[0].mxu0
        %v9566 = vadd.f32 0.0, %v9565
        %v9567 = vpop.f32.mrb[0].mxu0
        %v9568 = vpop.f32.mrb[0].mxu0
        %v9569 = vadd.f32 0.0, %v9568
        %v9570 = vpop.f32.mrb[0].mxu0
        %9571 = vmatprep.mubr.bf16.mxu0 0
        %9572 = vmatmul.mubr.bf16.gmra.mrb[0].mxu0 %v9445
        %v9573 = vpop.f32.mrb[0].mxu0
        %v9574 = vadd.f32 0.0, %v9573
        %v9575 = vpop.f32.mrb[0].mxu0
        %v9576 = vpop.f32.mrb[0].mxu0
        %v9577 = vadd.f32 0.0, %v9576
        %v9578 = vpop.f32.mrb[0].mxu0
        %9579 = vdwg.mxu0
        %v9580 = vpack.c.bf16 %v9499, %v9495
        %v9581 = vpack.c.bf16 %v9501, %v9497
        %v9582 = vpack.c.bf16 %v9561, %v9558
        %v9583 = vpack.c.bf16 %v9509, %v9505
        %v9584 = vpack.c.bf16 %v9511, %v9507
        %v9585 = vpack.c.bf16 %v9569, %v9566
        %v9586 = vpack.c.bf16 %v9519, %v9515
        %v9587 = vpack.c.bf16 %v9521, %v9517
        %v9588 = vpack.c.bf16 %v9577, %v9574
        %v9589 = vld [vmem:[%s8] sm:$0x3]
        %v9590 = vld [vmem:[%s7] sm:$0xff]
        %v9591 = vld [vmem:[%s7 + $0x8] sm:$0xff]
        %v9592 = vld [vmem:[%s7 + $0x10] sm:$0xff]
        %v9593 = vld [vmem:[%s7 + $0x18] sm:$0xff]
        %v9594 = vld [vmem:[%s7 + $0x20] sm:$0xff]
        %v9595 = vld [vmem:[%s7 + $0x28] sm:$0xff]
        %v9596 = vld [vmem:[%s7 + $0x30] sm:$0xff]
        %v9597 = vld [vmem:[%s7 + $0x38] sm:$0xff]
        %v9598 = vld [vmem:[%s7 + $0x40] sm:$0xff]
        %v9599 = vld [vmem:[%s7 + $0x48] sm:$0xff]
        %v9600 = vld [vmem:[%s7 + $0x50] sm:$0xff]
        %v9601 = vld [vmem:[%s7 + $0x58] sm:$0xff]
        %v9602 = vld [vmem:[%s7 + $0x60] sm:$0xff]
        %v9603 = vld [vmem:[%s7 + $0x68] sm:$0xff]
        %v9604 = vld [vmem:[%s7 + $0x70] sm:$0xff]
        %v9605 = vld [vmem:[%s7 + $0x78] sm:$0xff]
        %v9606 = vld [vmem:[%s7 + $0x80] sm:$0xff]
        %v9607 = vld [vmem:[%s7 + $0x88] sm:$0xff]
        %v9608 = vld [vmem:[%s7 + $0x90] sm:$0xff]
        %v9609 = vld [vmem:[%s7 + $0x98] sm:$0xff]
        %v9610 = vld [vmem:[%s7 + $0xa0] sm:$0xff]
        %v9611 = vld [vmem:[%s7 + $0xa8] sm:$0xff]
        %v9612 = vld [vmem:[%s7 + $0xb0] sm:$0xff]
        %v9613 = vld [vmem:[%s7 + $0xb8] sm:$0xff]
        %v9614 = vld [vmem:[%s7 + $0xc0] sm:$0xff]
        %v9615 = vld [vmem:[%s7 + $0xc8] sm:$0xff]
        %v9616 = vld [vmem:[%s7 + $0xd0] sm:$0xff]
        %v9617 = vld [vmem:[%s7 + $0xd8] sm:$0xff]
        %v9618 = vld [vmem:[%s7 + $0xe0] sm:$0xff]
        %v9619 = vld [vmem:[%s7 + $0xe8] sm:$0xff]
        %v9620 = vld [vmem:[%s7 + $0xf0] sm:$0xff]
        %v9621 = vld [vmem:[%s7 + $0xf8] sm:$0xff]
        %v9622 = vld [vmem:[%s7 + $0x100] sm:$0xff]
        %v9623 = vld [vmem:[%s7 + $0x108] sm:$0xff]
        %v9624 = vld [vmem:[%s7 + $0x110] sm:$0xff]
        %v9625 = vld [vmem:[%s7 + $0x118] sm:$0xff]
        %v9626 = vld [vmem:[%s7 + $0x120] sm:$0xff]
        %v9627 = vld [vmem:[%s7 + $0x128] sm:$0xff]
        %v9628 = vld [vmem:[%s7 + $0x130] sm:$0xff]
        %v9629 = vld [vmem:[%s7 + $0x138] sm:$0xff]
        %v9630 = vld [vmem:[%s7 + $0x140] sm:$0xff]
        %v9631 = vld [vmem:[%s7 + $0x148] sm:$0xff]
        %v9632 = vld [vmem:[%s7 + $0x150] sm:$0xff]
        %v9633 = vld [vmem:[%s7 + $0x158] sm:$0xff]
        %v9634 = vld [vmem:[%s7 + $0x160] sm:$0xff]
        %v9635 = vld [vmem:[%s7 + $0x168] sm:$0xff]
        %v9636 = vld [vmem:[%s7 + $0x170] sm:$0xff]
        %v9637 = vld [vmem:[%s7 + $0x178] sm:$0xff]
        %v9686 = vunpack.c.l.b16 %v9590
        %v9687 = vunpack.c.h.b16 %v9590
        %v9688 = vunpack.c.l.b16 %v9591
        %v9689 = vunpack.c.h.b16 %v9591
        %v9690 = vunpack.c.l.b16 %v9592
        %v9691 = vunpack.c.h.b16 %v9592
        %v9692 = vunpack.c.l.b16 %v9593
        %v9693 = vunpack.c.h.b16 %v9593
        %v9694 = vunpack.c.l.b16 %v9594
        %v9695 = vunpack.c.h.b16 %v9594
        %v9696 = vunpack.c.l.b16 %v9595
        %v9697 = vunpack.c.h.b16 %v9595
        %v9698 = vunpack.c.l.b16 %v9596
        %v9699 = vunpack.c.h.b16 %v9596
        %v9700 = vunpack.c.l.b16 %v9597
        %v9701 = vunpack.c.h.b16 %v9597
        %v9702 = vunpack.c.l.b16 %v9598
        %v9703 = vunpack.c.h.b16 %v9598
        %v9704 = vunpack.c.l.b16 %v9599
        %v9705 = vunpack.c.h.b16 %v9599
        %v9706 = vunpack.c.l.b16 %v9600
        %v9707 = vunpack.c.h.b16 %v9600
        %v9708 = vunpack.c.l.b16 %v9601
        %v9709 = vunpack.c.h.b16 %v9601
        %v9710 = vunpack.c.l.b16 %v9602
        %v9711 = vunpack.c.h.b16 %v9602
        %v9712 = vunpack.c.l.b16 %v9603
        %v9713 = vunpack.c.h.b16 %v9603
        %v9714 = vunpack.c.l.b16 %v9604
        %v9715 = vunpack.c.h.b16 %v9604
        %v9716 = vunpack.c.l.b16 %v9605
        %v9717 = vunpack.c.h.b16 %v9605
        %v9718 = vunpack.c.l.b16 %v9606
        %v9719 = vunpack.c.h.b16 %v9606
        %v9720 = vunpack.c.l.b16 %v9607
        %v9721 = vunpack.c.h.b16 %v9607
        %v9722 = vunpack.c.l.b16 %v9608
        %v9723 = vunpack.c.h.b16 %v9608
        %v9724 = vunpack.c.l.b16 %v9609
        %v9725 = vunpack.c.h.b16 %v9609
        %v9726 = vunpack.c.l.b16 %v9610
        %v9727 = vunpack.c.h.b16 %v9610
        %v9728 = vunpack.c.l.b16 %v9611
        %v9729 = vunpack.c.h.b16 %v9611
        %v9730 = vunpack.c.l.b16 %v9612
        %v9731 = vunpack.c.h.b16 %v9612
        %v9732 = vunpack.c.l.b16 %v9613
        %v9733 = vunpack.c.h.b16 %v9613
        %v9734 = vunpack.c.l.b16 %v9614
        %v9735 = vunpack.c.h.b16 %v9614
        %v9736 = vunpack.c.l.b16 %v9615
        %v9737 = vunpack.c.h.b16 %v9615
        %v9738 = vunpack.c.l.b16 %v9616
        %v9739 = vunpack.c.h.b16 %v9616
        %v9740 = vunpack.c.l.b16 %v9617
        %v9741 = vunpack.c.h.b16 %v9617
        %v9742 = vunpack.c.l.b16 %v9618
        %v9743 = vunpack.c.h.b16 %v9618
        %v9744 = vunpack.c.l.b16 %v9619
        %v9745 = vunpack.c.h.b16 %v9619
        %v9746 = vunpack.c.l.b16 %v9620
        %v9747 = vunpack.c.h.b16 %v9620
        %v9748 = vunpack.c.l.b16 %v9621
        %v9749 = vunpack.c.h.b16 %v9621
        %v9750 = vunpack.c.l.b16 %v9622
        %v9751 = vunpack.c.h.b16 %v9622
        %v9752 = vunpack.c.l.b16 %v9623
        %v9753 = vunpack.c.h.b16 %v9623
        %v9754 = vunpack.c.l.b16 %v9624
        %v9755 = vunpack.c.h.b16 %v9624
        %v9756 = vunpack.c.l.b16 %v9625
        %v9757 = vunpack.c.h.b16 %v9625
        %v9758 = vunpack.c.l.b16 %v9626
        %v9759 = vunpack.c.h.b16 %v9626
        %v9760 = vunpack.c.l.b16 %v9627
        %v9761 = vunpack.c.h.b16 %v9627
        %v9762 = vunpack.c.l.b16 %v9628
        %v9763 = vunpack.c.h.b16 %v9628
        %v9764 = vunpack.c.l.b16 %v9629
        %v9765 = vunpack.c.h.b16 %v9629
        %v9766 = vunpack.c.l.b16 %v9630
        %v9767 = vunpack.c.h.b16 %v9630
        %v9768 = vunpack.c.l.b16 %v9631
        %v9769 = vunpack.c.h.b16 %v9631
        %v9770 = vunpack.c.l.b16 %v9632
        %v9771 = vunpack.c.h.b16 %v9632
        %v9772 = vunpack.c.l.b16 %v9633
        %v9773 = vunpack.c.h.b16 %v9633
        %v9774 = vunpack.c.l.b16 %v9634
        %v9775 = vunpack.c.h.b16 %v9634
        %v9776 = vunpack.c.l.b16 %v9635
        %v9777 = vunpack.c.h.b16 %v9635
        %v9778 = vunpack.c.l.b16 %v9636
        %v9779 = vunpack.c.h.b16 %v9636
        %v9780 = vunpack.c.l.b16 %v9637
        %v9781 = vunpack.c.h.b16 %v9637
        %v9782 = vpack.c.b16 %v9688, %v9686
        %v9783 = vpack.c.b16 %v9689, %v9687
        %v9784 = vpack.c.b16 %v9692, %v9690
        %v9785 = vpack.c.b16 %v9693, %v9691
        %v9786 = vpack.c.b16 %v9696, %v9694
        %v9787 = vpack.c.b16 %v9697, %v9695
        %v9788 = vpack.c.b16 %v9700, %v9698
        %v9789 = vpack.c.b16 %v9701, %v9699
        %v9790 = vpack.c.b16 %v9704, %v9702
        %v9791 = vpack.c.b16 %v9705, %v9703
        %v9792 = vpack.c.b16 %v9708, %v9706
        %v9793 = vpack.c.b16 %v9709, %v9707
        %v9794 = vpack.c.b16 %v9712, %v9710
        %v9795 = vpack.c.b16 %v9713, %v9711
        %v9796 = vpack.c.b16 %v9716, %v9714
        %v9797 = vpack.c.b16 %v9717, %v9715
        %v9798 = vpack.c.b16 %v9720, %v9718
        %v9799 = vpack.c.b16 %v9721, %v9719
        %v9800 = vpack.c.b16 %v9724, %v9722
        %v9801 = vpack.c.b16 %v9725, %v9723
        %v9802 = vpack.c.b16 %v9728, %v9726
        %v9803 = vpack.c.b16 %v9729, %v9727
        %v9804 = vpack.c.b16 %v9732, %v9730
        %v9805 = vpack.c.b16 %v9733, %v9731
        %v9806 = vpack.c.b16 %v9736, %v9734
        %v9807 = vpack.c.b16 %v9737, %v9735
        %v9808 = vpack.c.b16 %v9740, %v9738
        %v9809 = vpack.c.b16 %v9741, %v9739
        %v9810 = vpack.c.b16 %v9744, %v9742
        %v9811 = vpack.c.b16 %v9745, %v9743
        %v9812 = vpack.c.b16 %v9748, %v9746
        %v9813 = vpack.c.b16 %v9749, %v9747
        %v9814 = vpack.c.b16 %v9752, %v9750
        %v9815 = vpack.c.b16 %v9753, %v9751
        %v9816 = vpack.c.b16 %v9756, %v9754
        %v9817 = vpack.c.b16 %v9757, %v9755
        %v9818 = vpack.c.b16 %v9760, %v9758
        %v9819 = vpack.c.b16 %v9761, %v9759
        %v9820 = vpack.c.b16 %v9764, %v9762
        %v9821 = vpack.c.b16 %v9765, %v9763
        %v9822 = vpack.c.b16 %v9768, %v9766
        %v9823 = vpack.c.b16 %v9769, %v9767
        %v9824 = vpack.c.b16 %v9772, %v9770
        %v9825 = vpack.c.b16 %v9773, %v9771
        %v9826 = vpack.c.b16 %v9776, %v9774
        %v9827 = vpack.c.b16 %v9777, %v9775
        %v9828 = vpack.c.b16 %v9780, %v9778
        %v9829 = vpack.c.b16 %v9781, %v9779
        %9878 = vmatprep.subr.bf16.mxu0 %v9783
        %9879 = vmatpush1.bf16.msra.mxu0 %v9782
        %9880 = vmatprep.subr.bf16.mxu0 %v9785
        %9881 = vmatpush1.bf16.msra.mxu0 %v9784
        %9882 = vmatprep.subr.bf16.mxu0 %v9787
        %9883 = vmatpush1.bf16.msra.mxu0 %v9786
        %9884 = vmatprep.subr.bf16.mxu0 %v9789
        %9885 = vmatpush1.bf16.msra.mxu0 %v9788
        %9886 = vmatprep.subr.bf16.mxu0 %v9791
        %9887 = vmatpush1.bf16.msra.mxu0 %v9790
        %9888 = vmatprep.subr.bf16.mxu0 %v9793
        %9889 = vmatpush1.bf16.msra.mxu0 %v9792
        %9890 = vmatprep.subr.bf16.mxu0 %v9795
        %9891 = vmatpush1.bf16.msra.mxu0 %v9794
        %9892 = vmatprep.subr.bf16.mxu0 %v9797
        %9893 = vmatpush1.bf16.msra.mxu0 %v9796
        %9894 = vmatprep.subr.bf16.mxu0 %v9799
        %9895 = vmatpush1.bf16.msra.mxu0 %v9798
        %9896 = vmatprep.subr.bf16.mxu0 %v9801
        %9897 = vmatpush1.bf16.msra.mxu0 %v9800
        %9898 = vmatprep.subr.bf16.mxu0 %v9803
        %9899 = vmatpush1.bf16.msra.mxu0 %v9802
        %9900 = vmatprep.subr.bf16.mxu0 %v9805
        %9901 = vmatpush1.bf16.msra.mxu0 %v9804
        %9902 = vmatprep.subr.bf16.mxu0 %v9807
        %9903 = vmatpush1.bf16.msra.mxu0 %v9806
        %9904 = vmatprep.subr.bf16.mxu0 %v9809
        %9905 = vmatpush1.bf16.msra.mxu0 %v9808
        %9906 = vmatprep.subr.bf16.mxu0 %v9811
        %9907 = vmatpush1.bf16.msra.mxu0 %v9810
        %9908 = vmatprep.subr.bf16.mxu0 %v9813
        %9909 = vmatpush1.bf16.msra.mxu0 %v9812
        %9910 = vmatprep.mubr.bf16.mxu0 %v9581
        %9911 = vmatmul.mubr.bf16.gmra.mrb[0].mxu0 %v9580
        %v9912 = vpop.f32.mrb[0].mxu0
        %v9913 = vadd.f32 0.0, %v9912
        %v9914 = vpop.f32.mrb[0].mxu0
        %v9915 = vadd.f32 0.0, %v9914
        %v9916 = vpop.f32.mrb[0].mxu0
        %v9917 = vadd.f32 0.0, %v9916
        %v9918 = vpop.f32.mrb[0].mxu0
        %v9919 = vadd.f32 0.0, %v9918
        %9920 = vmatprep.mubr.bf16.mxu0 %v9584
        %9921 = vmatmul.mubr.bf16.gmra.mrb[0].mxu0 %v9583
        %v9922 = vpop.f32.mrb[0].mxu0
        %v9923 = vadd.f32 0.0, %v9922
        %v9924 = vpop.f32.mrb[0].mxu0
        %v9925 = vadd.f32 0.0, %v9924
        %v9926 = vpop.f32.mrb[0].mxu0
        %v9927 = vadd.f32 0.0, %v9926
        %v9928 = vpop.f32.mrb[0].mxu0
        %v9929 = vadd.f32 0.0, %v9928
        %9930 = vmatprep.mubr.bf16.mxu0 %v9587
        %9931 = vmatmul.mubr.bf16.gmra.mrb[0].mxu0 %v9586
        %v9932 = vpop.f32.mrb[0].mxu0
        %v9933 = vadd.f32 0.0, %v9932
        %v9934 = vpop.f32.mrb[0].mxu0
        %v9935 = vadd.f32 0.0, %v9934
        %v9936 = vpop.f32.mrb[0].mxu0
        %v9937 = vadd.f32 0.0, %v9936
        %v9938 = vpop.f32.mrb[0].mxu0
        %v9939 = vadd.f32 0.0, %v9938
        %9940 = vdwg.mxu0
        %9941 = vmatprep.subr.bf16.mxu0 %v9815
        %9942 = vmatpush1.bf16.msra.mxu0 %v9814
        %9943 = vmatprep.subr.bf16.mxu0 %v9817
        %9944 = vmatpush1.bf16.msra.mxu0 %v9816
        %9945 = vmatprep.subr.bf16.mxu0 %v9819
        %9946 = vmatpush1.bf16.msra.mxu0 %v9818
        %9947 = vmatprep.subr.bf16.mxu0 %v9821
        %9948 = vmatpush1.bf16.msra.mxu0 %v9820
        %9949 = vmatprep.subr.bf16.mxu0 %v9823
        %9950 = vmatpush1.bf16.msra.mxu0 %v9822
        %9951 = vmatprep.subr.bf16.mxu0 %v9825
        %9952 = vmatpush1.bf16.msra.mxu0 %v9824
        %9953 = vmatprep.subr.bf16.mxu0 %v9827
        %9954 = vmatpush1.bf16.msra.mxu0 %v9826
        %9955 = vmatprep.subr.bf16.mxu0 %v9829
        %9956 = vmatpush1.bf16.msra.mxu0 %v9828
        %9957 = vmatprep.subr.bf16.mxu0 0
        %9958 = vmatpush1.bf16.msra.mxu0 0
        %9959 = vmatprep.subr.bf16.mxu0 0
        %9960 = vmatpush1.bf16.msra.mxu0 0
        %9961 = vmatprep.subr.bf16.mxu0 0
        %9962 = vmatpush1.bf16.msra.mxu0 0
        %9963 = vmatprep.subr.bf16.mxu0 0
        %9964 = vmatpush1.bf16.msra.mxu0 0
        %9965 = vmatprep.subr.bf16.mxu0 0
        %9966 = vmatpush1.bf16.msra.mxu0 0
        %9967 = vmatprep.subr.bf16.mxu0 0
        %9968 = vmatpush1.bf16.msra.mxu0 0
        %9969 = vmatprep.subr.bf16.mxu0 0
        %9970 = vmatpush1.bf16.msra.mxu0 0
        %9971 = vmatprep.subr.bf16.mxu0 0
        %9972 = vmatpush1.bf16.msra.mxu0 0
        %9973 = vmatprep.mubr.bf16.mxu0 0
        %9974 = vmatmul.mubr.bf16.gmra.mrb[0].mxu0 %v9582
        %v9975 = vpop.f32.mrb[0].mxu0
        %v9976 = vadd.f32 %v9913, %v9975
        %v9977 = vpop.f32.mrb[0].mxu0
        %v9978 = vadd.f32 %v9915, %v9977
        %v9979 = vpop.f32.mrb[0].mxu0
        %v9980 = vadd.f32 %v9917, %v9979
        %v9981 = vpop.f32.mrb[0].mxu0
        %v9982 = vadd.f32 %v9919, %v9981
        %9983 = vmatprep.mubr.bf16.mxu0 0
        %9984 = vmatmul.mubr.bf16.gmra.mrb[0].mxu0 %v9585
        %v9985 = vpop.f32.mrb[0].mxu0
        %v9986 = vadd.f32 %v9923, %v9985
        %v9987 = vpop.f32.mrb[0].mxu0
        %v9988 = vadd.f32 %v9925, %v9987
        %v9989 = vpop.f32.mrb[0].mxu0
        %v9990 = vadd.f32 %v9927, %v9989
        %v9991 = vpop.f32.mrb[0].mxu0
        %v9992 = vadd.f32 %v9929, %v9991
        %9993 = vmatprep.mubr.bf16.mxu0 0
        %9994 = vmatmul.mubr.bf16.gmra.mrb[0].mxu0 %v9588
        %v9995 = vpop.f32.mrb[0].mxu0
        %v9996 = vadd.f32 %v9933, %v9995
        %v9997 = vpop.f32.mrb[0].mxu0
        %v9998 = vadd.f32 %v9935, %v9997
        %v9999 = vpop.f32.mrb[0].mxu0
        %v10000 = vadd.f32 %v9937, %v9999
        %v10001 = vpop.f32.mrb[0].mxu0
        %v10002 = vadd.f32 %v9939, %v10001
        %10003 = vdwg.mxu0
        %v10005 = vlaneseq
        %v10006 = vshrl.u32 %v10005, 7
        %v10007 = vsub.s32 0, %v10006
        %v10008 = vrot.slane %v9589, %v10007
        %v10009 = vlaneseq
        %v10010 = vshrl.u32 %v10009, 7
        %v10011 = vsub.s32 1, %v10010
        %v10012 = vrot.slane %v9589, %v10011
        %v10015 = vadd.f32 %v10008, %v9976
        %v10016 = vadd.f32 %v10012, %v9978
        %v10017 = vadd.f32 %v10008, %v9980
        %v10018 = vadd.f32 %v10012, %v9982
        %v10019 = vadd.f32 %v10008, %v9986
        %v10020 = vadd.f32 %v10012, %v9988
        %v10021 = vadd.f32 %v10008, %v9990
        %v10022 = vadd.f32 %v10012, %v9992
        %v10023 = vadd.f32 %v10008, %v9996
        %v10024 = vadd.f32 %v10012, %v9998
        %v10025 = vadd.f32 %v10008, %v10000
        %v10026 = vadd.f32 %v10012, %v10002
        %s10027 = scalar_lea.vmem %s7, 384
        %v10028 = vld [vmem:[%s10027] sm:$0xff]
        %v10029 = vld [vmem:[%s10027 + $0x8] sm:$0xff]
        %v10030 = vld [vmem:[%s10027 + $0x10] sm:$0xff]
        %v10031 = vld [vmem:[%s10027 + $0x18] sm:$0xff]
        %v10032 = vld [vmem:[%s10027 + $0x20] sm:$0xff]
        %v10033 = vld [vmem:[%s10027 + $0x28] sm:$0xff]
        %v10034 = vld [vmem:[%s10027 + $0x30] sm:$0xff]
        %v10035 = vld [vmem:[%s10027 + $0x38] sm:$0xff]
        %v10036 = vld [vmem:[%s10027 + $0x40] sm:$0xff]
        %v10037 = vld [vmem:[%s10027 + $0x48] sm:$0xff]
        %v10038 = vld [vmem:[%s10027 + $0x50] sm:$0xff]
        %v10039 = vld [vmem:[%s10027 + $0x58] sm:$0xff]
        %v10040 = vld [vmem:[%s10027 + $0x60] sm:$0xff]
        %v10041 = vld [vmem:[%s10027 + $0x68] sm:$0xff]
        %v10042 = vld [vmem:[%s10027 + $0x70] sm:$0xff]
        %v10043 = vld [vmem:[%s10027 + $0x78] sm:$0xff]
        %v10044 = vld [vmem:[%s10027 + $0x80] sm:$0xff]
        %v10045 = vld [vmem:[%s10027 + $0x88] sm:$0xff]
        %v10046 = vld [vmem:[%s10027 + $0x90] sm:$0xff]
        %v10047 = vld [vmem:[%s10027 + $0x98] sm:$0xff]
        %v10048 = vld [vmem:[%s10027 + $0xa0] sm:$0xff]
        %v10049 = vld [vmem:[%s10027 + $0xa8] sm:$0xff]
        %v10050 = vld [vmem:[%s10027 + $0xb0] sm:$0xff]
        %v10051 = vld [vmem:[%s10027 + $0xb8] sm:$0xff]
        %v10052 = vld [vmem:[%s10027 + $0xc0] sm:$0xff]
        %v10053 = vld [vmem:[%s10027 + $0xc8] sm:$0xff]
        %v10054 = vld [vmem:[%s10027 + $0xd0] sm:$0xff]
        %v10055 = vld [vmem:[%s10027 + $0xd8] sm:$0xff]
        %v10056 = vld [vmem:[%s10027 + $0xe0] sm:$0xff]
        %v10057 = vld [vmem:[%s10027 + $0xe8] sm:$0xff]
        %v10058 = vld [vmem:[%s10027 + $0xf0] sm:$0xff]
        %v10059 = vld [vmem:[%s10027 + $0xf8] sm:$0xff]
        %v10060 = vld [vmem:[%s10027 + $0x100] sm:$0xff]
        %v10061 = vld [vmem:[%s10027 + $0x108] sm:$0xff]
        %v10062 = vld [vmem:[%s10027 + $0x110] sm:$0xff]
        %v10063 = vld [vmem:[%s10027 + $0x118] sm:$0xff]
        %v10064 = vld [vmem:[%s10027 + $0x120] sm:$0xff]
        %v10065 = vld [vmem:[%s10027 + $0x128] sm:$0xff]
        %v10066 = vld [vmem:[%s10027 + $0x130] sm:$0xff]
        %v10067 = vld [vmem:[%s10027 + $0x138] sm:$0xff]
        %v10068 = vld [vmem:[%s10027 + $0x140] sm:$0xff]
        %v10069 = vld [vmem:[%s10027 + $0x148] sm:$0xff]
        %v10070 = vld [vmem:[%s10027 + $0x150] sm:$0xff]
        %v10071 = vld [vmem:[%s10027 + $0x158] sm:$0xff]
        %v10072 = vld [vmem:[%s10027 + $0x160] sm:$0xff]
        %v10073 = vld [vmem:[%s10027 + $0x168] sm:$0xff]
        %v10074 = vld [vmem:[%s10027 + $0x170] sm:$0xff]
        %v10075 = vld [vmem:[%s10027 + $0x178] sm:$0xff]
        %v10077 = vshrl.u32 %v9580, 16
        %v10079 = vshll.u32 %v9580, 16
        %v10081 = vrot.slane %v10079, 1
        %v10082 = vor.u32 %v10077, %v10081
        %v10084 = vshll.u32 %v9583, 16
        %v10086 = vrot.slane %v10084, 1
        %v10087 = vsel %vm2042, %v10082, %v10086
        %v10089 = vshrl.u32 %v9581, 16
        %v10091 = vshll.u32 %v9581, 16
        %v10093 = vrot.slane %v10091, 1
        %v10094 = vor.u32 %v10089, %v10093
        %v10096 = vshll.u32 %v9584, 16
        %v10098 = vrot.slane %v10096, 1
        %v10099 = vsel %vm2042, %v10094, %v10098
        %v10101 = vshrl.u32 %v9582, 16
        %v10103 = vshll.u32 %v9582, 16
        %v10105 = vrot.slane %v10103, 1
        %v10106 = vor.u32 %v10101, %v10105
        %v10108 = vshll.u32 %v9585, 16
        %v10110 = vrot.slane %v10108, 1
        %v10111 = vsel %vm2042, %v10106, %v10110
        %v10112 = vshrl.u32 %v9583, 16
        %v10114 = vor.u32 %v10112, %v10086
        %v10116 = vshll.u32 %v9586, 16
        %v10118 = vrot.slane %v10116, 1
        %v10119 = vsel %vm2042, %v10114, %v10118
        %v10120 = vshrl.u32 %v9584, 16
        %v10122 = vor.u32 %v10120, %v10098
        %v10124 = vshll.u32 %v9587, 16
        %v10126 = vrot.slane %v10124, 1
        %v10127 = vsel %vm2042, %v10122, %v10126
        %v10128 = vshrl.u32 %v9585, 16
        %v10130 = vor.u32 %v10128, %v10110
        %v10132 = vshll.u32 %v9588, 16
        %v10134 = vrot.slane %v10132, 1
        %v10135 = vsel %vm2042, %v10130, %v10134
        %v10136 = vshrl.u32 %v9586, 16
        %v10138 = vor.u32 %v10136, %v10118
        %v10139 = vshrl.u32 %v9587, 16
        %v10141 = vor.u32 %v10139, %v10126
        %v10142 = vshrl.u32 %v9588, 16
        %v10144 = vor.u32 %v10142, %v10134
        %v10202 = vunpack.c.l.b16 %v10028
        %v10203 = vunpack.c.h.b16 %v10028
        %v10204 = vunpack.c.l.b16 %v10029
        %v10205 = vunpack.c.h.b16 %v10029
        %v10206 = vunpack.c.l.b16 %v10030
        %v10207 = vunpack.c.h.b16 %v10030
        %v10208 = vunpack.c.l.b16 %v10031
        %v10209 = vunpack.c.h.b16 %v10031
        %v10210 = vunpack.c.l.b16 %v10032
        %v10211 = vunpack.c.h.b16 %v10032
        %v10212 = vunpack.c.l.b16 %v10033
        %v10213 = vunpack.c.h.b16 %v10033
        %v10214 = vunpack.c.l.b16 %v10034
        %v10215 = vunpack.c.h.b16 %v10034
        %v10216 = vunpack.c.l.b16 %v10035
        %v10217 = vunpack.c.h.b16 %v10035
        %v10218 = vunpack.c.l.b16 %v10036
        %v10219 = vunpack.c.h.b16 %v10036
        %v10220 = vunpack.c.l.b16 %v10037
        %v10221 = vunpack.c.h.b16 %v10037
        %v10222 = vunpack.c.l.b16 %v10038
        %v10223 = vunpack.c.h.b16 %v10038
        %v10224 = vunpack.c.l.b16 %v10039
        %v10225 = vunpack.c.h.b16 %v10039
        %v10226 = vunpack.c.l.b16 %v10040
        %v10227 = vunpack.c.h.b16 %v10040
        %v10228 = vunpack.c.l.b16 %v10041
        %v10229 = vunpack.c.h.b16 %v10041
        %v10230 = vunpack.c.l.b16 %v10042
        %v10231 = vunpack.c.h.b16 %v10042
        %v10232 = vunpack.c.l.b16 %v10043
        %v10233 = vunpack.c.h.b16 %v10043
        %v10234 = vunpack.c.l.b16 %v10044
        %v10235 = vunpack.c.h.b16 %v10044
        %v10236 = vunpack.c.l.b16 %v10045
        %v10237 = vunpack.c.h.b16 %v10045
        %v10238 = vunpack.c.l.b16 %v10046
        %v10239 = vunpack.c.h.b16 %v10046
        %v10240 = vunpack.c.l.b16 %v10047
        %v10241 = vunpack.c.h.b16 %v10047
        %v10242 = vunpack.c.l.b16 %v10048
        %v10243 = vunpack.c.h.b16 %v10048
        %v10244 = vunpack.c.l.b16 %v10049
        %v10245 = vunpack.c.h.b16 %v10049
        %v10246 = vunpack.c.l.b16 %v10050
        %v10247 = vunpack.c.h.b16 %v10050
        %v10248 = vunpack.c.l.b16 %v10051
        %v10249 = vunpack.c.h.b16 %v10051
        %v10250 = vunpack.c.l.b16 %v10052
        %v10251 = vunpack.c.h.b16 %v10052
        %v10252 = vunpack.c.l.b16 %v10053
        %v10253 = vunpack.c.h.b16 %v10053
        %v10254 = vunpack.c.l.b16 %v10054
        %v10255 = vunpack.c.h.b16 %v10054
        %v10256 = vunpack.c.l.b16 %v10055
        %v10257 = vunpack.c.h.b16 %v10055
        %v10258 = vunpack.c.l.b16 %v10056
        %v10259 = vunpack.c.h.b16 %v10056
        %v10260 = vunpack.c.l.b16 %v10057
        %v10261 = vunpack.c.h.b16 %v10057
        %v10262 = vunpack.c.l.b16 %v10058
        %v10263 = vunpack.c.h.b16 %v10058
        %v10264 = vunpack.c.l.b16 %v10059
        %v10265 = vunpack.c.h.b16 %v10059
        %v10266 = vunpack.c.l.b16 %v10060
        %v10267 = vunpack.c.h.b16 %v10060
        %v10268 = vunpack.c.l.b16 %v10061
        %v10269 = vunpack.c.h.b16 %v10061
        %v10270 = vunpack.c.l.b16 %v10062
        %v10271 = vunpack.c.h.b16 %v10062
        %v10272 = vunpack.c.l.b16 %v10063
        %v10273 = vunpack.c.h.b16 %v10063
        %v10274 = vunpack.c.l.b16 %v10064
        %v10275 = vunpack.c.h.b16 %v10064
        %v10276 = vunpack.c.l.b16 %v10065
        %v10277 = vunpack.c.h.b16 %v10065
        %v10278 = vunpack.c.l.b16 %v10066
        %v10279 = vunpack.c.h.b16 %v10066
        %v10280 = vunpack.c.l.b16 %v10067
        %v10281 = vunpack.c.h.b16 %v10067
        %v10282 = vunpack.c.l.b16 %v10068
        %v10283 = vunpack.c.h.b16 %v10068
        %v10284 = vunpack.c.l.b16 %v10069
        %v10285 = vunpack.c.h.b16 %v10069
        %v10286 = vunpack.c.l.b16 %v10070
        %v10287 = vunpack.c.h.b16 %v10070
        %v10288 = vunpack.c.l.b16 %v10071
        %v10289 = vunpack.c.h.b16 %v10071
        %v10290 = vunpack.c.l.b16 %v10072
        %v10291 = vunpack.c.h.b16 %v10072
        %v10292 = vunpack.c.l.b16 %v10073
        %v10293 = vunpack.c.h.b16 %v10073
        %v10294 = vunpack.c.l.b16 %v10074
        %v10295 = vunpack.c.h.b16 %v10074
        %v10296 = vunpack.c.l.b16 %v10075
        %v10297 = vunpack.c.h.b16 %v10075
        %v10298 = vpack.c.b16 %v10204, %v10202
        %v10299 = vpack.c.b16 %v10205, %v10203
        %v10300 = vpack.c.b16 %v10208, %v10206
        %v10301 = vpack.c.b16 %v10209, %v10207
        %v10302 = vpack.c.b16 %v10212, %v10210
        %v10303 = vpack.c.b16 %v10213, %v10211
        %v10304 = vpack.c.b16 %v10216, %v10214
        %v10305 = vpack.c.b16 %v10217, %v10215
        %v10306 = vpack.c.b16 %v10220, %v10218
        %v10307 = vpack.c.b16 %v10221, %v10219
        %v10308 = vpack.c.b16 %v10224, %v10222
        %v10309 = vpack.c.b16 %v10225, %v10223
        %v10310 = vpack.c.b16 %v10228, %v10226
        %v10311 = vpack.c.b16 %v10229, %v10227
        %v10312 = vpack.c.b16 %v10232, %v10230
        %v10313 = vpack.c.b16 %v10233, %v10231
        %v10314 = vpack.c.b16 %v10236, %v10234
        %v10315 = vpack.c.b16 %v10237, %v10235
        %v10316 = vpack.c.b16 %v10240, %v10238
        %v10317 = vpack.c.b16 %v10241, %v10239
        %v10318 = vpack.c.b16 %v10244, %v10242
        %v10319 = vpack.c.b16 %v10245, %v10243
        %v10320 = vpack.c.b16 %v10248, %v10246
        %v10321 = vpack.c.b16 %v10249, %v10247
        %v10322 = vpack.c.b16 %v10252, %v10250
        %v10323 = vpack.c.b16 %v10253, %v10251
        %v10324 = vpack.c.b16 %v10256, %v10254
        %v10325 = vpack.c.b16 %v10257, %v10255
        %v10326 = vpack.c.b16 %v10260, %v10258
        %v10327 = vpack.c.b16 %v10261, %v10259
        %v10328 = vpack.c.b16 %v10264, %v10262
        %v10329 = vpack.c.b16 %v10265, %v10263
        %v10330 = vpack.c.b16 %v10268, %v10266
        %v10331 = vpack.c.b16 %v10269, %v10267
        %v10332 = vpack.c.b16 %v10272, %v10270
        %v10333 = vpack.c.b16 %v10273, %v10271
        %v10334 = vpack.c.b16 %v10276, %v10274
        %v10335 = vpack.c.b16 %v10277, %v10275
        %v10336 = vpack.c.b16 %v10280, %v10278
        %v10337 = vpack.c.b16 %v10281, %v10279
        %v10338 = vpack.c.b16 %v10284, %v10282
        %v10339 = vpack.c.b16 %v10285, %v10283
        %v10340 = vpack.c.b16 %v10288, %v10286
        %v10341 = vpack.c.b16 %v10289, %v10287
        %v10342 = vpack.c.b16 %v10292, %v10290
        %v10343 = vpack.c.b16 %v10293, %v10291
        %v10344 = vpack.c.b16 %v10296, %v10294
        %v10345 = vpack.c.b16 %v10297, %v10295
        %10394 = vmatprep.subr.bf16.mxu0 %v10299
        %10395 = vmatpush1.bf16.msra.mxu0 %v10298
        %10396 = vmatprep.subr.bf16.mxu0 %v10301
        %10397 = vmatpush1.bf16.msra.mxu0 %v10300
        %10398 = vmatprep.subr.bf16.mxu0 %v10303
        %10399 = vmatpush1.bf16.msra.mxu0 %v10302
        %10400 = vmatprep.subr.bf16.mxu0 %v10305
        %10401 = vmatpush1.bf16.msra.mxu0 %v10304
        %10402 = vmatprep.subr.bf16.mxu0 %v10307
        %10403 = vmatpush1.bf16.msra.mxu0 %v10306
        %10404 = vmatprep.subr.bf16.mxu0 %v10309
        %10405 = vmatpush1.bf16.msra.mxu0 %v10308
        %10406 = vmatprep.subr.bf16.mxu0 %v10311
        %10407 = vmatpush1.bf16.msra.mxu0 %v10310
        %10408 = vmatprep.subr.bf16.mxu0 %v10313
        %10409 = vmatpush1.bf16.msra.mxu0 %v10312
        %10410 = vmatprep.subr.bf16.mxu0 %v10315
        %10411 = vmatpush1.bf16.msra.mxu0 %v10314
        %10412 = vmatprep.subr.bf16.mxu0 %v10317
        %10413 = vmatpush1.bf16.msra.mxu0 %v10316
        %10414 = vmatprep.subr.bf16.mxu0 %v10319
        %10415 = vmatpush1.bf16.msra.mxu0 %v10318
        %10416 = vmatprep.subr.bf16.mxu0 %v10321
        %10417 = vmatpush1.bf16.msra.mxu0 %v10320
        %10418 = vmatprep.subr.bf16.mxu0 %v10323
        %10419 = vmatpush1.bf16.msra.mxu0 %v10322
        %10420 = vmatprep.subr.bf16.mxu0 %v10325
        %10421 = vmatpush1.bf16.msra.mxu0 %v10324
        %10422 = vmatprep.subr.bf16.mxu0 %v10327
        %10423 = vmatpush1.bf16.msra.mxu0 %v10326
        %10424 = vmatprep.subr.bf16.mxu0 %v10329
        %10425 = vmatpush1.bf16.msra.mxu0 %v10328
        %10426 = vmatprep.mubr.bf16.mxu0 %v10099
        %10427 = vmatmul.mubr.bf16.gmra.mrb[0].mxu0 %v10087
        %v10428 = vpop.f32.mrb[0].mxu0
        %v10429 = vadd.f32 0.0, %v10428
        %v10430 = vpop.f32.mrb[0].mxu0
        %v10431 = vadd.f32 0.0, %v10430
        %v10432 = vpop.f32.mrb[0].mxu0
        %v10433 = vadd.f32 0.0, %v10432
        %v10434 = vpop.f32.mrb[0].mxu0
        %v10435 = vadd.f32 0.0, %v10434
        %10436 = vmatprep.mubr.bf16.mxu0 %v10127
        %10437 = vmatmul.mubr.bf16.gmra.mrb[0].mxu0 %v10119
        %v10438 = vpop.f32.mrb[0].mxu0
        %v10439 = vadd.f32 0.0, %v10438
        %v10440 = vpop.f32.mrb[0].mxu0
        %v10441 = vadd.f32 0.0, %v10440
        %v10442 = vpop.f32.mrb[0].mxu0
        %v10443 = vadd.f32 0.0, %v10442
        %v10444 = vpop.f32.mrb[0].mxu0
        %v10445 = vadd.f32 0.0, %v10444
        %10446 = vmatprep.mubr.bf16.mxu0 %v10141
        %10447 = vmatmul.mubr.bf16.gmra.mrb[0].mxu0 %v10138
        %v10448 = vpop.f32.mrb[0].mxu0
        %v10449 = vadd.f32 0.0, %v10448
        %v10450 = vpop.f32.mrb[0].mxu0
        %v10451 = vadd.f32 0.0, %v10450
        %v10452 = vpop.f32.mrb[0].mxu0
        %v10453 = vadd.f32 0.0, %v10452
        %v10454 = vpop.f32.mrb[0].mxu0
        %v10455 = vadd.f32 0.0, %v10454
        %10456 = vdwg.mxu0
        %10457 = vmatprep.subr.bf16.mxu0 %v10331
        %10458 = vmatpush1.bf16.msra.mxu0 %v10330
        %10459 = vmatprep.subr.bf16.mxu0 %v10333
        %10460 = vmatpush1.bf16.msra.mxu0 %v10332
        %10461 = vmatprep.subr.bf16.mxu0 %v10335
        %10462 = vmatpush1.bf16.msra.mxu0 %v10334
        %10463 = vmatprep.subr.bf16.mxu0 %v10337
        %10464 = vmatpush1.bf16.msra.mxu0 %v10336
        %10465 = vmatprep.subr.bf16.mxu0 %v10339
        %10466 = vmatpush1.bf16.msra.mxu0 %v10338
        %10467 = vmatprep.subr.bf16.mxu0 %v10341
        %10468 = vmatpush1.bf16.msra.mxu0 %v10340
        %10469 = vmatprep.subr.bf16.mxu0 %v10343
        %10470 = vmatpush1.bf16.msra.mxu0 %v10342
        %10471 = vmatprep.subr.bf16.mxu0 %v10345
        %10472 = vmatpush1.bf16.msra.mxu0 %v10344
        %10473 = vmatprep.subr.bf16.mxu0 0
        %10474 = vmatpush1.bf16.msra.mxu0 0
        %10475 = vmatprep.subr.bf16.mxu0 0
        %10476 = vmatpush1.bf16.msra.mxu0 0
        %10477 = vmatprep.subr.bf16.mxu0 0
        %10478 = vmatpush1.bf16.msra.mxu0 0
        %10479 = vmatprep.subr.bf16.mxu0 0
        %10480 = vmatpush1.bf16.msra.mxu0 0
        %10481 = vmatprep.subr.bf16.mxu0 0
        %10482 = vmatpush1.bf16.msra.mxu0 0
        %10483 = vmatprep.subr.bf16.mxu0 0
        %10484 = vmatpush1.bf16.msra.mxu0 0
        %10485 = vmatprep.subr.bf16.mxu0 0
        %10486 = vmatpush1.bf16.msra.mxu0 0
        %10487 = vmatprep.subr.bf16.mxu0 0
        %10488 = vmatpush1.bf16.msra.mxu0 0
        %10489 = vmatprep.mubr.bf16.mxu0 0
        %10490 = vmatmul.mubr.bf16.gmra.mrb[0].mxu0 %v10111
        %v10491 = vpop.f32.mrb[0].mxu0
        %v10492 = vadd.f32 %v10429, %v10491
        %v10493 = vpop.f32.mrb[0].mxu0
        %v10494 = vadd.f32 %v10431, %v10493
        %v10495 = vpop.f32.mrb[0].mxu0
        %v10496 = vadd.f32 %v10433, %v10495
        %v10497 = vpop.f32.mrb[0].mxu0
        %v10498 = vadd.f32 %v10435, %v10497
        %10499 = vmatprep.mubr.bf16.mxu0 0
        %10500 = vmatmul.mubr.bf16.gmra.mrb[0].mxu0 %v10135
        %v10501 = vpop.f32.mrb[0].mxu0
        %v10502 = vadd.f32 %v10439, %v10501
        %v10503 = vpop.f32.mrb[0].mxu0
        %v10504 = vadd.f32 %v10441, %v10503
        %v10505 = vpop.f32.mrb[0].mxu0
        %v10506 = vadd.f32 %v10443, %v10505
        %v10507 = vpop.f32.mrb[0].mxu0
        %v10508 = vadd.f32 %v10445, %v10507
        %10509 = vmatprep.mubr.bf16.mxu0 0
        %10510 = vmatmul.mubr.bf16.gmra.mrb[0].mxu0 %v10144
        %v10511 = vpop.f32.mrb[0].mxu0
        %v10512 = vadd.f32 %v10449, %v10511
        %v10513 = vpop.f32.mrb[0].mxu0
        %v10514 = vadd.f32 %v10451, %v10513
        %v10515 = vpop.f32.mrb[0].mxu0
        %v10516 = vadd.f32 %v10453, %v10515
        %v10517 = vpop.f32.mrb[0].mxu0
        %v10518 = vadd.f32 %v10455, %v10517
        %10519 = vdwg.mxu0
        %v10520 = vadd.f32 %v10015, %v10492
        %v10521 = vadd.f32 %v10016, %v10494
        %v10522 = vadd.f32 %v10017, %v10496
        %v10523 = vadd.f32 %v10018, %v10498
        %v10524 = vadd.f32 %v10019, %v10502
        %v10525 = vadd.f32 %v10020, %v10504
        %v10526 = vadd.f32 %v10021, %v10506
        %v10527 = vadd.f32 %v10022, %v10508
        %v10528 = vadd.f32 %v10023, %v10512
        %v10529 = vadd.f32 %v10024, %v10514
        %v10530 = vadd.f32 %v10025, %v10516
        %v10531 = vadd.f32 %v10026, %v10518
        %s10532 = scalar_lea.vmem %s7, 768
        %v10533 = vld [vmem:[%s10532] sm:$0xff]
        %v10534 = vld [vmem:[%s10532 + $0x8] sm:$0xff]
        %v10535 = vld [vmem:[%s10532 + $0x10] sm:$0xff]
        %v10536 = vld [vmem:[%s10532 + $0x18] sm:$0xff]
        %v10537 = vld [vmem:[%s10532 + $0x20] sm:$0xff]
        %v10538 = vld [vmem:[%s10532 + $0x28] sm:$0xff]
        %v10539 = vld [vmem:[%s10532 + $0x30] sm:$0xff]
        %v10540 = vld [vmem:[%s10532 + $0x38] sm:$0xff]
        %v10541 = vld [vmem:[%s10532 + $0x40] sm:$0xff]
        %v10542 = vld [vmem:[%s10532 + $0x48] sm:$0xff]
        %v10543 = vld [vmem:[%s10532 + $0x50] sm:$0xff]
        %v10544 = vld [vmem:[%s10532 + $0x58] sm:$0xff]
        %v10545 = vld [vmem:[%s10532 + $0x60] sm:$0xff]
        %v10546 = vld [vmem:[%s10532 + $0x68] sm:$0xff]
        %v10547 = vld [vmem:[%s10532 + $0x70] sm:$0xff]
        %v10548 = vld [vmem:[%s10532 + $0x78] sm:$0xff]
        %v10549 = vld [vmem:[%s10532 + $0x80] sm:$0xff]
        %v10550 = vld [vmem:[%s10532 + $0x88] sm:$0xff]
        %v10551 = vld [vmem:[%s10532 + $0x90] sm:$0xff]
        %v10552 = vld [vmem:[%s10532 + $0x98] sm:$0xff]
        %v10553 = vld [vmem:[%s10532 + $0xa0] sm:$0xff]
        %v10554 = vld [vmem:[%s10532 + $0xa8] sm:$0xff]
        %v10555 = vld [vmem:[%s10532 + $0xb0] sm:$0xff]
        %v10556 = vld [vmem:[%s10532 + $0xb8] sm:$0xff]
        %v10557 = vld [vmem:[%s10532 + $0xc0] sm:$0xff]
        %v10558 = vld [vmem:[%s10532 + $0xc8] sm:$0xff]
        %v10559 = vld [vmem:[%s10532 + $0xd0] sm:$0xff]
        %v10560 = vld [vmem:[%s10532 + $0xd8] sm:$0xff]
        %v10561 = vld [vmem:[%s10532 + $0xe0] sm:$0xff]
        %v10562 = vld [vmem:[%s10532 + $0xe8] sm:$0xff]
        %v10563 = vld [vmem:[%s10532 + $0xf0] sm:$0xff]
        %v10564 = vld [vmem:[%s10532 + $0xf8] sm:$0xff]
        %v10565 = vld [vmem:[%s10532 + $0x100] sm:$0xff]
        %v10566 = vld [vmem:[%s10532 + $0x108] sm:$0xff]
        %v10567 = vld [vmem:[%s10532 + $0x110] sm:$0xff]
        %v10568 = vld [vmem:[%s10532 + $0x118] sm:$0xff]
        %v10569 = vld [vmem:[%s10532 + $0x120] sm:$0xff]
        %v10570 = vld [vmem:[%s10532 + $0x128] sm:$0xff]
        %v10571 = vld [vmem:[%s10532 + $0x130] sm:$0xff]
        %v10572 = vld [vmem:[%s10532 + $0x138] sm:$0xff]
        %v10573 = vld [vmem:[%s10532 + $0x140] sm:$0xff]
        %v10574 = vld [vmem:[%s10532 + $0x148] sm:$0xff]
        %v10575 = vld [vmem:[%s10532 + $0x150] sm:$0xff]
        %v10576 = vld [vmem:[%s10532 + $0x158] sm:$0xff]
        %v10577 = vld [vmem:[%s10532 + $0x160] sm:$0xff]
        %v10578 = vld [vmem:[%s10532 + $0x168] sm:$0xff]
        %v10579 = vld [vmem:[%s10532 + $0x170] sm:$0xff]
        %v10580 = vld [vmem:[%s10532 + $0x178] sm:$0xff]
        %v10590 = vrot.slane %v9580, 1
        %v10591 = vrot.slane %v9583, 1
        %v10592 = vsel %vm7252, %v10590, %v10591
        %v10593 = vrot.slane %v9581, 1
        %v10594 = vrot.slane %v9584, 1
        %v10595 = vsel %vm7252, %v10593, %v10594
        %v10596 = vrot.slane %v9582, 1
        %v10597 = vrot.slane %v9585, 1
        %v10598 = vsel %vm7252, %v10596, %v10597
        %v10599 = vrot.slane %v9586, 1
        %v10600 = vsel %vm7252, %v10591, %v10599
        %v10601 = vrot.slane %v9587, 1
        %v10602 = vsel %vm7252, %v10594, %v10601
        %v10603 = vrot.slane %v9588, 1
        %v10604 = vsel %vm7252, %v10597, %v10603
        %v10662 = vunpack.c.l.b16 %v10533
        %v10663 = vunpack.c.h.b16 %v10533
        %v10664 = vunpack.c.l.b16 %v10534
        %v10665 = vunpack.c.h.b16 %v10534
        %v10666 = vunpack.c.l.b16 %v10535
        %v10667 = vunpack.c.h.b16 %v10535
        %v10668 = vunpack.c.l.b16 %v10536
        %v10669 = vunpack.c.h.b16 %v10536
        %v10670 = vunpack.c.l.b16 %v10537
        %v10671 = vunpack.c.h.b16 %v10537
        %v10672 = vunpack.c.l.b16 %v10538
        %v10673 = vunpack.c.h.b16 %v10538
        %v10674 = vunpack.c.l.b16 %v10539
        %v10675 = vunpack.c.h.b16 %v10539
        %v10676 = vunpack.c.l.b16 %v10540
        %v10677 = vunpack.c.h.b16 %v10540
        %v10678 = vunpack.c.l.b16 %v10541
        %v10679 = vunpack.c.h.b16 %v10541
        %v10680 = vunpack.c.l.b16 %v10542
        %v10681 = vunpack.c.h.b16 %v10542
        %v10682 = vunpack.c.l.b16 %v10543
        %v10683 = vunpack.c.h.b16 %v10543
        %v10684 = vunpack.c.l.b16 %v10544
        %v10685 = vunpack.c.h.b16 %v10544
        %v10686 = vunpack.c.l.b16 %v10545
        %v10687 = vunpack.c.h.b16 %v10545
        %v10688 = vunpack.c.l.b16 %v10546
        %v10689 = vunpack.c.h.b16 %v10546
        %v10690 = vunpack.c.l.b16 %v10547
        %v10691 = vunpack.c.h.b16 %v10547
        %v10692 = vunpack.c.l.b16 %v10548
        %v10693 = vunpack.c.h.b16 %v10548
        %v10694 = vunpack.c.l.b16 %v10549
        %v10695 = vunpack.c.h.b16 %v10549
        %v10696 = vunpack.c.l.b16 %v10550
        %v10697 = vunpack.c.h.b16 %v10550
        %v10698 = vunpack.c.l.b16 %v10551
        %v10699 = vunpack.c.h.b16 %v10551
        %v10700 = vunpack.c.l.b16 %v10552
        %v10701 = vunpack.c.h.b16 %v10552
        %v10702 = vunpack.c.l.b16 %v10553
        %v10703 = vunpack.c.h.b16 %v10553
        %v10704 = vunpack.c.l.b16 %v10554
        %v10705 = vunpack.c.h.b16 %v10554
        %v10706 = vunpack.c.l.b16 %v10555
        %v10707 = vunpack.c.h.b16 %v10555
        %v10708 = vunpack.c.l.b16 %v10556
        %v10709 = vunpack.c.h.b16 %v10556
        %v10710 = vunpack.c.l.b16 %v10557
        %v10711 = vunpack.c.h.b16 %v10557
        %v10712 = vunpack.c.l.b16 %v10558
        %v10713 = vunpack.c.h.b16 %v10558
        %v10714 = vunpack.c.l.b16 %v10559
        %v10715 = vunpack.c.h.b16 %v10559
        %v10716 = vunpack.c.l.b16 %v10560
        %v10717 = vunpack.c.h.b16 %v10560
        %v10718 = vunpack.c.l.b16 %v10561
        %v10719 = vunpack.c.h.b16 %v10561
        %v10720 = vunpack.c.l.b16 %v10562
        %v10721 = vunpack.c.h.b16 %v10562
        %v10722 = vunpack.c.l.b16 %v10563
        %v10723 = vunpack.c.h.b16 %v10563
        %v10724 = vunpack.c.l.b16 %v10564
        %v10725 = vunpack.c.h.b16 %v10564
        %v10726 = vunpack.c.l.b16 %v10565
        %v10727 = vunpack.c.h.b16 %v10565
        %v10728 = vunpack.c.l.b16 %v10566
        %v10729 = vunpack.c.h.b16 %v10566
        %v10730 = vunpack.c.l.b16 %v10567
        %v10731 = vunpack.c.h.b16 %v10567
        %v10732 = vunpack.c.l.b16 %v10568
        %v10733 = vunpack.c.h.b16 %v10568
        %v10734 = vunpack.c.l.b16 %v10569
        %v10735 = vunpack.c.h.b16 %v10569
        %v10736 = vunpack.c.l.b16 %v10570
        %v10737 = vunpack.c.h.b16 %v10570
        %v10738 = vunpack.c.l.b16 %v10571
        %v10739 = vunpack.c.h.b16 %v10571
        %v10740 = vunpack.c.l.b16 %v10572
        %v10741 = vunpack.c.h.b16 %v10572
        %v10742 = vunpack.c.l.b16 %v10573
        %v10743 = vunpack.c.h.b16 %v10573
        %v10744 = vunpack.c.l.b16 %v10574
        %v10745 = vunpack.c.h.b16 %v10574
        %v10746 = vunpack.c.l.b16 %v10575
        %v10747 = vunpack.c.h.b16 %v10575
        %v10748 = vunpack.c.l.b16 %v10576
        %v10749 = vunpack.c.h.b16 %v10576
        %v10750 = vunpack.c.l.b16 %v10577
        %v10751 = vunpack.c.h.b16 %v10577
        %v10752 = vunpack.c.l.b16 %v10578
        %v10753 = vunpack.c.h.b16 %v10578
        %v10754 = vunpack.c.l.b16 %v10579
        %v10755 = vunpack.c.h.b16 %v10579
        %v10756 = vunpack.c.l.b16 %v10580
        %v10757 = vunpack.c.h.b16 %v10580
        %v10758 = vpack.c.b16 %v10664, %v10662
        %v10759 = vpack.c.b16 %v10665, %v10663
        %v10760 = vpack.c.b16 %v10668, %v10666
        %v10761 = vpack.c.b16 %v10669, %v10667
        %v10762 = vpack.c.b16 %v10672, %v10670
        %v10763 = vpack.c.b16 %v10673, %v10671
        %v10764 = vpack.c.b16 %v10676, %v10674
        %v10765 = vpack.c.b16 %v10677, %v10675
        %v10766 = vpack.c.b16 %v10680, %v10678
        %v10767 = vpack.c.b16 %v10681, %v10679
        %v10768 = vpack.c.b16 %v10684, %v10682
        %v10769 = vpack.c.b16 %v10685, %v10683
        %v10770 = vpack.c.b16 %v10688, %v10686
        %v10771 = vpack.c.b16 %v10689, %v10687
        %v10772 = vpack.c.b16 %v10692, %v10690
        %v10773 = vpack.c.b16 %v10693, %v10691
        %v10774 = vpack.c.b16 %v10696, %v10694
        %v10775 = vpack.c.b16 %v10697, %v10695
        %v10776 = vpack.c.b16 %v10700, %v10698
        %v10777 = vpack.c.b16 %v10701, %v10699
        %v10778 = vpack.c.b16 %v10704, %v10702
        %v10779 = vpack.c.b16 %v10705, %v10703
        %v10780 = vpack.c.b16 %v10708, %v10706
        %v10781 = vpack.c.b16 %v10709, %v10707
        %v10782 = vpack.c.b16 %v10712, %v10710
        %v10783 = vpack.c.b16 %v10713, %v10711
        %v10784 = vpack.c.b16 %v10716, %v10714
        %v10785 = vpack.c.b16 %v10717, %v10715
        %v10786 = vpack.c.b16 %v10720, %v10718
        %v10787 = vpack.c.b16 %v10721, %v10719
        %v10788 = vpack.c.b16 %v10724, %v10722
        %v10789 = vpack.c.b16 %v10725, %v10723
        %v10790 = vpack.c.b16 %v10728, %v10726
        %v10791 = vpack.c.b16 %v10729, %v10727
        %v10792 = vpack.c.b16 %v10732, %v10730
        %v10793 = vpack.c.b16 %v10733, %v10731
        %v10794 = vpack.c.b16 %v10736, %v10734
        %v10795 = vpack.c.b16 %v10737, %v10735
        %v10796 = vpack.c.b16 %v10740, %v10738
        %v10797 = vpack.c.b16 %v10741, %v10739
        %v10798 = vpack.c.b16 %v10744, %v10742
        %v10799 = vpack.c.b16 %v10745, %v10743
        %v10800 = vpack.c.b16 %v10748, %v10746
        %v10801 = vpack.c.b16 %v10749, %v10747
        %v10802 = vpack.c.b16 %v10752, %v10750
        %v10803 = vpack.c.b16 %v10753, %v10751
        %v10804 = vpack.c.b16 %v10756, %v10754
        %v10805 = vpack.c.b16 %v10757, %v10755
        %10854 = vmatprep.subr.bf16.mxu0 %v10759
        %10855 = vmatpush1.bf16.msra.mxu0 %v10758
        %10856 = vmatprep.subr.bf16.mxu0 %v10761
        %10857 = vmatpush1.bf16.msra.mxu0 %v10760
        %10858 = vmatprep.subr.bf16.mxu0 %v10763
        %10859 = vmatpush1.bf16.msra.mxu0 %v10762
        %10860 = vmatprep.subr.bf16.mxu0 %v10765
        %10861 = vmatpush1.bf16.msra.mxu0 %v10764
        %10862 = vmatprep.subr.bf16.mxu0 %v10767
        %10863 = vmatpush1.bf16.msra.mxu0 %v10766
        %10864 = vmatprep.subr.bf16.mxu0 %v10769
        %10865 = vmatpush1.bf16.msra.mxu0 %v10768
        %10866 = vmatprep.subr.bf16.mxu0 %v10771
        %10867 = vmatpush1.bf16.msra.mxu0 %v10770
        %10868 = vmatprep.subr.bf16.mxu0 %v10773
        %10869 = vmatpush1.bf16.msra.mxu0 %v10772
        %10870 = vmatprep.subr.bf16.mxu0 %v10775
        %10871 = vmatpush1.bf16.msra.mxu0 %v10774
        %10872 = vmatprep.subr.bf16.mxu0 %v10777
        %10873 = vmatpush1.bf16.msra.mxu0 %v10776
        %10874 = vmatprep.subr.bf16.mxu0 %v10779
        %10875 = vmatpush1.bf16.msra.mxu0 %v10778
        %10876 = vmatprep.subr.bf16.mxu0 %v10781
        %10877 = vmatpush1.bf16.msra.mxu0 %v10780
        %10878 = vmatprep.subr.bf16.mxu0 %v10783
        %10879 = vmatpush1.bf16.msra.mxu0 %v10782
        %10880 = vmatprep.subr.bf16.mxu0 %v10785
        %10881 = vmatpush1.bf16.msra.mxu0 %v10784
        %10882 = vmatprep.subr.bf16.mxu0 %v10787
        %10883 = vmatpush1.bf16.msra.mxu0 %v10786
        %10884 = vmatprep.subr.bf16.mxu0 %v10789
        %10885 = vmatpush1.bf16.msra.mxu0 %v10788
        %10886 = vmatprep.mubr.bf16.mxu0 %v10595
        %10887 = vmatmul.mubr.bf16.gmra.mrb[0].mxu0 %v10592
        %v10888 = vpop.f32.mrb[0].mxu0
        %v10889 = vadd.f32 0.0, %v10888
        %v10890 = vpop.f32.mrb[0].mxu0
        %v10891 = vadd.f32 0.0, %v10890
        %v10892 = vpop.f32.mrb[0].mxu0
        %v10893 = vadd.f32 0.0, %v10892
        %v10894 = vpop.f32.mrb[0].mxu0
        %v10895 = vadd.f32 0.0, %v10894
        %10896 = vmatprep.mubr.bf16.mxu0 %v10602
        %10897 = vmatmul.mubr.bf16.gmra.mrb[0].mxu0 %v10600
        %v10898 = vpop.f32.mrb[0].mxu0
        %v10899 = vadd.f32 0.0, %v10898
        %v10900 = vpop.f32.mrb[0].mxu0
        %v10901 = vadd.f32 0.0, %v10900
        %v10902 = vpop.f32.mrb[0].mxu0
        %v10903 = vadd.f32 0.0, %v10902
        %v10904 = vpop.f32.mrb[0].mxu0
        %v10905 = vadd.f32 0.0, %v10904
        %10906 = vmatprep.mubr.bf16.mxu0 %v10601
        %10907 = vmatmul.mubr.bf16.gmra.mrb[0].mxu0 %v10599
        %v10908 = vpop.f32.mrb[0].mxu0
        %v10909 = vadd.f32 0.0, %v10908
        %v10910 = vpop.f32.mrb[0].mxu0
        %v10911 = vadd.f32 0.0, %v10910
        %v10912 = vpop.f32.mrb[0].mxu0
        %v10913 = vadd.f32 0.0, %v10912
        %v10914 = vpop.f32.mrb[0].mxu0
        %v10915 = vadd.f32 0.0, %v10914
        %10916 = vdwg.mxu0
        %10917 = vmatprep.subr.bf16.mxu0 %v10791
        %10918 = vmatpush1.bf16.msra.mxu0 %v10790
        %10919 = vmatprep.subr.bf16.mxu0 %v10793
        %10920 = vmatpush1.bf16.msra.mxu0 %v10792
        %10921 = vmatprep.subr.bf16.mxu0 %v10795
        %10922 = vmatpush1.bf16.msra.mxu0 %v10794
        %10923 = vmatprep.subr.bf16.mxu0 %v10797
        %10924 = vmatpush1.bf16.msra.mxu0 %v10796
        %10925 = vmatprep.subr.bf16.mxu0 %v10799
        %10926 = vmatpush1.bf16.msra.mxu0 %v10798
        %10927 = vmatprep.subr.bf16.mxu0 %v10801
        %10928 = vmatpush1.bf16.msra.mxu0 %v10800
        %10929 = vmatprep.subr.bf16.mxu0 %v10803
        %10930 = vmatpush1.bf16.msra.mxu0 %v10802
        %10931 = vmatprep.subr.bf16.mxu0 %v10805
        %10932 = vmatpush1.bf16.msra.mxu0 %v10804
        %10933 = vmatprep.subr.bf16.mxu0 0
        %10934 = vmatpush1.bf16.msra.mxu0 0
        %10935 = vmatprep.subr.bf16.mxu0 0
        %10936 = vmatpush1.bf16.msra.mxu0 0
        %10937 = vmatprep.subr.bf16.mxu0 0
        %10938 = vmatpush1.bf16.msra.mxu0 0
        %10939 = vmatprep.subr.bf16.mxu0 0
        %10940 = vmatpush1.bf16.msra.mxu0 0
        %10941 = vmatprep.subr.bf16.mxu0 0
        %10942 = vmatpush1.bf16.msra.mxu0 0
        %10943 = vmatprep.subr.bf16.mxu0 0
        %10944 = vmatpush1.bf16.msra.mxu0 0
        %10945 = vmatprep.subr.bf16.mxu0 0
        %10946 = vmatpush1.bf16.msra.mxu0 0
        %10947 = vmatprep.subr.bf16.mxu0 0
        %10948 = vmatpush1.bf16.msra.mxu0 0
        %10949 = vmatprep.mubr.bf16.mxu0 0
        %10950 = vmatmul.mubr.bf16.gmra.mrb[0].mxu0 %v10598
        %v10951 = vpop.f32.mrb[0].mxu0
        %v10952 = vadd.f32 %v10889, %v10951
        %v10953 = vpop.f32.mrb[0].mxu0
        %v10954 = vadd.f32 %v10891, %v10953
        %v10955 = vpop.f32.mrb[0].mxu0
        %v10956 = vadd.f32 %v10893, %v10955
        %v10957 = vpop.f32.mrb[0].mxu0
        %v10958 = vadd.f32 %v10895, %v10957
        %10959 = vmatprep.mubr.bf16.mxu0 0
        %10960 = vmatmul.mubr.bf16.gmra.mrb[0].mxu0 %v10604
        %v10961 = vpop.f32.mrb[0].mxu0
        %v10962 = vadd.f32 %v10899, %v10961
        %v10963 = vpop.f32.mrb[0].mxu0
        %v10964 = vadd.f32 %v10901, %v10963
        %v10965 = vpop.f32.mrb[0].mxu0
        %v10966 = vadd.f32 %v10903, %v10965
        %v10967 = vpop.f32.mrb[0].mxu0
        %v10968 = vadd.f32 %v10905, %v10967
        %10969 = vmatprep.mubr.bf16.mxu0 0
        %10970 = vmatmul.mubr.bf16.gmra.mrb[0].mxu0 %v10603
        %v10971 = vpop.f32.mrb[0].mxu0
        %v10972 = vadd.f32 %v10909, %v10971
        %v10973 = vpop.f32.mrb[0].mxu0
        %v10974 = vadd.f32 %v10911, %v10973
        %v10975 = vpop.f32.mrb[0].mxu0
        %v10976 = vadd.f32 %v10913, %v10975
        %v10977 = vpop.f32.mrb[0].mxu0
        %v10978 = vadd.f32 %v10915, %v10977
        %10979 = vdwg.mxu0
        %v10980 = vadd.f32 %v10520, %v10952
        %v10981 = vadd.f32 %v10521, %v10954
        %v10982 = vadd.f32 %v10522, %v10956
        %v10983 = vadd.f32 %v10523, %v10958
        %v10984 = vadd.f32 %v10524, %v10962
        %v10985 = vadd.f32 %v10525, %v10964
        %v10986 = vadd.f32 %v10526, %v10966
        %v10987 = vadd.f32 %v10527, %v10968
        %v10988 = vadd.f32 %v10528, %v10972
        %v10989 = vadd.f32 %v10529, %v10974
        %v10990 = vadd.f32 %v10530, %v10976
        %v10991 = vadd.f32 %v10531, %v10978
        %v10992 = vmax.f32 %v10980, 0.0
        %v10993 = vmax.f32 %v10981, 0.0
        %v10994 = vmax.f32 %v10982, 0.0
        %v10995 = vmax.f32 %v10983, 0.0
        %v10996 = vmax.f32 %v10984, 0.0
        %v10997 = vmax.f32 %v10985, 0.0
        %v10998 = vmax.f32 %v10986, 0.0
        %v10999 = vmax.f32 %v10987, 0.0
        %v11000 = vmax.f32 %v10988, 0.0
        %v11001 = vmax.f32 %v10989, 0.0
        %v11002 = vmax.f32 %v10990, 0.0
        %v11003 = vmax.f32 %v10991, 0.0
        %v11004 = vpack.c.bf16 %v10994, %v10992
        %v11005 = vpack.c.bf16 %v10995, %v10993
        %v11006 = vpack.c.bf16 %v10998, %v10996
        %v11007 = vpack.c.bf16 %v10999, %v10997
        %v11008 = vpack.c.bf16 %v11002, %v11000
        %v11009 = vpack.c.bf16 %v11003, %v11001
        %v11010 = vld [vmem:[%s10] sm:$0x1]
        %v11011 = vld [vmem:[%s9] sm:$0xf]
        %v11012 = vld [vmem:[%s9 + $0x4] sm:$0xf]
        %v11013 = vld [vmem:[%s9 + $0x8] sm:$0xf]
        %v11014 = vld [vmem:[%s9 + $0xc] sm:$0xf]
        %v11015 = vld [vmem:[%s9 + $0x10] sm:$0xf]
        %v11016 = vld [vmem:[%s9 + $0x14] sm:$0xf]
        %v11017 = vld [vmem:[%s9 + $0x18] sm:$0xf]
        %v11018 = vld [vmem:[%s9 + $0x1c] sm:$0xf]
        %v11019 = vld [vmem:[%s9 + $0x20] sm:$0xf]
        %v11020 = vld [vmem:[%s9 + $0x24] sm:$0xf]
        %v11021 = vld [vmem:[%s9 + $0x28] sm:$0xf]
        %v11022 = vld [vmem:[%s9 + $0x2c] sm:$0xf]
        %v11023 = vld [vmem:[%s9 + $0x30] sm:$0xf]
        %v11024 = vld [vmem:[%s9 + $0x34] sm:$0xf]
        %v11025 = vld [vmem:[%s9 + $0x38] sm:$0xf]
        %v11026 = vld [vmem:[%s9 + $0x3c] sm:$0xf]
        %v11027 = vld [vmem:[%s9 + $0x40] sm:$0xf]
        %v11028 = vld [vmem:[%s9 + $0x44] sm:$0xf]
        %v11029 = vld [vmem:[%s9 + $0x48] sm:$0xf]
        %v11030 = vld [vmem:[%s9 + $0x4c] sm:$0xf]
        %v11031 = vld [vmem:[%s9 + $0x50] sm:$0xf]
        %v11032 = vld [vmem:[%s9 + $0x54] sm:$0xf]
        %v11033 = vld [vmem:[%s9 + $0x58] sm:$0xf]
        %v11034 = vld [vmem:[%s9 + $0x5c] sm:$0xf]
        %v11035 = vld [vmem:[%s9 + $0x60] sm:$0xf]
        %v11036 = vld [vmem:[%s9 + $0x64] sm:$0xf]
        %v11037 = vld [vmem:[%s9 + $0x68] sm:$0xf]
        %v11038 = vld [vmem:[%s9 + $0x6c] sm:$0xf]
        %v11039 = vld [vmem:[%s9 + $0x70] sm:$0xf]
        %v11040 = vld [vmem:[%s9 + $0x74] sm:$0xf]
        %v11041 = vld [vmem:[%s9 + $0x78] sm:$0xf]
        %v11042 = vld [vmem:[%s9 + $0x7c] sm:$0xf]
        %v11075 = vunpack.c.l.b16 %v11011
        %v11076 = vunpack.c.l.b16 %v11012
        %v11077 = vunpack.c.l.b16 %v11013
        %v11078 = vunpack.c.l.b16 %v11014
        %v11079 = vunpack.c.l.b16 %v11015
        %v11080 = vunpack.c.l.b16 %v11016
        %v11081 = vunpack.c.l.b16 %v11017
        %v11082 = vunpack.c.l.b16 %v11018
        %v11083 = vunpack.c.l.b16 %v11019
        %v11084 = vunpack.c.l.b16 %v11020
        %v11085 = vunpack.c.l.b16 %v11021
        %v11086 = vunpack.c.l.b16 %v11022
        %v11087 = vunpack.c.l.b16 %v11023
        %v11088 = vunpack.c.l.b16 %v11024
        %v11089 = vunpack.c.l.b16 %v11025
        %v11090 = vunpack.c.l.b16 %v11026
        %v11091 = vunpack.c.l.b16 %v11027
        %v11092 = vunpack.c.l.b16 %v11028
        %v11093 = vunpack.c.l.b16 %v11029
        %v11094 = vunpack.c.l.b16 %v11030
        %v11095 = vunpack.c.l.b16 %v11031
        %v11096 = vunpack.c.l.b16 %v11032
        %v11097 = vunpack.c.l.b16 %v11033
        %v11098 = vunpack.c.l.b16 %v11034
        %v11099 = vunpack.c.l.b16 %v11035
        %v11100 = vunpack.c.l.b16 %v11036
        %v11101 = vunpack.c.l.b16 %v11037
        %v11102 = vunpack.c.l.b16 %v11038
        %v11103 = vunpack.c.l.b16 %v11039
        %v11104 = vunpack.c.l.b16 %v11040
        %v11105 = vunpack.c.l.b16 %v11041
        %v11106 = vunpack.c.l.b16 %v11042
        %v11107 = vpack.c.b16 %v11076, %v11075
        %v11108 = vpack.c.b16 %v11078, %v11077
        %v11109 = vpack.c.b16 %v11080, %v11079
        %v11110 = vpack.c.b16 %v11082, %v11081
        %v11111 = vpack.c.b16 %v11084, %v11083
        %v11112 = vpack.c.b16 %v11086, %v11085
        %v11113 = vpack.c.b16 %v11088, %v11087
        %v11114 = vpack.c.b16 %v11090, %v11089
        %v11115 = vpack.c.b16 %v11092, %v11091
        %v11116 = vpack.c.b16 %v11094, %v11093
        %v11117 = vpack.c.b16 %v11096, %v11095
        %v11118 = vpack.c.b16 %v11098, %v11097
        %v11119 = vpack.c.b16 %v11100, %v11099
        %v11120 = vpack.c.b16 %v11102, %v11101
        %v11121 = vpack.c.b16 %v11104, %v11103
        %v11122 = vpack.c.b16 %v11106, %v11105
        %11139 = vmatprep.subr.bf16.mxu0 0
        %11140 = vmatpush1.bf16.msra.mxu0 %v11107
        %11141 = vmatprep.subr.bf16.mxu0 0
        %11142 = vmatpush1.bf16.msra.mxu0 %v11108
        %11143 = vmatprep.subr.bf16.mxu0 0
        %11144 = vmatpush1.bf16.msra.mxu0 %v11109
        %11145 = vmatprep.subr.bf16.mxu0 0
        %11146 = vmatpush1.bf16.msra.mxu0 %v11110
        %11147 = vmatprep.subr.bf16.mxu0 0
        %11148 = vmatpush1.bf16.msra.mxu0 %v11111
        %11149 = vmatprep.subr.bf16.mxu0 0
        %11150 = vmatpush1.bf16.msra.mxu0 %v11112
        %11151 = vmatprep.subr.bf16.mxu0 0
        %11152 = vmatpush1.bf16.msra.mxu0 %v11113
        %11153 = vmatprep.subr.bf16.mxu0 0
        %11154 = vmatpush1.bf16.msra.mxu0 %v11114
        %11155 = vmatprep.subr.bf16.mxu0 0
        %11156 = vmatpush1.bf16.msra.mxu0 %v11115
        %11157 = vmatprep.subr.bf16.mxu0 0
        %11158 = vmatpush1.bf16.msra.mxu0 %v11116
        %11159 = vmatprep.subr.bf16.mxu0 0
        %11160 = vmatpush1.bf16.msra.mxu0 %v11117
        %11161 = vmatprep.subr.bf16.mxu0 0
        %11162 = vmatpush1.bf16.msra.mxu0 %v11118
        %11163 = vmatprep.subr.bf16.mxu0 0
        %11164 = vmatpush1.bf16.msra.mxu0 %v11119
        %11165 = vmatprep.subr.bf16.mxu0 0
        %11166 = vmatpush1.bf16.msra.mxu0 %v11120
        %11167 = vmatprep.subr.bf16.mxu0 0
        %11168 = vmatpush1.bf16.msra.mxu0 %v11121
        %11169 = vmatprep.subr.bf16.mxu0 0
        %11170 = vmatpush1.bf16.msra.mxu0 %v11122
        %11171 = vmatprep.mubr.bf16.mxu0 %v11005
        %11172 = vmatmul.mubr.bf16.gmra.mrb[0].mxu0 %v11004
        %v11173 = vpop.f32.mrb[0].mxu0
        %v11174 = vadd.f32 0.0, %v11173
        %v11175 = vpop.f32.mrb[0].mxu0
        %v11176 = vpop.f32.mrb[0].mxu0
        %v11177 = vadd.f32 0.0, %v11176
        %v11178 = vpop.f32.mrb[0].mxu0
        %11179 = vmatprep.mubr.bf16.mxu0 %v11007
        %11180 = vmatmul.mubr.bf16.gmra.mrb[0].mxu0 %v11006
        %v11181 = vpop.f32.mrb[0].mxu0
        %v11182 = vadd.f32 0.0, %v11181
        %v11183 = vpop.f32.mrb[0].mxu0
        %v11184 = vpop.f32.mrb[0].mxu0
        %v11185 = vadd.f32 0.0, %v11184
        %v11186 = vpop.f32.mrb[0].mxu0
        %11187 = vmatprep.mubr.bf16.mxu0 %v11009
        %11188 = vmatmul.mubr.bf16.gmra.mrb[0].mxu0 %v11008
        %v11189 = vpop.f32.mrb[0].mxu0
        %v11190 = vadd.f32 0.0, %v11189
        %v11191 = vpop.f32.mrb[0].mxu0
        %v11192 = vpop.f32.mrb[0].mxu0
        %v11193 = vadd.f32 0.0, %v11192
        %v11194 = vpop.f32.mrb[0].mxu0
        %11195 = vdwg.mxu0
        %v11197 = vlaneseq
        %v11198 = vshrl.u32 %v11197, 7
        %v11199 = vsub.s32 0, %v11198
        %v11200 = vrot.slane %v11010, %v11199
        %v11202 = vadd.f32 %v11200, %v11174
        %v11203 = vadd.f32 %v11200, %v11177
        %v11204 = vadd.f32 %v11200, %v11182
        %v11205 = vadd.f32 %v11200, %v11185
        %v11206 = vadd.f32 %v11200, %v11190
        %v11207 = vadd.f32 %v11200, %v11193
        %v11208 = vld [vmem:[%s9 + $0x80] sm:$0xf]
        %v11209 = vld [vmem:[%s9 + $0x84] sm:$0xf]
        %v11210 = vld [vmem:[%s9 + $0x88] sm:$0xf]
        %v11211 = vld [vmem:[%s9 + $0x8c] sm:$0xf]
        %v11212 = vld [vmem:[%s9 + $0x90] sm:$0xf]
        %v11213 = vld [vmem:[%s9 + $0x94] sm:$0xf]
        %v11214 = vld [vmem:[%s9 + $0x98] sm:$0xf]
        %v11215 = vld [vmem:[%s9 + $0x9c] sm:$0xf]
        %v11216 = vld [vmem:[%s9 + $0xa0] sm:$0xf]
        %v11217 = vld [vmem:[%s9 + $0xa4] sm:$0xf]
        %v11218 = vld [vmem:[%s9 + $0xa8] sm:$0xf]
        %v11219 = vld [vmem:[%s9 + $0xac] sm:$0xf]
        %v11220 = vld [vmem:[%s9 + $0xb0] sm:$0xf]
        %v11221 = vld [vmem:[%s9 + $0xb4] sm:$0xf]
        %v11222 = vld [vmem:[%s9 + $0xb8] sm:$0xf]
        %v11223 = vld [vmem:[%s9 + $0xbc] sm:$0xf]
        %v11224 = vld [vmem:[%s9 + $0xc0] sm:$0xf]
        %v11225 = vld [vmem:[%s9 + $0xc4] sm:$0xf]
        %v11226 = vld [vmem:[%s9 + $0xc8] sm:$0xf]
        %v11227 = vld [vmem:[%s9 + $0xcc] sm:$0xf]
        %v11228 = vld [vmem:[%s9 + $0xd0] sm:$0xf]
        %v11229 = vld [vmem:[%s9 + $0xd4] sm:$0xf]
        %v11230 = vld [vmem:[%s9 + $0xd8] sm:$0xf]
        %v11231 = vld [vmem:[%s9 + $0xdc] sm:$0xf]
        %v11232 = vld [vmem:[%s9 + $0xe0] sm:$0xf]
        %v11233 = vld [vmem:[%s9 + $0xe4] sm:$0xf]
        %v11234 = vld [vmem:[%s9 + $0xe8] sm:$0xf]
        %v11235 = vld [vmem:[%s9 + $0xec] sm:$0xf]
        %v11236 = vld [vmem:[%s9 + $0xf0] sm:$0xf]
        %v11237 = vld [vmem:[%s9 + $0xf4] sm:$0xf]
        %v11238 = vld [vmem:[%s9 + $0xf8] sm:$0xf]
        %v11239 = vld [vmem:[%s9 + $0xfc] sm:$0xf]
        %v11241 = vshrl.u32 %v11004, 16
        %v11243 = vshll.u32 %v11004, 16
        %v11245 = vrot.slane %v11243, 1
        %v11246 = vor.u32 %v11241, %v11245
        %v11248 = vshll.u32 %v11006, 16
        %v11250 = vrot.slane %v11248, 1
        %v11251 = vsel %vm2042, %v11246, %v11250
        %v11253 = vshrl.u32 %v11005, 16
        %v11255 = vshll.u32 %v11005, 16
        %v11257 = vrot.slane %v11255, 1
        %v11258 = vor.u32 %v11253, %v11257
        %v11260 = vshll.u32 %v11007, 16
        %v11262 = vrot.slane %v11260, 1
        %v11263 = vsel %vm2042, %v11258, %v11262
        %v11264 = vshrl.u32 %v11006, 16
        %v11266 = vor.u32 %v11264, %v11250
        %v11268 = vshll.u32 %v11008, 16
        %v11270 = vrot.slane %v11268, 1
        %v11271 = vsel %vm2042, %v11266, %v11270
        %v11272 = vshrl.u32 %v11007, 16
        %v11274 = vor.u32 %v11272, %v11262
        %v11276 = vshll.u32 %v11009, 16
        %v11278 = vrot.slane %v11276, 1
        %v11279 = vsel %vm2042, %v11274, %v11278
        %v11280 = vshrl.u32 %v11008, 16
        %v11282 = vor.u32 %v11280, %v11270
        %v11283 = vshrl.u32 %v11009, 16
        %v11285 = vor.u32 %v11283, %v11278
        %v11324 = vunpack.c.l.b16 %v11208
        %v11325 = vunpack.c.l.b16 %v11209
        %v11326 = vunpack.c.l.b16 %v11210
        %v11327 = vunpack.c.l.b16 %v11211
        %v11328 = vunpack.c.l.b16 %v11212
        %v11329 = vunpack.c.l.b16 %v11213
        %v11330 = vunpack.c.l.b16 %v11214
        %v11331 = vunpack.c.l.b16 %v11215
        %v11332 = vunpack.c.l.b16 %v11216
        %v11333 = vunpack.c.l.b16 %v11217
        %v11334 = vunpack.c.l.b16 %v11218
        %v11335 = vunpack.c.l.b16 %v11219
        %v11336 = vunpack.c.l.b16 %v11220
        %v11337 = vunpack.c.l.b16 %v11221
        %v11338 = vunpack.c.l.b16 %v11222
        %v11339 = vunpack.c.l.b16 %v11223
        %v11340 = vunpack.c.l.b16 %v11224
        %v11341 = vunpack.c.l.b16 %v11225
        %v11342 = vunpack.c.l.b16 %v11226
        %v11343 = vunpack.c.l.b16 %v11227
        %v11344 = vunpack.c.l.b16 %v11228
        %v11345 = vunpack.c.l.b16 %v11229
        %v11346 = vunpack.c.l.b16 %v11230
        %v11347 = vunpack.c.l.b16 %v11231
        %v11348 = vunpack.c.l.b16 %v11232
        %v11349 = vunpack.c.l.b16 %v11233
        %v11350 = vunpack.c.l.b16 %v11234
        %v11351 = vunpack.c.l.b16 %v11235
        %v11352 = vunpack.c.l.b16 %v11236
        %v11353 = vunpack.c.l.b16 %v11237
        %v11354 = vunpack.c.l.b16 %v11238
        %v11355 = vunpack.c.l.b16 %v11239
        %v11356 = vpack.c.b16 %v11325, %v11324
        %v11357 = vpack.c.b16 %v11327, %v11326
        %v11358 = vpack.c.b16 %v11329, %v11328
        %v11359 = vpack.c.b16 %v11331, %v11330
        %v11360 = vpack.c.b16 %v11333, %v11332
        %v11361 = vpack.c.b16 %v11335, %v11334
        %v11362 = vpack.c.b16 %v11337, %v11336
        %v11363 = vpack.c.b16 %v11339, %v11338
        %v11364 = vpack.c.b16 %v11341, %v11340
        %v11365 = vpack.c.b16 %v11343, %v11342
        %v11366 = vpack.c.b16 %v11345, %v11344
        %v11367 = vpack.c.b16 %v11347, %v11346
        %v11368 = vpack.c.b16 %v11349, %v11348
        %v11369 = vpack.c.b16 %v11351, %v11350
        %v11370 = vpack.c.b16 %v11353, %v11352
        %v11371 = vpack.c.b16 %v11355, %v11354
        %11388 = vmatprep.subr.bf16.mxu0 0
        %11389 = vmatpush1.bf16.msra.mxu0 %v11356
        %11390 = vmatprep.subr.bf16.mxu0 0
        %11391 = vmatpush1.bf16.msra.mxu0 %v11357
        %11392 = vmatprep.subr.bf16.mxu0 0
        %11393 = vmatpush1.bf16.msra.mxu0 %v11358
        %11394 = vmatprep.subr.bf16.mxu0 0
        %11395 = vmatpush1.bf16.msra.mxu0 %v11359
        %11396 = vmatprep.subr.bf16.mxu0 0
        %11397 = vmatpush1.bf16.msra.mxu0 %v11360
        %11398 = vmatprep.subr.bf16.mxu0 0
        %11399 = vmatpush1.bf16.msra.mxu0 %v11361
        %11400 = vmatprep.subr.bf16.mxu0 0
        %11401 = vmatpush1.bf16.msra.mxu0 %v11362
        %11402 = vmatprep.subr.bf16.mxu0 0
        %11403 = vmatpush1.bf16.msra.mxu0 %v11363
        %11404 = vmatprep.subr.bf16.mxu0 0
        %11405 = vmatpush1.bf16.msra.mxu0 %v11364
        %11406 = vmatprep.subr.bf16.mxu0 0
        %11407 = vmatpush1.bf16.msra.mxu0 %v11365
        %11408 = vmatprep.subr.bf16.mxu0 0
        %11409 = vmatpush1.bf16.msra.mxu0 %v11366
        %11410 = vmatprep.subr.bf16.mxu0 0
        %11411 = vmatpush1.bf16.msra.mxu0 %v11367
        %11412 = vmatprep.subr.bf16.mxu0 0
        %11413 = vmatpush1.bf16.msra.mxu0 %v11368
        %11414 = vmatprep.subr.bf16.mxu0 0
        %11415 = vmatpush1.bf16.msra.mxu0 %v11369
        %11416 = vmatprep.subr.bf16.mxu0 0
        %11417 = vmatpush1.bf16.msra.mxu0 %v11370
        %11418 = vmatprep.subr.bf16.mxu0 0
        %11419 = vmatpush1.bf16.msra.mxu0 %v11371
        %11420 = vmatprep.mubr.bf16.mxu0 %v11263
        %11421 = vmatmul.mubr.bf16.gmra.mrb[0].mxu0 %v11251
        %v11422 = vpop.f32.mrb[0].mxu0
        %v11423 = vadd.f32 0.0, %v11422
        %v11424 = vpop.f32.mrb[0].mxu0
        %v11425 = vpop.f32.mrb[0].mxu0
        %v11426 = vadd.f32 0.0, %v11425
        %v11427 = vpop.f32.mrb[0].mxu0
        %11428 = vmatprep.mubr.bf16.mxu0 %v11279
        %11429 = vmatmul.mubr.bf16.gmra.mrb[0].mxu0 %v11271
        %v11430 = vpop.f32.mrb[0].mxu0
        %v11431 = vadd.f32 0.0, %v11430
        %v11432 = vpop.f32.mrb[0].mxu0
        %v11433 = vpop.f32.mrb[0].mxu0
        %v11434 = vadd.f32 0.0, %v11433
        %v11435 = vpop.f32.mrb[0].mxu0
        %11436 = vmatprep.mubr.bf16.mxu0 %v11285
        %11437 = vmatmul.mubr.bf16.gmra.mrb[0].mxu0 %v11282
        %v11438 = vpop.f32.mrb[0].mxu0
        %v11439 = vadd.f32 0.0, %v11438
        %v11440 = vpop.f32.mrb[0].mxu0
        %v11441 = vpop.f32.mrb[0].mxu0
        %v11442 = vadd.f32 0.0, %v11441
        %v11443 = vpop.f32.mrb[0].mxu0
        %11444 = vdwg.mxu0
        %v11445 = vadd.f32 %v11202, %v11423
        %v11446 = vadd.f32 %v11203, %v11426
        %v11447 = vadd.f32 %v11204, %v11431
        %v11448 = vadd.f32 %v11205, %v11434
        %v11449 = vadd.f32 %v11206, %v11439
        %v11450 = vadd.f32 %v11207, %v11442
        %v11451 = vld [vmem:[%s9 + $0x100] sm:$0xf]
        %v11452 = vld [vmem:[%s9 + $0x104] sm:$0xf]
        %v11453 = vld [vmem:[%s9 + $0x108] sm:$0xf]
        %v11454 = vld [vmem:[%s9 + $0x10c] sm:$0xf]
        %v11455 = vld [vmem:[%s9 + $0x110] sm:$0xf]
        %v11456 = vld [vmem:[%s9 + $0x114] sm:$0xf]
        %v11457 = vld [vmem:[%s9 + $0x118] sm:$0xf]
        %v11458 = vld [vmem:[%s9 + $0x11c] sm:$0xf]
        %v11459 = vld [vmem:[%s9 + $0x120] sm:$0xf]
        %v11460 = vld [vmem:[%s9 + $0x124] sm:$0xf]
        %v11461 = vld [vmem:[%s9 + $0x128] sm:$0xf]
        %v11462 = vld [vmem:[%s9 + $0x12c] sm:$0xf]
        %v11463 = vld [vmem:[%s9 + $0x130] sm:$0xf]
        %v11464 = vld [vmem:[%s9 + $0x134] sm:$0xf]
        %v11465 = vld [vmem:[%s9 + $0x138] sm:$0xf]
        %v11466 = vld [vmem:[%s9 + $0x13c] sm:$0xf]
        %v11467 = vld [vmem:[%s9 + $0x140] sm:$0xf]
        %v11468 = vld [vmem:[%s9 + $0x144] sm:$0xf]
        %v11469 = vld [vmem:[%s9 + $0x148] sm:$0xf]
        %v11470 = vld [vmem:[%s9 + $0x14c] sm:$0xf]
        %v11471 = vld [vmem:[%s9 + $0x150] sm:$0xf]
        %v11472 = vld [vmem:[%s9 + $0x154] sm:$0xf]
        %v11473 = vld [vmem:[%s9 + $0x158] sm:$0xf]
        %v11474 = vld [vmem:[%s9 + $0x15c] sm:$0xf]
        %v11475 = vld [vmem:[%s9 + $0x160] sm:$0xf]
        %v11476 = vld [vmem:[%s9 + $0x164] sm:$0xf]
        %v11477 = vld [vmem:[%s9 + $0x168] sm:$0xf]
        %v11478 = vld [vmem:[%s9 + $0x16c] sm:$0xf]
        %v11479 = vld [vmem:[%s9 + $0x170] sm:$0xf]
        %v11480 = vld [vmem:[%s9 + $0x174] sm:$0xf]
        %v11481 = vld [vmem:[%s9 + $0x178] sm:$0xf]
        %v11482 = vld [vmem:[%s9 + $0x17c] sm:$0xf]
        %v11489 = vrot.slane %v11004, 1
        %v11490 = vrot.slane %v11006, 1
        %v11491 = vsel %vm7252, %v11489, %v11490
        %v11492 = vrot.slane %v11005, 1
        %v11493 = vrot.slane %v11007, 1
        %v11494 = vsel %vm7252, %v11492, %v11493
        %v11495 = vrot.slane %v11008, 1
        %v11496 = vsel %vm7252, %v11490, %v11495
        %v11497 = vrot.slane %v11009, 1
        %v11498 = vsel %vm7252, %v11493, %v11497
        %v11537 = vunpack.c.l.b16 %v11451
        %v11538 = vunpack.c.l.b16 %v11452
        %v11539 = vunpack.c.l.b16 %v11453
        %v11540 = vunpack.c.l.b16 %v11454
        %v11541 = vunpack.c.l.b16 %v11455
        %v11542 = vunpack.c.l.b16 %v11456
        %v11543 = vunpack.c.l.b16 %v11457
        %v11544 = vunpack.c.l.b16 %v11458
        %v11545 = vunpack.c.l.b16 %v11459
        %v11546 = vunpack.c.l.b16 %v11460
        %v11547 = vunpack.c.l.b16 %v11461
        %v11548 = vunpack.c.l.b16 %v11462
        %v11549 = vunpack.c.l.b16 %v11463
        %v11550 = vunpack.c.l.b16 %v11464
        %v11551 = vunpack.c.l.b16 %v11465
        %v11552 = vunpack.c.l.b16 %v11466
        %v11553 = vunpack.c.l.b16 %v11467
        %v11554 = vunpack.c.l.b16 %v11468
        %v11555 = vunpack.c.l.b16 %v11469
        %v11556 = vunpack.c.l.b16 %v11470
        %v11557 = vunpack.c.l.b16 %v11471
        %v11558 = vunpack.c.l.b16 %v11472
        %v11559 = vunpack.c.l.b16 %v11473
        %v11560 = vunpack.c.l.b16 %v11474
        %v11561 = vunpack.c.l.b16 %v11475
        %v11562 = vunpack.c.l.b16 %v11476
        %v11563 = vunpack.c.l.b16 %v11477
        %v11564 = vunpack.c.l.b16 %v11478
        %v11565 = vunpack.c.l.b16 %v11479
        %v11566 = vunpack.c.l.b16 %v11480
        %v11567 = vunpack.c.l.b16 %v11481
        %v11568 = vunpack.c.l.b16 %v11482
        %v11569 = vpack.c.b16 %v11538, %v11537
        %v11570 = vpack.c.b16 %v11540, %v11539
        %v11571 = vpack.c.b16 %v11542, %v11541
        %v11572 = vpack.c.b16 %v11544, %v11543
        %v11573 = vpack.c.b16 %v11546, %v11545
        %v11574 = vpack.c.b16 %v11548, %v11547
        %v11575 = vpack.c.b16 %v11550, %v11549
        %v11576 = vpack.c.b16 %v11552, %v11551
        %v11577 = vpack.c.b16 %v11554, %v11553
        %v11578 = vpack.c.b16 %v11556, %v11555
        %v11579 = vpack.c.b16 %v11558, %v11557
        %v11580 = vpack.c.b16 %v11560, %v11559
        %v11581 = vpack.c.b16 %v11562, %v11561
        %v11582 = vpack.c.b16 %v11564, %v11563
        %v11583 = vpack.c.b16 %v11566, %v11565
        %v11584 = vpack.c.b16 %v11568, %v11567
        %11601 = vmatprep.subr.bf16.mxu0 0
        %11602 = vmatpush1.bf16.msra.mxu0 %v11569
        %11603 = vmatprep.subr.bf16.mxu0 0
        %11604 = vmatpush1.bf16.msra.mxu0 %v11570
        %11605 = vmatprep.subr.bf16.mxu0 0
        %11606 = vmatpush1.bf16.msra.mxu0 %v11571
        %11607 = vmatprep.subr.bf16.mxu0 0
        %11608 = vmatpush1.bf16.msra.mxu0 %v11572
        %11609 = vmatprep.subr.bf16.mxu0 0
        %11610 = vmatpush1.bf16.msra.mxu0 %v11573
        %11611 = vmatprep.subr.bf16.mxu0 0
        %11612 = vmatpush1.bf16.msra.mxu0 %v11574
        %11613 = vmatprep.subr.bf16.mxu0 0
        %11614 = vmatpush1.bf16.msra.mxu0 %v11575
        %11615 = vmatprep.subr.bf16.mxu0 0
        %11616 = vmatpush1.bf16.msra.mxu0 %v11576
        %11617 = vmatprep.subr.bf16.mxu0 0
        %11618 = vmatpush1.bf16.msra.mxu0 %v11577
        %11619 = vmatprep.subr.bf16.mxu0 0
        %11620 = vmatpush1.bf16.msra.mxu0 %v11578
        %11621 = vmatprep.subr.bf16.mxu0 0
        %11622 = vmatpush1.bf16.msra.mxu0 %v11579
        %11623 = vmatprep.subr.bf16.mxu0 0
        %11624 = vmatpush1.bf16.msra.mxu0 %v11580
        %11625 = vmatprep.subr.bf16.mxu0 0
        %11626 = vmatpush1.bf16.msra.mxu0 %v11581
        %11627 = vmatprep.subr.bf16.mxu0 0
        %11628 = vmatpush1.bf16.msra.mxu0 %v11582
        %11629 = vmatprep.subr.bf16.mxu0 0
        %11630 = vmatpush1.bf16.msra.mxu0 %v11583
        %11631 = vmatprep.subr.bf16.mxu0 0
        %11632 = vmatpush1.bf16.msra.mxu0 %v11584
        %11633 = vmatprep.mubr.bf16.mxu0 %v11494
        %11634 = vmatmul.mubr.bf16.gmra.mrb[0].mxu0 %v11491
        %v11635 = vpop.f32.mrb[0].mxu0
        %v11636 = vadd.f32 0.0, %v11635
        %v11637 = vpop.f32.mrb[0].mxu0
        %v11638 = vpop.f32.mrb[0].mxu0
        %v11639 = vadd.f32 0.0, %v11638
        %v11640 = vpop.f32.mrb[0].mxu0
        %11641 = vmatprep.mubr.bf16.mxu0 %v11498
        %11642 = vmatmul.mubr.bf16.gmra.mrb[0].mxu0 %v11496
        %v11643 = vpop.f32.mrb[0].mxu0
        %v11644 = vadd.f32 0.0, %v11643
        %v11645 = vpop.f32.mrb[0].mxu0
        %v11646 = vpop.f32.mrb[0].mxu0
        %v11647 = vadd.f32 0.0, %v11646
        %v11648 = vpop.f32.mrb[0].mxu0
        %11649 = vmatprep.mubr.bf16.mxu0 %v11497
        %11650 = vmatmul.mubr.bf16.gmra.mrb[0].mxu0 %v11495
        %v11651 = vpop.f32.mrb[0].mxu0
        %v11652 = vadd.f32 0.0, %v11651
        %v11653 = vpop.f32.mrb[0].mxu0
        %v11654 = vpop.f32.mrb[0].mxu0
        %v11655 = vadd.f32 0.0, %v11654
        %v11656 = vpop.f32.mrb[0].mxu0
        %11657 = vdwg.mxu0
        %v11658 = vadd.f32 %v11445, %v11636
        %v11659 = vadd.f32 %v11446, %v11639
        %v11660 = vadd.f32 %v11447, %v11644
        %v11661 = vadd.f32 %v11448, %v11647
        %v11662 = vadd.f32 %v11449, %v11652
        %v11663 = vadd.f32 %v11450, %v11655
        %v11664 = vld [vmem:[%s9 + $0x180] sm:$0xf]
        %v11665 = vld [vmem:[%s9 + $0x184] sm:$0xf]
        %v11666 = vld [vmem:[%s9 + $0x188] sm:$0xf]
        %v11667 = vld [vmem:[%s9 + $0x18c] sm:$0xf]
        %v11668 = vld [vmem:[%s9 + $0x190] sm:$0xf]
        %v11669 = vld [vmem:[%s9 + $0x194] sm:$0xf]
        %v11670 = vld [vmem:[%s9 + $0x198] sm:$0xf]
        %v11671 = vld [vmem:[%s9 + $0x19c] sm:$0xf]
        %v11672 = vld [vmem:[%s9 + $0x1a0] sm:$0xf]
        %v11673 = vld [vmem:[%s9 + $0x1a4] sm:$0xf]
        %v11674 = vld [vmem:[%s9 + $0x1a8] sm:$0xf]
        %v11675 = vld [vmem:[%s9 + $0x1ac] sm:$0xf]
        %v11676 = vld [vmem:[%s9 + $0x1b0] sm:$0xf]
        %v11677 = vld [vmem:[%s9 + $0x1b4] sm:$0xf]
        %v11678 = vld [vmem:[%s9 + $0x1b8] sm:$0xf]
        %v11679 = vld [vmem:[%s9 + $0x1bc] sm:$0xf]
        %v11680 = vld [vmem:[%s9 + $0x1c0] sm:$0xf]
        %v11681 = vld [vmem:[%s9 + $0x1c4] sm:$0xf]
        %v11682 = vld [vmem:[%s9 + $0x1c8] sm:$0xf]
        %v11683 = vld [vmem:[%s9 + $0x1cc] sm:$0xf]
        %v11684 = vld [vmem:[%s9 + $0x1d0] sm:$0xf]
        %v11685 = vld [vmem:[%s9 + $0x1d4] sm:$0xf]
        %v11686 = vld [vmem:[%s9 + $0x1d8] sm:$0xf]
        %v11687 = vld [vmem:[%s9 + $0x1dc] sm:$0xf]
        %v11688 = vld [vmem:[%s9 + $0x1e0] sm:$0xf]
        %v11689 = vld [vmem:[%s9 + $0x1e4] sm:$0xf]
        %v11690 = vld [vmem:[%s9 + $0x1e8] sm:$0xf]
        %v11691 = vld [vmem:[%s9 + $0x1ec] sm:$0xf]
        %v11692 = vld [vmem:[%s9 + $0x1f0] sm:$0xf]
        %v11693 = vld [vmem:[%s9 + $0x1f4] sm:$0xf]
        %v11694 = vld [vmem:[%s9 + $0x1f8] sm:$0xf]
        %v11695 = vld [vmem:[%s9 + $0x1fc] sm:$0xf]
        %vm11696 = vsmask.f32 6400
        %v11697 = vrot.slane %v11241, 1
        %v11698 = vrot.slane %v11243, 2
        %v11699 = vor.u32 %v11697, %v11698
        %v11700 = vrot.slane %v11264, 1
        %v11701 = vrot.slane %v11248, 2
        %v11702 = vor.u32 %v11700, %v11701
        %v11703 = vsel %vm11696, %v11699, %v11702
        %v11704 = vrot.slane %v11253, 1
        %v11705 = vrot.slane %v11255, 2
        %v11706 = vor.u32 %v11704, %v11705
        %v11707 = vrot.slane %v11272, 1
        %v11708 = vrot.slane %v11260, 2
        %v11709 = vor.u32 %v11707, %v11708
        %v11710 = vsel %vm11696, %v11706, %v11709
        %v11711 = vrot.slane %v11280, 1
        %v11712 = vrot.slane %v11268, 2
        %v11713 = vor.u32 %v11711, %v11712
        %v11714 = vsel %vm11696, %v11702, %v11713
        %v11715 = vrot.slane %v11283, 1
        %v11716 = vrot.slane %v11276, 2
        %v11717 = vor.u32 %v11715, %v11716
        %v11718 = vsel %vm11696, %v11709, %v11717
        %v11757 = vunpack.c.l.b16 %v11664
        %v11758 = vunpack.c.l.b16 %v11665
        %v11759 = vunpack.c.l.b16 %v11666
        %v11760 = vunpack.c.l.b16 %v11667
        %v11761 = vunpack.c.l.b16 %v11668
        %v11762 = vunpack.c.l.b16 %v11669
        %v11763 = vunpack.c.l.b16 %v11670
        %v11764 = vunpack.c.l.b16 %v11671
        %v11765 = vunpack.c.l.b16 %v11672
        %v11766 = vunpack.c.l.b16 %v11673
        %v11767 = vunpack.c.l.b16 %v11674
        %v11768 = vunpack.c.l.b16 %v11675
        %v11769 = vunpack.c.l.b16 %v11676
        %v11770 = vunpack.c.l.b16 %v11677
        %v11771 = vunpack.c.l.b16 %v11678
        %v11772 = vunpack.c.l.b16 %v11679
        %v11773 = vunpack.c.l.b16 %v11680
        %v11774 = vunpack.c.l.b16 %v11681
        %v11775 = vunpack.c.l.b16 %v11682
        %v11776 = vunpack.c.l.b16 %v11683
        %v11777 = vunpack.c.l.b16 %v11684
        %v11778 = vunpack.c.l.b16 %v11685
        %v11779 = vunpack.c.l.b16 %v11686
        %v11780 = vunpack.c.l.b16 %v11687
        %v11781 = vunpack.c.l.b16 %v11688
        %v11782 = vunpack.c.l.b16 %v11689
        %v11783 = vunpack.c.l.b16 %v11690
        %v11784 = vunpack.c.l.b16 %v11691
        %v11785 = vunpack.c.l.b16 %v11692
        %v11786 = vunpack.c.l.b16 %v11693
        %v11787 = vunpack.c.l.b16 %v11694
        %v11788 = vunpack.c.l.b16 %v11695
        %v11789 = vpack.c.b16 %v11758, %v11757
        %v11790 = vpack.c.b16 %v11760, %v11759
        %v11791 = vpack.c.b16 %v11762, %v11761
        %v11792 = vpack.c.b16 %v11764, %v11763
        %v11793 = vpack.c.b16 %v11766, %v11765
        %v11794 = vpack.c.b16 %v11768, %v11767
        %v11795 = vpack.c.b16 %v11770, %v11769
        %v11796 = vpack.c.b16 %v11772, %v11771
        %v11797 = vpack.c.b16 %v11774, %v11773
        %v11798 = vpack.c.b16 %v11776, %v11775
        %v11799 = vpack.c.b16 %v11778, %v11777
        %v11800 = vpack.c.b16 %v11780, %v11779
        %v11801 = vpack.c.b16 %v11782, %v11781
        %v11802 = vpack.c.b16 %v11784, %v11783
        %v11803 = vpack.c.b16 %v11786, %v11785
        %v11804 = vpack.c.b16 %v11788, %v11787
        %11821 = vmatprep.subr.bf16.mxu0 0
        %11822 = vmatpush1.bf16.msra.mxu0 %v11789
        %11823 = vmatprep.subr.bf16.mxu0 0
        %11824 = vmatpush1.bf16.msra.mxu0 %v11790
        %11825 = vmatprep.subr.bf16.mxu0 0
        %11826 = vmatpush1.bf16.msra.mxu0 %v11791
        %11827 = vmatprep.subr.bf16.mxu0 0
        %11828 = vmatpush1.bf16.msra.mxu0 %v11792
        %11829 = vmatprep.subr.bf16.mxu0 0
        %11830 = vmatpush1.bf16.msra.mxu0 %v11793
        %11831 = vmatprep.subr.bf16.mxu0 0
        %11832 = vmatpush1.bf16.msra.mxu0 %v11794
        %11833 = vmatprep.subr.bf16.mxu0 0
        %11834 = vmatpush1.bf16.msra.mxu0 %v11795
        %11835 = vmatprep.subr.bf16.mxu0 0
        %11836 = vmatpush1.bf16.msra.mxu0 %v11796
        %11837 = vmatprep.subr.bf16.mxu0 0
        %11838 = vmatpush1.bf16.msra.mxu0 %v11797
        %11839 = vmatprep.subr.bf16.mxu0 0
        %11840 = vmatpush1.bf16.msra.mxu0 %v11798
        %11841 = vmatprep.subr.bf16.mxu0 0
        %11842 = vmatpush1.bf16.msra.mxu0 %v11799
        %11843 = vmatprep.subr.bf16.mxu0 0
        %11844 = vmatpush1.bf16.msra.mxu0 %v11800
        %11845 = vmatprep.subr.bf16.mxu0 0
        %11846 = vmatpush1.bf16.msra.mxu0 %v11801
        %11847 = vmatprep.subr.bf16.mxu0 0
        %11848 = vmatpush1.bf16.msra.mxu0 %v11802
        %11849 = vmatprep.subr.bf16.mxu0 0
        %11850 = vmatpush1.bf16.msra.mxu0 %v11803
        %11851 = vmatprep.subr.bf16.mxu0 0
        %11852 = vmatpush1.bf16.msra.mxu0 %v11804
        %11853 = vmatprep.mubr.bf16.mxu0 %v11710
        %11854 = vmatmul.mubr.bf16.gmra.mrb[0].mxu0 %v11703
        %v11855 = vpop.f32.mrb[0].mxu0
        %v11856 = vadd.f32 0.0, %v11855
        %v11857 = vpop.f32.mrb[0].mxu0
        %v11858 = vpop.f32.mrb[0].mxu0
        %v11859 = vadd.f32 0.0, %v11858
        %v11860 = vpop.f32.mrb[0].mxu0
        %11861 = vmatprep.mubr.bf16.mxu0 %v11718
        %11862 = vmatmul.mubr.bf16.gmra.mrb[0].mxu0 %v11714
        %v11863 = vpop.f32.mrb[0].mxu0
        %v11864 = vadd.f32 0.0, %v11863
        %v11865 = vpop.f32.mrb[0].mxu0
        %v11866 = vpop.f32.mrb[0].mxu0
        %v11867 = vadd.f32 0.0, %v11866
        %v11868 = vpop.f32.mrb[0].mxu0
        %11869 = vmatprep.mubr.bf16.mxu0 %v11717
        %11870 = vmatmul.mubr.bf16.gmra.mrb[0].mxu0 %v11713
        %v11871 = vpop.f32.mrb[0].mxu0
        %v11872 = vadd.f32 0.0, %v11871
        %v11873 = vpop.f32.mrb[0].mxu0
        %v11874 = vpop.f32.mrb[0].mxu0
        %v11875 = vadd.f32 0.0, %v11874
        %v11876 = vpop.f32.mrb[0].mxu0
        %11877 = vdwg.mxu0
        %v11878 = vadd.f32 %v11658, %v11856
        %v11879 = vadd.f32 %v11659, %v11859
        %v11880 = vadd.f32 %v11660, %v11864
        %v11881 = vadd.f32 %v11661, %v11867
        %v11882 = vadd.f32 %v11662, %v11872
        %v11883 = vadd.f32 %v11663, %v11875
        %v11884 = vmax.f32 %v11878, 0.0
        %v11885 = vmax.f32 %v11879, 0.0
        %v11886 = vmax.f32 %v11880, 0.0
        %v11887 = vmax.f32 %v11881, 0.0
        %v11888 = vmax.f32 %v11882, 0.0
        %v11889 = vmax.f32 %v11883, 0.0
        %v11890 = vpack.c.bf16 %v11885, %v11884
        %v11891 = vpack.c.bf16 %v11887, %v11886
        %v11892 = vpack.c.bf16 %v11889, %v11888
        %v11893 = vld [vmem:[%s11] sm:$0xf]
        %vm11894 = vcmask 351232
        %v11896 = vsel %vm11894, %v11893, 0
        %vm11898 = vcmask 1044480
        %vm11899 = vcmask 1045504
        %v11900 = vsel %vm11898, 4294967295, 65535
        %v11901 = vsel %vm11899, %v11900, 0
        %v11903 = vand.u32 %v11892, %v11901
        %11905 = vmatprep.subr.bf16.mxu0 0
        %11906 = vmatpush1.bf16.msra.mxu0 %v11890
        %11907 = vmatprep.subr.bf16.mxu0 0
        %11908 = vmatpush1.bf16.msra.mxu0 %v11891
        %11909 = vmatprep.subr.bf16.mxu0 0
        %11910 = vmatpush1.bf16.msra.mxu0 %v11903
        %11911 = vmatprep.subr.bf16.mxu0 0
        %11912 = vmatpush1.bf16.msra.mxu0 0
        %11913 = vmatprep.subr.bf16.mxu0 0
        %11914 = vmatpush1.bf16.msra.mxu0 0
        %11915 = vmatprep.subr.bf16.mxu0 0
        %11916 = vmatpush1.bf16.msra.mxu0 0
        %11917 = vmatprep.subr.bf16.mxu0 0
        %11918 = vmatpush1.bf16.msra.mxu0 0
        %11919 = vmatprep.subr.bf16.mxu0 0
        %11920 = vmatpush1.bf16.msra.mxu0 0
        %11921 = vmatprep.subr.bf16.mxu0 0
        %11922 = vmatpush1.bf16.msra.mxu0 0
        %11923 = vmatprep.subr.bf16.mxu0 0
        %11924 = vmatpush1.bf16.msra.mxu0 0
        %11925 = vmatprep.subr.bf16.mxu0 0
        %11926 = vmatpush1.bf16.msra.mxu0 0
        %11927 = vmatprep.subr.bf16.mxu0 0
        %11928 = vmatpush1.bf16.msra.mxu0 0
        %11929 = vmatprep.subr.bf16.mxu0 0
        %11930 = vmatpush1.bf16.msra.mxu0 0
        %11931 = vmatprep.subr.bf16.mxu0 0
        %11932 = vmatpush1.bf16.msra.mxu0 0
        %11933 = vmatprep.subr.bf16.mxu0 0
        %11934 = vmatpush1.bf16.msra.mxu0 0
        %11935 = vmatprep.subr.bf16.mxu0 0
        %11936 = vmatpush1.bf16.msra.mxu0 0
        %11937 = vmatprep.mubr.bf16.mxu0 0
        %11938 = vmatmul.mubr.bf16.gmra.mrb[0].mxu0 %v11896
        %v11939 = vpop.f32.mrb[0].mxu0
        %v11940 = vadd.f32 0.0, %v11939
        %v11941 = vpop.f32.mrb[0].mxu0
        %v11942 = vpop.f32.mrb[0].mxu0
        %v11943 = vpop.f32.mrb[0].mxu0
        %11944 = vdwg.mxu0
        %v11945 = vpack.c.bf16 %v11940, %v11940
        %v11946 = vld [vmem:[%s12] sm:$0xf]
        %v11947 = vld [vmem:[%s12 + $0x4] sm:$0xf]
        %v11948 = vld [vmem:[%s12 + $0x8] sm:$0xf]
        %v11949 = vld [vmem:[%s12 + $0xc] sm:$0xf]
        %v11950 = vld [vmem:[%s12 + $0x10] sm:$0xf]
        %v11951 = vld [vmem:[%s12 + $0x14] sm:$0xf]
        %v11952 = vld [vmem:[%s12 + $0x18] sm:$0xf]
        %v11953 = vld [vmem:[%s12 + $0x1c] sm:$0xf]
        %v11954 = vld [vmem:[%s13] sm:$0x1]
        %v11956 = vlaneseq
        %v11957 = vshrl.u32 %v11956, 7
        %v11958 = vsub.s32 0, %v11957
        %v11959 = vrot.slane %v11954, %v11958
        %v11969 = vunpack.c.l.b16 %v11946
        %v11970 = vunpack.c.l.b16 %v11947
        %v11971 = vunpack.c.l.b16 %v11948
        %v11972 = vunpack.c.l.b16 %v11949
        %v11973 = vunpack.c.l.b16 %v11950
        %v11974 = vunpack.c.l.b16 %v11951
        %v11975 = vunpack.c.l.b16 %v11952
        %v11976 = vunpack.c.l.b16 %v11953
        %v11977 = vpack.c.b16 %v11970, %v11969
        %v11978 = vpack.c.b16 %v11972, %v11971
        %v11979 = vpack.c.b16 %v11974, %v11973
        %v11980 = vpack.c.b16 %v11976, %v11975
        %vm11985 = vcmask 523264
        %v11987 = vsel %vm11985, %v11945, 0
        %11989 = vmatprep.subr.bf16.mxu0 0
        %11990 = vmatpush1.bf16.msra.mxu0 %v11977
        %11991 = vmatprep.subr.bf16.mxu0 0
        %11992 = vmatpush1.bf16.msra.mxu0 %v11978
        %11993 = vmatprep.subr.bf16.mxu0 0
        %11994 = vmatpush1.bf16.msra.mxu0 %v11979
        %11995 = vmatprep.subr.bf16.mxu0 0
        %11996 = vmatpush1.bf16.msra.mxu0 %v11980
        %11997 = vmatprep.subr.bf16.mxu0 0
        %11998 = vmatpush1.bf16.msra.mxu0 0
        %11999 = vmatprep.subr.bf16.mxu0 0
        %12000 = vmatpush1.bf16.msra.mxu0 0
        %12001 = vmatprep.subr.bf16.mxu0 0
        %12002 = vmatpush1.bf16.msra.mxu0 0
        %12003 = vmatprep.subr.bf16.mxu0 0
        %12004 = vmatpush1.bf16.msra.mxu0 0
        %12005 = vmatprep.subr.bf16.mxu0 0
        %12006 = vmatpush1.bf16.msra.mxu0 0
        %12007 = vmatprep.subr.bf16.mxu0 0
        %12008 = vmatpush1.bf16.msra.mxu0 0
        %12009 = vmatprep.subr.bf16.mxu0 0
        %12010 = vmatpush1.bf16.msra.mxu0 0
        %12011 = vmatprep.subr.bf16.mxu0 0
        %12012 = vmatpush1.bf16.msra.mxu0 0
        %12013 = vmatprep.subr.bf16.mxu0 0
        %12014 = vmatpush1.bf16.msra.mxu0 0
        %12015 = vmatprep.subr.bf16.mxu0 0
        %12016 = vmatpush1.bf16.msra.mxu0 0
        %12017 = vmatprep.subr.bf16.mxu0 0
        %12018 = vmatpush1.bf16.msra.mxu0 0
        %12019 = vmatprep.subr.bf16.mxu0 0
        %12020 = vmatpush1.bf16.msra.mxu0 0
        %12021 = vmatprep.mubr.bf16.mxu0 0
        %12022 = vmatmul.mubr.bf16.gmra.mrb[0].mxu0 %v11987
        %v12023 = vpop.f32.mrb[0].mxu0
        %v12024 = vadd.f32 %v11959, %v12023
        %v12025 = vpop.f32.mrb[0].mxu0
        %v12026 = vpop.f32.mrb[0].mxu0
        %v12027 = vpop.f32.mrb[0].mxu0
        %12028 = vdwg.mxu0
        %12029 = vst [vmem:[%s461] sm:$0xff] %v12024
        %s12030 = sand.u32 %s335, 1
        %s12031 = scalar_lea.sflag [#allocation3], %s12030
        %s12032 = sand.u32 %s335, 1
        %s12033 = smul.addr %s12032, 8
        %s12034 = scalar_lea.vmem [#allocation2], %s12033
        // Predicated region
        $region77: #{cnn_forward.1} parent=75 // pred_check
          %p12035 = pneg %p345
        $region78: #{cnn_forward.1} parent=75 // pred_check_branch
          %12037 = sbr.rel (%p12035) target = $region80
        $region79: #{cnn_forward.1} parent=75 // pred_region
          %s12039 = ssub.s32 128, 128
          %12040 = vsyncadd %s12031, %s12039
          %s12041 = smul.addr %s28, 128
          %s12042 = scalar_lea.hbm %s14, %s12041
          %s12044 = sshll.u32 %s12034, 4
          %s12045 = int_to_ptr.vmem [resolvable:$true] %s12044
          %12047 = dma.vmem_to_hbm [thread:$0]  %s12045, 128, %s12042, %s12031
        $region80: #{cnn_forward.1} parent=75 // pred_fallthru
          _
      $region76: #{cnn_forward.1} parent=5 // pred_fallthru
        _
      %p12048 = scmp.le.s32.totalorder 2, %s23
      // Predicated region
      $region81: #{cnn_forward.1} parent=5 // pred_check
        %p12049 = pneg %p12048
      $region82: #{cnn_forward.1} parent=5 // pred_check_branch
        %12051 = sbr.rel (%p12049) target = $region84
      $region83: #{cnn_forward.1} parent=5 // pred_region
        %s12052 = ssub.s32 %s23, 2
        // Predicated region
        $region85: #{cnn_forward.1} parent=83 // pred_check
          %p12053 = pneg %p351
        $region86: #{cnn_forward.1} parent=83 // pred_check_branch
          %12055 = sbr.rel (%p12053) target = $region88
        $region87: #{cnn_forward.1} parent=83 // pred_region
          %s12056 = sand.u32 %s336, 1
          %s12057 = scalar_lea.sflag [#allocation3], %s12056
          %s12058 = sand.u32 %s336, 1
          %s12059 = smul.addr %s12058, 8
          %s12060 = scalar_lea.vmem [#allocation2], %s12059
          %12061 = dma.done %s12057, 128
        $region88: #{cnn_forward.1} parent=83 // pred_fallthru
          _
      $region84: #{cnn_forward.1} parent=5 // pred_fallthru
        _
    $region6: #{cnn_forward.1} parent=1 // loop_footer
      %s27 = sadd.s32 1, %s23
    $region7: #{cnn_forward.1} parent=1 // loop_footer_branch
      %22 = sbr.rel target = $region3
    $region8: #{cnn_forward.1} parent=1 // loop_exit
      _
    %12062 = vsyncpa [#allocation3], 1
    %s12063 = scalar_lea.sflag [#allocation3], 1
    %12064 = vsyncpa %s12063, 1

</llo_original>
